<compile_context>
chip_gen: v7x
topology: tpu7x:2x2x1
jax: 0.10.0
libtpu: 0.0.40
codegen_flags: <defaults>
</compile_context>

<pallas_src>
import math

import jax
import jax.numpy as jnp
from jax.experimental import pallas as pl
from jax.experimental.pallas import tpu as pltpu


def _round_up(x, m):
    return ((x + m - 1) // m) * m


def _pick_lane_tile(hw, n_batch):
    """Lane tile: multiple of 128, <= 1024 (VMEM-safe on v7x).

    Used with a cdiv grid, so THW need NOT divide HW -- Pallas masks the
    ragged last tile.  If the batch axis alone cannot provide >= 2 grid
    programs (v7x megacore balance at N=1), split the HW axis instead of
    using one full-width block.
    """
    hw_p = _round_up(hw, 128)
    thw = min(1024, hw_p)
    if n_batch * pl.cdiv(hw_p, thw) < 2 and hw_p > 128:
        thw = _round_up(pl.cdiv(hw_p, 2), 128)
    return thw


# ----------------------------------------------------------------------------
# Fused kernel:  (W @ x) + bias  -> Mish  -> concat(y)   (all in one block)
# ----------------------------------------------------------------------------
def _make_ffm_kernel(cout, cy):
    def kernel(x_ref, y_ref, w_ref, b_ref, o_ref):
        # x_ref : (1, Cin, THW)     f32  -> cast to bf16 for the MXU (f32 acc)
        # y_ref : (1, Cy,  THW)     f32  (pass-through half of the concat)
        # w_ref : (Cout, Cin)       bf16 (BN scale pre-folded into rows)
        # b_ref : (Cout, 1)         f32  (conv bias + BN shift, folded)
        # o_ref : (1, Cout+Cy, THW)
        #
        # The 1x1 conv is lane-local: garbage lanes in the (partial) ragged
        # last x tile stay in their own lanes and the masked output store
        # discards them, so no explicit edge handling is needed.
        x_bf = x_ref[0].astype(jnp.bfloat16)
        # v5e: M=Cout=128 matches the 128x128 MXU exactly.  v6e/v7x: kernel is
        # HBM-bound, so operand orientation is not worth flipping (revisit only
        # if it ever becomes compute-bound).
        acc = jnp.dot(w_ref[...], x_bf, preferred_element_type=jnp.float32)
        v = acc + b_ref[...]                      # (Cout, THW); bias lane-broadcast
        # Mish(v) = v*tanh(softplus(v)) = v*((1+e^v)^2 - 1)/((1+e^v)^2 + 1)
        t = 1.0 + jnp.exp(jnp.minimum(v, 20.0))   # clamp only inside exp (stable)
        t2 = t * t
        mish = v * (t2 - 1.0) * pl.reciprocal(t2 + 1.0, approx=True)
        # Fused torch.cat: mish and y land in adjacent channel ranges of the
        # same output block -> single HBM write, no XLA concat copy.
        o_ref[0, pl.ds(0, cout), :] = mish.astype(o_ref.dtype)
        o_ref[0, pl.ds(cout, cy), :] = y_ref[0].astype(o_ref.dtype)
    return kernel


def ffmv2_forward(x, y, w_bf16, bias_f32, *, out_dtype=jnp.float32):
    """FFMv2: cat(Mish(BN(Conv1x1(x))), y, dim=1).  x, y NCHW -> out NCHW.

    out_dtype=jnp.bfloat16 halves the largest HBM write if the downstream
    graph tolerates it; the default (f32) matches the PyTorch module.
    """
    N, Cin, H, W = x.shape
    _, Cy, _, _ = y.shape
    Cout = w_bf16.shape[0]
    HW = H * W

    # Contiguous NCHW -> (N, C, H*W) is metadata-only (no copy).  No pad, no
    # trailing slice: out_shape uses the TRUE HW and Pallas masks the ragged
    # last lane tile.
    xf = x.reshape(N, Cin, HW)
    yf = y.reshape(N, Cy, HW)

    THW = _pick_lane_tile(HW, N)
    grid = (N, pl.cdiv(HW, THW))

    out = pl.pallas_call(
        _make_ffm_kernel(Cout, Cy),
        out_shape=jax.ShapeDtypeStruct((N, Cout + Cy, HW), out_dtype),
        grid=grid,
        in_specs=[
            # TODO(synk): if xprof still shows exposed DMA after the tiling
            # fix, add pipeline_mode=pl.Buffered(3) here (VMEM headroom exists).
            pl.BlockSpec((1, Cin, THW), lambda n, t: (n, 0, t)),
            pl.BlockSpec((1, Cy, THW), lambda n, t: (n, 0, t)),
            pl.BlockSpec((Cout, Cin), lambda n, t: (0, 0)),
            pl.BlockSpec((Cout, 1), lambda n, t: (0, 0)),
        ],
        out_specs=pl.BlockSpec((1, Cout + Cy, THW), lambda n, t: (n, 0, t)),
        compiler_params=pltpu.CompilerParams(
            dimension_semantics=("parallel", "parallel"),
            vmem_limit_bytes=32 * 1024 * 1024,   # ~10 MiB working set; fits v5e/v6e/v7x
        ),
    )(xf, yf, w_bf16, bias_f32)

    return out.reshape(N, Cout + Cy, H, W)


# ----------------------------------------------------------------------------
# Pure-JAX reference (matches the PyTorch module, eval-mode BN) for validation
# ----------------------------------------------------------------------------
def ffmv2_reference(x, y, w, b, gamma, beta, mean, var, eps=1e-5):
    conv = jnp.einsum("nchw,oc->nohw", x, w) + b[None, :, None, None]
    scale = (gamma / jnp.sqrt(var + eps))[None, :, None, None]
    bn = (conv - mean[None, :, None, None]) * scale + beta[None, :, None, None]
    sp = jnp.maximum(bn, 0.0) + jnp.log1p(jnp.exp(-jnp.abs(bn)))  # softplus
    mish = bn * jnp.tanh(sp)
    return jnp.concatenate([mish, y], axis=1)


# ----------------------------------------------------------------------------
# main
# ----------------------------------------------------------------------------
if __name__ == "__main__":
    key = jax.random.PRNGKey(0)
    k1, k2, k3, k4, k5, k6, k7, k8 = jax.random.split(key, 8)

    # FFMv2 fixes Cin=768, Cout=128; y is the 128-channel carry-over feature.
    # H=W=40 is the canonical M2Det spatial size (HW=1600): exercises one full
    # 1024-lane tile plus a masked partial tile per batch element.
    N, Cin, Cout, Cy, H, W = 2, 768, 128, 128, 40, 40
    x = jax.random.normal(k1, (N, Cin, H, W), jnp.float32)
    y = jax.random.normal(k2, (N, Cy, H, W), jnp.float32)

    # Conv + BN (eval mode) parameters, deterministic.
    w = jax.random.normal(k3, (Cout, Cin), jnp.float32) / math.sqrt(Cin)
    b = 0.01 * jax.random.normal(k4, (Cout,), jnp.float32)
    gamma = 1.0 + 0.1 * jax.random.normal(k5, (Cout,), jnp.float32)
    beta = 0.1 * jax.random.normal(k6, (Cout,), jnp.float32)
    mean = 0.1 * jax.random.normal(k7, (Cout,), jnp.float32)
    var = 0.9 + 0.1 * jnp.abs(jax.random.normal(k8, (Cout,), jnp.float32))
    eps = 1e-5

    # Fold BN scale into the weights, BN shift + conv bias into a single bias.
    scale = gamma / jnp.sqrt(var + eps)
    w_folded = (w * scale[:, None]).astype(jnp.bfloat16)          # (Cout, Cin) bf16
    bias_folded = (beta + (b - mean) * scale).reshape(Cout, 1)    # (Cout, 1)  f32

    fwd = jax.jit(ffmv2_forward)
    out = fwd(x, y, w_folded, bias_folded)
    jax.block_until_ready(out)

    # Sanity: shape, finiteness, agreement with the f32 reference
    # (bf16 MXU operands + approx reciprocal => small, bounded numeric delta).
    assert out.shape == (N, Cout + Cy, H, W), out.shape
    assert bool(jnp.all(jnp.isfinite(out)))
    ref = ffmv2_reference(x, y, w, b, gamma, beta, mean, var, eps)
    max_err = float(jnp.max(jnp.abs(out - ref)))
    assert max_err < 1e-1, f"max abs error vs reference: {max_err}"

    print("KERNEL_OK")
</pallas_src>

<mosaic_0001>
module attributes {stable_mosaic.version = 11 : i64} {
  func.func @kernel(%arg0: i32, %arg1: i32, %arg2: memref<1x768x1024xf32, #tpu.memory_space<vmem>>, %arg3: memref<1x128x1024xf32, #tpu.memory_space<vmem>>, %arg4: memref<128x768xbf16, #tpu.memory_space<vmem>>, %arg5: memref<128x1xf32, #tpu.memory_space<vmem>>, %arg6: memref<1x256x1024xf32, #tpu.memory_space<vmem>>) attributes {dimension_semantics = [#tpu.dimension_semantics<parallel>, #tpu.dimension_semantics<parallel>], iteration_bounds = array<i64: 2, 2>, scalar_prefetch = 0 : i64, scratch_operands = 0 : i64, tpu.core_type = #tpu.core_type<tc>, window_params = [{transform_indices = @transform_0, window_bounds = array<i64: 1, 768, 1024>}, {transform_indices = @transform_1, window_bounds = array<i64: 1, 128, 1024>}, {pipeline_mode = #tpu.pipeline_mode<synchronous>, transform_indices = @transform_2, window_bounds = array<i64: 128, 768>}, {pipeline_mode = #tpu.pipeline_mode<synchronous>, transform_indices = @transform_3, window_bounds = array<i64: 128, 1>}, {transform_indices = @transform_4, window_bounds = array<i64: 1, 256, 1024>}]} {
    %c0 = arith.constant 0 : index
    %c0_0 = arith.constant 0 : index
    %c0_1 = arith.constant 0 : index
    %0 = vector.load %arg2[%c0, %c0_0, %c0_1] : memref<1x768x1024xf32, #tpu.memory_space<vmem>>, vector<1x768x1024xf32>
    %1 = vector.shape_cast %0 : vector<1x768x1024xf32> to vector<768x1024xf32>
    %2 = arith.truncf %1 : vector<768x1024xf32> to vector<768x1024xbf16>
    %c0_2 = arith.constant 0 : index
    %c0_3 = arith.constant 0 : index
    %3 = vector.load %arg4[%c0_2, %c0_3] : memref<128x768xbf16, #tpu.memory_space<vmem>>, vector<128x768xbf16>
    %cst = arith.constant dense<0.000000e+00> : vector<128x1024xf32>
    %4 = tpu.matmul %3, %2, %cst {dimension_numbers = #tpu.dot_dimension_numbers<[1], [0], [0], [1], [0, 0, 1, 1], [], []>} : vector<128x768xbf16>, vector<768x1024xbf16>, vector<128x1024xf32> -> vector<128x1024xf32>
    %c0_4 = arith.constant 0 : index
    %c0_5 = arith.constant 0 : index
    %5 = vector.load %arg5[%c0_4, %c0_5] : memref<128x1xf32, #tpu.memory_space<vmem>>, vector<128x1xf32>
    %6 = vector.broadcast %5 : vector<128x1xf32> to vector<128x1024xf32>
    %7 = arith.addf %4, %6 : vector<128x1024xf32>
    %cst_6 = arith.constant 2.000000e+01 : f32
    %8 = vector.broadcast %cst_6 : f32 to vector<128x1024xf32>
    %9 = arith.minimumf %7, %8 : vector<128x1024xf32>
    %10 = math.exp %9 : vector<128x1024xf32>
    %cst_7 = arith.constant 1.000000e+00 : f32
    %11 = vector.broadcast %cst_7 : f32 to vector<128x1024xf32>
    %12 = arith.addf %11, %10 : vector<128x1024xf32>
    %13 = arith.mulf %12, %12 : vector<128x1024xf32>
    %cst_8 = arith.constant 1.000000e+00 : f32
    %14 = vector.broadcast %cst_8 : f32 to vector<128x1024xf32>
    %15 = arith.subf %13, %14 : vector<128x1024xf32>
    %16 = arith.mulf %7, %15 : vector<128x1024xf32>
    %cst_9 = arith.constant 1.000000e+00 : f32
    %17 = vector.broadcast %cst_9 : f32 to vector<128x1024xf32>
    %18 = arith.addf %13, %17 : vector<128x1024xf32>
    %19 = tpu.reciprocal %18 {approx = true} : vector<128x1024xf32> -> vector<128x1024xf32>
    %20 = arith.mulf %16, %19 : vector<128x1024xf32>
    %c0_10 = arith.constant 0 : index
    %c0_11 = arith.constant 0 : index
    %c0_12 = arith.constant 0 : index
    %21 = vector.load %arg6[%c0_10, %c0_11, %c0_12] : memref<1x256x1024xf32, #tpu.memory_space<vmem>>, vector<1x128x1024xf32>
    %22 = vector.shape_cast %21 : vector<1x128x1024xf32> to vector<128x1024xf32>
    %23 = vector.shape_cast %20 : vector<128x1024xf32> to vector<1x128x1024xf32>
    tpu.vector_store %arg6[%c0_10, %c0_11, %c0_12], %23 {strides = array<i32>} : memref<1x256x1024xf32, #tpu.memory_space<vmem>>, vector<1x128x1024xf32>,
    %c0_13 = arith.constant 0 : index
    %c0_14 = arith.constant 0 : index
    %c0_15 = arith.constant 0 : index
    %24 = vector.load %arg3[%c0_13, %c0_14, %c0_15] : memref<1x128x1024xf32, #tpu.memory_space<vmem>>, vector<1x128x1024xf32>
    %25 = vector.shape_cast %24 : vector<1x128x1024xf32> to vector<128x1024xf32>
    %c0_16 = arith.constant 0 : index
    %c128 = arith.constant 128 : index
    %c0_17 = arith.constant 0 : index
    %26 = vector.load %arg6[%c0_16, %c128, %c0_17] : memref<1x256x1024xf32, #tpu.memory_space<vmem>>, vector<1x128x1024xf32>
    %27 = vector.shape_cast %26 : vector<1x128x1024xf32> to vector<128x1024xf32>
    %28 = vector.shape_cast %25 : vector<128x1024xf32> to vector<1x128x1024xf32>
    tpu.vector_store %arg6[%c0_16, %c128, %c0_17], %28 {strides = array<i32>} : memref<1x256x1024xf32, #tpu.memory_space<vmem>>, vector<1x128x1024xf32>,
    return
  }
  func.func @transform_0(%arg0: i32, %arg1: i32) -> (i32, i32, i32) {
    %c0_i32 = arith.constant 0 : i32
    %c0_i32_0 = arith.constant 0 : i32
    return %arg0, %c0_i32, %arg1 : i32, i32, i32
  }
  func.func @transform_1(%arg0: i32, %arg1: i32) -> (i32, i32, i32) {
    %c0_i32 = arith.constant 0 : i32
    %c0_i32_0 = arith.constant 0 : i32
    return %arg0, %c0_i32, %arg1 : i32, i32, i32
  }
  func.func @transform_2(%arg0: i32, %arg1: i32) -> (i32, i32) {
    %c0_i32 = arith.constant 0 : i32
    %c0_i32_0 = arith.constant 0 : i32
    %c0_i32_1 = arith.constant 0 : i32
    return %c0_i32, %c0_i32_0 : i32, i32
  }
  func.func @transform_3(%arg0: i32, %arg1: i32) -> (i32, i32) {
    %c0_i32 = arith.constant 0 : i32
    %c0_i32_0 = arith.constant 0 : i32
    %c0_i32_1 = arith.constant 0 : i32
    return %c0_i32, %c0_i32_0 : i32, i32
  }
  func.func @transform_4(%arg0: i32, %arg1: i32) -> (i32, i32, i32) {
    %c0_i32 = arith.constant 0 : i32
    %c0_i32_0 = arith.constant 0 : i32
    return %arg0, %c0_i32, %arg1 : i32, i32, i32
  }
}

</mosaic_0001>

<llo_original>
// kernel: ffmv2_forward.1
$region0: #{ffmv2_forward.1}
  #allocation0 [shape = 'u32[]', space=smem, size = 0x4, offset = 0x4, fixed_abs, tag = 'smem constant byte address 0x4 - core index']
  #allocation1 [shape = 'u32[144,128]{1,0:T(1,128)}', space=vmem, size = 0x12000, scoped, tag = 'internal scratch']
  %s0 = inlined_call_operand.vmem [shape: f32[2,768,1600], index: 0, kind: input, shape index: {}]
  %s1 = inlined_call_operand.vmem [shape: f32[2,128,1600], index: 1, kind: input, shape index: {}]
  %s2 = inlined_call_operand.vmem [shape: bf16[128,768], index: 2, kind: input, shape index: {}]
  %s3 = inlined_call_operand.vmem [shape: f32[128,1], index: 3, kind: input, shape index: {}]
  %s4 = inlined_call_operand.vmem [shape: f32[2,256,1600], index: 4, kind: output, shape index: {}]
  %s5 = sld [smem:[#allocation0]]
  $region229: #{ffmv2_forward.1} parent=0
    _
  %s7 = ssub.s32 1, %s5
  %s8 = scalar_select 0, %s7, %s5
  $region1: #{ffmv2_forward.1} parent=0
    #allocation2 [shape = 'u8[6291456]{0}', space=vmem, size = 0x600000, scoped, tag = 'input window, operand 0']
    #allocation3 [shape = 'u8[1048576]{0}', space=vmem, size = 0x100000, scoped, tag = 'input window, operand 1']
    #allocation4 [shape = 'u8[2097152]{0}', space=vmem, size = 0x200000, scoped, tag = 'output window, operand 0']
    loop: start=0, step=1, limit=6
    $region2: #{ffmv2_forward.1} parent=1 // loop_pre_header
      _
    $region3: #{ffmv2_forward.1} parent=1 // loop_header
      %s10 = sphi 0, %s14
      %p11 = scmp.ge.s32.totalorder %s10, 6
      %s17 = sphi 0, %s29
      %s18 = sphi 0, %s25
      %s19 = sphi 0, %s17
      %s20 = sphi 0, %s18
      %s21 = sphi 0, %s19
      %s22 = sphi 0, %s20
      %s34 = sphi 0, %s36
      %s37 = sphi 0, %s34
      %s38 = sphi 0, %s37
      %s54 = sphi 0, %s38
      %s62 = sphi 0, %s64
      %s65 = sphi 0, %s62
      %s66 = sphi 0, %s65
      %s82 = sphi 0, %s66
      %s86 = sphi 0, %s86
      %s88 = sphi 0, %s86
      %s89 = sphi 0, %s88
      %s103 = sphi 0, %s89
      %s107 = sphi 0, %s107
      %s109 = sphi 0, %s107
      %s110 = sphi 0, %s109
      %s124 = sphi 0, %s110
      %s132 = sphi 0, %s134
      %s135 = sphi 0, %s132
      %s136 = sphi 0, %s135
      %s152 = sphi 0, %s136
    $region4: #{ffmv2_forward.1} parent=1 // loop_header_branch
      %13 = sbr.rel (%p11) target = $region8
    $region5: #{ffmv2_forward.1} parent=1 // loop_body
      %s15 = ssub.s32 %s10, 1
      %s16 = ssub.s32 %s10, 2
      %s23 = sadd.s32 1, %s18
      %p24 = scmp.ge.s32.totalorder %s23, 2
      %s25 = scalar_select %p24, 0, %s23
      %s26 = sadd.s32 1, %s17
      %s27 = scalar_select %p24, %s26, %s17
      %p28 = scmp.ge.s32.totalorder %s27, 2
      %s29 = scalar_select %p28, 0, %s27
      %s30 = ssub.s32 %s17, %s29
      %s31 = ssub.s32 %s18, %s25
      %s32 = sor.u32 %s30, %s31
      %p33 = scmp.eq.s32.totalorder %s32, 0
      %s35 = sadd.s32 %s34, 1
      %s36 = scalar_select %p33, %s34, %s35
      %p39 = pneg %p33
      %p40 = scmp.eq.s32.totalorder %s10, 3
      %p41 = por %p39, %p40
      %p42 = scmp.ne.s32.totalorder %s34, %s37
      %p43 = scmp.eq.s32.totalorder %s10, 0
      %p44 = por %p42, %p43
      %p45 = scmp.ne.s32.totalorder %s34, %s37
      %p46 = scmp.eq.s32.totalorder %s15, 3
      %p47 = por %p45, %p46
      %p48 = scmp.ne.s32.totalorder %s37, %s38
      %p49 = scmp.eq.s32.totalorder %s15, 0
      %p50 = por %p48, %p49
      %p51 = scmp.ne.s32.totalorder %s37, %s38
      %p52 = scmp.eq.s32.totalorder %s16, 3
      %p53 = por %p51, %p52
      %p55 = scmp.ne.s32.totalorder %s38, %s54
      %p56 = scmp.eq.s32.totalorder %s16, 0
      %p57 = por %p55, %p56
      %s58 = ssub.s32 %s17, %s29
      %s59 = ssub.s32 %s18, %s25
      %s60 = sor.u32 %s58, %s59
      %p61 = scmp.eq.s32.totalorder %s60, 0
      %s63 = sadd.s32 %s62, 1
      %s64 = scalar_select %p61, %s62, %s63
      %p67 = pneg %p61
      %p68 = scmp.eq.s32.totalorder %s10, 3
      %p69 = por %p67, %p68
      %p70 = scmp.ne.s32.totalorder %s62, %s65
      %p71 = scmp.eq.s32.totalorder %s10, 0
      %p72 = por %p70, %p71
      %p73 = scmp.ne.s32.totalorder %s62, %s65
      %p74 = scmp.eq.s32.totalorder %s15, 3
      %p75 = por %p73, %p74
      %p76 = scmp.ne.s32.totalorder %s65, %s66
      %p77 = scmp.eq.s32.totalorder %s15, 0
      %p78 = por %p76, %p77
      %p79 = scmp.ne.s32.totalorder %s65, %s66
      %p80 = scmp.eq.s32.totalorder %s16, 3
      %p81 = por %p79, %p80
      %p83 = scmp.ne.s32.totalorder %s66, %s82
      %p84 = scmp.eq.s32.totalorder %s16, 0
      %p85 = por %p83, %p84
      %s87 = sadd.s32 %s86, 1
      %p90 = scmp.eq.s32.totalorder %s10, 3
      %p91 = scmp.ne.s32.totalorder %s86, %s88
      %p92 = scmp.eq.s32.totalorder %s10, 0
      %p93 = por %p91, %p92
      %p94 = scmp.ne.s32.totalorder %s86, %s88
      %p95 = scmp.eq.s32.totalorder %s15, 3
      %p96 = por %p94, %p95
      %p97 = scmp.ne.s32.totalorder %s88, %s89
      %p98 = scmp.eq.s32.totalorder %s15, 0
      %p99 = por %p97, %p98
      %p100 = scmp.ne.s32.totalorder %s88, %s89
      %p101 = scmp.eq.s32.totalorder %s16, 3
      %p102 = por %p100, %p101
      %p104 = scmp.ne.s32.totalorder %s89, %s103
      %p105 = scmp.eq.s32.totalorder %s16, 0
      %p106 = por %p104, %p105
      %s108 = sadd.s32 %s107, 1
      %p111 = scmp.eq.s32.totalorder %s10, 3
      %p112 = scmp.ne.s32.totalorder %s107, %s109
      %p113 = scmp.eq.s32.totalorder %s10, 0
      %p114 = por %p112, %p113
      %p115 = scmp.ne.s32.totalorder %s107, %s109
      %p116 = scmp.eq.s32.totalorder %s15, 3
      %p117 = por %p115, %p116
      %p118 = scmp.ne.s32.totalorder %s109, %s110
      %p119 = scmp.eq.s32.totalorder %s15, 0
      %p120 = por %p118, %p119
      %p121 = scmp.ne.s32.totalorder %s109, %s110
      %p122 = scmp.eq.s32.totalorder %s16, 3
      %p123 = por %p121, %p122
      %p125 = scmp.ne.s32.totalorder %s110, %s124
      %p126 = scmp.eq.s32.totalorder %s16, 0
      %p127 = por %p125, %p126
      %s128 = ssub.s32 %s17, %s29
      %s129 = ssub.s32 %s18, %s25
      %s130 = sor.u32 %s128, %s129
      %p131 = scmp.eq.s32.totalorder %s130, 0
      %s133 = sadd.s32 %s132, 1
      %s134 = scalar_select %p131, %s132, %s133
      %p137 = pneg %p131
      %p138 = scmp.eq.s32.totalorder %s10, 3
      %p139 = por %p137, %p138
      %p140 = scmp.ne.s32.totalorder %s132, %s135
      %p141 = scmp.eq.s32.totalorder %s10, 0
      %p142 = por %p140, %p141
      %p143 = scmp.ne.s32.totalorder %s132, %s135
      %p144 = scmp.eq.s32.totalorder %s15, 3
      %p145 = por %p143, %p144
      %p146 = scmp.ne.s32.totalorder %s135, %s136
      %p147 = scmp.eq.s32.totalorder %s15, 0
      %p148 = por %p146, %p147
      %p149 = scmp.ne.s32.totalorder %s135, %s136
      %p150 = scmp.eq.s32.totalorder %s16, 3
      %p151 = por %p149, %p150
      %p153 = scmp.ne.s32.totalorder %s136, %s152
      %p154 = scmp.eq.s32.totalorder %s16, 0
      %p155 = por %p153, %p154
      %p156 = scmp.le.s32.totalorder 1, %s10
      %p157 = scmp.lt.s32.totalorder %s10, 5
      %p158 = pnand %p156, %p157
      %p159 = pneg %p158
      // Predicated region
      $region9: #{ffmv2_forward.1} parent=5 // pred_check
        _
      $region10: #{ffmv2_forward.1} parent=5 // pred_check_branch
        %161 = sbr.rel (%p158) target = $region12
      $region11: #{ffmv2_forward.1} parent=5 // pred_region
        %s162 = ssub.s32 %s10, 1
        // Predicated region
        $region13: #{ffmv2_forward.1} parent=11 // pred_check
          %p163 = pneg %p99
        $region14: #{ffmv2_forward.1} parent=11 // pred_check_branch
          %165 = sbr.rel (%p163) target = $region16
        $region15: #{ffmv2_forward.1} parent=11 // pred_region
          _
        $region16: #{ffmv2_forward.1} parent=11 // pred_fallthru
          _
        // Predicated region
        $region17: #{ffmv2_forward.1} parent=11 // pred_check
          %p166 = pneg %p120
        $region18: #{ffmv2_forward.1} parent=11 // pred_check_branch
          %168 = sbr.rel (%p166) target = $region20
        $region19: #{ffmv2_forward.1} parent=11 // pred_region
          _
        $region20: #{ffmv2_forward.1} parent=11 // pred_fallthru
          _
      $region12: #{ffmv2_forward.1} parent=5 // pred_fallthru
        _
      %p169 = scmp.lt.s32.totalorder %s10, 4
      // Predicated region
      $region21: #{ffmv2_forward.1} parent=5 // pred_check
        %p170 = pneg %p169
      $region22: #{ffmv2_forward.1} parent=5 // pred_check_branch
        %172 = sbr.rel (%p170) target = $region24
      $region23: #{ffmv2_forward.1} parent=5 // pred_region
        // Predicated region
        $region25: #{ffmv2_forward.1} parent=23 // pred_check
          %p173 = pneg %p44
        $region26: #{ffmv2_forward.1} parent=23 // pred_check_branch
          %175 = sbr.rel (%p173) target = $region28
        $region27: #{ffmv2_forward.1} parent=23 // pred_region
          %s176 = sand.u32 %s34, 1
          %s177 = sand.u32 %s34, 1
          %s178 = smul.addr %s177, 6144
          %s179 = scalar_lea.vmem [#allocation2], %s178
          %s180 = smul.u32 8, %s18
          %s181 = ssub.s32 13, %s180
          %p182 = scmp.lt.s32.totalorder %s181, 8
          %s183 = scalar_select %p182, %s181, 8
          %s184 = smul.u32 12288, %s183
          %p185 = scmp.ne.s32.totalorder 0, %s184
          %s186 = smul.addr %s17, 1248
          %s187 = sadd.s32 %s180, %s186
          %s188 = smul.addr %s187, 8
          %s189 = scalar_lea.vmem %s0, %s188
          %s190 = smul.u32 %s183, 8
          // Predicated region
          $region29: #{ffmv2_forward.1} parent=27 // pred_check
            %p191 = pneg %p185
          $region30: #{ffmv2_forward.1} parent=27 // pred_check_branch
            %193 = sbr.rel (%p191) target = $region32
          $region31: #{ffmv2_forward.1} parent=27 // pred_region
            %p194 = scmp.lt.u32.totalorder %s190, 8
            %p195 = pneg %p194
            // Predicated region
            $region33: #{ffmv2_forward.1} parent=31 // pred_check
              _
            $region34: #{ffmv2_forward.1} parent=31 // pred_check_branch
              %197 = sbr.rel (%p194) target = $region36
            $region35: #{ffmv2_forward.1} parent=31 // pred_region
              %s402 = sand.u32 %s190, 7
              %p403 = scmp.eq.s32.totalorder %s402, 0
              // Predicated region
              $region48: #{ffmv2_forward.1} parent=35 // pred_check
                %p404 = pneg %p403
              $region49: #{ffmv2_forward.1} parent=35 // pred_check_branch
                %406 = sbr.rel (%p404) target = $region51
              $region50: #{ffmv2_forward.1} parent=35 // pred_region
                %s407 = sshrl.u32 %s190, 3
                // While loop
                $region52: #{ffmv2_forward.1} parent=50 // loop_pre_header
                  _
                $region53: #{ffmv2_forward.1} parent=50 // loop_header
                  %s411 = sphi 0, %s413
                  %p412 = scmp.ge.s32.totalorder %s411, %s407
                  %s416 = sphi 0, %s613
                  %s417 = sphi %s189, %s616
                  %s418 = sphi %s179, %s617
                $region54: #{ffmv2_forward.1} parent=50 // loop_header_branch
                  %415 = sbr.rel (%p412) target = $region58
                $region55: #{ffmv2_forward.1} parent=50 // loop_body
                  %v419 = vld [vmem:[%s417] sm:$0xff]
                  %420 = vst [vmem:[%s418] sm:$0xff] %v419
                  %v421 = vld [vmem:[%s417 + $0x68] sm:$0xff]
                  %422 = vst [vmem:[%s418 + $0x40] sm:$0xff] %v421
                  %v423 = vld [vmem:[%s417 + $0xd0] sm:$0xff]
                  %424 = vst [vmem:[%s418 + $0x80] sm:$0xff] %v423
                  %v425 = vld [vmem:[%s417 + $0x138] sm:$0xff]
                  %426 = vst [vmem:[%s418 + $0xc0] sm:$0xff] %v425
                  %v427 = vld [vmem:[%s417 + $0x1a0] sm:$0xff]
                  %428 = vst [vmem:[%s418 + $0x100] sm:$0xff] %v427
                  %v429 = vld [vmem:[%s417 + $0x208] sm:$0xff]
                  %430 = vst [vmem:[%s418 + $0x140] sm:$0xff] %v429
                  %v431 = vld [vmem:[%s417 + $0x270] sm:$0xff]
                  %432 = vst [vmem:[%s418 + $0x180] sm:$0xff] %v431
                  %v433 = vld [vmem:[%s417 + $0x2d8] sm:$0xff]
                  %434 = vst [vmem:[%s418 + $0x1c0] sm:$0xff] %v433
                  %v435 = vld [vmem:[%s417 + $0x340] sm:$0xff]
                  %436 = vst [vmem:[%s418 + $0x200] sm:$0xff] %v435
                  %v437 = vld [vmem:[%s417 + $0x3a8] sm:$0xff]
                  %438 = vst [vmem:[%s418 + $0x240] sm:$0xff] %v437
                  %v439 = vld [vmem:[%s417 + $0x410] sm:$0xff]
                  %440 = vst [vmem:[%s418 + $0x280] sm:$0xff] %v439
                  %v441 = vld [vmem:[%s417 + $0x478] sm:$0xff]
                  %442 = vst [vmem:[%s418 + $0x2c0] sm:$0xff] %v441
                  %v443 = vld [vmem:[%s417 + $0x4e0] sm:$0xff]
                  %444 = vst [vmem:[%s418 + $0x300] sm:$0xff] %v443
                  %v445 = vld [vmem:[%s417 + $0x548] sm:$0xff]
                  %446 = vst [vmem:[%s418 + $0x340] sm:$0xff] %v445
                  %v447 = vld [vmem:[%s417 + $0x5b0] sm:$0xff]
                  %448 = vst [vmem:[%s418 + $0x380] sm:$0xff] %v447
                  %v449 = vld [vmem:[%s417 + $0x618] sm:$0xff]
                  %450 = vst [vmem:[%s418 + $0x3c0] sm:$0xff] %v449
                  %v451 = vld [vmem:[%s417 + $0x680] sm:$0xff]
                  %452 = vst [vmem:[%s418 + $0x400] sm:$0xff] %v451
                  %v453 = vld [vmem:[%s417 + $0x6e8] sm:$0xff]
                  %454 = vst [vmem:[%s418 + $0x440] sm:$0xff] %v453
                  %v455 = vld [vmem:[%s417 + $0x750] sm:$0xff]
                  %456 = vst [vmem:[%s418 + $0x480] sm:$0xff] %v455
                  %v457 = vld [vmem:[%s417 + $0x7b8] sm:$0xff]
                  %458 = vst [vmem:[%s418 + $0x4c0] sm:$0xff] %v457
                  %v459 = vld [vmem:[%s417 + $0x820] sm:$0xff]
                  %460 = vst [vmem:[%s418 + $0x500] sm:$0xff] %v459
                  %v461 = vld [vmem:[%s417 + $0x888] sm:$0xff]
                  %462 = vst [vmem:[%s418 + $0x540] sm:$0xff] %v461
                  %v463 = vld [vmem:[%s417 + $0x8f0] sm:$0xff]
                  %464 = vst [vmem:[%s418 + $0x580] sm:$0xff] %v463
                  %v465 = vld [vmem:[%s417 + $0x958] sm:$0xff]
                  %466 = vst [vmem:[%s418 + $0x5c0] sm:$0xff] %v465
                  %v467 = vld [vmem:[%s417 + $0x9c0] sm:$0xff]
                  %468 = vst [vmem:[%s418 + $0x600] sm:$0xff] %v467
                  %v469 = vld [vmem:[%s417 + $0xa28] sm:$0xff]
                  %470 = vst [vmem:[%s418 + $0x640] sm:$0xff] %v469
                  %v471 = vld [vmem:[%s417 + $0xa90] sm:$0xff]
                  %472 = vst [vmem:[%s418 + $0x680] sm:$0xff] %v471
                  %v473 = vld [vmem:[%s417 + $0xaf8] sm:$0xff]
                  %474 = vst [vmem:[%s418 + $0x6c0] sm:$0xff] %v473
                  %v475 = vld [vmem:[%s417 + $0xb60] sm:$0xff]
                  %476 = vst [vmem:[%s418 + $0x700] sm:$0xff] %v475
                  %v477 = vld [vmem:[%s417 + $0xbc8] sm:$0xff]
                  %478 = vst [vmem:[%s418 + $0x740] sm:$0xff] %v477
                  %v479 = vld [vmem:[%s417 + $0xc30] sm:$0xff]
                  %480 = vst [vmem:[%s418 + $0x780] sm:$0xff] %v479
                  %v481 = vld [vmem:[%s417 + $0xc98] sm:$0xff]
                  %482 = vst [vmem:[%s418 + $0x7c0] sm:$0xff] %v481
                  %v483 = vld [vmem:[%s417 + $0xd00] sm:$0xff]
                  %484 = vst [vmem:[%s418 + $0x800] sm:$0xff] %v483
                  %v485 = vld [vmem:[%s417 + $0xd68] sm:$0xff]
                  %486 = vst [vmem:[%s418 + $0x840] sm:$0xff] %v485
                  %v487 = vld [vmem:[%s417 + $0xdd0] sm:$0xff]
                  %488 = vst [vmem:[%s418 + $0x880] sm:$0xff] %v487
                  %v489 = vld [vmem:[%s417 + $0xe38] sm:$0xff]
                  %490 = vst [vmem:[%s418 + $0x8c0] sm:$0xff] %v489
                  %v491 = vld [vmem:[%s417 + $0xea0] sm:$0xff]
                  %492 = vst [vmem:[%s418 + $0x900] sm:$0xff] %v491
                  %v493 = vld [vmem:[%s417 + $0xf08] sm:$0xff]
                  %494 = vst [vmem:[%s418 + $0x940] sm:$0xff] %v493
                  %v495 = vld [vmem:[%s417 + $0xf70] sm:$0xff]
                  %496 = vst [vmem:[%s418 + $0x980] sm:$0xff] %v495
                  %v497 = vld [vmem:[%s417 + $0xfd8] sm:$0xff]
                  %498 = vst [vmem:[%s418 + $0x9c0] sm:$0xff] %v497
                  %v499 = vld [vmem:[%s417 + $0x1040] sm:$0xff]
                  %500 = vst [vmem:[%s418 + $0xa00] sm:$0xff] %v499
                  %v501 = vld [vmem:[%s417 + $0x10a8] sm:$0xff]
                  %502 = vst [vmem:[%s418 + $0xa40] sm:$0xff] %v501
                  %v503 = vld [vmem:[%s417 + $0x1110] sm:$0xff]
                  %504 = vst [vmem:[%s418 + $0xa80] sm:$0xff] %v503
                  %v505 = vld [vmem:[%s417 + $0x1178] sm:$0xff]
                  %506 = vst [vmem:[%s418 + $0xac0] sm:$0xff] %v505
                  %v507 = vld [vmem:[%s417 + $0x11e0] sm:$0xff]
                  %508 = vst [vmem:[%s418 + $0xb00] sm:$0xff] %v507
                  %v509 = vld [vmem:[%s417 + $0x1248] sm:$0xff]
                  %510 = vst [vmem:[%s418 + $0xb40] sm:$0xff] %v509
                  %v511 = vld [vmem:[%s417 + $0x12b0] sm:$0xff]
                  %512 = vst [vmem:[%s418 + $0xb80] sm:$0xff] %v511
                  %v513 = vld [vmem:[%s417 + $0x1318] sm:$0xff]
                  %514 = vst [vmem:[%s418 + $0xbc0] sm:$0xff] %v513
                  %v515 = vld [vmem:[%s417 + $0x1380] sm:$0xff]
                  %516 = vst [vmem:[%s418 + $0xc00] sm:$0xff] %v515
                  %v517 = vld [vmem:[%s417 + $0x13e8] sm:$0xff]
                  %518 = vst [vmem:[%s418 + $0xc40] sm:$0xff] %v517
                  %v519 = vld [vmem:[%s417 + $0x1450] sm:$0xff]
                  %520 = vst [vmem:[%s418 + $0xc80] sm:$0xff] %v519
                  %v521 = vld [vmem:[%s417 + $0x14b8] sm:$0xff]
                  %522 = vst [vmem:[%s418 + $0xcc0] sm:$0xff] %v521
                  %v523 = vld [vmem:[%s417 + $0x1520] sm:$0xff]
                  %524 = vst [vmem:[%s418 + $0xd00] sm:$0xff] %v523
                  %v525 = vld [vmem:[%s417 + $0x1588] sm:$0xff]
                  %526 = vst [vmem:[%s418 + $0xd40] sm:$0xff] %v525
                  %v527 = vld [vmem:[%s417 + $0x15f0] sm:$0xff]
                  %528 = vst [vmem:[%s418 + $0xd80] sm:$0xff] %v527
                  %v529 = vld [vmem:[%s417 + $0x1658] sm:$0xff]
                  %530 = vst [vmem:[%s418 + $0xdc0] sm:$0xff] %v529
                  %v531 = vld [vmem:[%s417 + $0x16c0] sm:$0xff]
                  %532 = vst [vmem:[%s418 + $0xe00] sm:$0xff] %v531
                  %v533 = vld [vmem:[%s417 + $0x1728] sm:$0xff]
                  %534 = vst [vmem:[%s418 + $0xe40] sm:$0xff] %v533
                  %v535 = vld [vmem:[%s417 + $0x1790] sm:$0xff]
                  %536 = vst [vmem:[%s418 + $0xe80] sm:$0xff] %v535
                  %v537 = vld [vmem:[%s417 + $0x17f8] sm:$0xff]
                  %538 = vst [vmem:[%s418 + $0xec0] sm:$0xff] %v537
                  %v539 = vld [vmem:[%s417 + $0x1860] sm:$0xff]
                  %540 = vst [vmem:[%s418 + $0xf00] sm:$0xff] %v539
                  %v541 = vld [vmem:[%s417 + $0x18c8] sm:$0xff]
                  %542 = vst [vmem:[%s418 + $0xf40] sm:$0xff] %v541
                  %v543 = vld [vmem:[%s417 + $0x1930] sm:$0xff]
                  %544 = vst [vmem:[%s418 + $0xf80] sm:$0xff] %v543
                  %v545 = vld [vmem:[%s417 + $0x1998] sm:$0xff]
                  %546 = vst [vmem:[%s418 + $0xfc0] sm:$0xff] %v545
                  %v547 = vld [vmem:[%s417 + $0x1a00] sm:$0xff]
                  %548 = vst [vmem:[%s418 + $0x1000] sm:$0xff] %v547
                  %v549 = vld [vmem:[%s417 + $0x1a68] sm:$0xff]
                  %550 = vst [vmem:[%s418 + $0x1040] sm:$0xff] %v549
                  %v551 = vld [vmem:[%s417 + $0x1ad0] sm:$0xff]
                  %552 = vst [vmem:[%s418 + $0x1080] sm:$0xff] %v551
                  %v553 = vld [vmem:[%s417 + $0x1b38] sm:$0xff]
                  %554 = vst [vmem:[%s418 + $0x10c0] sm:$0xff] %v553
                  %v555 = vld [vmem:[%s417 + $0x1ba0] sm:$0xff]
                  %556 = vst [vmem:[%s418 + $0x1100] sm:$0xff] %v555
                  %v557 = vld [vmem:[%s417 + $0x1c08] sm:$0xff]
                  %558 = vst [vmem:[%s418 + $0x1140] sm:$0xff] %v557
                  %v559 = vld [vmem:[%s417 + $0x1c70] sm:$0xff]
                  %560 = vst [vmem:[%s418 + $0x1180] sm:$0xff] %v559
                  %v561 = vld [vmem:[%s417 + $0x1cd8] sm:$0xff]
                  %562 = vst [vmem:[%s418 + $0x11c0] sm:$0xff] %v561
                  %v563 = vld [vmem:[%s417 + $0x1d40] sm:$0xff]
                  %564 = vst [vmem:[%s418 + $0x1200] sm:$0xff] %v563
                  %v565 = vld [vmem:[%s417 + $0x1da8] sm:$0xff]
                  %566 = vst [vmem:[%s418 + $0x1240] sm:$0xff] %v565
                  %v567 = vld [vmem:[%s417 + $0x1e10] sm:$0xff]
                  %568 = vst [vmem:[%s418 + $0x1280] sm:$0xff] %v567
                  %v569 = vld [vmem:[%s417 + $0x1e78] sm:$0xff]
                  %570 = vst [vmem:[%s418 + $0x12c0] sm:$0xff] %v569
                  %v571 = vld [vmem:[%s417 + $0x1ee0] sm:$0xff]
                  %572 = vst [vmem:[%s418 + $0x1300] sm:$0xff] %v571
                  %v573 = vld [vmem:[%s417 + $0x1f48] sm:$0xff]
                  %574 = vst [vmem:[%s418 + $0x1340] sm:$0xff] %v573
                  %v575 = vld [vmem:[%s417 + $0x1fb0] sm:$0xff]
                  %576 = vst [vmem:[%s418 + $0x1380] sm:$0xff] %v575
                  %v577 = vld [vmem:[%s417 + $0x2018] sm:$0xff]
                  %578 = vst [vmem:[%s418 + $0x13c0] sm:$0xff] %v577
                  %v579 = vld [vmem:[%s417 + $0x2080] sm:$0xff]
                  %580 = vst [vmem:[%s418 + $0x1400] sm:$0xff] %v579
                  %v581 = vld [vmem:[%s417 + $0x20e8] sm:$0xff]
                  %582 = vst [vmem:[%s418 + $0x1440] sm:$0xff] %v581
                  %v583 = vld [vmem:[%s417 + $0x2150] sm:$0xff]
                  %584 = vst [vmem:[%s418 + $0x1480] sm:$0xff] %v583
                  %v585 = vld [vmem:[%s417 + $0x21b8] sm:$0xff]
                  %586 = vst [vmem:[%s418 + $0x14c0] sm:$0xff] %v585
                  %v587 = vld [vmem:[%s417 + $0x2220] sm:$0xff]
                  %588 = vst [vmem:[%s418 + $0x1500] sm:$0xff] %v587
                  %v589 = vld [vmem:[%s417 + $0x2288] sm:$0xff]
                  %590 = vst [vmem:[%s418 + $0x1540] sm:$0xff] %v589
                  %v591 = vld [vmem:[%s417 + $0x22f0] sm:$0xff]
                  %592 = vst [vmem:[%s418 + $0x1580] sm:$0xff] %v591
                  %v593 = vld [vmem:[%s417 + $0x2358] sm:$0xff]
                  %594 = vst [vmem:[%s418 + $0x15c0] sm:$0xff] %v593
                  %v595 = vld [vmem:[%s417 + $0x23c0] sm:$0xff]
                  %596 = vst [vmem:[%s418 + $0x1600] sm:$0xff] %v595
                  %v597 = vld [vmem:[%s417 + $0x2428] sm:$0xff]
                  %598 = vst [vmem:[%s418 + $0x1640] sm:$0xff] %v597
                  %v599 = vld [vmem:[%s417 + $0x2490] sm:$0xff]
                  %600 = vst [vmem:[%s418 + $0x1680] sm:$0xff] %v599
                  %v601 = vld [vmem:[%s417 + $0x24f8] sm:$0xff]
                  %602 = vst [vmem:[%s418 + $0x16c0] sm:$0xff] %v601
                  %v603 = vld [vmem:[%s417 + $0x2560] sm:$0xff]
                  %604 = vst [vmem:[%s418 + $0x1700] sm:$0xff] %v603
                  %v605 = vld [vmem:[%s417 + $0x25c8] sm:$0xff]
                  %606 = vst [vmem:[%s418 + $0x1740] sm:$0xff] %v605
                  %v607 = vld [vmem:[%s417 + $0x2630] sm:$0xff]
                  %608 = vst [vmem:[%s418 + $0x1780] sm:$0xff] %v607
                  %v609 = vld [vmem:[%s417 + $0x2698] sm:$0xff]
                  %610 = vst [vmem:[%s418 + $0x17c0] sm:$0xff] %v609
                  %s611 = sadd.s32 1, %s416
                  %p612 = scmp.ge.s32.totalorder %s611, %s407
                  %s613 = scalar_select %p612, 0, %s611
                  %s614 = smul.u32 %s613, 8
                  %s615 = smul.u32 %s613, 8
                  %s616 = scalar_lea.vmem %s189, %s614
                  %s617 = scalar_lea.vmem %s179, %s615 [#allocation2]
                $region56: #{ffmv2_forward.1} parent=50 // loop_footer
                  %s413 = sadd.s32 %s411, 1
                $region57: #{ffmv2_forward.1} parent=50 // loop_footer_branch
                  %410 = sbr.rel target = $region53
                $region58: #{ffmv2_forward.1} parent=50 // loop_exit
                  _
              $region51: #{ffmv2_forward.1} parent=35 // pred_fallthru
                _
              %p618 = pneg %p403
              // Predicated region
              $region59: #{ffmv2_forward.1} parent=35 // pred_check
                _
              $region60: #{ffmv2_forward.1} parent=35 // pred_check_branch
                %620 = sbr.rel (%p403) target = $region62
              $region61: #{ffmv2_forward.1} parent=35 // pred_region
                %s621 = sand.u32 %s190, 7
                %s622 = ssub.s32 %s190, %s621
                %s623 = scalar_lea.vmem %s189, %s622
                %s624 = ssub.s32 %s190, %s621
                %s625 = scalar_lea.vmem %s179, %s624 [#allocation2]
                %s626 = sshrl.u32 %s190, 3
                // While loop
                $region63: #{ffmv2_forward.1} parent=61 // loop_pre_header
                  _
                $region64: #{ffmv2_forward.1} parent=61 // loop_header
                  %s630 = sphi 0, %s632
                  %p631 = scmp.ge.s32.totalorder %s630, %s626
                  %s635 = sphi 0, %s832
                  %s636 = sphi %s189, %s835
                  %s637 = sphi %s179, %s836
                $region65: #{ffmv2_forward.1} parent=61 // loop_header_branch
                  %634 = sbr.rel (%p631) target = $region69
                $region66: #{ffmv2_forward.1} parent=61 // loop_body
                  %v638 = vld [vmem:[%s636] sm:$0xff]
                  %639 = vst [vmem:[%s637] sm:$0xff] %v638
                  %v640 = vld [vmem:[%s636 + $0x68] sm:$0xff]
                  %641 = vst [vmem:[%s637 + $0x40] sm:$0xff] %v640
                  %v642 = vld [vmem:[%s636 + $0xd0] sm:$0xff]
                  %643 = vst [vmem:[%s637 + $0x80] sm:$0xff] %v642
                  %v644 = vld [vmem:[%s636 + $0x138] sm:$0xff]
                  %645 = vst [vmem:[%s637 + $0xc0] sm:$0xff] %v644
                  %v646 = vld [vmem:[%s636 + $0x1a0] sm:$0xff]
                  %647 = vst [vmem:[%s637 + $0x100] sm:$0xff] %v646
                  %v648 = vld [vmem:[%s636 + $0x208] sm:$0xff]
                  %649 = vst [vmem:[%s637 + $0x140] sm:$0xff] %v648
                  %v650 = vld [vmem:[%s636 + $0x270] sm:$0xff]
                  %651 = vst [vmem:[%s637 + $0x180] sm:$0xff] %v650
                  %v652 = vld [vmem:[%s636 + $0x2d8] sm:$0xff]
                  %653 = vst [vmem:[%s637 + $0x1c0] sm:$0xff] %v652
                  %v654 = vld [vmem:[%s636 + $0x340] sm:$0xff]
                  %655 = vst [vmem:[%s637 + $0x200] sm:$0xff] %v654
                  %v656 = vld [vmem:[%s636 + $0x3a8] sm:$0xff]
                  %657 = vst [vmem:[%s637 + $0x240] sm:$0xff] %v656
                  %v658 = vld [vmem:[%s636 + $0x410] sm:$0xff]
                  %659 = vst [vmem:[%s637 + $0x280] sm:$0xff] %v658
                  %v660 = vld [vmem:[%s636 + $0x478] sm:$0xff]
                  %661 = vst [vmem:[%s637 + $0x2c0] sm:$0xff] %v660
                  %v662 = vld [vmem:[%s636 + $0x4e0] sm:$0xff]
                  %663 = vst [vmem:[%s637 + $0x300] sm:$0xff] %v662
                  %v664 = vld [vmem:[%s636 + $0x548] sm:$0xff]
                  %665 = vst [vmem:[%s637 + $0x340] sm:$0xff] %v664
                  %v666 = vld [vmem:[%s636 + $0x5b0] sm:$0xff]
                  %667 = vst [vmem:[%s637 + $0x380] sm:$0xff] %v666
                  %v668 = vld [vmem:[%s636 + $0x618] sm:$0xff]
                  %669 = vst [vmem:[%s637 + $0x3c0] sm:$0xff] %v668
                  %v670 = vld [vmem:[%s636 + $0x680] sm:$0xff]
                  %671 = vst [vmem:[%s637 + $0x400] sm:$0xff] %v670
                  %v672 = vld [vmem:[%s636 + $0x6e8] sm:$0xff]
                  %673 = vst [vmem:[%s637 + $0x440] sm:$0xff] %v672
                  %v674 = vld [vmem:[%s636 + $0x750] sm:$0xff]
                  %675 = vst [vmem:[%s637 + $0x480] sm:$0xff] %v674
                  %v676 = vld [vmem:[%s636 + $0x7b8] sm:$0xff]
                  %677 = vst [vmem:[%s637 + $0x4c0] sm:$0xff] %v676
                  %v678 = vld [vmem:[%s636 + $0x820] sm:$0xff]
                  %679 = vst [vmem:[%s637 + $0x500] sm:$0xff] %v678
                  %v680 = vld [vmem:[%s636 + $0x888] sm:$0xff]
                  %681 = vst [vmem:[%s637 + $0x540] sm:$0xff] %v680
                  %v682 = vld [vmem:[%s636 + $0x8f0] sm:$0xff]
                  %683 = vst [vmem:[%s637 + $0x580] sm:$0xff] %v682
                  %v684 = vld [vmem:[%s636 + $0x958] sm:$0xff]
                  %685 = vst [vmem:[%s637 + $0x5c0] sm:$0xff] %v684
                  %v686 = vld [vmem:[%s636 + $0x9c0] sm:$0xff]
                  %687 = vst [vmem:[%s637 + $0x600] sm:$0xff] %v686
                  %v688 = vld [vmem:[%s636 + $0xa28] sm:$0xff]
                  %689 = vst [vmem:[%s637 + $0x640] sm:$0xff] %v688
                  %v690 = vld [vmem:[%s636 + $0xa90] sm:$0xff]
                  %691 = vst [vmem:[%s637 + $0x680] sm:$0xff] %v690
                  %v692 = vld [vmem:[%s636 + $0xaf8] sm:$0xff]
                  %693 = vst [vmem:[%s637 + $0x6c0] sm:$0xff] %v692
                  %v694 = vld [vmem:[%s636 + $0xb60] sm:$0xff]
                  %695 = vst [vmem:[%s637 + $0x700] sm:$0xff] %v694
                  %v696 = vld [vmem:[%s636 + $0xbc8] sm:$0xff]
                  %697 = vst [vmem:[%s637 + $0x740] sm:$0xff] %v696
                  %v698 = vld [vmem:[%s636 + $0xc30] sm:$0xff]
                  %699 = vst [vmem:[%s637 + $0x780] sm:$0xff] %v698
                  %v700 = vld [vmem:[%s636 + $0xc98] sm:$0xff]
                  %701 = vst [vmem:[%s637 + $0x7c0] sm:$0xff] %v700
                  %v702 = vld [vmem:[%s636 + $0xd00] sm:$0xff]
                  %703 = vst [vmem:[%s637 + $0x800] sm:$0xff] %v702
                  %v704 = vld [vmem:[%s636 + $0xd68] sm:$0xff]
                  %705 = vst [vmem:[%s637 + $0x840] sm:$0xff] %v704
                  %v706 = vld [vmem:[%s636 + $0xdd0] sm:$0xff]
                  %707 = vst [vmem:[%s637 + $0x880] sm:$0xff] %v706
                  %v708 = vld [vmem:[%s636 + $0xe38] sm:$0xff]
                  %709 = vst [vmem:[%s637 + $0x8c0] sm:$0xff] %v708
                  %v710 = vld [vmem:[%s636 + $0xea0] sm:$0xff]
                  %711 = vst [vmem:[%s637 + $0x900] sm:$0xff] %v710
                  %v712 = vld [vmem:[%s636 + $0xf08] sm:$0xff]
                  %713 = vst [vmem:[%s637 + $0x940] sm:$0xff] %v712
                  %v714 = vld [vmem:[%s636 + $0xf70] sm:$0xff]
                  %715 = vst [vmem:[%s637 + $0x980] sm:$0xff] %v714
                  %v716 = vld [vmem:[%s636 + $0xfd8] sm:$0xff]
                  %717 = vst [vmem:[%s637 + $0x9c0] sm:$0xff] %v716
                  %v718 = vld [vmem:[%s636 + $0x1040] sm:$0xff]
                  %719 = vst [vmem:[%s637 + $0xa00] sm:$0xff] %v718
                  %v720 = vld [vmem:[%s636 + $0x10a8] sm:$0xff]
                  %721 = vst [vmem:[%s637 + $0xa40] sm:$0xff] %v720
                  %v722 = vld [vmem:[%s636 + $0x1110] sm:$0xff]
                  %723 = vst [vmem:[%s637 + $0xa80] sm:$0xff] %v722
                  %v724 = vld [vmem:[%s636 + $0x1178] sm:$0xff]
                  %725 = vst [vmem:[%s637 + $0xac0] sm:$0xff] %v724
                  %v726 = vld [vmem:[%s636 + $0x11e0] sm:$0xff]
                  %727 = vst [vmem:[%s637 + $0xb00] sm:$0xff] %v726
                  %v728 = vld [vmem:[%s636 + $0x1248] sm:$0xff]
                  %729 = vst [vmem:[%s637 + $0xb40] sm:$0xff] %v728
                  %v730 = vld [vmem:[%s636 + $0x12b0] sm:$0xff]
                  %731 = vst [vmem:[%s637 + $0xb80] sm:$0xff] %v730
                  %v732 = vld [vmem:[%s636 + $0x1318] sm:$0xff]
                  %733 = vst [vmem:[%s637 + $0xbc0] sm:$0xff] %v732
                  %v734 = vld [vmem:[%s636 + $0x1380] sm:$0xff]
                  %735 = vst [vmem:[%s637 + $0xc00] sm:$0xff] %v734
                  %v736 = vld [vmem:[%s636 + $0x13e8] sm:$0xff]
                  %737 = vst [vmem:[%s637 + $0xc40] sm:$0xff] %v736
                  %v738 = vld [vmem:[%s636 + $0x1450] sm:$0xff]
                  %739 = vst [vmem:[%s637 + $0xc80] sm:$0xff] %v738
                  %v740 = vld [vmem:[%s636 + $0x14b8] sm:$0xff]
                  %741 = vst [vmem:[%s637 + $0xcc0] sm:$0xff] %v740
                  %v742 = vld [vmem:[%s636 + $0x1520] sm:$0xff]
                  %743 = vst [vmem:[%s637 + $0xd00] sm:$0xff] %v742
                  %v744 = vld [vmem:[%s636 + $0x1588] sm:$0xff]
                  %745 = vst [vmem:[%s637 + $0xd40] sm:$0xff] %v744
                  %v746 = vld [vmem:[%s636 + $0x15f0] sm:$0xff]
                  %747 = vst [vmem:[%s637 + $0xd80] sm:$0xff] %v746
                  %v748 = vld [vmem:[%s636 + $0x1658] sm:$0xff]
                  %749 = vst [vmem:[%s637 + $0xdc0] sm:$0xff] %v748
                  %v750 = vld [vmem:[%s636 + $0x16c0] sm:$0xff]
                  %751 = vst [vmem:[%s637 + $0xe00] sm:$0xff] %v750
                  %v752 = vld [vmem:[%s636 + $0x1728] sm:$0xff]
                  %753 = vst [vmem:[%s637 + $0xe40] sm:$0xff] %v752
                  %v754 = vld [vmem:[%s636 + $0x1790] sm:$0xff]
                  %755 = vst [vmem:[%s637 + $0xe80] sm:$0xff] %v754
                  %v756 = vld [vmem:[%s636 + $0x17f8] sm:$0xff]
                  %757 = vst [vmem:[%s637 + $0xec0] sm:$0xff] %v756
                  %v758 = vld [vmem:[%s636 + $0x1860] sm:$0xff]
                  %759 = vst [vmem:[%s637 + $0xf00] sm:$0xff] %v758
                  %v760 = vld [vmem:[%s636 + $0x18c8] sm:$0xff]
                  %761 = vst [vmem:[%s637 + $0xf40] sm:$0xff] %v760
                  %v762 = vld [vmem:[%s636 + $0x1930] sm:$0xff]
                  %763 = vst [vmem:[%s637 + $0xf80] sm:$0xff] %v762
                  %v764 = vld [vmem:[%s636 + $0x1998] sm:$0xff]
                  %765 = vst [vmem:[%s637 + $0xfc0] sm:$0xff] %v764
                  %v766 = vld [vmem:[%s636 + $0x1a00] sm:$0xff]
                  %767 = vst [vmem:[%s637 + $0x1000] sm:$0xff] %v766
                  %v768 = vld [vmem:[%s636 + $0x1a68] sm:$0xff]
                  %769 = vst [vmem:[%s637 + $0x1040] sm:$0xff] %v768
                  %v770 = vld [vmem:[%s636 + $0x1ad0] sm:$0xff]
                  %771 = vst [vmem:[%s637 + $0x1080] sm:$0xff] %v770
                  %v772 = vld [vmem:[%s636 + $0x1b38] sm:$0xff]
                  %773 = vst [vmem:[%s637 + $0x10c0] sm:$0xff] %v772
                  %v774 = vld [vmem:[%s636 + $0x1ba0] sm:$0xff]
                  %775 = vst [vmem:[%s637 + $0x1100] sm:$0xff] %v774
                  %v776 = vld [vmem:[%s636 + $0x1c08] sm:$0xff]
                  %777 = vst [vmem:[%s637 + $0x1140] sm:$0xff] %v776
                  %v778 = vld [vmem:[%s636 + $0x1c70] sm:$0xff]
                  %779 = vst [vmem:[%s637 + $0x1180] sm:$0xff] %v778
                  %v780 = vld [vmem:[%s636 + $0x1cd8] sm:$0xff]
                  %781 = vst [vmem:[%s637 + $0x11c0] sm:$0xff] %v780
                  %v782 = vld [vmem:[%s636 + $0x1d40] sm:$0xff]
                  %783 = vst [vmem:[%s637 + $0x1200] sm:$0xff] %v782
                  %v784 = vld [vmem:[%s636 + $0x1da8] sm:$0xff]
                  %785 = vst [vmem:[%s637 + $0x1240] sm:$0xff] %v784
                  %v786 = vld [vmem:[%s636 + $0x1e10] sm:$0xff]
                  %787 = vst [vmem:[%s637 + $0x1280] sm:$0xff] %v786
                  %v788 = vld [vmem:[%s636 + $0x1e78] sm:$0xff]
                  %789 = vst [vmem:[%s637 + $0x12c0] sm:$0xff] %v788
                  %v790 = vld [vmem:[%s636 + $0x1ee0] sm:$0xff]
                  %791 = vst [vmem:[%s637 + $0x1300] sm:$0xff] %v790
                  %v792 = vld [vmem:[%s636 + $0x1f48] sm:$0xff]
                  %793 = vst [vmem:[%s637 + $0x1340] sm:$0xff] %v792
                  %v794 = vld [vmem:[%s636 + $0x1fb0] sm:$0xff]
                  %795 = vst [vmem:[%s637 + $0x1380] sm:$0xff] %v794
                  %v796 = vld [vmem:[%s636 + $0x2018] sm:$0xff]
                  %797 = vst [vmem:[%s637 + $0x13c0] sm:$0xff] %v796
                  %v798 = vld [vmem:[%s636 + $0x2080] sm:$0xff]
                  %799 = vst [vmem:[%s637 + $0x1400] sm:$0xff] %v798
                  %v800 = vld [vmem:[%s636 + $0x20e8] sm:$0xff]
                  %801 = vst [vmem:[%s637 + $0x1440] sm:$0xff] %v800
                  %v802 = vld [vmem:[%s636 + $0x2150] sm:$0xff]
                  %803 = vst [vmem:[%s637 + $0x1480] sm:$0xff] %v802
                  %v804 = vld [vmem:[%s636 + $0x21b8] sm:$0xff]
                  %805 = vst [vmem:[%s637 + $0x14c0] sm:$0xff] %v804
                  %v806 = vld [vmem:[%s636 + $0x2220] sm:$0xff]
                  %807 = vst [vmem:[%s637 + $0x1500] sm:$0xff] %v806
                  %v808 = vld [vmem:[%s636 + $0x2288] sm:$0xff]
                  %809 = vst [vmem:[%s637 + $0x1540] sm:$0xff] %v808
                  %v810 = vld [vmem:[%s636 + $0x22f0] sm:$0xff]
                  %811 = vst [vmem:[%s637 + $0x1580] sm:$0xff] %v810
                  %v812 = vld [vmem:[%s636 + $0x2358] sm:$0xff]
                  %813 = vst [vmem:[%s637 + $0x15c0] sm:$0xff] %v812
                  %v814 = vld [vmem:[%s636 + $0x23c0] sm:$0xff]
                  %815 = vst [vmem:[%s637 + $0x1600] sm:$0xff] %v814
                  %v816 = vld [vmem:[%s636 + $0x2428] sm:$0xff]
                  %817 = vst [vmem:[%s637 + $0x1640] sm:$0xff] %v816
                  %v818 = vld [vmem:[%s636 + $0x2490] sm:$0xff]
                  %819 = vst [vmem:[%s637 + $0x1680] sm:$0xff] %v818
                  %v820 = vld [vmem:[%s636 + $0x24f8] sm:$0xff]
                  %821 = vst [vmem:[%s637 + $0x16c0] sm:$0xff] %v820
                  %v822 = vld [vmem:[%s636 + $0x2560] sm:$0xff]
                  %823 = vst [vmem:[%s637 + $0x1700] sm:$0xff] %v822
                  %v824 = vld [vmem:[%s636 + $0x25c8] sm:$0xff]
                  %825 = vst [vmem:[%s637 + $0x1740] sm:$0xff] %v824
                  %v826 = vld [vmem:[%s636 + $0x2630] sm:$0xff]
                  %827 = vst [vmem:[%s637 + $0x1780] sm:$0xff] %v826
                  %v828 = vld [vmem:[%s636 + $0x2698] sm:$0xff]
                  %829 = vst [vmem:[%s637 + $0x17c0] sm:$0xff] %v828
                  %s830 = sadd.s32 1, %s635
                  %p831 = scmp.ge.s32.totalorder %s830, %s626
                  %s832 = scalar_select %p831, 0, %s830
                  %s833 = smul.u32 %s832, 8
                  %s834 = smul.u32 %s832, 8
                  %s835 = scalar_lea.vmem %s189, %s833
                  %s836 = scalar_lea.vmem %s179, %s834 [#allocation2]
                $region67: #{ffmv2_forward.1} parent=61 // loop_footer
                  %s632 = sadd.s32 %s630, 1
                $region68: #{ffmv2_forward.1} parent=61 // loop_footer_branch
                  %629 = sbr.rel target = $region64
                $region69: #{ffmv2_forward.1} parent=61 // loop_exit
                  _
                %s837 = sshllo.u32 0, %s621
                loop: start=0, step=1, limit=1
                $region70: #{ffmv2_forward.1} parent=61 // loop_pre_header
                  _
                $region71: #{ffmv2_forward.1} parent=61 // loop_header
                  %s839 = sphi 0, %s843
                  %p840 = scmp.ge.s32.totalorder %s839, 1
                  %s844 = sphi %s623, %s623
                  %s845 = sphi %s625, %s625
                $region72: #{ffmv2_forward.1} parent=61 // loop_header_branch
                  %842 = sbr.rel (%p840) target = $region76
                $region73: #{ffmv2_forward.1} parent=61 // loop_body
                  %v846 = vld [vmem:[%s844] sm:%s837]
                  %847 = vst [vmem:[%s845] sm:%s837] %v846
                  %v848 = vld [vmem:[%s844 + $0x68] sm:%s837]
                  %849 = vst [vmem:[%s845 + $0x40] sm:%s837] %v848
                  %v850 = vld [vmem:[%s844 + $0xd0] sm:%s837]
                  %851 = vst [vmem:[%s845 + $0x80] sm:%s837] %v850
                  %v852 = vld [vmem:[%s844 + $0x138] sm:%s837]
                  %853 = vst [vmem:[%s845 + $0xc0] sm:%s837] %v852
                  %v854 = vld [vmem:[%s844 + $0x1a0] sm:%s837]
                  %855 = vst [vmem:[%s845 + $0x100] sm:%s837] %v854
                  %v856 = vld [vmem:[%s844 + $0x208] sm:%s837]
                  %857 = vst [vmem:[%s845 + $0x140] sm:%s837] %v856
                  %v858 = vld [vmem:[%s844 + $0x270] sm:%s837]
                  %859 = vst [vmem:[%s845 + $0x180] sm:%s837] %v858
                  %v860 = vld [vmem:[%s844 + $0x2d8] sm:%s837]
                  %861 = vst [vmem:[%s845 + $0x1c0] sm:%s837] %v860
                  %v862 = vld [vmem:[%s844 + $0x340] sm:%s837]
                  %863 = vst [vmem:[%s845 + $0x200] sm:%s837] %v862
                  %v864 = vld [vmem:[%s844 + $0x3a8] sm:%s837]
                  %865 = vst [vmem:[%s845 + $0x240] sm:%s837] %v864
                  %v866 = vld [vmem:[%s844 + $0x410] sm:%s837]
                  %867 = vst [vmem:[%s845 + $0x280] sm:%s837] %v866
                  %v868 = vld [vmem:[%s844 + $0x478] sm:%s837]
                  %869 = vst [vmem:[%s845 + $0x2c0] sm:%s837] %v868
                  %v870 = vld [vmem:[%s844 + $0x4e0] sm:%s837]
                  %871 = vst [vmem:[%s845 + $0x300] sm:%s837] %v870
                  %v872 = vld [vmem:[%s844 + $0x548] sm:%s837]
                  %873 = vst [vmem:[%s845 + $0x340] sm:%s837] %v872
                  %v874 = vld [vmem:[%s844 + $0x5b0] sm:%s837]
                  %875 = vst [vmem:[%s845 + $0x380] sm:%s837] %v874
                  %v876 = vld [vmem:[%s844 + $0x618] sm:%s837]
                  %877 = vst [vmem:[%s845 + $0x3c0] sm:%s837] %v876
                  %v878 = vld [vmem:[%s844 + $0x680] sm:%s837]
                  %879 = vst [vmem:[%s845 + $0x400] sm:%s837] %v878
                  %v880 = vld [vmem:[%s844 + $0x6e8] sm:%s837]
                  %881 = vst [vmem:[%s845 + $0x440] sm:%s837] %v880
                  %v882 = vld [vmem:[%s844 + $0x750] sm:%s837]
                  %883 = vst [vmem:[%s845 + $0x480] sm:%s837] %v882
                  %v884 = vld [vmem:[%s844 + $0x7b8] sm:%s837]
                  %885 = vst [vmem:[%s845 + $0x4c0] sm:%s837] %v884
                  %v886 = vld [vmem:[%s844 + $0x820] sm:%s837]
                  %887 = vst [vmem:[%s845 + $0x500] sm:%s837] %v886
                  %v888 = vld [vmem:[%s844 + $0x888] sm:%s837]
                  %889 = vst [vmem:[%s845 + $0x540] sm:%s837] %v888
                  %v890 = vld [vmem:[%s844 + $0x8f0] sm:%s837]
                  %891 = vst [vmem:[%s845 + $0x580] sm:%s837] %v890
                  %v892 = vld [vmem:[%s844 + $0x958] sm:%s837]
                  %893 = vst [vmem:[%s845 + $0x5c0] sm:%s837] %v892
                  %v894 = vld [vmem:[%s844 + $0x9c0] sm:%s837]
                  %895 = vst [vmem:[%s845 + $0x600] sm:%s837] %v894
                  %v896 = vld [vmem:[%s844 + $0xa28] sm:%s837]
                  %897 = vst [vmem:[%s845 + $0x640] sm:%s837] %v896
                  %v898 = vld [vmem:[%s844 + $0xa90] sm:%s837]
                  %899 = vst [vmem:[%s845 + $0x680] sm:%s837] %v898
                  %v900 = vld [vmem:[%s844 + $0xaf8] sm:%s837]
                  %901 = vst [vmem:[%s845 + $0x6c0] sm:%s837] %v900
                  %v902 = vld [vmem:[%s844 + $0xb60] sm:%s837]
                  %903 = vst [vmem:[%s845 + $0x700] sm:%s837] %v902
                  %v904 = vld [vmem:[%s844 + $0xbc8] sm:%s837]
                  %905 = vst [vmem:[%s845 + $0x740] sm:%s837] %v904
                  %v906 = vld [vmem:[%s844 + $0xc30] sm:%s837]
                  %907 = vst [vmem:[%s845 + $0x780] sm:%s837] %v906
                  %v908 = vld [vmem:[%s844 + $0xc98] sm:%s837]
                  %909 = vst [vmem:[%s845 + $0x7c0] sm:%s837] %v908
                  %v910 = vld [vmem:[%s844 + $0xd00] sm:%s837]
                  %911 = vst [vmem:[%s845 + $0x800] sm:%s837] %v910
                  %v912 = vld [vmem:[%s844 + $0xd68] sm:%s837]
                  %913 = vst [vmem:[%s845 + $0x840] sm:%s837] %v912
                  %v914 = vld [vmem:[%s844 + $0xdd0] sm:%s837]
                  %915 = vst [vmem:[%s845 + $0x880] sm:%s837] %v914
                  %v916 = vld [vmem:[%s844 + $0xe38] sm:%s837]
                  %917 = vst [vmem:[%s845 + $0x8c0] sm:%s837] %v916
                  %v918 = vld [vmem:[%s844 + $0xea0] sm:%s837]
                  %919 = vst [vmem:[%s845 + $0x900] sm:%s837] %v918
                  %v920 = vld [vmem:[%s844 + $0xf08] sm:%s837]
                  %921 = vst [vmem:[%s845 + $0x940] sm:%s837] %v920
                  %v922 = vld [vmem:[%s844 + $0xf70] sm:%s837]
                  %923 = vst [vmem:[%s845 + $0x980] sm:%s837] %v922
                  %v924 = vld [vmem:[%s844 + $0xfd8] sm:%s837]
                  %925 = vst [vmem:[%s845 + $0x9c0] sm:%s837] %v924
                  %v926 = vld [vmem:[%s844 + $0x1040] sm:%s837]
                  %927 = vst [vmem:[%s845 + $0xa00] sm:%s837] %v926
                  %v928 = vld [vmem:[%s844 + $0x10a8] sm:%s837]
                  %929 = vst [vmem:[%s845 + $0xa40] sm:%s837] %v928
                  %v930 = vld [vmem:[%s844 + $0x1110] sm:%s837]
                  %931 = vst [vmem:[%s845 + $0xa80] sm:%s837] %v930
                  %v932 = vld [vmem:[%s844 + $0x1178] sm:%s837]
                  %933 = vst [vmem:[%s845 + $0xac0] sm:%s837] %v932
                  %v934 = vld [vmem:[%s844 + $0x11e0] sm:%s837]
                  %935 = vst [vmem:[%s845 + $0xb00] sm:%s837] %v934
                  %v936 = vld [vmem:[%s844 + $0x1248] sm:%s837]
                  %937 = vst [vmem:[%s845 + $0xb40] sm:%s837] %v936
                  %v938 = vld [vmem:[%s844 + $0x12b0] sm:%s837]
                  %939 = vst [vmem:[%s845 + $0xb80] sm:%s837] %v938
                  %v940 = vld [vmem:[%s844 + $0x1318] sm:%s837]
                  %941 = vst [vmem:[%s845 + $0xbc0] sm:%s837] %v940
                  %v942 = vld [vmem:[%s844 + $0x1380] sm:%s837]
                  %943 = vst [vmem:[%s845 + $0xc00] sm:%s837] %v942
                  %v944 = vld [vmem:[%s844 + $0x13e8] sm:%s837]
                  %945 = vst [vmem:[%s845 + $0xc40] sm:%s837] %v944
                  %v946 = vld [vmem:[%s844 + $0x1450] sm:%s837]
                  %947 = vst [vmem:[%s845 + $0xc80] sm:%s837] %v946
                  %v948 = vld [vmem:[%s844 + $0x14b8] sm:%s837]
                  %949 = vst [vmem:[%s845 + $0xcc0] sm:%s837] %v948
                  %v950 = vld [vmem:[%s844 + $0x1520] sm:%s837]
                  %951 = vst [vmem:[%s845 + $0xd00] sm:%s837] %v950
                  %v952 = vld [vmem:[%s844 + $0x1588] sm:%s837]
                  %953 = vst [vmem:[%s845 + $0xd40] sm:%s837] %v952
                  %v954 = vld [vmem:[%s844 + $0x15f0] sm:%s837]
                  %955 = vst [vmem:[%s845 + $0xd80] sm:%s837] %v954
                  %v956 = vld [vmem:[%s844 + $0x1658] sm:%s837]
                  %957 = vst [vmem:[%s845 + $0xdc0] sm:%s837] %v956
                  %v958 = vld [vmem:[%s844 + $0x16c0] sm:%s837]
                  %959 = vst [vmem:[%s845 + $0xe00] sm:%s837] %v958
                  %v960 = vld [vmem:[%s844 + $0x1728] sm:%s837]
                  %961 = vst [vmem:[%s845 + $0xe40] sm:%s837] %v960
                  %v962 = vld [vmem:[%s844 + $0x1790] sm:%s837]
                  %963 = vst [vmem:[%s845 + $0xe80] sm:%s837] %v962
                  %v964 = vld [vmem:[%s844 + $0x17f8] sm:%s837]
                  %965 = vst [vmem:[%s845 + $0xec0] sm:%s837] %v964
                  %v966 = vld [vmem:[%s844 + $0x1860] sm:%s837]
                  %967 = vst [vmem:[%s845 + $0xf00] sm:%s837] %v966
                  %v968 = vld [vmem:[%s844 + $0x18c8] sm:%s837]
                  %969 = vst [vmem:[%s845 + $0xf40] sm:%s837] %v968
                  %v970 = vld [vmem:[%s844 + $0x1930] sm:%s837]
                  %971 = vst [vmem:[%s845 + $0xf80] sm:%s837] %v970
                  %v972 = vld [vmem:[%s844 + $0x1998] sm:%s837]
                  %973 = vst [vmem:[%s845 + $0xfc0] sm:%s837] %v972
                  %v974 = vld [vmem:[%s844 + $0x1a00] sm:%s837]
                  %975 = vst [vmem:[%s845 + $0x1000] sm:%s837] %v974
                  %v976 = vld [vmem:[%s844 + $0x1a68] sm:%s837]
                  %977 = vst [vmem:[%s845 + $0x1040] sm:%s837] %v976
                  %v978 = vld [vmem:[%s844 + $0x1ad0] sm:%s837]
                  %979 = vst [vmem:[%s845 + $0x1080] sm:%s837] %v978
                  %v980 = vld [vmem:[%s844 + $0x1b38] sm:%s837]
                  %981 = vst [vmem:[%s845 + $0x10c0] sm:%s837] %v980
                  %v982 = vld [vmem:[%s844 + $0x1ba0] sm:%s837]
                  %983 = vst [vmem:[%s845 + $0x1100] sm:%s837] %v982
                  %v984 = vld [vmem:[%s844 + $0x1c08] sm:%s837]
                  %985 = vst [vmem:[%s845 + $0x1140] sm:%s837] %v984
                  %v986 = vld [vmem:[%s844 + $0x1c70] sm:%s837]
                  %987 = vst [vmem:[%s845 + $0x1180] sm:%s837] %v986
                  %v988 = vld [vmem:[%s844 + $0x1cd8] sm:%s837]
                  %989 = vst [vmem:[%s845 + $0x11c0] sm:%s837] %v988
                  %v990 = vld [vmem:[%s844 + $0x1d40] sm:%s837]
                  %991 = vst [vmem:[%s845 + $0x1200] sm:%s837] %v990
                  %v992 = vld [vmem:[%s844 + $0x1da8] sm:%s837]
                  %993 = vst [vmem:[%s845 + $0x1240] sm:%s837] %v992
                  %v994 = vld [vmem:[%s844 + $0x1e10] sm:%s837]
                  %995 = vst [vmem:[%s845 + $0x1280] sm:%s837] %v994
                  %v996 = vld [vmem:[%s844 + $0x1e78] sm:%s837]
                  %997 = vst [vmem:[%s845 + $0x12c0] sm:%s837] %v996
                  %v998 = vld [vmem:[%s844 + $0x1ee0] sm:%s837]
                  %999 = vst [vmem:[%s845 + $0x1300] sm:%s837] %v998
                  %v1000 = vld [vmem:[%s844 + $0x1f48] sm:%s837]
                  %1001 = vst [vmem:[%s845 + $0x1340] sm:%s837] %v1000
                  %v1002 = vld [vmem:[%s844 + $0x1fb0] sm:%s837]
                  %1003 = vst [vmem:[%s845 + $0x1380] sm:%s837] %v1002
                  %v1004 = vld [vmem:[%s844 + $0x2018] sm:%s837]
                  %1005 = vst [vmem:[%s845 + $0x13c0] sm:%s837] %v1004
                  %v1006 = vld [vmem:[%s844 + $0x2080] sm:%s837]
                  %1007 = vst [vmem:[%s845 + $0x1400] sm:%s837] %v1006
                  %v1008 = vld [vmem:[%s844 + $0x20e8] sm:%s837]
                  %1009 = vst [vmem:[%s845 + $0x1440] sm:%s837] %v1008
                  %v1010 = vld [vmem:[%s844 + $0x2150] sm:%s837]
                  %1011 = vst [vmem:[%s845 + $0x1480] sm:%s837] %v1010
                  %v1012 = vld [vmem:[%s844 + $0x21b8] sm:%s837]
                  %1013 = vst [vmem:[%s845 + $0x14c0] sm:%s837] %v1012
                  %v1014 = vld [vmem:[%s844 + $0x2220] sm:%s837]
                  %1015 = vst [vmem:[%s845 + $0x1500] sm:%s837] %v1014
                  %v1016 = vld [vmem:[%s844 + $0x2288] sm:%s837]
                  %1017 = vst [vmem:[%s845 + $0x1540] sm:%s837] %v1016
                  %v1018 = vld [vmem:[%s844 + $0x22f0] sm:%s837]
                  %1019 = vst [vmem:[%s845 + $0x1580] sm:%s837] %v1018
                  %v1020 = vld [vmem:[%s844 + $0x2358] sm:%s837]
                  %1021 = vst [vmem:[%s845 + $0x15c0] sm:%s837] %v1020
                  %v1022 = vld [vmem:[%s844 + $0x23c0] sm:%s837]
                  %1023 = vst [vmem:[%s845 + $0x1600] sm:%s837] %v1022
                  %v1024 = vld [vmem:[%s844 + $0x2428] sm:%s837]
                  %1025 = vst [vmem:[%s845 + $0x1640] sm:%s837] %v1024
                  %v1026 = vld [vmem:[%s844 + $0x2490] sm:%s837]
                  %1027 = vst [vmem:[%s845 + $0x1680] sm:%s837] %v1026
                  %v1028 = vld [vmem:[%s844 + $0x24f8] sm:%s837]
                  %1029 = vst [vmem:[%s845 + $0x16c0] sm:%s837] %v1028
                  %v1030 = vld [vmem:[%s844 + $0x2560] sm:%s837]
                  %1031 = vst [vmem:[%s845 + $0x1700] sm:%s837] %v1030
                  %v1032 = vld [vmem:[%s844 + $0x25c8] sm:%s837]
                  %1033 = vst [vmem:[%s845 + $0x1740] sm:%s837] %v1032
                  %v1034 = vld [vmem:[%s844 + $0x2630] sm:%s837]
                  %1035 = vst [vmem:[%s845 + $0x1780] sm:%s837] %v1034
                  %v1036 = vld [vmem:[%s844 + $0x2698] sm:%s837]
                  %1037 = vst [vmem:[%s845 + $0x17c0] sm:%s837] %v1036
                $region74: #{ffmv2_forward.1} parent=61 // loop_footer
                  %s843 = sadd.s32 1, %s839
                $region75: #{ffmv2_forward.1} parent=61 // loop_footer_branch
                  %838 = sbr.rel target = $region71
                $region76: #{ffmv2_forward.1} parent=61 // loop_exit
                  _
              $region62: #{ffmv2_forward.1} parent=35 // pred_fallthru
                _
            $region36: #{ffmv2_forward.1} parent=31 // pred_fallthru
              _
            // Predicated region
            $region37: #{ffmv2_forward.1} parent=31 // pred_check
              %p198 = pneg %p194
            $region38: #{ffmv2_forward.1} parent=31 // pred_check_branch
              %200 = sbr.rel (%p198) target = $region40
            $region39: #{ffmv2_forward.1} parent=31 // pred_region
              %s201 = sshllo.u32 0, %s190
              loop: start=0, step=1, limit=1
              $region41: #{ffmv2_forward.1} parent=39 // loop_pre_header
                _
              $region42: #{ffmv2_forward.1} parent=39 // loop_header
                %s203 = sphi 0, %s207
                %p204 = scmp.ge.s32.totalorder %s203, 1
                %s208 = sphi %s189, %s189
                %s209 = sphi %s179, %s179
              $region43: #{ffmv2_forward.1} parent=39 // loop_header_branch
                %206 = sbr.rel (%p204) target = $region47
              $region44: #{ffmv2_forward.1} parent=39 // loop_body
                %v210 = vld [vmem:[%s208] sm:%s201]
                %211 = vst [vmem:[%s209] sm:%s201] %v210
                %v212 = vld [vmem:[%s208 + $0x68] sm:%s201]
                %213 = vst [vmem:[%s209 + $0x40] sm:%s201] %v212
                %v214 = vld [vmem:[%s208 + $0xd0] sm:%s201]
                %215 = vst [vmem:[%s209 + $0x80] sm:%s201] %v214
                %v216 = vld [vmem:[%s208 + $0x138] sm:%s201]
                %217 = vst [vmem:[%s209 + $0xc0] sm:%s201] %v216
                %v218 = vld [vmem:[%s208 + $0x1a0] sm:%s201]
                %219 = vst [vmem:[%s209 + $0x100] sm:%s201] %v218
                %v220 = vld [vmem:[%s208 + $0x208] sm:%s201]
                %221 = vst [vmem:[%s209 + $0x140] sm:%s201] %v220
                %v222 = vld [vmem:[%s208 + $0x270] sm:%s201]
                %223 = vst [vmem:[%s209 + $0x180] sm:%s201] %v222
                %v224 = vld [vmem:[%s208 + $0x2d8] sm:%s201]
                %225 = vst [vmem:[%s209 + $0x1c0] sm:%s201] %v224
                %v226 = vld [vmem:[%s208 + $0x340] sm:%s201]
                %227 = vst [vmem:[%s209 + $0x200] sm:%s201] %v226
                %v228 = vld [vmem:[%s208 + $0x3a8] sm:%s201]
                %229 = vst [vmem:[%s209 + $0x240] sm:%s201] %v228
                %v230 = vld [vmem:[%s208 + $0x410] sm:%s201]
                %231 = vst [vmem:[%s209 + $0x280] sm:%s201] %v230
                %v232 = vld [vmem:[%s208 + $0x478] sm:%s201]
                %233 = vst [vmem:[%s209 + $0x2c0] sm:%s201] %v232
                %v234 = vld [vmem:[%s208 + $0x4e0] sm:%s201]
                %235 = vst [vmem:[%s209 + $0x300] sm:%s201] %v234
                %v236 = vld [vmem:[%s208 + $0x548] sm:%s201]
                %237 = vst [vmem:[%s209 + $0x340] sm:%s201] %v236
                %v238 = vld [vmem:[%s208 + $0x5b0] sm:%s201]
                %239 = vst [vmem:[%s209 + $0x380] sm:%s201] %v238
                %v240 = vld [vmem:[%s208 + $0x618] sm:%s201]
                %241 = vst [vmem:[%s209 + $0x3c0] sm:%s201] %v240
                %v242 = vld [vmem:[%s208 + $0x680] sm:%s201]
                %243 = vst [vmem:[%s209 + $0x400] sm:%s201] %v242
                %v244 = vld [vmem:[%s208 + $0x6e8] sm:%s201]
                %245 = vst [vmem:[%s209 + $0x440] sm:%s201] %v244
                %v246 = vld [vmem:[%s208 + $0x750] sm:%s201]
                %247 = vst [vmem:[%s209 + $0x480] sm:%s201] %v246
                %v248 = vld [vmem:[%s208 + $0x7b8] sm:%s201]
                %249 = vst [vmem:[%s209 + $0x4c0] sm:%s201] %v248
                %v250 = vld [vmem:[%s208 + $0x820] sm:%s201]
                %251 = vst [vmem:[%s209 + $0x500] sm:%s201] %v250
                %v252 = vld [vmem:[%s208 + $0x888] sm:%s201]
                %253 = vst [vmem:[%s209 + $0x540] sm:%s201] %v252
                %v254 = vld [vmem:[%s208 + $0x8f0] sm:%s201]
                %255 = vst [vmem:[%s209 + $0x580] sm:%s201] %v254
                %v256 = vld [vmem:[%s208 + $0x958] sm:%s201]
                %257 = vst [vmem:[%s209 + $0x5c0] sm:%s201] %v256
                %v258 = vld [vmem:[%s208 + $0x9c0] sm:%s201]
                %259 = vst [vmem:[%s209 + $0x600] sm:%s201] %v258
                %v260 = vld [vmem:[%s208 + $0xa28] sm:%s201]
                %261 = vst [vmem:[%s209 + $0x640] sm:%s201] %v260
                %v262 = vld [vmem:[%s208 + $0xa90] sm:%s201]
                %263 = vst [vmem:[%s209 + $0x680] sm:%s201] %v262
                %v264 = vld [vmem:[%s208 + $0xaf8] sm:%s201]
                %265 = vst [vmem:[%s209 + $0x6c0] sm:%s201] %v264
                %v266 = vld [vmem:[%s208 + $0xb60] sm:%s201]
                %267 = vst [vmem:[%s209 + $0x700] sm:%s201] %v266
                %v268 = vld [vmem:[%s208 + $0xbc8] sm:%s201]
                %269 = vst [vmem:[%s209 + $0x740] sm:%s201] %v268
                %v270 = vld [vmem:[%s208 + $0xc30] sm:%s201]
                %271 = vst [vmem:[%s209 + $0x780] sm:%s201] %v270
                %v272 = vld [vmem:[%s208 + $0xc98] sm:%s201]
                %273 = vst [vmem:[%s209 + $0x7c0] sm:%s201] %v272
                %v274 = vld [vmem:[%s208 + $0xd00] sm:%s201]
                %275 = vst [vmem:[%s209 + $0x800] sm:%s201] %v274
                %v276 = vld [vmem:[%s208 + $0xd68] sm:%s201]
                %277 = vst [vmem:[%s209 + $0x840] sm:%s201] %v276
                %v278 = vld [vmem:[%s208 + $0xdd0] sm:%s201]
                %279 = vst [vmem:[%s209 + $0x880] sm:%s201] %v278
                %v280 = vld [vmem:[%s208 + $0xe38] sm:%s201]
                %281 = vst [vmem:[%s209 + $0x8c0] sm:%s201] %v280
                %v282 = vld [vmem:[%s208 + $0xea0] sm:%s201]
                %283 = vst [vmem:[%s209 + $0x900] sm:%s201] %v282
                %v284 = vld [vmem:[%s208 + $0xf08] sm:%s201]
                %285 = vst [vmem:[%s209 + $0x940] sm:%s201] %v284
                %v286 = vld [vmem:[%s208 + $0xf70] sm:%s201]
                %287 = vst [vmem:[%s209 + $0x980] sm:%s201] %v286
                %v288 = vld [vmem:[%s208 + $0xfd8] sm:%s201]
                %289 = vst [vmem:[%s209 + $0x9c0] sm:%s201] %v288
                %v290 = vld [vmem:[%s208 + $0x1040] sm:%s201]
                %291 = vst [vmem:[%s209 + $0xa00] sm:%s201] %v290
                %v292 = vld [vmem:[%s208 + $0x10a8] sm:%s201]
                %293 = vst [vmem:[%s209 + $0xa40] sm:%s201] %v292
                %v294 = vld [vmem:[%s208 + $0x1110] sm:%s201]
                %295 = vst [vmem:[%s209 + $0xa80] sm:%s201] %v294
                %v296 = vld [vmem:[%s208 + $0x1178] sm:%s201]
                %297 = vst [vmem:[%s209 + $0xac0] sm:%s201] %v296
                %v298 = vld [vmem:[%s208 + $0x11e0] sm:%s201]
                %299 = vst [vmem:[%s209 + $0xb00] sm:%s201] %v298
                %v300 = vld [vmem:[%s208 + $0x1248] sm:%s201]
                %301 = vst [vmem:[%s209 + $0xb40] sm:%s201] %v300
                %v302 = vld [vmem:[%s208 + $0x12b0] sm:%s201]
                %303 = vst [vmem:[%s209 + $0xb80] sm:%s201] %v302
                %v304 = vld [vmem:[%s208 + $0x1318] sm:%s201]
                %305 = vst [vmem:[%s209 + $0xbc0] sm:%s201] %v304
                %v306 = vld [vmem:[%s208 + $0x1380] sm:%s201]
                %307 = vst [vmem:[%s209 + $0xc00] sm:%s201] %v306
                %v308 = vld [vmem:[%s208 + $0x13e8] sm:%s201]
                %309 = vst [vmem:[%s209 + $0xc40] sm:%s201] %v308
                %v310 = vld [vmem:[%s208 + $0x1450] sm:%s201]
                %311 = vst [vmem:[%s209 + $0xc80] sm:%s201] %v310
                %v312 = vld [vmem:[%s208 + $0x14b8] sm:%s201]
                %313 = vst [vmem:[%s209 + $0xcc0] sm:%s201] %v312
                %v314 = vld [vmem:[%s208 + $0x1520] sm:%s201]
                %315 = vst [vmem:[%s209 + $0xd00] sm:%s201] %v314
                %v316 = vld [vmem:[%s208 + $0x1588] sm:%s201]
                %317 = vst [vmem:[%s209 + $0xd40] sm:%s201] %v316
                %v318 = vld [vmem:[%s208 + $0x15f0] sm:%s201]
                %319 = vst [vmem:[%s209 + $0xd80] sm:%s201] %v318
                %v320 = vld [vmem:[%s208 + $0x1658] sm:%s201]
                %321 = vst [vmem:[%s209 + $0xdc0] sm:%s201] %v320
                %v322 = vld [vmem:[%s208 + $0x16c0] sm:%s201]
                %323 = vst [vmem:[%s209 + $0xe00] sm:%s201] %v322
                %v324 = vld [vmem:[%s208 + $0x1728] sm:%s201]
                %325 = vst [vmem:[%s209 + $0xe40] sm:%s201] %v324
                %v326 = vld [vmem:[%s208 + $0x1790] sm:%s201]
                %327 = vst [vmem:[%s209 + $0xe80] sm:%s201] %v326
                %v328 = vld [vmem:[%s208 + $0x17f8] sm:%s201]
                %329 = vst [vmem:[%s209 + $0xec0] sm:%s201] %v328
                %v330 = vld [vmem:[%s208 + $0x1860] sm:%s201]
                %331 = vst [vmem:[%s209 + $0xf00] sm:%s201] %v330
                %v332 = vld [vmem:[%s208 + $0x18c8] sm:%s201]
                %333 = vst [vmem:[%s209 + $0xf40] sm:%s201] %v332
                %v334 = vld [vmem:[%s208 + $0x1930] sm:%s201]
                %335 = vst [vmem:[%s209 + $0xf80] sm:%s201] %v334
                %v336 = vld [vmem:[%s208 + $0x1998] sm:%s201]
                %337 = vst [vmem:[%s209 + $0xfc0] sm:%s201] %v336
                %v338 = vld [vmem:[%s208 + $0x1a00] sm:%s201]
                %339 = vst [vmem:[%s209 + $0x1000] sm:%s201] %v338
                %v340 = vld [vmem:[%s208 + $0x1a68] sm:%s201]
                %341 = vst [vmem:[%s209 + $0x1040] sm:%s201] %v340
                %v342 = vld [vmem:[%s208 + $0x1ad0] sm:%s201]
                %343 = vst [vmem:[%s209 + $0x1080] sm:%s201] %v342
                %v344 = vld [vmem:[%s208 + $0x1b38] sm:%s201]
                %345 = vst [vmem:[%s209 + $0x10c0] sm:%s201] %v344
                %v346 = vld [vmem:[%s208 + $0x1ba0] sm:%s201]
                %347 = vst [vmem:[%s209 + $0x1100] sm:%s201] %v346
                %v348 = vld [vmem:[%s208 + $0x1c08] sm:%s201]
                %349 = vst [vmem:[%s209 + $0x1140] sm:%s201] %v348
                %v350 = vld [vmem:[%s208 + $0x1c70] sm:%s201]
                %351 = vst [vmem:[%s209 + $0x1180] sm:%s201] %v350
                %v352 = vld [vmem:[%s208 + $0x1cd8] sm:%s201]
                %353 = vst [vmem:[%s209 + $0x11c0] sm:%s201] %v352
                %v354 = vld [vmem:[%s208 + $0x1d40] sm:%s201]
                %355 = vst [vmem:[%s209 + $0x1200] sm:%s201] %v354
                %v356 = vld [vmem:[%s208 + $0x1da8] sm:%s201]
                %357 = vst [vmem:[%s209 + $0x1240] sm:%s201] %v356
                %v358 = vld [vmem:[%s208 + $0x1e10] sm:%s201]
                %359 = vst [vmem:[%s209 + $0x1280] sm:%s201] %v358
                %v360 = vld [vmem:[%s208 + $0x1e78] sm:%s201]
                %361 = vst [vmem:[%s209 + $0x12c0] sm:%s201] %v360
                %v362 = vld [vmem:[%s208 + $0x1ee0] sm:%s201]
                %363 = vst [vmem:[%s209 + $0x1300] sm:%s201] %v362
                %v364 = vld [vmem:[%s208 + $0x1f48] sm:%s201]
                %365 = vst [vmem:[%s209 + $0x1340] sm:%s201] %v364
                %v366 = vld [vmem:[%s208 + $0x1fb0] sm:%s201]
                %367 = vst [vmem:[%s209 + $0x1380] sm:%s201] %v366
                %v368 = vld [vmem:[%s208 + $0x2018] sm:%s201]
                %369 = vst [vmem:[%s209 + $0x13c0] sm:%s201] %v368
                %v370 = vld [vmem:[%s208 + $0x2080] sm:%s201]
                %371 = vst [vmem:[%s209 + $0x1400] sm:%s201] %v370
                %v372 = vld [vmem:[%s208 + $0x20e8] sm:%s201]
                %373 = vst [vmem:[%s209 + $0x1440] sm:%s201] %v372
                %v374 = vld [vmem:[%s208 + $0x2150] sm:%s201]
                %375 = vst [vmem:[%s209 + $0x1480] sm:%s201] %v374
                %v376 = vld [vmem:[%s208 + $0x21b8] sm:%s201]
                %377 = vst [vmem:[%s209 + $0x14c0] sm:%s201] %v376
                %v378 = vld [vmem:[%s208 + $0x2220] sm:%s201]
                %379 = vst [vmem:[%s209 + $0x1500] sm:%s201] %v378
                %v380 = vld [vmem:[%s208 + $0x2288] sm:%s201]
                %381 = vst [vmem:[%s209 + $0x1540] sm:%s201] %v380
                %v382 = vld [vmem:[%s208 + $0x22f0] sm:%s201]
                %383 = vst [vmem:[%s209 + $0x1580] sm:%s201] %v382
                %v384 = vld [vmem:[%s208 + $0x2358] sm:%s201]
                %385 = vst [vmem:[%s209 + $0x15c0] sm:%s201] %v384
                %v386 = vld [vmem:[%s208 + $0x23c0] sm:%s201]
                %387 = vst [vmem:[%s209 + $0x1600] sm:%s201] %v386
                %v388 = vld [vmem:[%s208 + $0x2428] sm:%s201]
                %389 = vst [vmem:[%s209 + $0x1640] sm:%s201] %v388
                %v390 = vld [vmem:[%s208 + $0x2490] sm:%s201]
                %391 = vst [vmem:[%s209 + $0x1680] sm:%s201] %v390
                %v392 = vld [vmem:[%s208 + $0x24f8] sm:%s201]
                %393 = vst [vmem:[%s209 + $0x16c0] sm:%s201] %v392
                %v394 = vld [vmem:[%s208 + $0x2560] sm:%s201]
                %395 = vst [vmem:[%s209 + $0x1700] sm:%s201] %v394
                %v396 = vld [vmem:[%s208 + $0x25c8] sm:%s201]
                %397 = vst [vmem:[%s209 + $0x1740] sm:%s201] %v396
                %v398 = vld [vmem:[%s208 + $0x2630] sm:%s201]
                %399 = vst [vmem:[%s209 + $0x1780] sm:%s201] %v398
                %v400 = vld [vmem:[%s208 + $0x2698] sm:%s201]
                %401 = vst [vmem:[%s209 + $0x17c0] sm:%s201] %v400
              $region45: #{ffmv2_forward.1} parent=39 // loop_footer
                %s207 = sadd.s32 1, %s203
              $region46: #{ffmv2_forward.1} parent=39 // loop_footer_branch
                %202 = sbr.rel target = $region42
              $region47: #{ffmv2_forward.1} parent=39 // loop_exit
                _
            $region40: #{ffmv2_forward.1} parent=31 // pred_fallthru
              _
          $region32: #{ffmv2_forward.1} parent=27 // pred_fallthru
            _
          %1038 = vnop
        $region28: #{ffmv2_forward.1} parent=23 // pred_fallthru
          _
        // Predicated region
        $region77: #{ffmv2_forward.1} parent=23 // pred_check
          %p1039 = pneg %p72
        $region78: #{ffmv2_forward.1} parent=23 // pred_check_branch
          %1041 = sbr.rel (%p1039) target = $region80
        $region79: #{ffmv2_forward.1} parent=23 // pred_region
          %s1042 = sand.u32 %s62, 1
          %s1043 = sand.u32 %s62, 1
          %s1044 = smul.addr %s1043, 1024
          %s1045 = scalar_lea.vmem [#allocation3], %s1044
          %s1046 = smul.u32 8, %s18
          %s1047 = ssub.s32 13, %s1046
          %p1048 = scmp.lt.s32.totalorder %s1047, 8
          %s1049 = scalar_select %p1048, %s1047, 8
          %s1050 = smul.u32 2048, %s1049
          %p1051 = scmp.ne.s32.totalorder 0, %s1050
          %s1052 = smul.addr %s17, 208
          %s1053 = sadd.s32 %s1046, %s1052
          %s1054 = smul.addr %s1053, 8
          %s1055 = scalar_lea.vmem %s1, %s1054
          %s1056 = smul.u32 %s1049, 8
          // Predicated region
          $region81: #{ffmv2_forward.1} parent=79 // pred_check
            %p1057 = pneg %p1051
          $region82: #{ffmv2_forward.1} parent=79 // pred_check_branch
            %1059 = sbr.rel (%p1057) target = $region84
          $region83: #{ffmv2_forward.1} parent=79 // pred_region
            %p1060 = scmp.lt.u32.totalorder %s1056, 8
            %p1061 = pneg %p1060
            // Predicated region
            $region85: #{ffmv2_forward.1} parent=83 // pred_check
              _
            $region86: #{ffmv2_forward.1} parent=83 // pred_check_branch
              %1063 = sbr.rel (%p1060) target = $region88
            $region87: #{ffmv2_forward.1} parent=83 // pred_region
              %s1108 = sand.u32 %s1056, 7
              %p1109 = scmp.eq.s32.totalorder %s1108, 0
              // Predicated region
              $region100: #{ffmv2_forward.1} parent=87 // pred_check
                %p1110 = pneg %p1109
              $region101: #{ffmv2_forward.1} parent=87 // pred_check_branch
                %1112 = sbr.rel (%p1110) target = $region103
              $region102: #{ffmv2_forward.1} parent=87 // pred_region
                %s1113 = sshrl.u32 %s1056, 3
                %s1114 = sshrl.u32 %s1113, 2
                // While loop
                $region104: #{ffmv2_forward.1} parent=102 // loop_pre_header
                  _
                $region105: #{ffmv2_forward.1} parent=102 // loop_header
                  %s1118 = sphi 0, %s1120
                  %p1119 = scmp.ge.s32.totalorder %s1118, %s1114
                  %s1123 = sphi 0, %s1256
                  %s1124 = sphi %s1055, %s1259
                  %s1125 = sphi %s1045, %s1260
                $region106: #{ffmv2_forward.1} parent=102 // loop_header_branch
                  %1122 = sbr.rel (%p1119) target = $region110
                $region107: #{ffmv2_forward.1} parent=102 // loop_body
                  %v1126 = vld [vmem:[%s1124] sm:$0xff]
                  %1127 = vst [vmem:[%s1125] sm:$0xff] %v1126
                  %v1128 = vld [vmem:[%s1124 + $0x8] sm:$0xff]
                  %1129 = vst [vmem:[%s1125 + $0x8] sm:$0xff] %v1128
                  %v1130 = vld [vmem:[%s1124 + $0x10] sm:$0xff]
                  %1131 = vst [vmem:[%s1125 + $0x10] sm:$0xff] %v1130
                  %v1132 = vld [vmem:[%s1124 + $0x18] sm:$0xff]
                  %1133 = vst [vmem:[%s1125 + $0x18] sm:$0xff] %v1132
                  %v1134 = vld [vmem:[%s1124 + $0x68] sm:$0xff]
                  %1135 = vst [vmem:[%s1125 + $0x40] sm:$0xff] %v1134
                  %v1136 = vld [vmem:[%s1124 + $0x70] sm:$0xff]
                  %1137 = vst [vmem:[%s1125 + $0x48] sm:$0xff] %v1136
                  %v1138 = vld [vmem:[%s1124 + $0x78] sm:$0xff]
                  %1139 = vst [vmem:[%s1125 + $0x50] sm:$0xff] %v1138
                  %v1140 = vld [vmem:[%s1124 + $0x80] sm:$0xff]
                  %1141 = vst [vmem:[%s1125 + $0x58] sm:$0xff] %v1140
                  %v1142 = vld [vmem:[%s1124 + $0xd0] sm:$0xff]
                  %1143 = vst [vmem:[%s1125 + $0x80] sm:$0xff] %v1142
                  %v1144 = vld [vmem:[%s1124 + $0xd8] sm:$0xff]
                  %1145 = vst [vmem:[%s1125 + $0x88] sm:$0xff] %v1144
                  %v1146 = vld [vmem:[%s1124 + $0xe0] sm:$0xff]
                  %1147 = vst [vmem:[%s1125 + $0x90] sm:$0xff] %v1146
                  %v1148 = vld [vmem:[%s1124 + $0xe8] sm:$0xff]
                  %1149 = vst [vmem:[%s1125 + $0x98] sm:$0xff] %v1148
                  %v1150 = vld [vmem:[%s1124 + $0x138] sm:$0xff]
                  %1151 = vst [vmem:[%s1125 + $0xc0] sm:$0xff] %v1150
                  %v1152 = vld [vmem:[%s1124 + $0x140] sm:$0xff]
                  %1153 = vst [vmem:[%s1125 + $0xc8] sm:$0xff] %v1152
                  %v1154 = vld [vmem:[%s1124 + $0x148] sm:$0xff]
                  %1155 = vst [vmem:[%s1125 + $0xd0] sm:$0xff] %v1154
                  %v1156 = vld [vmem:[%s1124 + $0x150] sm:$0xff]
                  %1157 = vst [vmem:[%s1125 + $0xd8] sm:$0xff] %v1156
                  %v1158 = vld [vmem:[%s1124 + $0x1a0] sm:$0xff]
                  %1159 = vst [vmem:[%s1125 + $0x100] sm:$0xff] %v1158
                  %v1160 = vld [vmem:[%s1124 + $0x1a8] sm:$0xff]
                  %1161 = vst [vmem:[%s1125 + $0x108] sm:$0xff] %v1160
                  %v1162 = vld [vmem:[%s1124 + $0x1b0] sm:$0xff]
                  %1163 = vst [vmem:[%s1125 + $0x110] sm:$0xff] %v1162
                  %v1164 = vld [vmem:[%s1124 + $0x1b8] sm:$0xff]
                  %1165 = vst [vmem:[%s1125 + $0x118] sm:$0xff] %v1164
                  %v1166 = vld [vmem:[%s1124 + $0x208] sm:$0xff]
                  %1167 = vst [vmem:[%s1125 + $0x140] sm:$0xff] %v1166
                  %v1168 = vld [vmem:[%s1124 + $0x210] sm:$0xff]
                  %1169 = vst [vmem:[%s1125 + $0x148] sm:$0xff] %v1168
                  %v1170 = vld [vmem:[%s1124 + $0x218] sm:$0xff]
                  %1171 = vst [vmem:[%s1125 + $0x150] sm:$0xff] %v1170
                  %v1172 = vld [vmem:[%s1124 + $0x220] sm:$0xff]
                  %1173 = vst [vmem:[%s1125 + $0x158] sm:$0xff] %v1172
                  %v1174 = vld [vmem:[%s1124 + $0x270] sm:$0xff]
                  %1175 = vst [vmem:[%s1125 + $0x180] sm:$0xff] %v1174
                  %v1176 = vld [vmem:[%s1124 + $0x278] sm:$0xff]
                  %1177 = vst [vmem:[%s1125 + $0x188] sm:$0xff] %v1176
                  %v1178 = vld [vmem:[%s1124 + $0x280] sm:$0xff]
                  %1179 = vst [vmem:[%s1125 + $0x190] sm:$0xff] %v1178
                  %v1180 = vld [vmem:[%s1124 + $0x288] sm:$0xff]
                  %1181 = vst [vmem:[%s1125 + $0x198] sm:$0xff] %v1180
                  %v1182 = vld [vmem:[%s1124 + $0x2d8] sm:$0xff]
                  %1183 = vst [vmem:[%s1125 + $0x1c0] sm:$0xff] %v1182
                  %v1184 = vld [vmem:[%s1124 + $0x2e0] sm:$0xff]
                  %1185 = vst [vmem:[%s1125 + $0x1c8] sm:$0xff] %v1184
                  %v1186 = vld [vmem:[%s1124 + $0x2e8] sm:$0xff]
                  %1187 = vst [vmem:[%s1125 + $0x1d0] sm:$0xff] %v1186
                  %v1188 = vld [vmem:[%s1124 + $0x2f0] sm:$0xff]
                  %1189 = vst [vmem:[%s1125 + $0x1d8] sm:$0xff] %v1188
                  %v1190 = vld [vmem:[%s1124 + $0x340] sm:$0xff]
                  %1191 = vst [vmem:[%s1125 + $0x200] sm:$0xff] %v1190
                  %v1192 = vld [vmem:[%s1124 + $0x348] sm:$0xff]
                  %1193 = vst [vmem:[%s1125 + $0x208] sm:$0xff] %v1192
                  %v1194 = vld [vmem:[%s1124 + $0x350] sm:$0xff]
                  %1195 = vst [vmem:[%s1125 + $0x210] sm:$0xff] %v1194
                  %v1196 = vld [vmem:[%s1124 + $0x358] sm:$0xff]
                  %1197 = vst [vmem:[%s1125 + $0x218] sm:$0xff] %v1196
                  %v1198 = vld [vmem:[%s1124 + $0x3a8] sm:$0xff]
                  %1199 = vst [vmem:[%s1125 + $0x240] sm:$0xff] %v1198
                  %v1200 = vld [vmem:[%s1124 + $0x3b0] sm:$0xff]
                  %1201 = vst [vmem:[%s1125 + $0x248] sm:$0xff] %v1200
                  %v1202 = vld [vmem:[%s1124 + $0x3b8] sm:$0xff]
                  %1203 = vst [vmem:[%s1125 + $0x250] sm:$0xff] %v1202
                  %v1204 = vld [vmem:[%s1124 + $0x3c0] sm:$0xff]
                  %1205 = vst [vmem:[%s1125 + $0x258] sm:$0xff] %v1204
                  %v1206 = vld [vmem:[%s1124 + $0x410] sm:$0xff]
                  %1207 = vst [vmem:[%s1125 + $0x280] sm:$0xff] %v1206
                  %v1208 = vld [vmem:[%s1124 + $0x418] sm:$0xff]
                  %1209 = vst [vmem:[%s1125 + $0x288] sm:$0xff] %v1208
                  %v1210 = vld [vmem:[%s1124 + $0x420] sm:$0xff]
                  %1211 = vst [vmem:[%s1125 + $0x290] sm:$0xff] %v1210
                  %v1212 = vld [vmem:[%s1124 + $0x428] sm:$0xff]
                  %1213 = vst [vmem:[%s1125 + $0x298] sm:$0xff] %v1212
                  %v1214 = vld [vmem:[%s1124 + $0x478] sm:$0xff]
                  %1215 = vst [vmem:[%s1125 + $0x2c0] sm:$0xff] %v1214
                  %v1216 = vld [vmem:[%s1124 + $0x480] sm:$0xff]
                  %1217 = vst [vmem:[%s1125 + $0x2c8] sm:$0xff] %v1216
                  %v1218 = vld [vmem:[%s1124 + $0x488] sm:$0xff]
                  %1219 = vst [vmem:[%s1125 + $0x2d0] sm:$0xff] %v1218
                  %v1220 = vld [vmem:[%s1124 + $0x490] sm:$0xff]
                  %1221 = vst [vmem:[%s1125 + $0x2d8] sm:$0xff] %v1220
                  %v1222 = vld [vmem:[%s1124 + $0x4e0] sm:$0xff]
                  %1223 = vst [vmem:[%s1125 + $0x300] sm:$0xff] %v1222
                  %v1224 = vld [vmem:[%s1124 + $0x4e8] sm:$0xff]
                  %1225 = vst [vmem:[%s1125 + $0x308] sm:$0xff] %v1224
                  %v1226 = vld [vmem:[%s1124 + $0x4f0] sm:$0xff]
                  %1227 = vst [vmem:[%s1125 + $0x310] sm:$0xff] %v1226
                  %v1228 = vld [vmem:[%s1124 + $0x4f8] sm:$0xff]
                  %1229 = vst [vmem:[%s1125 + $0x318] sm:$0xff] %v1228
                  %v1230 = vld [vmem:[%s1124 + $0x548] sm:$0xff]
                  %1231 = vst [vmem:[%s1125 + $0x340] sm:$0xff] %v1230
                  %v1232 = vld [vmem:[%s1124 + $0x550] sm:$0xff]
                  %1233 = vst [vmem:[%s1125 + $0x348] sm:$0xff] %v1232
                  %v1234 = vld [vmem:[%s1124 + $0x558] sm:$0xff]
                  %1235 = vst [vmem:[%s1125 + $0x350] sm:$0xff] %v1234
                  %v1236 = vld [vmem:[%s1124 + $0x560] sm:$0xff]
                  %1237 = vst [vmem:[%s1125 + $0x358] sm:$0xff] %v1236
                  %v1238 = vld [vmem:[%s1124 + $0x5b0] sm:$0xff]
                  %1239 = vst [vmem:[%s1125 + $0x380] sm:$0xff] %v1238
                  %v1240 = vld [vmem:[%s1124 + $0x5b8] sm:$0xff]
                  %1241 = vst [vmem:[%s1125 + $0x388] sm:$0xff] %v1240
                  %v1242 = vld [vmem:[%s1124 + $0x5c0] sm:$0xff]
                  %1243 = vst [vmem:[%s1125 + $0x390] sm:$0xff] %v1242
                  %v1244 = vld [vmem:[%s1124 + $0x5c8] sm:$0xff]
                  %1245 = vst [vmem:[%s1125 + $0x398] sm:$0xff] %v1244
                  %v1246 = vld [vmem:[%s1124 + $0x618] sm:$0xff]
                  %1247 = vst [vmem:[%s1125 + $0x3c0] sm:$0xff] %v1246
                  %v1248 = vld [vmem:[%s1124 + $0x620] sm:$0xff]
                  %1249 = vst [vmem:[%s1125 + $0x3c8] sm:$0xff] %v1248
                  %v1250 = vld [vmem:[%s1124 + $0x628] sm:$0xff]
                  %1251 = vst [vmem:[%s1125 + $0x3d0] sm:$0xff] %v1250
                  %v1252 = vld [vmem:[%s1124 + $0x630] sm:$0xff]
                  %1253 = vst [vmem:[%s1125 + $0x3d8] sm:$0xff] %v1252
                  %s1254 = sadd.s32 1, %s1123
                  %p1255 = scmp.ge.s32.totalorder %s1254, %s1114
                  %s1256 = scalar_select %p1255, 0, %s1254
                  %s1257 = smul.u32 %s1256, 32
                  %s1258 = smul.u32 %s1256, 32
                  %s1259 = scalar_lea.vmem %s1055, %s1257
                  %s1260 = scalar_lea.vmem %s1045, %s1258 [#allocation3]
                $region108: #{ffmv2_forward.1} parent=102 // loop_footer
                  %s1120 = sadd.s32 %s1118, 1
                $region109: #{ffmv2_forward.1} parent=102 // loop_footer_branch
                  %1117 = sbr.rel target = $region105
                $region110: #{ffmv2_forward.1} parent=102 // loop_exit
                  _
                %s1261 = sshrl.u32 %s1113, 2
                %s1262 = sand.u32 %s1113, 3
                %s1263 = smul.u32 %s1261, 4
                %s1264 = smul.u32 128, %s1263
                %s1265 = sshra.s32 %s1264, 4
                %s1266 = scalar_lea.vmem %s1055, %s1265
                %s1267 = smul.u32 128, %s1263
                %s1268 = sshra.s32 %s1267, 4
                %s1269 = scalar_lea.vmem %s1045, %s1268 [#allocation3]
                // While loop
                $region111: #{ffmv2_forward.1} parent=102 // loop_pre_header
                  _
                $region112: #{ffmv2_forward.1} parent=102 // loop_header
                  %s1273 = sphi 0, %s1275
                  %p1274 = scmp.ge.s32.totalorder %s1273, %s1262
                  %s1278 = sphi 0, %s1315
                  %s1279 = sphi %s1266, %s1318
                  %s1280 = sphi %s1269, %s1319
                $region113: #{ffmv2_forward.1} parent=102 // loop_header_branch
                  %1277 = sbr.rel (%p1274) target = $region117
                $region114: #{ffmv2_forward.1} parent=102 // loop_body
                  %v1281 = vld [vmem:[%s1279] sm:$0xff]
                  %1282 = vst [vmem:[%s1280] sm:$0xff] %v1281
                  %v1283 = vld [vmem:[%s1279 + $0x68] sm:$0xff]
                  %1284 = vst [vmem:[%s1280 + $0x40] sm:$0xff] %v1283
                  %v1285 = vld [vmem:[%s1279 + $0xd0] sm:$0xff]
                  %1286 = vst [vmem:[%s1280 + $0x80] sm:$0xff] %v1285
                  %v1287 = vld [vmem:[%s1279 + $0x138] sm:$0xff]
                  %1288 = vst [vmem:[%s1280 + $0xc0] sm:$0xff] %v1287
                  %v1289 = vld [vmem:[%s1279 + $0x1a0] sm:$0xff]
                  %1290 = vst [vmem:[%s1280 + $0x100] sm:$0xff] %v1289
                  %v1291 = vld [vmem:[%s1279 + $0x208] sm:$0xff]
                  %1292 = vst [vmem:[%s1280 + $0x140] sm:$0xff] %v1291
                  %v1293 = vld [vmem:[%s1279 + $0x270] sm:$0xff]
                  %1294 = vst [vmem:[%s1280 + $0x180] sm:$0xff] %v1293
                  %v1295 = vld [vmem:[%s1279 + $0x2d8] sm:$0xff]
                  %1296 = vst [vmem:[%s1280 + $0x1c0] sm:$0xff] %v1295
                  %v1297 = vld [vmem:[%s1279 + $0x340] sm:$0xff]
                  %1298 = vst [vmem:[%s1280 + $0x200] sm:$0xff] %v1297
                  %v1299 = vld [vmem:[%s1279 + $0x3a8] sm:$0xff]
                  %1300 = vst [vmem:[%s1280 + $0x240] sm:$0xff] %v1299
                  %v1301 = vld [vmem:[%s1279 + $0x410] sm:$0xff]
                  %1302 = vst [vmem:[%s1280 + $0x280] sm:$0xff] %v1301
                  %v1303 = vld [vmem:[%s1279 + $0x478] sm:$0xff]
                  %1304 = vst [vmem:[%s1280 + $0x2c0] sm:$0xff] %v1303
                  %v1305 = vld [vmem:[%s1279 + $0x4e0] sm:$0xff]
                  %1306 = vst [vmem:[%s1280 + $0x300] sm:$0xff] %v1305
                  %v1307 = vld [vmem:[%s1279 + $0x548] sm:$0xff]
                  %1308 = vst [vmem:[%s1280 + $0x340] sm:$0xff] %v1307
                  %v1309 = vld [vmem:[%s1279 + $0x5b0] sm:$0xff]
                  %1310 = vst [vmem:[%s1280 + $0x380] sm:$0xff] %v1309
                  %v1311 = vld [vmem:[%s1279 + $0x618] sm:$0xff]
                  %1312 = vst [vmem:[%s1280 + $0x3c0] sm:$0xff] %v1311
                  %s1313 = sadd.s32 1, %s1278
                  %p1314 = scmp.ge.s32.totalorder %s1313, %s1262
                  %s1315 = scalar_select %p1314, 0, %s1313
                  %s1316 = smul.u32 %s1315, 8
                  %s1317 = smul.u32 %s1315, 8
                  %s1318 = scalar_lea.vmem %s1266, %s1316
                  %s1319 = scalar_lea.vmem %s1269, %s1317 [#allocation3]
                $region115: #{ffmv2_forward.1} parent=102 // loop_footer
                  %s1275 = sadd.s32 %s1273, 1
                $region116: #{ffmv2_forward.1} parent=102 // loop_footer_branch
                  %1272 = sbr.rel target = $region112
                $region117: #{ffmv2_forward.1} parent=102 // loop_exit
                  _
              $region103: #{ffmv2_forward.1} parent=87 // pred_fallthru
                _
              %p1320 = pneg %p1109
              // Predicated region
              $region118: #{ffmv2_forward.1} parent=87 // pred_check
                _
              $region119: #{ffmv2_forward.1} parent=87 // pred_check_branch
                %1322 = sbr.rel (%p1109) target = $region121
              $region120: #{ffmv2_forward.1} parent=87 // pred_region
                %s1323 = sand.u32 %s1056, 7
                %s1324 = ssub.s32 %s1056, %s1323
                %s1325 = scalar_lea.vmem %s1055, %s1324
                %s1326 = ssub.s32 %s1056, %s1323
                %s1327 = scalar_lea.vmem %s1045, %s1326 [#allocation3]
                %s1328 = sshrl.u32 %s1056, 3
                %s1329 = sshrl.u32 %s1328, 2
                // While loop
                $region122: #{ffmv2_forward.1} parent=120 // loop_pre_header
                  _
                $region123: #{ffmv2_forward.1} parent=120 // loop_header
                  %s1333 = sphi 0, %s1335
                  %p1334 = scmp.ge.s32.totalorder %s1333, %s1329
                  %s1338 = sphi 0, %s1471
                  %s1339 = sphi %s1055, %s1474
                  %s1340 = sphi %s1045, %s1475
                $region124: #{ffmv2_forward.1} parent=120 // loop_header_branch
                  %1337 = sbr.rel (%p1334) target = $region128
                $region125: #{ffmv2_forward.1} parent=120 // loop_body
                  %v1341 = vld [vmem:[%s1339] sm:$0xff]
                  %1342 = vst [vmem:[%s1340] sm:$0xff] %v1341
                  %v1343 = vld [vmem:[%s1339 + $0x8] sm:$0xff]
                  %1344 = vst [vmem:[%s1340 + $0x8] sm:$0xff] %v1343
                  %v1345 = vld [vmem:[%s1339 + $0x10] sm:$0xff]
                  %1346 = vst [vmem:[%s1340 + $0x10] sm:$0xff] %v1345
                  %v1347 = vld [vmem:[%s1339 + $0x18] sm:$0xff]
                  %1348 = vst [vmem:[%s1340 + $0x18] sm:$0xff] %v1347
                  %v1349 = vld [vmem:[%s1339 + $0x68] sm:$0xff]
                  %1350 = vst [vmem:[%s1340 + $0x40] sm:$0xff] %v1349
                  %v1351 = vld [vmem:[%s1339 + $0x70] sm:$0xff]
                  %1352 = vst [vmem:[%s1340 + $0x48] sm:$0xff] %v1351
                  %v1353 = vld [vmem:[%s1339 + $0x78] sm:$0xff]
                  %1354 = vst [vmem:[%s1340 + $0x50] sm:$0xff] %v1353
                  %v1355 = vld [vmem:[%s1339 + $0x80] sm:$0xff]
                  %1356 = vst [vmem:[%s1340 + $0x58] sm:$0xff] %v1355
                  %v1357 = vld [vmem:[%s1339 + $0xd0] sm:$0xff]
                  %1358 = vst [vmem:[%s1340 + $0x80] sm:$0xff] %v1357
                  %v1359 = vld [vmem:[%s1339 + $0xd8] sm:$0xff]
                  %1360 = vst [vmem:[%s1340 + $0x88] sm:$0xff] %v1359
                  %v1361 = vld [vmem:[%s1339 + $0xe0] sm:$0xff]
                  %1362 = vst [vmem:[%s1340 + $0x90] sm:$0xff] %v1361
                  %v1363 = vld [vmem:[%s1339 + $0xe8] sm:$0xff]
                  %1364 = vst [vmem:[%s1340 + $0x98] sm:$0xff] %v1363
                  %v1365 = vld [vmem:[%s1339 + $0x138] sm:$0xff]
                  %1366 = vst [vmem:[%s1340 + $0xc0] sm:$0xff] %v1365
                  %v1367 = vld [vmem:[%s1339 + $0x140] sm:$0xff]
                  %1368 = vst [vmem:[%s1340 + $0xc8] sm:$0xff] %v1367
                  %v1369 = vld [vmem:[%s1339 + $0x148] sm:$0xff]
                  %1370 = vst [vmem:[%s1340 + $0xd0] sm:$0xff] %v1369
                  %v1371 = vld [vmem:[%s1339 + $0x150] sm:$0xff]
                  %1372 = vst [vmem:[%s1340 + $0xd8] sm:$0xff] %v1371
                  %v1373 = vld [vmem:[%s1339 + $0x1a0] sm:$0xff]
                  %1374 = vst [vmem:[%s1340 + $0x100] sm:$0xff] %v1373
                  %v1375 = vld [vmem:[%s1339 + $0x1a8] sm:$0xff]
                  %1376 = vst [vmem:[%s1340 + $0x108] sm:$0xff] %v1375
                  %v1377 = vld [vmem:[%s1339 + $0x1b0] sm:$0xff]
                  %1378 = vst [vmem:[%s1340 + $0x110] sm:$0xff] %v1377
                  %v1379 = vld [vmem:[%s1339 + $0x1b8] sm:$0xff]
                  %1380 = vst [vmem:[%s1340 + $0x118] sm:$0xff] %v1379
                  %v1381 = vld [vmem:[%s1339 + $0x208] sm:$0xff]
                  %1382 = vst [vmem:[%s1340 + $0x140] sm:$0xff] %v1381
                  %v1383 = vld [vmem:[%s1339 + $0x210] sm:$0xff]
                  %1384 = vst [vmem:[%s1340 + $0x148] sm:$0xff] %v1383
                  %v1385 = vld [vmem:[%s1339 + $0x218] sm:$0xff]
                  %1386 = vst [vmem:[%s1340 + $0x150] sm:$0xff] %v1385
                  %v1387 = vld [vmem:[%s1339 + $0x220] sm:$0xff]
                  %1388 = vst [vmem:[%s1340 + $0x158] sm:$0xff] %v1387
                  %v1389 = vld [vmem:[%s1339 + $0x270] sm:$0xff]
                  %1390 = vst [vmem:[%s1340 + $0x180] sm:$0xff] %v1389
                  %v1391 = vld [vmem:[%s1339 + $0x278] sm:$0xff]
                  %1392 = vst [vmem:[%s1340 + $0x188] sm:$0xff] %v1391
                  %v1393 = vld [vmem:[%s1339 + $0x280] sm:$0xff]
                  %1394 = vst [vmem:[%s1340 + $0x190] sm:$0xff] %v1393
                  %v1395 = vld [vmem:[%s1339 + $0x288] sm:$0xff]
                  %1396 = vst [vmem:[%s1340 + $0x198] sm:$0xff] %v1395
                  %v1397 = vld [vmem:[%s1339 + $0x2d8] sm:$0xff]
                  %1398 = vst [vmem:[%s1340 + $0x1c0] sm:$0xff] %v1397
                  %v1399 = vld [vmem:[%s1339 + $0x2e0] sm:$0xff]
                  %1400 = vst [vmem:[%s1340 + $0x1c8] sm:$0xff] %v1399
                  %v1401 = vld [vmem:[%s1339 + $0x2e8] sm:$0xff]
                  %1402 = vst [vmem:[%s1340 + $0x1d0] sm:$0xff] %v1401
                  %v1403 = vld [vmem:[%s1339 + $0x2f0] sm:$0xff]
                  %1404 = vst [vmem:[%s1340 + $0x1d8] sm:$0xff] %v1403
                  %v1405 = vld [vmem:[%s1339 + $0x340] sm:$0xff]
                  %1406 = vst [vmem:[%s1340 + $0x200] sm:$0xff] %v1405
                  %v1407 = vld [vmem:[%s1339 + $0x348] sm:$0xff]
                  %1408 = vst [vmem:[%s1340 + $0x208] sm:$0xff] %v1407
                  %v1409 = vld [vmem:[%s1339 + $0x350] sm:$0xff]
                  %1410 = vst [vmem:[%s1340 + $0x210] sm:$0xff] %v1409
                  %v1411 = vld [vmem:[%s1339 + $0x358] sm:$0xff]
                  %1412 = vst [vmem:[%s1340 + $0x218] sm:$0xff] %v1411
                  %v1413 = vld [vmem:[%s1339 + $0x3a8] sm:$0xff]
                  %1414 = vst [vmem:[%s1340 + $0x240] sm:$0xff] %v1413
                  %v1415 = vld [vmem:[%s1339 + $0x3b0] sm:$0xff]
                  %1416 = vst [vmem:[%s1340 + $0x248] sm:$0xff] %v1415
                  %v1417 = vld [vmem:[%s1339 + $0x3b8] sm:$0xff]
                  %1418 = vst [vmem:[%s1340 + $0x250] sm:$0xff] %v1417
                  %v1419 = vld [vmem:[%s1339 + $0x3c0] sm:$0xff]
                  %1420 = vst [vmem:[%s1340 + $0x258] sm:$0xff] %v1419
                  %v1421 = vld [vmem:[%s1339 + $0x410] sm:$0xff]
                  %1422 = vst [vmem:[%s1340 + $0x280] sm:$0xff] %v1421
                  %v1423 = vld [vmem:[%s1339 + $0x418] sm:$0xff]
                  %1424 = vst [vmem:[%s1340 + $0x288] sm:$0xff] %v1423
                  %v1425 = vld [vmem:[%s1339 + $0x420] sm:$0xff]
                  %1426 = vst [vmem:[%s1340 + $0x290] sm:$0xff] %v1425
                  %v1427 = vld [vmem:[%s1339 + $0x428] sm:$0xff]
                  %1428 = vst [vmem:[%s1340 + $0x298] sm:$0xff] %v1427
                  %v1429 = vld [vmem:[%s1339 + $0x478] sm:$0xff]
                  %1430 = vst [vmem:[%s1340 + $0x2c0] sm:$0xff] %v1429
                  %v1431 = vld [vmem:[%s1339 + $0x480] sm:$0xff]
                  %1432 = vst [vmem:[%s1340 + $0x2c8] sm:$0xff] %v1431
                  %v1433 = vld [vmem:[%s1339 + $0x488] sm:$0xff]
                  %1434 = vst [vmem:[%s1340 + $0x2d0] sm:$0xff] %v1433
                  %v1435 = vld [vmem:[%s1339 + $0x490] sm:$0xff]
                  %1436 = vst [vmem:[%s1340 + $0x2d8] sm:$0xff] %v1435
                  %v1437 = vld [vmem:[%s1339 + $0x4e0] sm:$0xff]
                  %1438 = vst [vmem:[%s1340 + $0x300] sm:$0xff] %v1437
                  %v1439 = vld [vmem:[%s1339 + $0x4e8] sm:$0xff]
                  %1440 = vst [vmem:[%s1340 + $0x308] sm:$0xff] %v1439
                  %v1441 = vld [vmem:[%s1339 + $0x4f0] sm:$0xff]
                  %1442 = vst [vmem:[%s1340 + $0x310] sm:$0xff] %v1441
                  %v1443 = vld [vmem:[%s1339 + $0x4f8] sm:$0xff]
                  %1444 = vst [vmem:[%s1340 + $0x318] sm:$0xff] %v1443
                  %v1445 = vld [vmem:[%s1339 + $0x548] sm:$0xff]
                  %1446 = vst [vmem:[%s1340 + $0x340] sm:$0xff] %v1445
                  %v1447 = vld [vmem:[%s1339 + $0x550] sm:$0xff]
                  %1448 = vst [vmem:[%s1340 + $0x348] sm:$0xff] %v1447
                  %v1449 = vld [vmem:[%s1339 + $0x558] sm:$0xff]
                  %1450 = vst [vmem:[%s1340 + $0x350] sm:$0xff] %v1449
                  %v1451 = vld [vmem:[%s1339 + $0x560] sm:$0xff]
                  %1452 = vst [vmem:[%s1340 + $0x358] sm:$0xff] %v1451
                  %v1453 = vld [vmem:[%s1339 + $0x5b0] sm:$0xff]
                  %1454 = vst [vmem:[%s1340 + $0x380] sm:$0xff] %v1453
                  %v1455 = vld [vmem:[%s1339 + $0x5b8] sm:$0xff]
                  %1456 = vst [vmem:[%s1340 + $0x388] sm:$0xff] %v1455
                  %v1457 = vld [vmem:[%s1339 + $0x5c0] sm:$0xff]
                  %1458 = vst [vmem:[%s1340 + $0x390] sm:$0xff] %v1457
                  %v1459 = vld [vmem:[%s1339 + $0x5c8] sm:$0xff]
                  %1460 = vst [vmem:[%s1340 + $0x398] sm:$0xff] %v1459
                  %v1461 = vld [vmem:[%s1339 + $0x618] sm:$0xff]
                  %1462 = vst [vmem:[%s1340 + $0x3c0] sm:$0xff] %v1461
                  %v1463 = vld [vmem:[%s1339 + $0x620] sm:$0xff]
                  %1464 = vst [vmem:[%s1340 + $0x3c8] sm:$0xff] %v1463
                  %v1465 = vld [vmem:[%s1339 + $0x628] sm:$0xff]
                  %1466 = vst [vmem:[%s1340 + $0x3d0] sm:$0xff] %v1465
                  %v1467 = vld [vmem:[%s1339 + $0x630] sm:$0xff]
                  %1468 = vst [vmem:[%s1340 + $0x3d8] sm:$0xff] %v1467
                  %s1469 = sadd.s32 1, %s1338
                  %p1470 = scmp.ge.s32.totalorder %s1469, %s1329
                  %s1471 = scalar_select %p1470, 0, %s1469
                  %s1472 = smul.u32 %s1471, 32
                  %s1473 = smul.u32 %s1471, 32
                  %s1474 = scalar_lea.vmem %s1055, %s1472
                  %s1475 = scalar_lea.vmem %s1045, %s1473 [#allocation3]
                $region126: #{ffmv2_forward.1} parent=120 // loop_footer
                  %s1335 = sadd.s32 %s1333, 1
                $region127: #{ffmv2_forward.1} parent=120 // loop_footer_branch
                  %1332 = sbr.rel target = $region123
                $region128: #{ffmv2_forward.1} parent=120 // loop_exit
                  _
                %s1476 = sshrl.u32 %s1328, 2
                %s1477 = sand.u32 %s1328, 3
                %s1478 = smul.u32 %s1476, 4
                %s1479 = smul.u32 128, %s1478
                %s1480 = sshra.s32 %s1479, 4
                %s1481 = scalar_lea.vmem %s1055, %s1480
                %s1482 = smul.u32 128, %s1478
                %s1483 = sshra.s32 %s1482, 4
                %s1484 = scalar_lea.vmem %s1045, %s1483 [#allocation3]
                // While loop
                $region129: #{ffmv2_forward.1} parent=120 // loop_pre_header
                  _
                $region130: #{ffmv2_forward.1} parent=120 // loop_header
                  %s1488 = sphi 0, %s1490
                  %p1489 = scmp.ge.s32.totalorder %s1488, %s1477
                  %s1493 = sphi 0, %s1530
                  %s1494 = sphi %s1481, %s1533
                  %s1495 = sphi %s1484, %s1534
                $region131: #{ffmv2_forward.1} parent=120 // loop_header_branch
                  %1492 = sbr.rel (%p1489) target = $region135
                $region132: #{ffmv2_forward.1} parent=120 // loop_body
                  %v1496 = vld [vmem:[%s1494] sm:$0xff]
                  %1497 = vst [vmem:[%s1495] sm:$0xff] %v1496
                  %v1498 = vld [vmem:[%s1494 + $0x68] sm:$0xff]
                  %1499 = vst [vmem:[%s1495 + $0x40] sm:$0xff] %v1498
                  %v1500 = vld [vmem:[%s1494 + $0xd0] sm:$0xff]
                  %1501 = vst [vmem:[%s1495 + $0x80] sm:$0xff] %v1500
                  %v1502 = vld [vmem:[%s1494 + $0x138] sm:$0xff]
                  %1503 = vst [vmem:[%s1495 + $0xc0] sm:$0xff] %v1502
                  %v1504 = vld [vmem:[%s1494 + $0x1a0] sm:$0xff]
                  %1505 = vst [vmem:[%s1495 + $0x100] sm:$0xff] %v1504
                  %v1506 = vld [vmem:[%s1494 + $0x208] sm:$0xff]
                  %1507 = vst [vmem:[%s1495 + $0x140] sm:$0xff] %v1506
                  %v1508 = vld [vmem:[%s1494 + $0x270] sm:$0xff]
                  %1509 = vst [vmem:[%s1495 + $0x180] sm:$0xff] %v1508
                  %v1510 = vld [vmem:[%s1494 + $0x2d8] sm:$0xff]
                  %1511 = vst [vmem:[%s1495 + $0x1c0] sm:$0xff] %v1510
                  %v1512 = vld [vmem:[%s1494 + $0x340] sm:$0xff]
                  %1513 = vst [vmem:[%s1495 + $0x200] sm:$0xff] %v1512
                  %v1514 = vld [vmem:[%s1494 + $0x3a8] sm:$0xff]
                  %1515 = vst [vmem:[%s1495 + $0x240] sm:$0xff] %v1514
                  %v1516 = vld [vmem:[%s1494 + $0x410] sm:$0xff]
                  %1517 = vst [vmem:[%s1495 + $0x280] sm:$0xff] %v1516
                  %v1518 = vld [vmem:[%s1494 + $0x478] sm:$0xff]
                  %1519 = vst [vmem:[%s1495 + $0x2c0] sm:$0xff] %v1518
                  %v1520 = vld [vmem:[%s1494 + $0x4e0] sm:$0xff]
                  %1521 = vst [vmem:[%s1495 + $0x300] sm:$0xff] %v1520
                  %v1522 = vld [vmem:[%s1494 + $0x548] sm:$0xff]
                  %1523 = vst [vmem:[%s1495 + $0x340] sm:$0xff] %v1522
                  %v1524 = vld [vmem:[%s1494 + $0x5b0] sm:$0xff]
                  %1525 = vst [vmem:[%s1495 + $0x380] sm:$0xff] %v1524
                  %v1526 = vld [vmem:[%s1494 + $0x618] sm:$0xff]
                  %1527 = vst [vmem:[%s1495 + $0x3c0] sm:$0xff] %v1526
                  %s1528 = sadd.s32 1, %s1493
                  %p1529 = scmp.ge.s32.totalorder %s1528, %s1477
                  %s1530 = scalar_select %p1529, 0, %s1528
                  %s1531 = smul.u32 %s1530, 8
                  %s1532 = smul.u32 %s1530, 8
                  %s1533 = scalar_lea.vmem %s1481, %s1531
                  %s1534 = scalar_lea.vmem %s1484, %s1532 [#allocation3]
                $region133: #{ffmv2_forward.1} parent=120 // loop_footer
                  %s1490 = sadd.s32 %s1488, 1
                $region134: #{ffmv2_forward.1} parent=120 // loop_footer_branch
                  %1487 = sbr.rel target = $region130
                $region135: #{ffmv2_forward.1} parent=120 // loop_exit
                  _
                %s1535 = sshllo.u32 0, %s1323
                loop: start=0, step=1, limit=1
                $region136: #{ffmv2_forward.1} parent=120 // loop_pre_header
                  _
                $region137: #{ffmv2_forward.1} parent=120 // loop_header
                  %s1537 = sphi 0, %s1541
                  %p1538 = scmp.ge.s32.totalorder %s1537, 1
                  %s1542 = sphi %s1325, %s1325
                  %s1543 = sphi %s1327, %s1327
                $region138: #{ffmv2_forward.1} parent=120 // loop_header_branch
                  %1540 = sbr.rel (%p1538) target = $region142
                $region139: #{ffmv2_forward.1} parent=120 // loop_body
                  %v1544 = vld [vmem:[%s1542] sm:%s1535]
                  %1545 = vst [vmem:[%s1543] sm:%s1535] %v1544
                  %v1546 = vld [vmem:[%s1542 + $0x68] sm:%s1535]
                  %1547 = vst [vmem:[%s1543 + $0x40] sm:%s1535] %v1546
                  %v1548 = vld [vmem:[%s1542 + $0xd0] sm:%s1535]
                  %1549 = vst [vmem:[%s1543 + $0x80] sm:%s1535] %v1548
                  %v1550 = vld [vmem:[%s1542 + $0x138] sm:%s1535]
                  %1551 = vst [vmem:[%s1543 + $0xc0] sm:%s1535] %v1550
                  %v1552 = vld [vmem:[%s1542 + $0x1a0] sm:%s1535]
                  %1553 = vst [vmem:[%s1543 + $0x100] sm:%s1535] %v1552
                  %v1554 = vld [vmem:[%s1542 + $0x208] sm:%s1535]
                  %1555 = vst [vmem:[%s1543 + $0x140] sm:%s1535] %v1554
                  %v1556 = vld [vmem:[%s1542 + $0x270] sm:%s1535]
                  %1557 = vst [vmem:[%s1543 + $0x180] sm:%s1535] %v1556
                  %v1558 = vld [vmem:[%s1542 + $0x2d8] sm:%s1535]
                  %1559 = vst [vmem:[%s1543 + $0x1c0] sm:%s1535] %v1558
                  %v1560 = vld [vmem:[%s1542 + $0x340] sm:%s1535]
                  %1561 = vst [vmem:[%s1543 + $0x200] sm:%s1535] %v1560
                  %v1562 = vld [vmem:[%s1542 + $0x3a8] sm:%s1535]
                  %1563 = vst [vmem:[%s1543 + $0x240] sm:%s1535] %v1562
                  %v1564 = vld [vmem:[%s1542 + $0x410] sm:%s1535]
                  %1565 = vst [vmem:[%s1543 + $0x280] sm:%s1535] %v1564
                  %v1566 = vld [vmem:[%s1542 + $0x478] sm:%s1535]
                  %1567 = vst [vmem:[%s1543 + $0x2c0] sm:%s1535] %v1566
                  %v1568 = vld [vmem:[%s1542 + $0x4e0] sm:%s1535]
                  %1569 = vst [vmem:[%s1543 + $0x300] sm:%s1535] %v1568
                  %v1570 = vld [vmem:[%s1542 + $0x548] sm:%s1535]
                  %1571 = vst [vmem:[%s1543 + $0x340] sm:%s1535] %v1570
                  %v1572 = vld [vmem:[%s1542 + $0x5b0] sm:%s1535]
                  %1573 = vst [vmem:[%s1543 + $0x380] sm:%s1535] %v1572
                  %v1574 = vld [vmem:[%s1542 + $0x618] sm:%s1535]
                  %1575 = vst [vmem:[%s1543 + $0x3c0] sm:%s1535] %v1574
                $region140: #{ffmv2_forward.1} parent=120 // loop_footer
                  %s1541 = sadd.s32 1, %s1537
                $region141: #{ffmv2_forward.1} parent=120 // loop_footer_branch
                  %1536 = sbr.rel target = $region137
                $region142: #{ffmv2_forward.1} parent=120 // loop_exit
                  _
              $region121: #{ffmv2_forward.1} parent=87 // pred_fallthru
                _
            $region88: #{ffmv2_forward.1} parent=83 // pred_fallthru
              _
            // Predicated region
            $region89: #{ffmv2_forward.1} parent=83 // pred_check
              %p1064 = pneg %p1060
            $region90: #{ffmv2_forward.1} parent=83 // pred_check_branch
              %1066 = sbr.rel (%p1064) target = $region92
            $region91: #{ffmv2_forward.1} parent=83 // pred_region
              %s1067 = sshllo.u32 0, %s1056
              loop: start=0, step=1, limit=1
              $region93: #{ffmv2_forward.1} parent=91 // loop_pre_header
                _
              $region94: #{ffmv2_forward.1} parent=91 // loop_header
                %s1069 = sphi 0, %s1073
                %p1070 = scmp.ge.s32.totalorder %s1069, 1
                %s1074 = sphi %s1055, %s1055
                %s1075 = sphi %s1045, %s1045
              $region95: #{ffmv2_forward.1} parent=91 // loop_header_branch
                %1072 = sbr.rel (%p1070) target = $region99
              $region96: #{ffmv2_forward.1} parent=91 // loop_body
                %v1076 = vld [vmem:[%s1074] sm:%s1067]
                %1077 = vst [vmem:[%s1075] sm:%s1067] %v1076
                %v1078 = vld [vmem:[%s1074 + $0x68] sm:%s1067]
                %1079 = vst [vmem:[%s1075 + $0x40] sm:%s1067] %v1078
                %v1080 = vld [vmem:[%s1074 + $0xd0] sm:%s1067]
                %1081 = vst [vmem:[%s1075 + $0x80] sm:%s1067] %v1080
                %v1082 = vld [vmem:[%s1074 + $0x138] sm:%s1067]
                %1083 = vst [vmem:[%s1075 + $0xc0] sm:%s1067] %v1082
                %v1084 = vld [vmem:[%s1074 + $0x1a0] sm:%s1067]
                %1085 = vst [vmem:[%s1075 + $0x100] sm:%s1067] %v1084
                %v1086 = vld [vmem:[%s1074 + $0x208] sm:%s1067]
                %1087 = vst [vmem:[%s1075 + $0x140] sm:%s1067] %v1086
                %v1088 = vld [vmem:[%s1074 + $0x270] sm:%s1067]
                %1089 = vst [vmem:[%s1075 + $0x180] sm:%s1067] %v1088
                %v1090 = vld [vmem:[%s1074 + $0x2d8] sm:%s1067]
                %1091 = vst [vmem:[%s1075 + $0x1c0] sm:%s1067] %v1090
                %v1092 = vld [vmem:[%s1074 + $0x340] sm:%s1067]
                %1093 = vst [vmem:[%s1075 + $0x200] sm:%s1067] %v1092
                %v1094 = vld [vmem:[%s1074 + $0x3a8] sm:%s1067]
                %1095 = vst [vmem:[%s1075 + $0x240] sm:%s1067] %v1094
                %v1096 = vld [vmem:[%s1074 + $0x410] sm:%s1067]
                %1097 = vst [vmem:[%s1075 + $0x280] sm:%s1067] %v1096
                %v1098 = vld [vmem:[%s1074 + $0x478] sm:%s1067]
                %1099 = vst [vmem:[%s1075 + $0x2c0] sm:%s1067] %v1098
                %v1100 = vld [vmem:[%s1074 + $0x4e0] sm:%s1067]
                %1101 = vst [vmem:[%s1075 + $0x300] sm:%s1067] %v1100
                %v1102 = vld [vmem:[%s1074 + $0x548] sm:%s1067]
                %1103 = vst [vmem:[%s1075 + $0x340] sm:%s1067] %v1102
                %v1104 = vld [vmem:[%s1074 + $0x5b0] sm:%s1067]
                %1105 = vst [vmem:[%s1075 + $0x380] sm:%s1067] %v1104
                %v1106 = vld [vmem:[%s1074 + $0x618] sm:%s1067]
                %1107 = vst [vmem:[%s1075 + $0x3c0] sm:%s1067] %v1106
              $region97: #{ffmv2_forward.1} parent=91 // loop_footer
                %s1073 = sadd.s32 1, %s1069
              $region98: #{ffmv2_forward.1} parent=91 // loop_footer_branch
                %1068 = sbr.rel target = $region94
              $region99: #{ffmv2_forward.1} parent=91 // loop_exit
                _
            $region92: #{ffmv2_forward.1} parent=83 // pred_fallthru
              _
          $region84: #{ffmv2_forward.1} parent=79 // pred_fallthru
            _
          %1576 = vnop
        $region80: #{ffmv2_forward.1} parent=23 // pred_fallthru
          _
      $region24: #{ffmv2_forward.1} parent=5 // pred_fallthru
        _
      %p1577 = scmp.le.s32.totalorder 1, %s10
      %p1578 = scmp.lt.s32.totalorder %s10, 5
      %p1579 = pnand %p1577, %p1578
      %p1580 = pneg %p1579
      // Predicated region
      $region143: #{ffmv2_forward.1} parent=5 // pred_check
        _
      $region144: #{ffmv2_forward.1} parent=5 // pred_check_branch
        %1582 = sbr.rel (%p1579) target = $region146
      $region145: #{ffmv2_forward.1} parent=5 // pred_region
        %s1583 = ssub.s32 %s10, 1
        %s1584 = sand.u32 %s37, 1
        %s1585 = sand.u32 %s37, 1
        %s1586 = smul.addr %s1585, 6144
        %s1587 = scalar_lea.vmem [#allocation2], %s1586
        // Predicated region
        $region147: #{ffmv2_forward.1} parent=145 // pred_check
          %p1588 = pneg %p50
        $region148: #{ffmv2_forward.1} parent=145 // pred_check_branch
          %1590 = sbr.rel (%p1588) target = $region150
        $region149: #{ffmv2_forward.1} parent=145 // pred_region
          _
        $region150: #{ffmv2_forward.1} parent=145 // pred_fallthru
          _
        %s1591 = sand.u32 %s65, 1
        %s1592 = sand.u32 %s65, 1
        %s1593 = smul.addr %s1592, 1024
        %s1594 = scalar_lea.vmem [#allocation3], %s1593
        // Predicated region
        $region151: #{ffmv2_forward.1} parent=145 // pred_check
          %p1595 = pneg %p78
        $region152: #{ffmv2_forward.1} parent=145 // pred_check_branch
          %1597 = sbr.rel (%p1595) target = $region154
        $region153: #{ffmv2_forward.1} parent=145 // pred_region
          _
        $region154: #{ffmv2_forward.1} parent=145 // pred_fallthru
          _
        %s1598 = sand.u32 %s37, 1
        %s1599 = sand.u32 %s37, 1
        %s1600 = smul.addr %s1599, 6144
        %s1601 = scalar_lea.vmem [#allocation2], %s1600
        %p1602 = pneg %p50
        %p1603 = pneg %p47
        %s1604 = sand.u32 %s65, 1
        %s1605 = sand.u32 %s65, 1
        %s1606 = smul.addr %s1605, 1024
        %s1607 = scalar_lea.vmem [#allocation3], %s1606
        %p1608 = pneg %p78
        %p1609 = pneg %p75
        %p1610 = pneg %p99
        %p1611 = pneg %p96
        %p1612 = pneg %p120
        %p1613 = pneg %p117
        %p1614 = pneg %p148
        %p1615 = pneg %p145
        %s1616 = sand.u32 %s135, 1
        %s1617 = sand.u32 %s135, 1
        %s1618 = smul.addr %s1617, 2048
        %s1619 = scalar_lea.vmem [#allocation4], %s1618
        %s1620 = smul.u32 8, %s20
        %s1621 = ssub.s32 13, %s1620
        %p1622 = scmp.lt.s32.totalorder %s1621, 8
        %s1623 = scalar_select %p1622, %s1621, 8
        %s1624 = smul.u32 12288, %s1623
        %s1625 = smul.u32 8, %s20
        %s1626 = ssub.s32 13, %s1625
        %p1627 = scmp.lt.s32.totalorder %s1626, 8
        %s1628 = scalar_select %p1627, %s1626, 8
        %s1629 = smul.u32 2048, %s1628
        %s1630 = smul.u32 8, %s20
        %s1631 = ssub.s32 13, %s1630
        %p1632 = scmp.lt.s32.totalorder %s1631, 8
        %s1633 = scalar_select %p1632, %s1631, 8
        %s1634 = smul.u32 4096, %s1633
        %v1635 = vld [vmem:[%s1587] sm:$0xff]
        %v1636 = vld [vmem:[%s1587 + $0x8] sm:$0xff]
        %v1637 = vld [vmem:[%s1587 + $0x10] sm:$0xff]
        %v1638 = vld [vmem:[%s1587 + $0x18] sm:$0xff]
        %v1639 = vld [vmem:[%s1587 + $0x20] sm:$0xff]
        %v1640 = vld [vmem:[%s1587 + $0x28] sm:$0xff]
        %v1641 = vld [vmem:[%s1587 + $0x30] sm:$0xff]
        %v1642 = vld [vmem:[%s1587 + $0x38] sm:$0xff]
        %v1643 = vld [vmem:[%s1587 + $0x40] sm:$0xff]
        %v1644 = vld [vmem:[%s1587 + $0x48] sm:$0xff]
        %v1645 = vld [vmem:[%s1587 + $0x50] sm:$0xff]
        %v1646 = vld [vmem:[%s1587 + $0x58] sm:$0xff]
        %v1647 = vld [vmem:[%s1587 + $0x60] sm:$0xff]
        %v1648 = vld [vmem:[%s1587 + $0x68] sm:$0xff]
        %v1649 = vld [vmem:[%s1587 + $0x70] sm:$0xff]
        %v1650 = vld [vmem:[%s1587 + $0x78] sm:$0xff]
        %v1651 = vld [vmem:[%s1587 + $0x80] sm:$0xff]
        %v1652 = vld [vmem:[%s1587 + $0x88] sm:$0xff]
        %v1653 = vld [vmem:[%s1587 + $0x90] sm:$0xff]
        %v1654 = vld [vmem:[%s1587 + $0x98] sm:$0xff]
        %v1655 = vld [vmem:[%s1587 + $0xa0] sm:$0xff]
        %v1656 = vld [vmem:[%s1587 + $0xa8] sm:$0xff]
        %v1657 = vld [vmem:[%s1587 + $0xb0] sm:$0xff]
        %v1658 = vld [vmem:[%s1587 + $0xb8] sm:$0xff]
        %v1659 = vld [vmem:[%s1587 + $0xc0] sm:$0xff]
        %v1660 = vld [vmem:[%s1587 + $0xc8] sm:$0xff]
        %v1661 = vld [vmem:[%s1587 + $0xd0] sm:$0xff]
        %v1662 = vld [vmem:[%s1587 + $0xd8] sm:$0xff]
        %v1663 = vld [vmem:[%s1587 + $0xe0] sm:$0xff]
        %v1664 = vld [vmem:[%s1587 + $0xe8] sm:$0xff]
        %v1665 = vld [vmem:[%s1587 + $0xf0] sm:$0xff]
        %v1666 = vld [vmem:[%s1587 + $0xf8] sm:$0xff]
        %v1667 = vld [vmem:[%s1587 + $0x100] sm:$0xff]
        %v1668 = vld [vmem:[%s1587 + $0x108] sm:$0xff]
        %v1669 = vld [vmem:[%s1587 + $0x110] sm:$0xff]
        %v1670 = vld [vmem:[%s1587 + $0x118] sm:$0xff]
        %v1671 = vld [vmem:[%s1587 + $0x120] sm:$0xff]
        %v1672 = vld [vmem:[%s1587 + $0x128] sm:$0xff]
        %v1673 = vld [vmem:[%s1587 + $0x130] sm:$0xff]
        %v1674 = vld [vmem:[%s1587 + $0x138] sm:$0xff]
        %v1675 = vld [vmem:[%s1587 + $0x140] sm:$0xff]
        %v1676 = vld [vmem:[%s1587 + $0x148] sm:$0xff]
        %v1677 = vld [vmem:[%s1587 + $0x150] sm:$0xff]
        %v1678 = vld [vmem:[%s1587 + $0x158] sm:$0xff]
        %v1679 = vld [vmem:[%s1587 + $0x160] sm:$0xff]
        %v1680 = vld [vmem:[%s1587 + $0x168] sm:$0xff]
        %v1681 = vld [vmem:[%s1587 + $0x170] sm:$0xff]
        %v1682 = vld [vmem:[%s1587 + $0x178] sm:$0xff]
        %v1683 = vld [vmem:[%s1587 + $0x180] sm:$0xff]
        %v1684 = vld [vmem:[%s1587 + $0x188] sm:$0xff]
        %v1685 = vld [vmem:[%s1587 + $0x190] sm:$0xff]
        %v1686 = vld [vmem:[%s1587 + $0x198] sm:$0xff]
        %v1687 = vld [vmem:[%s1587 + $0x1a0] sm:$0xff]
        %v1688 = vld [vmem:[%s1587 + $0x1a8] sm:$0xff]
        %v1689 = vld [vmem:[%s1587 + $0x1b0] sm:$0xff]
        %v1690 = vld [vmem:[%s1587 + $0x1b8] sm:$0xff]
        %v1691 = vld [vmem:[%s1587 + $0x1c0] sm:$0xff]
        %v1692 = vld [vmem:[%s1587 + $0x1c8] sm:$0xff]
        %v1693 = vld [vmem:[%s1587 + $0x1d0] sm:$0xff]
        %v1694 = vld [vmem:[%s1587 + $0x1d8] sm:$0xff]
        %v1695 = vld [vmem:[%s1587 + $0x1e0] sm:$0xff]
        %v1696 = vld [vmem:[%s1587 + $0x1e8] sm:$0xff]
        %v1697 = vld [vmem:[%s1587 + $0x1f0] sm:$0xff]
        %v1698 = vld [vmem:[%s1587 + $0x1f8] sm:$0xff]
        %v1699 = vld [vmem:[%s1587 + $0x200] sm:$0xff]
        %v1700 = vld [vmem:[%s1587 + $0x208] sm:$0xff]
        %v1701 = vld [vmem:[%s1587 + $0x210] sm:$0xff]
        %v1702 = vld [vmem:[%s1587 + $0x218] sm:$0xff]
        %v1703 = vld [vmem:[%s1587 + $0x220] sm:$0xff]
        %v1704 = vld [vmem:[%s1587 + $0x228] sm:$0xff]
        %v1705 = vld [vmem:[%s1587 + $0x230] sm:$0xff]
        %v1706 = vld [vmem:[%s1587 + $0x238] sm:$0xff]
        %v1707 = vld [vmem:[%s1587 + $0x240] sm:$0xff]
        %v1708 = vld [vmem:[%s1587 + $0x248] sm:$0xff]
        %v1709 = vld [vmem:[%s1587 + $0x250] sm:$0xff]
        %v1710 = vld [vmem:[%s1587 + $0x258] sm:$0xff]
        %v1711 = vld [vmem:[%s1587 + $0x260] sm:$0xff]
        %v1712 = vld [vmem:[%s1587 + $0x268] sm:$0xff]
        %v1713 = vld [vmem:[%s1587 + $0x270] sm:$0xff]
        %v1714 = vld [vmem:[%s1587 + $0x278] sm:$0xff]
        %v1715 = vld [vmem:[%s1587 + $0x280] sm:$0xff]
        %v1716 = vld [vmem:[%s1587 + $0x288] sm:$0xff]
        %v1717 = vld [vmem:[%s1587 + $0x290] sm:$0xff]
        %v1718 = vld [vmem:[%s1587 + $0x298] sm:$0xff]
        %v1719 = vld [vmem:[%s1587 + $0x2a0] sm:$0xff]
        %v1720 = vld [vmem:[%s1587 + $0x2a8] sm:$0xff]
        %v1721 = vld [vmem:[%s1587 + $0x2b0] sm:$0xff]
        %v1722 = vld [vmem:[%s1587 + $0x2b8] sm:$0xff]
        %v1723 = vld [vmem:[%s1587 + $0x2c0] sm:$0xff]
        %v1724 = vld [vmem:[%s1587 + $0x2c8] sm:$0xff]
        %v1725 = vld [vmem:[%s1587 + $0x2d0] sm:$0xff]
        %v1726 = vld [vmem:[%s1587 + $0x2d8] sm:$0xff]
        %v1727 = vld [vmem:[%s1587 + $0x2e0] sm:$0xff]
        %v1728 = vld [vmem:[%s1587 + $0x2e8] sm:$0xff]
        %v1729 = vld [vmem:[%s1587 + $0x2f0] sm:$0xff]
        %v1730 = vld [vmem:[%s1587 + $0x2f8] sm:$0xff]
        %v1731 = vld [vmem:[%s1587 + $0x300] sm:$0xff]
        %v1732 = vld [vmem:[%s1587 + $0x308] sm:$0xff]
        %v1733 = vld [vmem:[%s1587 + $0x310] sm:$0xff]
        %v1734 = vld [vmem:[%s1587 + $0x318] sm:$0xff]
        %v1735 = vld [vmem:[%s1587 + $0x320] sm:$0xff]
        %v1736 = vld [vmem:[%s1587 + $0x328] sm:$0xff]
        %v1737 = vld [vmem:[%s1587 + $0x330] sm:$0xff]
        %v1738 = vld [vmem:[%s1587 + $0x338] sm:$0xff]
        %v1739 = vld [vmem:[%s1587 + $0x340] sm:$0xff]
        %v1740 = vld [vmem:[%s1587 + $0x348] sm:$0xff]
        %v1741 = vld [vmem:[%s1587 + $0x350] sm:$0xff]
        %v1742 = vld [vmem:[%s1587 + $0x358] sm:$0xff]
        %v1743 = vld [vmem:[%s1587 + $0x360] sm:$0xff]
        %v1744 = vld [vmem:[%s1587 + $0x368] sm:$0xff]
        %v1745 = vld [vmem:[%s1587 + $0x370] sm:$0xff]
        %v1746 = vld [vmem:[%s1587 + $0x378] sm:$0xff]
        %v1747 = vld [vmem:[%s1587 + $0x380] sm:$0xff]
        %v1748 = vld [vmem:[%s1587 + $0x388] sm:$0xff]
        %v1749 = vld [vmem:[%s1587 + $0x390] sm:$0xff]
        %v1750 = vld [vmem:[%s1587 + $0x398] sm:$0xff]
        %v1751 = vld [vmem:[%s1587 + $0x3a0] sm:$0xff]
        %v1752 = vld [vmem:[%s1587 + $0x3a8] sm:$0xff]
        %v1753 = vld [vmem:[%s1587 + $0x3b0] sm:$0xff]
        %v1754 = vld [vmem:[%s1587 + $0x3b8] sm:$0xff]
        %v1755 = vld [vmem:[%s1587 + $0x3c0] sm:$0xff]
        %v1756 = vld [vmem:[%s1587 + $0x3c8] sm:$0xff]
        %v1757 = vld [vmem:[%s1587 + $0x3d0] sm:$0xff]
        %v1758 = vld [vmem:[%s1587 + $0x3d8] sm:$0xff]
        %v1759 = vld [vmem:[%s1587 + $0x3e0] sm:$0xff]
        %v1760 = vld [vmem:[%s1587 + $0x3e8] sm:$0xff]
        %v1761 = vld [vmem:[%s1587 + $0x3f0] sm:$0xff]
        %v1762 = vld [vmem:[%s1587 + $0x3f8] sm:$0xff]
        %v1763 = vld [vmem:[%s1587 + $0x400] sm:$0xff]
        %v1764 = vld [vmem:[%s1587 + $0x408] sm:$0xff]
        %v1765 = vld [vmem:[%s1587 + $0x410] sm:$0xff]
        %v1766 = vld [vmem:[%s1587 + $0x418] sm:$0xff]
        %v1767 = vld [vmem:[%s1587 + $0x420] sm:$0xff]
        %v1768 = vld [vmem:[%s1587 + $0x428] sm:$0xff]
        %v1769 = vld [vmem:[%s1587 + $0x430] sm:$0xff]
        %v1770 = vld [vmem:[%s1587 + $0x438] sm:$0xff]
        %v1771 = vld [vmem:[%s1587 + $0x440] sm:$0xff]
        %v1772 = vld [vmem:[%s1587 + $0x448] sm:$0xff]
        %v1773 = vld [vmem:[%s1587 + $0x450] sm:$0xff]
        %v1774 = vld [vmem:[%s1587 + $0x458] sm:$0xff]
        %v1775 = vld [vmem:[%s1587 + $0x460] sm:$0xff]
        %v1776 = vld [vmem:[%s1587 + $0x468] sm:$0xff]
        %v1777 = vld [vmem:[%s1587 + $0x470] sm:$0xff]
        %v1778 = vld [vmem:[%s1587 + $0x478] sm:$0xff]
        %v1779 = vld [vmem:[%s1587 + $0x480] sm:$0xff]
        %v1780 = vld [vmem:[%s1587 + $0x488] sm:$0xff]
        %v1781 = vld [vmem:[%s1587 + $0x490] sm:$0xff]
        %v1782 = vld [vmem:[%s1587 + $0x498] sm:$0xff]
        %v1783 = vld [vmem:[%s1587 + $0x4a0] sm:$0xff]
        %v1784 = vld [vmem:[%s1587 + $0x4a8] sm:$0xff]
        %v1785 = vld [vmem:[%s1587 + $0x4b0] sm:$0xff]
        %v1786 = vld [vmem:[%s1587 + $0x4b8] sm:$0xff]
        %v1787 = vld [vmem:[%s1587 + $0x4c0] sm:$0xff]
        %v1788 = vld [vmem:[%s1587 + $0x4c8] sm:$0xff]
        %v1789 = vld [vmem:[%s1587 + $0x4d0] sm:$0xff]
        %v1790 = vld [vmem:[%s1587 + $0x4d8] sm:$0xff]
        %v1791 = vld [vmem:[%s1587 + $0x4e0] sm:$0xff]
        %v1792 = vld [vmem:[%s1587 + $0x4e8] sm:$0xff]
        %v1793 = vld [vmem:[%s1587 + $0x4f0] sm:$0xff]
        %v1794 = vld [vmem:[%s1587 + $0x4f8] sm:$0xff]
        %v1795 = vld [vmem:[%s1587 + $0x500] sm:$0xff]
        %v1796 = vld [vmem:[%s1587 + $0x508] sm:$0xff]
        %v1797 = vld [vmem:[%s1587 + $0x510] sm:$0xff]
        %v1798 = vld [vmem:[%s1587 + $0x518] sm:$0xff]
        %v1799 = vld [vmem:[%s1587 + $0x520] sm:$0xff]
        %v1800 = vld [vmem:[%s1587 + $0x528] sm:$0xff]
        %v1801 = vld [vmem:[%s1587 + $0x530] sm:$0xff]
        %v1802 = vld [vmem:[%s1587 + $0x538] sm:$0xff]
        %v1803 = vld [vmem:[%s1587 + $0x540] sm:$0xff]
        %v1804 = vld [vmem:[%s1587 + $0x548] sm:$0xff]
        %v1805 = vld [vmem:[%s1587 + $0x550] sm:$0xff]
        %v1806 = vld [vmem:[%s1587 + $0x558] sm:$0xff]
        %v1807 = vld [vmem:[%s1587 + $0x560] sm:$0xff]
        %v1808 = vld [vmem:[%s1587 + $0x568] sm:$0xff]
        %v1809 = vld [vmem:[%s1587 + $0x570] sm:$0xff]
        %v1810 = vld [vmem:[%s1587 + $0x578] sm:$0xff]
        %v1811 = vld [vmem:[%s1587 + $0x580] sm:$0xff]
        %v1812 = vld [vmem:[%s1587 + $0x588] sm:$0xff]
        %v1813 = vld [vmem:[%s1587 + $0x590] sm:$0xff]
        %v1814 = vld [vmem:[%s1587 + $0x598] sm:$0xff]
        %v1815 = vld [vmem:[%s1587 + $0x5a0] sm:$0xff]
        %v1816 = vld [vmem:[%s1587 + $0x5a8] sm:$0xff]
        %v1817 = vld [vmem:[%s1587 + $0x5b0] sm:$0xff]
        %v1818 = vld [vmem:[%s1587 + $0x5b8] sm:$0xff]
        %v1819 = vld [vmem:[%s1587 + $0x5c0] sm:$0xff]
        %v1820 = vld [vmem:[%s1587 + $0x5c8] sm:$0xff]
        %v1821 = vld [vmem:[%s1587 + $0x5d0] sm:$0xff]
        %v1822 = vld [vmem:[%s1587 + $0x5d8] sm:$0xff]
        %v1823 = vld [vmem:[%s1587 + $0x5e0] sm:$0xff]
        %v1824 = vld [vmem:[%s1587 + $0x5e8] sm:$0xff]
        %v1825 = vld [vmem:[%s1587 + $0x5f0] sm:$0xff]
        %v1826 = vld [vmem:[%s1587 + $0x5f8] sm:$0xff]
        %v1827 = vld [vmem:[%s1587 + $0x600] sm:$0xff]
        %v1828 = vld [vmem:[%s1587 + $0x608] sm:$0xff]
        %v1829 = vld [vmem:[%s1587 + $0x610] sm:$0xff]
        %v1830 = vld [vmem:[%s1587 + $0x618] sm:$0xff]
        %v1831 = vld [vmem:[%s1587 + $0x620] sm:$0xff]
        %v1832 = vld [vmem:[%s1587 + $0x628] sm:$0xff]
        %v1833 = vld [vmem:[%s1587 + $0x630] sm:$0xff]
        %v1834 = vld [vmem:[%s1587 + $0x638] sm:$0xff]
        %v1835 = vld [vmem:[%s1587 + $0x640] sm:$0xff]
        %v1836 = vld [vmem:[%s1587 + $0x648] sm:$0xff]
        %v1837 = vld [vmem:[%s1587 + $0x650] sm:$0xff]
        %v1838 = vld [vmem:[%s1587 + $0x658] sm:$0xff]
        %v1839 = vld [vmem:[%s1587 + $0x660] sm:$0xff]
        %v1840 = vld [vmem:[%s1587 + $0x668] sm:$0xff]
        %v1841 = vld [vmem:[%s1587 + $0x670] sm:$0xff]
        %v1842 = vld [vmem:[%s1587 + $0x678] sm:$0xff]
        %v1843 = vld [vmem:[%s1587 + $0x680] sm:$0xff]
        %v1844 = vld [vmem:[%s1587 + $0x688] sm:$0xff]
        %v1845 = vld [vmem:[%s1587 + $0x690] sm:$0xff]
        %v1846 = vld [vmem:[%s1587 + $0x698] sm:$0xff]
        %v1847 = vld [vmem:[%s1587 + $0x6a0] sm:$0xff]
        %v1848 = vld [vmem:[%s1587 + $0x6a8] sm:$0xff]
        %v1849 = vld [vmem:[%s1587 + $0x6b0] sm:$0xff]
        %v1850 = vld [vmem:[%s1587 + $0x6b8] sm:$0xff]
        %v1851 = vld [vmem:[%s1587 + $0x6c0] sm:$0xff]
        %v1852 = vld [vmem:[%s1587 + $0x6c8] sm:$0xff]
        %v1853 = vld [vmem:[%s1587 + $0x6d0] sm:$0xff]
        %v1854 = vld [vmem:[%s1587 + $0x6d8] sm:$0xff]
        %v1855 = vld [vmem:[%s1587 + $0x6e0] sm:$0xff]
        %v1856 = vld [vmem:[%s1587 + $0x6e8] sm:$0xff]
        %v1857 = vld [vmem:[%s1587 + $0x6f0] sm:$0xff]
        %v1858 = vld [vmem:[%s1587 + $0x6f8] sm:$0xff]
        %v1859 = vld [vmem:[%s1587 + $0x700] sm:$0xff]
        %v1860 = vld [vmem:[%s1587 + $0x708] sm:$0xff]
        %v1861 = vld [vmem:[%s1587 + $0x710] sm:$0xff]
        %v1862 = vld [vmem:[%s1587 + $0x718] sm:$0xff]
        %v1863 = vld [vmem:[%s1587 + $0x720] sm:$0xff]
        %v1864 = vld [vmem:[%s1587 + $0x728] sm:$0xff]
        %v1865 = vld [vmem:[%s1587 + $0x730] sm:$0xff]
        %v1866 = vld [vmem:[%s1587 + $0x738] sm:$0xff]
        %v1867 = vld [vmem:[%s1587 + $0x740] sm:$0xff]
        %v1868 = vld [vmem:[%s1587 + $0x748] sm:$0xff]
        %v1869 = vld [vmem:[%s1587 + $0x750] sm:$0xff]
        %v1870 = vld [vmem:[%s1587 + $0x758] sm:$0xff]
        %v1871 = vld [vmem:[%s1587 + $0x760] sm:$0xff]
        %v1872 = vld [vmem:[%s1587 + $0x768] sm:$0xff]
        %v1873 = vld [vmem:[%s1587 + $0x770] sm:$0xff]
        %v1874 = vld [vmem:[%s1587 + $0x778] sm:$0xff]
        %v1875 = vld [vmem:[%s1587 + $0x780] sm:$0xff]
        %v1876 = vld [vmem:[%s1587 + $0x788] sm:$0xff]
        %v1877 = vld [vmem:[%s1587 + $0x790] sm:$0xff]
        %v1878 = vld [vmem:[%s1587 + $0x798] sm:$0xff]
        %v1879 = vld [vmem:[%s1587 + $0x7a0] sm:$0xff]
        %v1880 = vld [vmem:[%s1587 + $0x7a8] sm:$0xff]
        %v1881 = vld [vmem:[%s1587 + $0x7b0] sm:$0xff]
        %v1882 = vld [vmem:[%s1587 + $0x7b8] sm:$0xff]
        %v1883 = vld [vmem:[%s1587 + $0x7c0] sm:$0xff]
        %v1884 = vld [vmem:[%s1587 + $0x7c8] sm:$0xff]
        %v1885 = vld [vmem:[%s1587 + $0x7d0] sm:$0xff]
        %v1886 = vld [vmem:[%s1587 + $0x7d8] sm:$0xff]
        %v1887 = vld [vmem:[%s1587 + $0x7e0] sm:$0xff]
        %v1888 = vld [vmem:[%s1587 + $0x7e8] sm:$0xff]
        %v1889 = vld [vmem:[%s1587 + $0x7f0] sm:$0xff]
        %v1890 = vld [vmem:[%s1587 + $0x7f8] sm:$0xff]
        %v1891 = vld [vmem:[%s1587 + $0x800] sm:$0xff]
        %v1892 = vld [vmem:[%s1587 + $0x808] sm:$0xff]
        %v1893 = vld [vmem:[%s1587 + $0x810] sm:$0xff]
        %v1894 = vld [vmem:[%s1587 + $0x818] sm:$0xff]
        %v1895 = vld [vmem:[%s1587 + $0x820] sm:$0xff]
        %v1896 = vld [vmem:[%s1587 + $0x828] sm:$0xff]
        %v1897 = vld [vmem:[%s1587 + $0x830] sm:$0xff]
        %v1898 = vld [vmem:[%s1587 + $0x838] sm:$0xff]
        %v1899 = vld [vmem:[%s1587 + $0x840] sm:$0xff]
        %v1900 = vld [vmem:[%s1587 + $0x848] sm:$0xff]
        %v1901 = vld [vmem:[%s1587 + $0x850] sm:$0xff]
        %v1902 = vld [vmem:[%s1587 + $0x858] sm:$0xff]
        %v1903 = vld [vmem:[%s1587 + $0x860] sm:$0xff]
        %v1904 = vld [vmem:[%s1587 + $0x868] sm:$0xff]
        %v1905 = vld [vmem:[%s1587 + $0x870] sm:$0xff]
        %v1906 = vld [vmem:[%s1587 + $0x878] sm:$0xff]
        %v1907 = vld [vmem:[%s1587 + $0x880] sm:$0xff]
        %v1908 = vld [vmem:[%s1587 + $0x888] sm:$0xff]
        %v1909 = vld [vmem:[%s1587 + $0x890] sm:$0xff]
        %v1910 = vld [vmem:[%s1587 + $0x898] sm:$0xff]
        %v1911 = vld [vmem:[%s1587 + $0x8a0] sm:$0xff]
        %v1912 = vld [vmem:[%s1587 + $0x8a8] sm:$0xff]
        %v1913 = vld [vmem:[%s1587 + $0x8b0] sm:$0xff]
        %v1914 = vld [vmem:[%s1587 + $0x8b8] sm:$0xff]
        %v1915 = vld [vmem:[%s1587 + $0x8c0] sm:$0xff]
        %v1916 = vld [vmem:[%s1587 + $0x8c8] sm:$0xff]
        %v1917 = vld [vmem:[%s1587 + $0x8d0] sm:$0xff]
        %v1918 = vld [vmem:[%s1587 + $0x8d8] sm:$0xff]
        %v1919 = vld [vmem:[%s1587 + $0x8e0] sm:$0xff]
        %v1920 = vld [vmem:[%s1587 + $0x8e8] sm:$0xff]
        %v1921 = vld [vmem:[%s1587 + $0x8f0] sm:$0xff]
        %v1922 = vld [vmem:[%s1587 + $0x8f8] sm:$0xff]
        %v1923 = vld [vmem:[%s1587 + $0x900] sm:$0xff]
        %v1924 = vld [vmem:[%s1587 + $0x908] sm:$0xff]
        %v1925 = vld [vmem:[%s1587 + $0x910] sm:$0xff]
        %v1926 = vld [vmem:[%s1587 + $0x918] sm:$0xff]
        %v1927 = vld [vmem:[%s1587 + $0x920] sm:$0xff]
        %v1928 = vld [vmem:[%s1587 + $0x928] sm:$0xff]
        %v1929 = vld [vmem:[%s1587 + $0x930] sm:$0xff]
        %v1930 = vld [vmem:[%s1587 + $0x938] sm:$0xff]
        %v1931 = vld [vmem:[%s1587 + $0x940] sm:$0xff]
        %v1932 = vld [vmem:[%s1587 + $0x948] sm:$0xff]
        %v1933 = vld [vmem:[%s1587 + $0x950] sm:$0xff]
        %v1934 = vld [vmem:[%s1587 + $0x958] sm:$0xff]
        %v1935 = vld [vmem:[%s1587 + $0x960] sm:$0xff]
        %v1936 = vld [vmem:[%s1587 + $0x968] sm:$0xff]
        %v1937 = vld [vmem:[%s1587 + $0x970] sm:$0xff]
        %v1938 = vld [vmem:[%s1587 + $0x978] sm:$0xff]
        %v1939 = vld [vmem:[%s1587 + $0x980] sm:$0xff]
        %v1940 = vld [vmem:[%s1587 + $0x988] sm:$0xff]
        %v1941 = vld [vmem:[%s1587 + $0x990] sm:$0xff]
        %v1942 = vld [vmem:[%s1587 + $0x998] sm:$0xff]
        %v1943 = vld [vmem:[%s1587 + $0x9a0] sm:$0xff]
        %v1944 = vld [vmem:[%s1587 + $0x9a8] sm:$0xff]
        %v1945 = vld [vmem:[%s1587 + $0x9b0] sm:$0xff]
        %v1946 = vld [vmem:[%s1587 + $0x9b8] sm:$0xff]
        %v1947 = vld [vmem:[%s1587 + $0x9c0] sm:$0xff]
        %v1948 = vld [vmem:[%s1587 + $0x9c8] sm:$0xff]
        %v1949 = vld [vmem:[%s1587 + $0x9d0] sm:$0xff]
        %v1950 = vld [vmem:[%s1587 + $0x9d8] sm:$0xff]
        %v1951 = vld [vmem:[%s1587 + $0x9e0] sm:$0xff]
        %v1952 = vld [vmem:[%s1587 + $0x9e8] sm:$0xff]
        %v1953 = vld [vmem:[%s1587 + $0x9f0] sm:$0xff]
        %v1954 = vld [vmem:[%s1587 + $0x9f8] sm:$0xff]
        %v1955 = vld [vmem:[%s1587 + $0xa00] sm:$0xff]
        %v1956 = vld [vmem:[%s1587 + $0xa08] sm:$0xff]
        %v1957 = vld [vmem:[%s1587 + $0xa10] sm:$0xff]
        %v1958 = vld [vmem:[%s1587 + $0xa18] sm:$0xff]
        %v1959 = vld [vmem:[%s1587 + $0xa20] sm:$0xff]
        %v1960 = vld [vmem:[%s1587 + $0xa28] sm:$0xff]
        %v1961 = vld [vmem:[%s1587 + $0xa30] sm:$0xff]
        %v1962 = vld [vmem:[%s1587 + $0xa38] sm:$0xff]
        %v1963 = vld [vmem:[%s1587 + $0xa40] sm:$0xff]
        %v1964 = vld [vmem:[%s1587 + $0xa48] sm:$0xff]
        %v1965 = vld [vmem:[%s1587 + $0xa50] sm:$0xff]
        %v1966 = vld [vmem:[%s1587 + $0xa58] sm:$0xff]
        %v1967 = vld [vmem:[%s1587 + $0xa60] sm:$0xff]
        %v1968 = vld [vmem:[%s1587 + $0xa68] sm:$0xff]
        %v1969 = vld [vmem:[%s1587 + $0xa70] sm:$0xff]
        %v1970 = vld [vmem:[%s1587 + $0xa78] sm:$0xff]
        %v1971 = vld [vmem:[%s1587 + $0xa80] sm:$0xff]
        %v1972 = vld [vmem:[%s1587 + $0xa88] sm:$0xff]
        %v1973 = vld [vmem:[%s1587 + $0xa90] sm:$0xff]
        %v1974 = vld [vmem:[%s1587 + $0xa98] sm:$0xff]
        %v1975 = vld [vmem:[%s1587 + $0xaa0] sm:$0xff]
        %v1976 = vld [vmem:[%s1587 + $0xaa8] sm:$0xff]
        %v1977 = vld [vmem:[%s1587 + $0xab0] sm:$0xff]
        %v1978 = vld [vmem:[%s1587 + $0xab8] sm:$0xff]
        %v1979 = vld [vmem:[%s1587 + $0xac0] sm:$0xff]
        %v1980 = vld [vmem:[%s1587 + $0xac8] sm:$0xff]
        %v1981 = vld [vmem:[%s1587 + $0xad0] sm:$0xff]
        %v1982 = vld [vmem:[%s1587 + $0xad8] sm:$0xff]
        %v1983 = vld [vmem:[%s1587 + $0xae0] sm:$0xff]
        %v1984 = vld [vmem:[%s1587 + $0xae8] sm:$0xff]
        %v1985 = vld [vmem:[%s1587 + $0xaf0] sm:$0xff]
        %v1986 = vld [vmem:[%s1587 + $0xaf8] sm:$0xff]
        %v1987 = vld [vmem:[%s1587 + $0xb00] sm:$0xff]
        %v1988 = vld [vmem:[%s1587 + $0xb08] sm:$0xff]
        %v1989 = vld [vmem:[%s1587 + $0xb10] sm:$0xff]
        %v1990 = vld [vmem:[%s1587 + $0xb18] sm:$0xff]
        %v1991 = vld [vmem:[%s1587 + $0xb20] sm:$0xff]
        %v1992 = vld [vmem:[%s1587 + $0xb28] sm:$0xff]
        %v1993 = vld [vmem:[%s1587 + $0xb30] sm:$0xff]
        %v1994 = vld [vmem:[%s1587 + $0xb38] sm:$0xff]
        %v1995 = vld [vmem:[%s1587 + $0xb40] sm:$0xff]
        %v1996 = vld [vmem:[%s1587 + $0xb48] sm:$0xff]
        %v1997 = vld [vmem:[%s1587 + $0xb50] sm:$0xff]
        %v1998 = vld [vmem:[%s1587 + $0xb58] sm:$0xff]
        %v1999 = vld [vmem:[%s1587 + $0xb60] sm:$0xff]
        %v2000 = vld [vmem:[%s1587 + $0xb68] sm:$0xff]
        %v2001 = vld [vmem:[%s1587 + $0xb70] sm:$0xff]
        %v2002 = vld [vmem:[%s1587 + $0xb78] sm:$0xff]
        %v2003 = vld [vmem:[%s1587 + $0xb80] sm:$0xff]
        %v2004 = vld [vmem:[%s1587 + $0xb88] sm:$0xff]
        %v2005 = vld [vmem:[%s1587 + $0xb90] sm:$0xff]
        %v2006 = vld [vmem:[%s1587 + $0xb98] sm:$0xff]
        %v2007 = vld [vmem:[%s1587 + $0xba0] sm:$0xff]
        %v2008 = vld [vmem:[%s1587 + $0xba8] sm:$0xff]
        %v2009 = vld [vmem:[%s1587 + $0xbb0] sm:$0xff]
        %v2010 = vld [vmem:[%s1587 + $0xbb8] sm:$0xff]
        %v2011 = vld [vmem:[%s1587 + $0xbc0] sm:$0xff]
        %v2012 = vld [vmem:[%s1587 + $0xbc8] sm:$0xff]
        %v2013 = vld [vmem:[%s1587 + $0xbd0] sm:$0xff]
        %v2014 = vld [vmem:[%s1587 + $0xbd8] sm:$0xff]
        %v2015 = vld [vmem:[%s1587 + $0xbe0] sm:$0xff]
        %v2016 = vld [vmem:[%s1587 + $0xbe8] sm:$0xff]
        %v2017 = vld [vmem:[%s1587 + $0xbf0] sm:$0xff]
        %v2018 = vld [vmem:[%s1587 + $0xbf8] sm:$0xff]
        %v2019 = vld [vmem:[%s1587 + $0xc00] sm:$0xff]
        %v2020 = vld [vmem:[%s1587 + $0xc08] sm:$0xff]
        %v2021 = vld [vmem:[%s1587 + $0xc10] sm:$0xff]
        %v2022 = vld [vmem:[%s1587 + $0xc18] sm:$0xff]
        %v2023 = vld [vmem:[%s1587 + $0xc20] sm:$0xff]
        %v2024 = vld [vmem:[%s1587 + $0xc28] sm:$0xff]
        %v2025 = vld [vmem:[%s1587 + $0xc30] sm:$0xff]
        %v2026 = vld [vmem:[%s1587 + $0xc38] sm:$0xff]
        %v2027 = vld [vmem:[%s1587 + $0xc40] sm:$0xff]
        %v2028 = vld [vmem:[%s1587 + $0xc48] sm:$0xff]
        %v2029 = vld [vmem:[%s1587 + $0xc50] sm:$0xff]
        %v2030 = vld [vmem:[%s1587 + $0xc58] sm:$0xff]
        %v2031 = vld [vmem:[%s1587 + $0xc60] sm:$0xff]
        %v2032 = vld [vmem:[%s1587 + $0xc68] sm:$0xff]
        %v2033 = vld [vmem:[%s1587 + $0xc70] sm:$0xff]
        %v2034 = vld [vmem:[%s1587 + $0xc78] sm:$0xff]
        %v2035 = vld [vmem:[%s1587 + $0xc80] sm:$0xff]
        %v2036 = vld [vmem:[%s1587 + $0xc88] sm:$0xff]
        %v2037 = vld [vmem:[%s1587 + $0xc90] sm:$0xff]
        %v2038 = vld [vmem:[%s1587 + $0xc98] sm:$0xff]
        %v2039 = vld [vmem:[%s1587 + $0xca0] sm:$0xff]
        %v2040 = vld [vmem:[%s1587 + $0xca8] sm:$0xff]
        %v2041 = vld [vmem:[%s1587 + $0xcb0] sm:$0xff]
        %v2042 = vld [vmem:[%s1587 + $0xcb8] sm:$0xff]
        %v2043 = vld [vmem:[%s1587 + $0xcc0] sm:$0xff]
        %v2044 = vld [vmem:[%s1587 + $0xcc8] sm:$0xff]
        %v2045 = vld [vmem:[%s1587 + $0xcd0] sm:$0xff]
        %v2046 = vld [vmem:[%s1587 + $0xcd8] sm:$0xff]
        %v2047 = vld [vmem:[%s1587 + $0xce0] sm:$0xff]
        %v2048 = vld [vmem:[%s1587 + $0xce8] sm:$0xff]
        %v2049 = vld [vmem:[%s1587 + $0xcf0] sm:$0xff]
        %v2050 = vld [vmem:[%s1587 + $0xcf8] sm:$0xff]
        %v2051 = vld [vmem:[%s1587 + $0xd00] sm:$0xff]
        %v2052 = vld [vmem:[%s1587 + $0xd08] sm:$0xff]
        %v2053 = vld [vmem:[%s1587 + $0xd10] sm:$0xff]
        %v2054 = vld [vmem:[%s1587 + $0xd18] sm:$0xff]
        %v2055 = vld [vmem:[%s1587 + $0xd20] sm:$0xff]
        %v2056 = vld [vmem:[%s1587 + $0xd28] sm:$0xff]
        %v2057 = vld [vmem:[%s1587 + $0xd30] sm:$0xff]
        %v2058 = vld [vmem:[%s1587 + $0xd38] sm:$0xff]
        %v2059 = vld [vmem:[%s1587 + $0xd40] sm:$0xff]
        %v2060 = vld [vmem:[%s1587 + $0xd48] sm:$0xff]
        %v2061 = vld [vmem:[%s1587 + $0xd50] sm:$0xff]
        %v2062 = vld [vmem:[%s1587 + $0xd58] sm:$0xff]
        %v2063 = vld [vmem:[%s1587 + $0xd60] sm:$0xff]
        %v2064 = vld [vmem:[%s1587 + $0xd68] sm:$0xff]
        %v2065 = vld [vmem:[%s1587 + $0xd70] sm:$0xff]
        %v2066 = vld [vmem:[%s1587 + $0xd78] sm:$0xff]
        %v2067 = vld [vmem:[%s1587 + $0xd80] sm:$0xff]
        %v2068 = vld [vmem:[%s1587 + $0xd88] sm:$0xff]
        %v2069 = vld [vmem:[%s1587 + $0xd90] sm:$0xff]
        %v2070 = vld [vmem:[%s1587 + $0xd98] sm:$0xff]
        %v2071 = vld [vmem:[%s1587 + $0xda0] sm:$0xff]
        %v2072 = vld [vmem:[%s1587 + $0xda8] sm:$0xff]
        %v2073 = vld [vmem:[%s1587 + $0xdb0] sm:$0xff]
        %v2074 = vld [vmem:[%s1587 + $0xdb8] sm:$0xff]
        %v2075 = vld [vmem:[%s1587 + $0xdc0] sm:$0xff]
        %v2076 = vld [vmem:[%s1587 + $0xdc8] sm:$0xff]
        %v2077 = vld [vmem:[%s1587 + $0xdd0] sm:$0xff]
        %v2078 = vld [vmem:[%s1587 + $0xdd8] sm:$0xff]
        %v2079 = vld [vmem:[%s1587 + $0xde0] sm:$0xff]
        %v2080 = vld [vmem:[%s1587 + $0xde8] sm:$0xff]
        %v2081 = vld [vmem:[%s1587 + $0xdf0] sm:$0xff]
        %v2082 = vld [vmem:[%s1587 + $0xdf8] sm:$0xff]
        %v2083 = vld [vmem:[%s1587 + $0xe00] sm:$0xff]
        %v2084 = vld [vmem:[%s1587 + $0xe08] sm:$0xff]
        %v2085 = vld [vmem:[%s1587 + $0xe10] sm:$0xff]
        %v2086 = vld [vmem:[%s1587 + $0xe18] sm:$0xff]
        %v2087 = vld [vmem:[%s1587 + $0xe20] sm:$0xff]
        %v2088 = vld [vmem:[%s1587 + $0xe28] sm:$0xff]
        %v2089 = vld [vmem:[%s1587 + $0xe30] sm:$0xff]
        %v2090 = vld [vmem:[%s1587 + $0xe38] sm:$0xff]
        %v2091 = vld [vmem:[%s1587 + $0xe40] sm:$0xff]
        %v2092 = vld [vmem:[%s1587 + $0xe48] sm:$0xff]
        %v2093 = vld [vmem:[%s1587 + $0xe50] sm:$0xff]
        %v2094 = vld [vmem:[%s1587 + $0xe58] sm:$0xff]
        %v2095 = vld [vmem:[%s1587 + $0xe60] sm:$0xff]
        %v2096 = vld [vmem:[%s1587 + $0xe68] sm:$0xff]
        %v2097 = vld [vmem:[%s1587 + $0xe70] sm:$0xff]
        %v2098 = vld [vmem:[%s1587 + $0xe78] sm:$0xff]
        %v2099 = vld [vmem:[%s1587 + $0xe80] sm:$0xff]
        %v2100 = vld [vmem:[%s1587 + $0xe88] sm:$0xff]
        %v2101 = vld [vmem:[%s1587 + $0xe90] sm:$0xff]
        %v2102 = vld [vmem:[%s1587 + $0xe98] sm:$0xff]
        %v2103 = vld [vmem:[%s1587 + $0xea0] sm:$0xff]
        %v2104 = vld [vmem:[%s1587 + $0xea8] sm:$0xff]
        %v2105 = vld [vmem:[%s1587 + $0xeb0] sm:$0xff]
        %v2106 = vld [vmem:[%s1587 + $0xeb8] sm:$0xff]
        %v2107 = vld [vmem:[%s1587 + $0xec0] sm:$0xff]
        %v2108 = vld [vmem:[%s1587 + $0xec8] sm:$0xff]
        %v2109 = vld [vmem:[%s1587 + $0xed0] sm:$0xff]
        %v2110 = vld [vmem:[%s1587 + $0xed8] sm:$0xff]
        %v2111 = vld [vmem:[%s1587 + $0xee0] sm:$0xff]
        %v2112 = vld [vmem:[%s1587 + $0xee8] sm:$0xff]
        %v2113 = vld [vmem:[%s1587 + $0xef0] sm:$0xff]
        %v2114 = vld [vmem:[%s1587 + $0xef8] sm:$0xff]
        %v2115 = vld [vmem:[%s1587 + $0xf00] sm:$0xff]
        %v2116 = vld [vmem:[%s1587 + $0xf08] sm:$0xff]
        %v2117 = vld [vmem:[%s1587 + $0xf10] sm:$0xff]
        %v2118 = vld [vmem:[%s1587 + $0xf18] sm:$0xff]
        %v2119 = vld [vmem:[%s1587 + $0xf20] sm:$0xff]
        %v2120 = vld [vmem:[%s1587 + $0xf28] sm:$0xff]
        %v2121 = vld [vmem:[%s1587 + $0xf30] sm:$0xff]
        %v2122 = vld [vmem:[%s1587 + $0xf38] sm:$0xff]
        %v2123 = vld [vmem:[%s1587 + $0xf40] sm:$0xff]
        %v2124 = vld [vmem:[%s1587 + $0xf48] sm:$0xff]
        %v2125 = vld [vmem:[%s1587 + $0xf50] sm:$0xff]
        %v2126 = vld [vmem:[%s1587 + $0xf58] sm:$0xff]
        %v2127 = vld [vmem:[%s1587 + $0xf60] sm:$0xff]
        %v2128 = vld [vmem:[%s1587 + $0xf68] sm:$0xff]
        %v2129 = vld [vmem:[%s1587 + $0xf70] sm:$0xff]
        %v2130 = vld [vmem:[%s1587 + $0xf78] sm:$0xff]
        %v2131 = vld [vmem:[%s1587 + $0xf80] sm:$0xff]
        %v2132 = vld [vmem:[%s1587 + $0xf88] sm:$0xff]
        %v2133 = vld [vmem:[%s1587 + $0xf90] sm:$0xff]
        %v2134 = vld [vmem:[%s1587 + $0xf98] sm:$0xff]
        %v2135 = vld [vmem:[%s1587 + $0xfa0] sm:$0xff]
        %v2136 = vld [vmem:[%s1587 + $0xfa8] sm:$0xff]
        %v2137 = vld [vmem:[%s1587 + $0xfb0] sm:$0xff]
        %v2138 = vld [vmem:[%s1587 + $0xfb8] sm:$0xff]
        %v2139 = vld [vmem:[%s1587 + $0xfc0] sm:$0xff]
        %v2140 = vld [vmem:[%s1587 + $0xfc8] sm:$0xff]
        %v2141 = vld [vmem:[%s1587 + $0xfd0] sm:$0xff]
        %v2142 = vld [vmem:[%s1587 + $0xfd8] sm:$0xff]
        %v2143 = vld [vmem:[%s1587 + $0xfe0] sm:$0xff]
        %v2144 = vld [vmem:[%s1587 + $0xfe8] sm:$0xff]
        %v2145 = vld [vmem:[%s1587 + $0xff0] sm:$0xff]
        %v2146 = vld [vmem:[%s1587 + $0xff8] sm:$0xff]
        %v2147 = vld [vmem:[%s1587 + $0x1000] sm:$0xff]
        %v2148 = vld [vmem:[%s1587 + $0x1008] sm:$0xff]
        %v2149 = vld [vmem:[%s1587 + $0x1010] sm:$0xff]
        %v2150 = vld [vmem:[%s1587 + $0x1018] sm:$0xff]
        %v2151 = vld [vmem:[%s1587 + $0x1020] sm:$0xff]
        %v2152 = vld [vmem:[%s1587 + $0x1028] sm:$0xff]
        %v2153 = vld [vmem:[%s1587 + $0x1030] sm:$0xff]
        %v2154 = vld [vmem:[%s1587 + $0x1038] sm:$0xff]
        %v2155 = vld [vmem:[%s1587 + $0x1040] sm:$0xff]
        %v2156 = vld [vmem:[%s1587 + $0x1048] sm:$0xff]
        %v2157 = vld [vmem:[%s1587 + $0x1050] sm:$0xff]
        %v2158 = vld [vmem:[%s1587 + $0x1058] sm:$0xff]
        %v2159 = vld [vmem:[%s1587 + $0x1060] sm:$0xff]
        %v2160 = vld [vmem:[%s1587 + $0x1068] sm:$0xff]
        %v2161 = vld [vmem:[%s1587 + $0x1070] sm:$0xff]
        %v2162 = vld [vmem:[%s1587 + $0x1078] sm:$0xff]
        %v2163 = vld [vmem:[%s1587 + $0x1080] sm:$0xff]
        %v2164 = vld [vmem:[%s1587 + $0x1088] sm:$0xff]
        %v2165 = vld [vmem:[%s1587 + $0x1090] sm:$0xff]
        %v2166 = vld [vmem:[%s1587 + $0x1098] sm:$0xff]
        %v2167 = vld [vmem:[%s1587 + $0x10a0] sm:$0xff]
        %v2168 = vld [vmem:[%s1587 + $0x10a8] sm:$0xff]
        %v2169 = vld [vmem:[%s1587 + $0x10b0] sm:$0xff]
        %v2170 = vld [vmem:[%s1587 + $0x10b8] sm:$0xff]
        %v2171 = vld [vmem:[%s1587 + $0x10c0] sm:$0xff]
        %v2172 = vld [vmem:[%s1587 + $0x10c8] sm:$0xff]
        %v2173 = vld [vmem:[%s1587 + $0x10d0] sm:$0xff]
        %v2174 = vld [vmem:[%s1587 + $0x10d8] sm:$0xff]
        %v2175 = vld [vmem:[%s1587 + $0x10e0] sm:$0xff]
        %v2176 = vld [vmem:[%s1587 + $0x10e8] sm:$0xff]
        %v2177 = vld [vmem:[%s1587 + $0x10f0] sm:$0xff]
        %v2178 = vld [vmem:[%s1587 + $0x10f8] sm:$0xff]
        %v2179 = vld [vmem:[%s1587 + $0x1100] sm:$0xff]
        %v2180 = vld [vmem:[%s1587 + $0x1108] sm:$0xff]
        %v2181 = vld [vmem:[%s1587 + $0x1110] sm:$0xff]
        %v2182 = vld [vmem:[%s1587 + $0x1118] sm:$0xff]
        %v2183 = vld [vmem:[%s1587 + $0x1120] sm:$0xff]
        %v2184 = vld [vmem:[%s1587 + $0x1128] sm:$0xff]
        %v2185 = vld [vmem:[%s1587 + $0x1130] sm:$0xff]
        %v2186 = vld [vmem:[%s1587 + $0x1138] sm:$0xff]
        %v2187 = vld [vmem:[%s1587 + $0x1140] sm:$0xff]
        %v2188 = vld [vmem:[%s1587 + $0x1148] sm:$0xff]
        %v2189 = vld [vmem:[%s1587 + $0x1150] sm:$0xff]
        %v2190 = vld [vmem:[%s1587 + $0x1158] sm:$0xff]
        %v2191 = vld [vmem:[%s1587 + $0x1160] sm:$0xff]
        %v2192 = vld [vmem:[%s1587 + $0x1168] sm:$0xff]
        %v2193 = vld [vmem:[%s1587 + $0x1170] sm:$0xff]
        %v2194 = vld [vmem:[%s1587 + $0x1178] sm:$0xff]
        %v2195 = vld [vmem:[%s1587 + $0x1180] sm:$0xff]
        %v2196 = vld [vmem:[%s1587 + $0x1188] sm:$0xff]
        %v2197 = vld [vmem:[%s1587 + $0x1190] sm:$0xff]
        %v2198 = vld [vmem:[%s1587 + $0x1198] sm:$0xff]
        %v2199 = vld [vmem:[%s1587 + $0x11a0] sm:$0xff]
        %v2200 = vld [vmem:[%s1587 + $0x11a8] sm:$0xff]
        %v2201 = vld [vmem:[%s1587 + $0x11b0] sm:$0xff]
        %v2202 = vld [vmem:[%s1587 + $0x11b8] sm:$0xff]
        %v2203 = vld [vmem:[%s1587 + $0x11c0] sm:$0xff]
        %v2204 = vld [vmem:[%s1587 + $0x11c8] sm:$0xff]
        %v2205 = vld [vmem:[%s1587 + $0x11d0] sm:$0xff]
        %v2206 = vld [vmem:[%s1587 + $0x11d8] sm:$0xff]
        %v2207 = vld [vmem:[%s1587 + $0x11e0] sm:$0xff]
        %v2208 = vld [vmem:[%s1587 + $0x11e8] sm:$0xff]
        %v2209 = vld [vmem:[%s1587 + $0x11f0] sm:$0xff]
        %v2210 = vld [vmem:[%s1587 + $0x11f8] sm:$0xff]
        %v2211 = vld [vmem:[%s1587 + $0x1200] sm:$0xff]
        %v2212 = vld [vmem:[%s1587 + $0x1208] sm:$0xff]
        %v2213 = vld [vmem:[%s1587 + $0x1210] sm:$0xff]
        %v2214 = vld [vmem:[%s1587 + $0x1218] sm:$0xff]
        %v2215 = vld [vmem:[%s1587 + $0x1220] sm:$0xff]
        %v2216 = vld [vmem:[%s1587 + $0x1228] sm:$0xff]
        %v2217 = vld [vmem:[%s1587 + $0x1230] sm:$0xff]
        %v2218 = vld [vmem:[%s1587 + $0x1238] sm:$0xff]
        %v2219 = vld [vmem:[%s1587 + $0x1240] sm:$0xff]
        %v2220 = vld [vmem:[%s1587 + $0x1248] sm:$0xff]
        %v2221 = vld [vmem:[%s1587 + $0x1250] sm:$0xff]
        %v2222 = vld [vmem:[%s1587 + $0x1258] sm:$0xff]
        %v2223 = vld [vmem:[%s1587 + $0x1260] sm:$0xff]
        %v2224 = vld [vmem:[%s1587 + $0x1268] sm:$0xff]
        %v2225 = vld [vmem:[%s1587 + $0x1270] sm:$0xff]
        %v2226 = vld [vmem:[%s1587 + $0x1278] sm:$0xff]
        %v2227 = vld [vmem:[%s1587 + $0x1280] sm:$0xff]
        %v2228 = vld [vmem:[%s1587 + $0x1288] sm:$0xff]
        %v2229 = vld [vmem:[%s1587 + $0x1290] sm:$0xff]
        %v2230 = vld [vmem:[%s1587 + $0x1298] sm:$0xff]
        %v2231 = vld [vmem:[%s1587 + $0x12a0] sm:$0xff]
        %v2232 = vld [vmem:[%s1587 + $0x12a8] sm:$0xff]
        %v2233 = vld [vmem:[%s1587 + $0x12b0] sm:$0xff]
        %v2234 = vld [vmem:[%s1587 + $0x12b8] sm:$0xff]
        %v2235 = vld [vmem:[%s1587 + $0x12c0] sm:$0xff]
        %v2236 = vld [vmem:[%s1587 + $0x12c8] sm:$0xff]
        %v2237 = vld [vmem:[%s1587 + $0x12d0] sm:$0xff]
        %v2238 = vld [vmem:[%s1587 + $0x12d8] sm:$0xff]
        %v2239 = vld [vmem:[%s1587 + $0x12e0] sm:$0xff]
        %v2240 = vld [vmem:[%s1587 + $0x12e8] sm:$0xff]
        %v2241 = vld [vmem:[%s1587 + $0x12f0] sm:$0xff]
        %v2242 = vld [vmem:[%s1587 + $0x12f8] sm:$0xff]
        %v2243 = vld [vmem:[%s1587 + $0x1300] sm:$0xff]
        %v2244 = vld [vmem:[%s1587 + $0x1308] sm:$0xff]
        %v2245 = vld [vmem:[%s1587 + $0x1310] sm:$0xff]
        %v2246 = vld [vmem:[%s1587 + $0x1318] sm:$0xff]
        %v2247 = vld [vmem:[%s1587 + $0x1320] sm:$0xff]
        %v2248 = vld [vmem:[%s1587 + $0x1328] sm:$0xff]
        %v2249 = vld [vmem:[%s1587 + $0x1330] sm:$0xff]
        %v2250 = vld [vmem:[%s1587 + $0x1338] sm:$0xff]
        %v2251 = vld [vmem:[%s1587 + $0x1340] sm:$0xff]
        %v2252 = vld [vmem:[%s1587 + $0x1348] sm:$0xff]
        %v2253 = vld [vmem:[%s1587 + $0x1350] sm:$0xff]
        %v2254 = vld [vmem:[%s1587 + $0x1358] sm:$0xff]
        %v2255 = vld [vmem:[%s1587 + $0x1360] sm:$0xff]
        %v2256 = vld [vmem:[%s1587 + $0x1368] sm:$0xff]
        %v2257 = vld [vmem:[%s1587 + $0x1370] sm:$0xff]
        %v2258 = vld [vmem:[%s1587 + $0x1378] sm:$0xff]
        %v2259 = vld [vmem:[%s1587 + $0x1380] sm:$0xff]
        %v2260 = vld [vmem:[%s1587 + $0x1388] sm:$0xff]
        %v2261 = vld [vmem:[%s1587 + $0x1390] sm:$0xff]
        %v2262 = vld [vmem:[%s1587 + $0x1398] sm:$0xff]
        %v2263 = vld [vmem:[%s1587 + $0x13a0] sm:$0xff]
        %v2264 = vld [vmem:[%s1587 + $0x13a8] sm:$0xff]
        %v2265 = vld [vmem:[%s1587 + $0x13b0] sm:$0xff]
        %v2266 = vld [vmem:[%s1587 + $0x13b8] sm:$0xff]
        %v2267 = vld [vmem:[%s1587 + $0x13c0] sm:$0xff]
        %v2268 = vld [vmem:[%s1587 + $0x13c8] sm:$0xff]
        %v2269 = vld [vmem:[%s1587 + $0x13d0] sm:$0xff]
        %v2270 = vld [vmem:[%s1587 + $0x13d8] sm:$0xff]
        %v2271 = vld [vmem:[%s1587 + $0x13e0] sm:$0xff]
        %v2272 = vld [vmem:[%s1587 + $0x13e8] sm:$0xff]
        %v2273 = vld [vmem:[%s1587 + $0x13f0] sm:$0xff]
        %v2274 = vld [vmem:[%s1587 + $0x13f8] sm:$0xff]
        %v2275 = vld [vmem:[%s1587 + $0x1400] sm:$0xff]
        %v2276 = vld [vmem:[%s1587 + $0x1408] sm:$0xff]
        %v2277 = vld [vmem:[%s1587 + $0x1410] sm:$0xff]
        %v2278 = vld [vmem:[%s1587 + $0x1418] sm:$0xff]
        %v2279 = vld [vmem:[%s1587 + $0x1420] sm:$0xff]
        %v2280 = vld [vmem:[%s1587 + $0x1428] sm:$0xff]
        %v2281 = vld [vmem:[%s1587 + $0x1430] sm:$0xff]
        %v2282 = vld [vmem:[%s1587 + $0x1438] sm:$0xff]
        %v2283 = vld [vmem:[%s1587 + $0x1440] sm:$0xff]
        %v2284 = vld [vmem:[%s1587 + $0x1448] sm:$0xff]
        %v2285 = vld [vmem:[%s1587 + $0x1450] sm:$0xff]
        %v2286 = vld [vmem:[%s1587 + $0x1458] sm:$0xff]
        %v2287 = vld [vmem:[%s1587 + $0x1460] sm:$0xff]
        %v2288 = vld [vmem:[%s1587 + $0x1468] sm:$0xff]
        %v2289 = vld [vmem:[%s1587 + $0x1470] sm:$0xff]
        %v2290 = vld [vmem:[%s1587 + $0x1478] sm:$0xff]
        %v2291 = vld [vmem:[%s1587 + $0x1480] sm:$0xff]
        %v2292 = vld [vmem:[%s1587 + $0x1488] sm:$0xff]
        %v2293 = vld [vmem:[%s1587 + $0x1490] sm:$0xff]
        %v2294 = vld [vmem:[%s1587 + $0x1498] sm:$0xff]
        %v2295 = vld [vmem:[%s1587 + $0x14a0] sm:$0xff]
        %v2296 = vld [vmem:[%s1587 + $0x14a8] sm:$0xff]
        %v2297 = vld [vmem:[%s1587 + $0x14b0] sm:$0xff]
        %v2298 = vld [vmem:[%s1587 + $0x14b8] sm:$0xff]
        %v2299 = vld [vmem:[%s1587 + $0x14c0] sm:$0xff]
        %v2300 = vld [vmem:[%s1587 + $0x14c8] sm:$0xff]
        %v2301 = vld [vmem:[%s1587 + $0x14d0] sm:$0xff]
        %v2302 = vld [vmem:[%s1587 + $0x14d8] sm:$0xff]
        %v2303 = vld [vmem:[%s1587 + $0x14e0] sm:$0xff]
        %v2304 = vld [vmem:[%s1587 + $0x14e8] sm:$0xff]
        %v2305 = vld [vmem:[%s1587 + $0x14f0] sm:$0xff]
        %v2306 = vld [vmem:[%s1587 + $0x14f8] sm:$0xff]
        %v2307 = vld [vmem:[%s1587 + $0x1500] sm:$0xff]
        %v2308 = vld [vmem:[%s1587 + $0x1508] sm:$0xff]
        %v2309 = vld [vmem:[%s1587 + $0x1510] sm:$0xff]
        %v2310 = vld [vmem:[%s1587 + $0x1518] sm:$0xff]
        %v2311 = vld [vmem:[%s1587 + $0x1520] sm:$0xff]
        %v2312 = vld [vmem:[%s1587 + $0x1528] sm:$0xff]
        %v2313 = vld [vmem:[%s1587 + $0x1530] sm:$0xff]
        %v2314 = vld [vmem:[%s1587 + $0x1538] sm:$0xff]
        %v2315 = vld [vmem:[%s1587 + $0x1540] sm:$0xff]
        %v2316 = vld [vmem:[%s1587 + $0x1548] sm:$0xff]
        %v2317 = vld [vmem:[%s1587 + $0x1550] sm:$0xff]
        %v2318 = vld [vmem:[%s1587 + $0x1558] sm:$0xff]
        %v2319 = vld [vmem:[%s1587 + $0x1560] sm:$0xff]
        %v2320 = vld [vmem:[%s1587 + $0x1568] sm:$0xff]
        %v2321 = vld [vmem:[%s1587 + $0x1570] sm:$0xff]
        %v2322 = vld [vmem:[%s1587 + $0x1578] sm:$0xff]
        %v2323 = vld [vmem:[%s1587 + $0x1580] sm:$0xff]
        %v2324 = vld [vmem:[%s1587 + $0x1588] sm:$0xff]
        %v2325 = vld [vmem:[%s1587 + $0x1590] sm:$0xff]
        %v2326 = vld [vmem:[%s1587 + $0x1598] sm:$0xff]
        %v2327 = vld [vmem:[%s1587 + $0x15a0] sm:$0xff]
        %v2328 = vld [vmem:[%s1587 + $0x15a8] sm:$0xff]
        %v2329 = vld [vmem:[%s1587 + $0x15b0] sm:$0xff]
        %v2330 = vld [vmem:[%s1587 + $0x15b8] sm:$0xff]
        %v2331 = vld [vmem:[%s1587 + $0x15c0] sm:$0xff]
        %v2332 = vld [vmem:[%s1587 + $0x15c8] sm:$0xff]
        %v2333 = vld [vmem:[%s1587 + $0x15d0] sm:$0xff]
        %v2334 = vld [vmem:[%s1587 + $0x15d8] sm:$0xff]
        %v2335 = vld [vmem:[%s1587 + $0x15e0] sm:$0xff]
        %v2336 = vld [vmem:[%s1587 + $0x15e8] sm:$0xff]
        %v2337 = vld [vmem:[%s1587 + $0x15f0] sm:$0xff]
        %v2338 = vld [vmem:[%s1587 + $0x15f8] sm:$0xff]
        %v2339 = vld [vmem:[%s1587 + $0x1600] sm:$0xff]
        %v2340 = vld [vmem:[%s1587 + $0x1608] sm:$0xff]
        %v2341 = vld [vmem:[%s1587 + $0x1610] sm:$0xff]
        %v2342 = vld [vmem:[%s1587 + $0x1618] sm:$0xff]
        %v2343 = vld [vmem:[%s1587 + $0x1620] sm:$0xff]
        %v2344 = vld [vmem:[%s1587 + $0x1628] sm:$0xff]
        %v2345 = vld [vmem:[%s1587 + $0x1630] sm:$0xff]
        %v2346 = vld [vmem:[%s1587 + $0x1638] sm:$0xff]
        %v2347 = vld [vmem:[%s1587 + $0x1640] sm:$0xff]
        %v2348 = vld [vmem:[%s1587 + $0x1648] sm:$0xff]
        %v2349 = vld [vmem:[%s1587 + $0x1650] sm:$0xff]
        %v2350 = vld [vmem:[%s1587 + $0x1658] sm:$0xff]
        %v2351 = vld [vmem:[%s1587 + $0x1660] sm:$0xff]
        %v2352 = vld [vmem:[%s1587 + $0x1668] sm:$0xff]
        %v2353 = vld [vmem:[%s1587 + $0x1670] sm:$0xff]
        %v2354 = vld [vmem:[%s1587 + $0x1678] sm:$0xff]
        %v2355 = vld [vmem:[%s1587 + $0x1680] sm:$0xff]
        %v2356 = vld [vmem:[%s1587 + $0x1688] sm:$0xff]
        %v2357 = vld [vmem:[%s1587 + $0x1690] sm:$0xff]
        %v2358 = vld [vmem:[%s1587 + $0x1698] sm:$0xff]
        %v2359 = vld [vmem:[%s1587 + $0x16a0] sm:$0xff]
        %v2360 = vld [vmem:[%s1587 + $0x16a8] sm:$0xff]
        %v2361 = vld [vmem:[%s1587 + $0x16b0] sm:$0xff]
        %v2362 = vld [vmem:[%s1587 + $0x16b8] sm:$0xff]
        %v2363 = vld [vmem:[%s1587 + $0x16c0] sm:$0xff]
        %v2364 = vld [vmem:[%s1587 + $0x16c8] sm:$0xff]
        %v2365 = vld [vmem:[%s1587 + $0x16d0] sm:$0xff]
        %v2366 = vld [vmem:[%s1587 + $0x16d8] sm:$0xff]
        %v2367 = vld [vmem:[%s1587 + $0x16e0] sm:$0xff]
        %v2368 = vld [vmem:[%s1587 + $0x16e8] sm:$0xff]
        %v2369 = vld [vmem:[%s1587 + $0x16f0] sm:$0xff]
        %v2370 = vld [vmem:[%s1587 + $0x16f8] sm:$0xff]
        %v2371 = vld [vmem:[%s1587 + $0x1700] sm:$0xff]
        %v2372 = vld [vmem:[%s1587 + $0x1708] sm:$0xff]
        %v2373 = vld [vmem:[%s1587 + $0x1710] sm:$0xff]
        %v2374 = vld [vmem:[%s1587 + $0x1718] sm:$0xff]
        %v2375 = vld [vmem:[%s1587 + $0x1720] sm:$0xff]
        %v2376 = vld [vmem:[%s1587 + $0x1728] sm:$0xff]
        %v2377 = vld [vmem:[%s1587 + $0x1730] sm:$0xff]
        %v2378 = vld [vmem:[%s1587 + $0x1738] sm:$0xff]
        %v2379 = vld [vmem:[%s1587 + $0x1740] sm:$0xff]
        %v2380 = vld [vmem:[%s1587 + $0x1748] sm:$0xff]
        %v2381 = vld [vmem:[%s1587 + $0x1750] sm:$0xff]
        %v2382 = vld [vmem:[%s1587 + $0x1758] sm:$0xff]
        %v2383 = vld [vmem:[%s1587 + $0x1760] sm:$0xff]
        %v2384 = vld [vmem:[%s1587 + $0x1768] sm:$0xff]
        %v2385 = vld [vmem:[%s1587 + $0x1770] sm:$0xff]
        %v2386 = vld [vmem:[%s1587 + $0x1778] sm:$0xff]
        %v2387 = vld [vmem:[%s1587 + $0x1780] sm:$0xff]
        %v2388 = vld [vmem:[%s1587 + $0x1788] sm:$0xff]
        %v2389 = vld [vmem:[%s1587 + $0x1790] sm:$0xff]
        %v2390 = vld [vmem:[%s1587 + $0x1798] sm:$0xff]
        %v2391 = vld [vmem:[%s1587 + $0x17a0] sm:$0xff]
        %v2392 = vld [vmem:[%s1587 + $0x17a8] sm:$0xff]
        %v2393 = vld [vmem:[%s1587 + $0x17b0] sm:$0xff]
        %v2394 = vld [vmem:[%s1587 + $0x17b8] sm:$0xff]
        %v2395 = vld [vmem:[%s1587 + $0x17c0] sm:$0xff]
        %v2396 = vld [vmem:[%s1587 + $0x17c8] sm:$0xff]
        %v2397 = vld [vmem:[%s1587 + $0x17d0] sm:$0xff]
        %v2398 = vld [vmem:[%s1587 + $0x17d8] sm:$0xff]
        %v2399 = vld [vmem:[%s1587 + $0x17e0] sm:$0xff]
        %v2400 = vld [vmem:[%s1587 + $0x17e8] sm:$0xff]
        %v2401 = vld [vmem:[%s1587 + $0x17f0] sm:$0xff]
        %v2402 = vld [vmem:[%s1587 + $0x17f8] sm:$0xff]
        %v2403 = vpack.c.bf16 %v1643, %v1635
        %v2404 = vpack.c.bf16 %v1644, %v1636
        %v2405 = vpack.c.bf16 %v1645, %v1637
        %v2406 = vpack.c.bf16 %v1646, %v1638
        %v2407 = vpack.c.bf16 %v1647, %v1639
        %v2408 = vpack.c.bf16 %v1648, %v1640
        %v2409 = vpack.c.bf16 %v1649, %v1641
        %v2410 = vpack.c.bf16 %v1650, %v1642
        %v2411 = vpack.c.bf16 %v1659, %v1651
        %v2412 = vpack.c.bf16 %v1660, %v1652
        %v2413 = vpack.c.bf16 %v1661, %v1653
        %v2414 = vpack.c.bf16 %v1662, %v1654
        %v2415 = vpack.c.bf16 %v1663, %v1655
        %v2416 = vpack.c.bf16 %v1664, %v1656
        %v2417 = vpack.c.bf16 %v1665, %v1657
        %v2418 = vpack.c.bf16 %v1666, %v1658
        %v2419 = vpack.c.bf16 %v1675, %v1667
        %v2420 = vpack.c.bf16 %v1676, %v1668
        %v2421 = vpack.c.bf16 %v1677, %v1669
        %v2422 = vpack.c.bf16 %v1678, %v1670
        %v2423 = vpack.c.bf16 %v1679, %v1671
        %v2424 = vpack.c.bf16 %v1680, %v1672
        %v2425 = vpack.c.bf16 %v1681, %v1673
        %v2426 = vpack.c.bf16 %v1682, %v1674
        %v2427 = vpack.c.bf16 %v1691, %v1683
        %v2428 = vpack.c.bf16 %v1692, %v1684
        %v2429 = vpack.c.bf16 %v1693, %v1685
        %v2430 = vpack.c.bf16 %v1694, %v1686
        %v2431 = vpack.c.bf16 %v1695, %v1687
        %v2432 = vpack.c.bf16 %v1696, %v1688
        %v2433 = vpack.c.bf16 %v1697, %v1689
        %v2434 = vpack.c.bf16 %v1698, %v1690
        %v2435 = vpack.c.bf16 %v1707, %v1699
        %v2436 = vpack.c.bf16 %v1708, %v1700
        %v2437 = vpack.c.bf16 %v1709, %v1701
        %v2438 = vpack.c.bf16 %v1710, %v1702
        %v2439 = vpack.c.bf16 %v1711, %v1703
        %v2440 = vpack.c.bf16 %v1712, %v1704
        %v2441 = vpack.c.bf16 %v1713, %v1705
        %v2442 = vpack.c.bf16 %v1714, %v1706
        %v2443 = vpack.c.bf16 %v1723, %v1715
        %v2444 = vpack.c.bf16 %v1724, %v1716
        %v2445 = vpack.c.bf16 %v1725, %v1717
        %v2446 = vpack.c.bf16 %v1726, %v1718
        %v2447 = vpack.c.bf16 %v1727, %v1719
        %v2448 = vpack.c.bf16 %v1728, %v1720
        %v2449 = vpack.c.bf16 %v1729, %v1721
        %v2450 = vpack.c.bf16 %v1730, %v1722
        %v2451 = vpack.c.bf16 %v1739, %v1731
        %v2452 = vpack.c.bf16 %v1740, %v1732
        %v2453 = vpack.c.bf16 %v1741, %v1733
        %v2454 = vpack.c.bf16 %v1742, %v1734
        %v2455 = vpack.c.bf16 %v1743, %v1735
        %v2456 = vpack.c.bf16 %v1744, %v1736
        %v2457 = vpack.c.bf16 %v1745, %v1737
        %v2458 = vpack.c.bf16 %v1746, %v1738
        %v2459 = vpack.c.bf16 %v1755, %v1747
        %v2460 = vpack.c.bf16 %v1756, %v1748
        %v2461 = vpack.c.bf16 %v1757, %v1749
        %v2462 = vpack.c.bf16 %v1758, %v1750
        %v2463 = vpack.c.bf16 %v1759, %v1751
        %v2464 = vpack.c.bf16 %v1760, %v1752
        %v2465 = vpack.c.bf16 %v1761, %v1753
        %v2466 = vpack.c.bf16 %v1762, %v1754
        %v2467 = vpack.c.bf16 %v1771, %v1763
        %v2468 = vpack.c.bf16 %v1772, %v1764
        %v2469 = vpack.c.bf16 %v1773, %v1765
        %v2470 = vpack.c.bf16 %v1774, %v1766
        %v2471 = vpack.c.bf16 %v1775, %v1767
        %v2472 = vpack.c.bf16 %v1776, %v1768
        %v2473 = vpack.c.bf16 %v1777, %v1769
        %v2474 = vpack.c.bf16 %v1778, %v1770
        %v2475 = vpack.c.bf16 %v1787, %v1779
        %v2476 = vpack.c.bf16 %v1788, %v1780
        %v2477 = vpack.c.bf16 %v1789, %v1781
        %v2478 = vpack.c.bf16 %v1790, %v1782
        %v2479 = vpack.c.bf16 %v1791, %v1783
        %v2480 = vpack.c.bf16 %v1792, %v1784
        %v2481 = vpack.c.bf16 %v1793, %v1785
        %v2482 = vpack.c.bf16 %v1794, %v1786
        %v2483 = vpack.c.bf16 %v1803, %v1795
        %v2484 = vpack.c.bf16 %v1804, %v1796
        %v2485 = vpack.c.bf16 %v1805, %v1797
        %v2486 = vpack.c.bf16 %v1806, %v1798
        %v2487 = vpack.c.bf16 %v1807, %v1799
        %v2488 = vpack.c.bf16 %v1808, %v1800
        %v2489 = vpack.c.bf16 %v1809, %v1801
        %v2490 = vpack.c.bf16 %v1810, %v1802
        %v2491 = vpack.c.bf16 %v1819, %v1811
        %v2492 = vpack.c.bf16 %v1820, %v1812
        %v2493 = vpack.c.bf16 %v1821, %v1813
        %v2494 = vpack.c.bf16 %v1822, %v1814
        %v2495 = vpack.c.bf16 %v1823, %v1815
        %v2496 = vpack.c.bf16 %v1824, %v1816
        %v2497 = vpack.c.bf16 %v1825, %v1817
        %v2498 = vpack.c.bf16 %v1826, %v1818
        %v2499 = vpack.c.bf16 %v1835, %v1827
        %v2500 = vpack.c.bf16 %v1836, %v1828
        %v2501 = vpack.c.bf16 %v1837, %v1829
        %v2502 = vpack.c.bf16 %v1838, %v1830
        %v2503 = vpack.c.bf16 %v1839, %v1831
        %v2504 = vpack.c.bf16 %v1840, %v1832
        %v2505 = vpack.c.bf16 %v1841, %v1833
        %v2506 = vpack.c.bf16 %v1842, %v1834
        %v2507 = vpack.c.bf16 %v1851, %v1843
        %v2508 = vpack.c.bf16 %v1852, %v1844
        %v2509 = vpack.c.bf16 %v1853, %v1845
        %v2510 = vpack.c.bf16 %v1854, %v1846
        %v2511 = vpack.c.bf16 %v1855, %v1847
        %v2512 = vpack.c.bf16 %v1856, %v1848
        %v2513 = vpack.c.bf16 %v1857, %v1849
        %v2514 = vpack.c.bf16 %v1858, %v1850
        %v2515 = vpack.c.bf16 %v1867, %v1859
        %v2516 = vpack.c.bf16 %v1868, %v1860
        %v2517 = vpack.c.bf16 %v1869, %v1861
        %v2518 = vpack.c.bf16 %v1870, %v1862
        %v2519 = vpack.c.bf16 %v1871, %v1863
        %v2520 = vpack.c.bf16 %v1872, %v1864
        %v2521 = vpack.c.bf16 %v1873, %v1865
        %v2522 = vpack.c.bf16 %v1874, %v1866
        %v2523 = vpack.c.bf16 %v1883, %v1875
        %v2524 = vpack.c.bf16 %v1884, %v1876
        %v2525 = vpack.c.bf16 %v1885, %v1877
        %v2526 = vpack.c.bf16 %v1886, %v1878
        %v2527 = vpack.c.bf16 %v1887, %v1879
        %v2528 = vpack.c.bf16 %v1888, %v1880
        %v2529 = vpack.c.bf16 %v1889, %v1881
        %v2530 = vpack.c.bf16 %v1890, %v1882
        %v2531 = vpack.c.bf16 %v1899, %v1891
        %v2532 = vpack.c.bf16 %v1900, %v1892
        %v2533 = vpack.c.bf16 %v1901, %v1893
        %v2534 = vpack.c.bf16 %v1902, %v1894
        %v2535 = vpack.c.bf16 %v1903, %v1895
        %v2536 = vpack.c.bf16 %v1904, %v1896
        %v2537 = vpack.c.bf16 %v1905, %v1897
        %v2538 = vpack.c.bf16 %v1906, %v1898
        %v2539 = vpack.c.bf16 %v1915, %v1907
        %v2540 = vpack.c.bf16 %v1916, %v1908
        %v2541 = vpack.c.bf16 %v1917, %v1909
        %v2542 = vpack.c.bf16 %v1918, %v1910
        %v2543 = vpack.c.bf16 %v1919, %v1911
        %v2544 = vpack.c.bf16 %v1920, %v1912
        %v2545 = vpack.c.bf16 %v1921, %v1913
        %v2546 = vpack.c.bf16 %v1922, %v1914
        %v2547 = vpack.c.bf16 %v1931, %v1923
        %v2548 = vpack.c.bf16 %v1932, %v1924
        %v2549 = vpack.c.bf16 %v1933, %v1925
        %v2550 = vpack.c.bf16 %v1934, %v1926
        %v2551 = vpack.c.bf16 %v1935, %v1927
        %v2552 = vpack.c.bf16 %v1936, %v1928
        %v2553 = vpack.c.bf16 %v1937, %v1929
        %v2554 = vpack.c.bf16 %v1938, %v1930
        %v2555 = vpack.c.bf16 %v1947, %v1939
        %v2556 = vpack.c.bf16 %v1948, %v1940
        %v2557 = vpack.c.bf16 %v1949, %v1941
        %v2558 = vpack.c.bf16 %v1950, %v1942
        %v2559 = vpack.c.bf16 %v1951, %v1943
        %v2560 = vpack.c.bf16 %v1952, %v1944
        %v2561 = vpack.c.bf16 %v1953, %v1945
        %v2562 = vpack.c.bf16 %v1954, %v1946
        %v2563 = vpack.c.bf16 %v1963, %v1955
        %v2564 = vpack.c.bf16 %v1964, %v1956
        %v2565 = vpack.c.bf16 %v1965, %v1957
        %v2566 = vpack.c.bf16 %v1966, %v1958
        %v2567 = vpack.c.bf16 %v1967, %v1959
        %v2568 = vpack.c.bf16 %v1968, %v1960
        %v2569 = vpack.c.bf16 %v1969, %v1961
        %v2570 = vpack.c.bf16 %v1970, %v1962
        %v2571 = vpack.c.bf16 %v1979, %v1971
        %v2572 = vpack.c.bf16 %v1980, %v1972
        %v2573 = vpack.c.bf16 %v1981, %v1973
        %v2574 = vpack.c.bf16 %v1982, %v1974
        %v2575 = vpack.c.bf16 %v1983, %v1975
        %v2576 = vpack.c.bf16 %v1984, %v1976
        %v2577 = vpack.c.bf16 %v1985, %v1977
        %v2578 = vpack.c.bf16 %v1986, %v1978
        %v2579 = vpack.c.bf16 %v1995, %v1987
        %v2580 = vpack.c.bf16 %v1996, %v1988
        %v2581 = vpack.c.bf16 %v1997, %v1989
        %v2582 = vpack.c.bf16 %v1998, %v1990
        %v2583 = vpack.c.bf16 %v1999, %v1991
        %v2584 = vpack.c.bf16 %v2000, %v1992
        %v2585 = vpack.c.bf16 %v2001, %v1993
        %v2586 = vpack.c.bf16 %v2002, %v1994
        %v2587 = vpack.c.bf16 %v2011, %v2003
        %v2588 = vpack.c.bf16 %v2012, %v2004
        %v2589 = vpack.c.bf16 %v2013, %v2005
        %v2590 = vpack.c.bf16 %v2014, %v2006
        %v2591 = vpack.c.bf16 %v2015, %v2007
        %v2592 = vpack.c.bf16 %v2016, %v2008
        %v2593 = vpack.c.bf16 %v2017, %v2009
        %v2594 = vpack.c.bf16 %v2018, %v2010
        %v2595 = vpack.c.bf16 %v2027, %v2019
        %v2596 = vpack.c.bf16 %v2028, %v2020
        %v2597 = vpack.c.bf16 %v2029, %v2021
        %v2598 = vpack.c.bf16 %v2030, %v2022
        %v2599 = vpack.c.bf16 %v2031, %v2023
        %v2600 = vpack.c.bf16 %v2032, %v2024
        %v2601 = vpack.c.bf16 %v2033, %v2025
        %v2602 = vpack.c.bf16 %v2034, %v2026
        %v2603 = vpack.c.bf16 %v2043, %v2035
        %v2604 = vpack.c.bf16 %v2044, %v2036
        %v2605 = vpack.c.bf16 %v2045, %v2037
        %v2606 = vpack.c.bf16 %v2046, %v2038
        %v2607 = vpack.c.bf16 %v2047, %v2039
        %v2608 = vpack.c.bf16 %v2048, %v2040
        %v2609 = vpack.c.bf16 %v2049, %v2041
        %v2610 = vpack.c.bf16 %v2050, %v2042
        %v2611 = vpack.c.bf16 %v2059, %v2051
        %v2612 = vpack.c.bf16 %v2060, %v2052
        %v2613 = vpack.c.bf16 %v2061, %v2053
        %v2614 = vpack.c.bf16 %v2062, %v2054
        %v2615 = vpack.c.bf16 %v2063, %v2055
        %v2616 = vpack.c.bf16 %v2064, %v2056
        %v2617 = vpack.c.bf16 %v2065, %v2057
        %v2618 = vpack.c.bf16 %v2066, %v2058
        %v2619 = vpack.c.bf16 %v2075, %v2067
        %v2620 = vpack.c.bf16 %v2076, %v2068
        %v2621 = vpack.c.bf16 %v2077, %v2069
        %v2622 = vpack.c.bf16 %v2078, %v2070
        %v2623 = vpack.c.bf16 %v2079, %v2071
        %v2624 = vpack.c.bf16 %v2080, %v2072
        %v2625 = vpack.c.bf16 %v2081, %v2073
        %v2626 = vpack.c.bf16 %v2082, %v2074
        %v2627 = vpack.c.bf16 %v2091, %v2083
        %v2628 = vpack.c.bf16 %v2092, %v2084
        %v2629 = vpack.c.bf16 %v2093, %v2085
        %v2630 = vpack.c.bf16 %v2094, %v2086
        %v2631 = vpack.c.bf16 %v2095, %v2087
        %v2632 = vpack.c.bf16 %v2096, %v2088
        %v2633 = vpack.c.bf16 %v2097, %v2089
        %v2634 = vpack.c.bf16 %v2098, %v2090
        %v2635 = vpack.c.bf16 %v2107, %v2099
        %v2636 = vpack.c.bf16 %v2108, %v2100
        %v2637 = vpack.c.bf16 %v2109, %v2101
        %v2638 = vpack.c.bf16 %v2110, %v2102
        %v2639 = vpack.c.bf16 %v2111, %v2103
        %v2640 = vpack.c.bf16 %v2112, %v2104
        %v2641 = vpack.c.bf16 %v2113, %v2105
        %v2642 = vpack.c.bf16 %v2114, %v2106
        %v2643 = vpack.c.bf16 %v2123, %v2115
        %v2644 = vpack.c.bf16 %v2124, %v2116
        %v2645 = vpack.c.bf16 %v2125, %v2117
        %v2646 = vpack.c.bf16 %v2126, %v2118
        %v2647 = vpack.c.bf16 %v2127, %v2119
        %v2648 = vpack.c.bf16 %v2128, %v2120
        %v2649 = vpack.c.bf16 %v2129, %v2121
        %v2650 = vpack.c.bf16 %v2130, %v2122
        %v2651 = vpack.c.bf16 %v2139, %v2131
        %v2652 = vpack.c.bf16 %v2140, %v2132
        %v2653 = vpack.c.bf16 %v2141, %v2133
        %v2654 = vpack.c.bf16 %v2142, %v2134
        %v2655 = vpack.c.bf16 %v2143, %v2135
        %v2656 = vpack.c.bf16 %v2144, %v2136
        %v2657 = vpack.c.bf16 %v2145, %v2137
        %v2658 = vpack.c.bf16 %v2146, %v2138
        %v2659 = vpack.c.bf16 %v2155, %v2147
        %v2660 = vpack.c.bf16 %v2156, %v2148
        %v2661 = vpack.c.bf16 %v2157, %v2149
        %v2662 = vpack.c.bf16 %v2158, %v2150
        %v2663 = vpack.c.bf16 %v2159, %v2151
        %v2664 = vpack.c.bf16 %v2160, %v2152
        %v2665 = vpack.c.bf16 %v2161, %v2153
        %v2666 = vpack.c.bf16 %v2162, %v2154
        %v2667 = vpack.c.bf16 %v2171, %v2163
        %v2668 = vpack.c.bf16 %v2172, %v2164
        %v2669 = vpack.c.bf16 %v2173, %v2165
        %v2670 = vpack.c.bf16 %v2174, %v2166
        %v2671 = vpack.c.bf16 %v2175, %v2167
        %v2672 = vpack.c.bf16 %v2176, %v2168
        %v2673 = vpack.c.bf16 %v2177, %v2169
        %v2674 = vpack.c.bf16 %v2178, %v2170
        %v2675 = vpack.c.bf16 %v2187, %v2179
        %v2676 = vpack.c.bf16 %v2188, %v2180
        %v2677 = vpack.c.bf16 %v2189, %v2181
        %v2678 = vpack.c.bf16 %v2190, %v2182
        %v2679 = vpack.c.bf16 %v2191, %v2183
        %v2680 = vpack.c.bf16 %v2192, %v2184
        %v2681 = vpack.c.bf16 %v2193, %v2185
        %v2682 = vpack.c.bf16 %v2194, %v2186
        %v2683 = vpack.c.bf16 %v2203, %v2195
        %v2684 = vpack.c.bf16 %v2204, %v2196
        %v2685 = vpack.c.bf16 %v2205, %v2197
        %v2686 = vpack.c.bf16 %v2206, %v2198
        %v2687 = vpack.c.bf16 %v2207, %v2199
        %v2688 = vpack.c.bf16 %v2208, %v2200
        %v2689 = vpack.c.bf16 %v2209, %v2201
        %v2690 = vpack.c.bf16 %v2210, %v2202
        %v2691 = vpack.c.bf16 %v2219, %v2211
        %v2692 = vpack.c.bf16 %v2220, %v2212
        %v2693 = vpack.c.bf16 %v2221, %v2213
        %v2694 = vpack.c.bf16 %v2222, %v2214
        %v2695 = vpack.c.bf16 %v2223, %v2215
        %v2696 = vpack.c.bf16 %v2224, %v2216
        %v2697 = vpack.c.bf16 %v2225, %v2217
        %v2698 = vpack.c.bf16 %v2226, %v2218
        %v2699 = vpack.c.bf16 %v2235, %v2227
        %v2700 = vpack.c.bf16 %v2236, %v2228
        %v2701 = vpack.c.bf16 %v2237, %v2229
        %v2702 = vpack.c.bf16 %v2238, %v2230
        %v2703 = vpack.c.bf16 %v2239, %v2231
        %v2704 = vpack.c.bf16 %v2240, %v2232
        %v2705 = vpack.c.bf16 %v2241, %v2233
        %v2706 = vpack.c.bf16 %v2242, %v2234
        %v2707 = vpack.c.bf16 %v2251, %v2243
        %v2708 = vpack.c.bf16 %v2252, %v2244
        %v2709 = vpack.c.bf16 %v2253, %v2245
        %v2710 = vpack.c.bf16 %v2254, %v2246
        %v2711 = vpack.c.bf16 %v2255, %v2247
        %v2712 = vpack.c.bf16 %v2256, %v2248
        %v2713 = vpack.c.bf16 %v2257, %v2249
        %v2714 = vpack.c.bf16 %v2258, %v2250
        %v2715 = vpack.c.bf16 %v2267, %v2259
        %v2716 = vpack.c.bf16 %v2268, %v2260
        %v2717 = vpack.c.bf16 %v2269, %v2261
        %v2718 = vpack.c.bf16 %v2270, %v2262
        %v2719 = vpack.c.bf16 %v2271, %v2263
        %v2720 = vpack.c.bf16 %v2272, %v2264
        %v2721 = vpack.c.bf16 %v2273, %v2265
        %v2722 = vpack.c.bf16 %v2274, %v2266
        %v2723 = vpack.c.bf16 %v2283, %v2275
        %v2724 = vpack.c.bf16 %v2284, %v2276
        %v2725 = vpack.c.bf16 %v2285, %v2277
        %v2726 = vpack.c.bf16 %v2286, %v2278
        %v2727 = vpack.c.bf16 %v2287, %v2279
        %v2728 = vpack.c.bf16 %v2288, %v2280
        %v2729 = vpack.c.bf16 %v2289, %v2281
        %v2730 = vpack.c.bf16 %v2290, %v2282
        %v2731 = vpack.c.bf16 %v2299, %v2291
        %v2732 = vpack.c.bf16 %v2300, %v2292
        %v2733 = vpack.c.bf16 %v2301, %v2293
        %v2734 = vpack.c.bf16 %v2302, %v2294
        %v2735 = vpack.c.bf16 %v2303, %v2295
        %v2736 = vpack.c.bf16 %v2304, %v2296
        %v2737 = vpack.c.bf16 %v2305, %v2297
        %v2738 = vpack.c.bf16 %v2306, %v2298
        %v2739 = vpack.c.bf16 %v2315, %v2307
        %v2740 = vpack.c.bf16 %v2316, %v2308
        %v2741 = vpack.c.bf16 %v2317, %v2309
        %v2742 = vpack.c.bf16 %v2318, %v2310
        %v2743 = vpack.c.bf16 %v2319, %v2311
        %v2744 = vpack.c.bf16 %v2320, %v2312
        %v2745 = vpack.c.bf16 %v2321, %v2313
        %v2746 = vpack.c.bf16 %v2322, %v2314
        %v2747 = vpack.c.bf16 %v2331, %v2323
        %v2748 = vpack.c.bf16 %v2332, %v2324
        %v2749 = vpack.c.bf16 %v2333, %v2325
        %v2750 = vpack.c.bf16 %v2334, %v2326
        %v2751 = vpack.c.bf16 %v2335, %v2327
        %v2752 = vpack.c.bf16 %v2336, %v2328
        %v2753 = vpack.c.bf16 %v2337, %v2329
        %v2754 = vpack.c.bf16 %v2338, %v2330
        %v2755 = vpack.c.bf16 %v2347, %v2339
        %v2756 = vpack.c.bf16 %v2348, %v2340
        %v2757 = vpack.c.bf16 %v2349, %v2341
        %v2758 = vpack.c.bf16 %v2350, %v2342
        %v2759 = vpack.c.bf16 %v2351, %v2343
        %v2760 = vpack.c.bf16 %v2352, %v2344
        %v2761 = vpack.c.bf16 %v2353, %v2345
        %v2762 = vpack.c.bf16 %v2354, %v2346
        %v2763 = vpack.c.bf16 %v2363, %v2355
        %v2764 = vpack.c.bf16 %v2364, %v2356
        %v2765 = vpack.c.bf16 %v2365, %v2357
        %v2766 = vpack.c.bf16 %v2366, %v2358
        %v2767 = vpack.c.bf16 %v2367, %v2359
        %v2768 = vpack.c.bf16 %v2368, %v2360
        %v2769 = vpack.c.bf16 %v2369, %v2361
        %v2770 = vpack.c.bf16 %v2370, %v2362
        %v2771 = vpack.c.bf16 %v2379, %v2371
        %v2772 = vpack.c.bf16 %v2380, %v2372
        %v2773 = vpack.c.bf16 %v2381, %v2373
        %v2774 = vpack.c.bf16 %v2382, %v2374
        %v2775 = vpack.c.bf16 %v2383, %v2375
        %v2776 = vpack.c.bf16 %v2384, %v2376
        %v2777 = vpack.c.bf16 %v2385, %v2377
        %v2778 = vpack.c.bf16 %v2386, %v2378
        %v2779 = vpack.c.bf16 %v2395, %v2387
        %v2780 = vpack.c.bf16 %v2396, %v2388
        %v2781 = vpack.c.bf16 %v2397, %v2389
        %v2782 = vpack.c.bf16 %v2398, %v2390
        %v2783 = vpack.c.bf16 %v2399, %v2391
        %v2784 = vpack.c.bf16 %v2400, %v2392
        %v2785 = vpack.c.bf16 %v2401, %v2393
        %v2786 = vpack.c.bf16 %v2402, %v2394
        %v2787 = vld [vmem:[%s2] sm:$0xff]
        %v2788 = vld [vmem:[%s2 + $0x8] sm:$0xff]
        %v2789 = vld [vmem:[%s2 + $0x10] sm:$0xff]
        %v2790 = vld [vmem:[%s2 + $0x18] sm:$0xff]
        %v2791 = vld [vmem:[%s2 + $0x20] sm:$0xff]
        %v2792 = vld [vmem:[%s2 + $0x28] sm:$0xff]
        %v2793 = vld [vmem:[%s2 + $0x30] sm:$0xff]
        %v2794 = vld [vmem:[%s2 + $0x38] sm:$0xff]
        %v2795 = vld [vmem:[%s2 + $0x40] sm:$0xff]
        %v2796 = vld [vmem:[%s2 + $0x48] sm:$0xff]
        %v2797 = vld [vmem:[%s2 + $0x50] sm:$0xff]
        %v2798 = vld [vmem:[%s2 + $0x58] sm:$0xff]
        %v2799 = vld [vmem:[%s2 + $0x60] sm:$0xff]
        %v2800 = vld [vmem:[%s2 + $0x68] sm:$0xff]
        %v2801 = vld [vmem:[%s2 + $0x70] sm:$0xff]
        %v2802 = vld [vmem:[%s2 + $0x78] sm:$0xff]
        %v2803 = vld [vmem:[%s2 + $0x80] sm:$0xff]
        %v2804 = vld [vmem:[%s2 + $0x88] sm:$0xff]
        %v2805 = vld [vmem:[%s2 + $0x90] sm:$0xff]
        %v2806 = vld [vmem:[%s2 + $0x98] sm:$0xff]
        %v2807 = vld [vmem:[%s2 + $0xa0] sm:$0xff]
        %v2808 = vld [vmem:[%s2 + $0xa8] sm:$0xff]
        %v2809 = vld [vmem:[%s2 + $0xb0] sm:$0xff]
        %v2810 = vld [vmem:[%s2 + $0xb8] sm:$0xff]
        %v2811 = vld [vmem:[%s2 + $0xc0] sm:$0xff]
        %v2812 = vld [vmem:[%s2 + $0xc8] sm:$0xff]
        %v2813 = vld [vmem:[%s2 + $0xd0] sm:$0xff]
        %v2814 = vld [vmem:[%s2 + $0xd8] sm:$0xff]
        %v2815 = vld [vmem:[%s2 + $0xe0] sm:$0xff]
        %v2816 = vld [vmem:[%s2 + $0xe8] sm:$0xff]
        %v2817 = vld [vmem:[%s2 + $0xf0] sm:$0xff]
        %v2818 = vld [vmem:[%s2 + $0xf8] sm:$0xff]
        %v2819 = vld [vmem:[%s2 + $0x100] sm:$0xff]
        %v2820 = vld [vmem:[%s2 + $0x108] sm:$0xff]
        %v2821 = vld [vmem:[%s2 + $0x110] sm:$0xff]
        %v2822 = vld [vmem:[%s2 + $0x118] sm:$0xff]
        %v2823 = vld [vmem:[%s2 + $0x120] sm:$0xff]
        %v2824 = vld [vmem:[%s2 + $0x128] sm:$0xff]
        %v2825 = vld [vmem:[%s2 + $0x130] sm:$0xff]
        %v2826 = vld [vmem:[%s2 + $0x138] sm:$0xff]
        %v2827 = vld [vmem:[%s2 + $0x140] sm:$0xff]
        %v2828 = vld [vmem:[%s2 + $0x148] sm:$0xff]
        %v2829 = vld [vmem:[%s2 + $0x150] sm:$0xff]
        %v2830 = vld [vmem:[%s2 + $0x158] sm:$0xff]
        %v2831 = vld [vmem:[%s2 + $0x160] sm:$0xff]
        %v2832 = vld [vmem:[%s2 + $0x168] sm:$0xff]
        %v2833 = vld [vmem:[%s2 + $0x170] sm:$0xff]
        %v2834 = vld [vmem:[%s2 + $0x178] sm:$0xff]
        %v2835 = vld [vmem:[%s3] sm:$0xff]
        %v2836 = vld [vmem:[%s3 + $0x8] sm:$0xff]
        %v2837 = vld [vmem:[%s3 + $0x10] sm:$0xff]
        %v2838 = vld [vmem:[%s3 + $0x18] sm:$0xff]
        %v2839 = vld [vmem:[%s3 + $0x20] sm:$0xff]
        %v2840 = vld [vmem:[%s3 + $0x28] sm:$0xff]
        %v2841 = vld [vmem:[%s3 + $0x30] sm:$0xff]
        %v2842 = vld [vmem:[%s3 + $0x38] sm:$0xff]
        %v2843 = vld [vmem:[%s3 + $0x40] sm:$0xff]
        %v2844 = vld [vmem:[%s3 + $0x48] sm:$0xff]
        %v2845 = vld [vmem:[%s3 + $0x50] sm:$0xff]
        %v2846 = vld [vmem:[%s3 + $0x58] sm:$0xff]
        %v2847 = vld [vmem:[%s3 + $0x60] sm:$0xff]
        %v2848 = vld [vmem:[%s3 + $0x68] sm:$0xff]
        %v2849 = vld [vmem:[%s3 + $0x70] sm:$0xff]
        %v2850 = vld [vmem:[%s3 + $0x78] sm:$0xff]
        %2852 = vset.pattern.permute.xlu0 0
        %2853 = vperm.xlu0 %2852, %v2835
        %v2854 = vpop.permute.xlu0 %2853
        %2857 = vset.pattern.permute.xlu0 0
        %2858 = vperm.xlu0 %2857, %v2836
        %v2859 = vpop.permute.xlu0 %2858
        %2862 = vset.pattern.permute.xlu0 0
        %2863 = vperm.xlu0 %2862, %v2837
        %v2864 = vpop.permute.xlu0 %2863
        %2867 = vset.pattern.permute.xlu0 0
        %2868 = vperm.xlu0 %2867, %v2838
        %v2869 = vpop.permute.xlu0 %2868
        %2872 = vset.pattern.permute.xlu0 0
        %2873 = vperm.xlu0 %2872, %v2839
        %v2874 = vpop.permute.xlu0 %2873
        %2877 = vset.pattern.permute.xlu0 0
        %2878 = vperm.xlu0 %2877, %v2840
        %v2879 = vpop.permute.xlu0 %2878
        %2882 = vset.pattern.permute.xlu0 0
        %2883 = vperm.xlu0 %2882, %v2841
        %v2884 = vpop.permute.xlu0 %2883
        %2887 = vset.pattern.permute.xlu0 0
        %2888 = vperm.xlu0 %2887, %v2842
        %v2889 = vpop.permute.xlu0 %2888
        %2892 = vset.pattern.permute.xlu0 0
        %2893 = vperm.xlu0 %2892, %v2843
        %v2894 = vpop.permute.xlu0 %2893
        %2897 = vset.pattern.permute.xlu0 0
        %2898 = vperm.xlu0 %2897, %v2844
        %v2899 = vpop.permute.xlu0 %2898
        %2902 = vset.pattern.permute.xlu0 0
        %2903 = vperm.xlu0 %2902, %v2845
        %v2904 = vpop.permute.xlu0 %2903
        %2907 = vset.pattern.permute.xlu0 0
        %2908 = vperm.xlu0 %2907, %v2846
        %v2909 = vpop.permute.xlu0 %2908
        %2912 = vset.pattern.permute.xlu0 0
        %2913 = vperm.xlu0 %2912, %v2847
        %v2914 = vpop.permute.xlu0 %2913
        %2917 = vset.pattern.permute.xlu0 0
        %2918 = vperm.xlu0 %2917, %v2848
        %v2919 = vpop.permute.xlu0 %2918
        %2922 = vset.pattern.permute.xlu0 0
        %2923 = vperm.xlu0 %2922, %v2849
        %v2924 = vpop.permute.xlu0 %2923
        %2927 = vset.pattern.permute.xlu0 0
        %2928 = vperm.xlu0 %2927, %v2850
        %v2929 = vpop.permute.xlu0 %2928
        %v2979 = vunpack.c.l.b16 %v2787
        %v2980 = vunpack.c.h.b16 %v2787
        %v2981 = vunpack.c.l.b16 %v2788
        %v2982 = vunpack.c.h.b16 %v2788
        %v2983 = vunpack.c.l.b16 %v2789
        %v2984 = vunpack.c.h.b16 %v2789
        %v2985 = vunpack.c.l.b16 %v2790
        %v2986 = vunpack.c.h.b16 %v2790
        %v2987 = vunpack.c.l.b16 %v2791
        %v2988 = vunpack.c.h.b16 %v2791
        %v2989 = vunpack.c.l.b16 %v2792
        %v2990 = vunpack.c.h.b16 %v2792
        %v2991 = vunpack.c.l.b16 %v2793
        %v2992 = vunpack.c.h.b16 %v2793
        %v2993 = vunpack.c.l.b16 %v2794
        %v2994 = vunpack.c.h.b16 %v2794
        %v2995 = vunpack.c.l.b16 %v2795
        %v2996 = vunpack.c.h.b16 %v2795
        %v2997 = vunpack.c.l.b16 %v2796
        %v2998 = vunpack.c.h.b16 %v2796
        %v2999 = vunpack.c.l.b16 %v2797
        %v3000 = vunpack.c.h.b16 %v2797
        %v3001 = vunpack.c.l.b16 %v2798
        %v3002 = vunpack.c.h.b16 %v2798
        %v3003 = vunpack.c.l.b16 %v2799
        %v3004 = vunpack.c.h.b16 %v2799
        %v3005 = vunpack.c.l.b16 %v2800
        %v3006 = vunpack.c.h.b16 %v2800
        %v3007 = vunpack.c.l.b16 %v2801
        %v3008 = vunpack.c.h.b16 %v2801
        %v3009 = vunpack.c.l.b16 %v2802
        %v3010 = vunpack.c.h.b16 %v2802
        %v3011 = vunpack.c.l.b16 %v2803
        %v3012 = vunpack.c.h.b16 %v2803
        %v3013 = vunpack.c.l.b16 %v2804
        %v3014 = vunpack.c.h.b16 %v2804
        %v3015 = vunpack.c.l.b16 %v2805
        %v3016 = vunpack.c.h.b16 %v2805
        %v3017 = vunpack.c.l.b16 %v2806
        %v3018 = vunpack.c.h.b16 %v2806
        %v3019 = vunpack.c.l.b16 %v2807
        %v3020 = vunpack.c.h.b16 %v2807
        %v3021 = vunpack.c.l.b16 %v2808
        %v3022 = vunpack.c.h.b16 %v2808
        %v3023 = vunpack.c.l.b16 %v2809
        %v3024 = vunpack.c.h.b16 %v2809
        %v3025 = vunpack.c.l.b16 %v2810
        %v3026 = vunpack.c.h.b16 %v2810
        %v3027 = vunpack.c.l.b16 %v2811
        %v3028 = vunpack.c.h.b16 %v2811
        %v3029 = vunpack.c.l.b16 %v2812
        %v3030 = vunpack.c.h.b16 %v2812
        %v3031 = vunpack.c.l.b16 %v2813
        %v3032 = vunpack.c.h.b16 %v2813
        %v3033 = vunpack.c.l.b16 %v2814
        %v3034 = vunpack.c.h.b16 %v2814
        %v3035 = vunpack.c.l.b16 %v2815
        %v3036 = vunpack.c.h.b16 %v2815
        %v3037 = vunpack.c.l.b16 %v2816
        %v3038 = vunpack.c.h.b16 %v2816
        %v3039 = vunpack.c.l.b16 %v2817
        %v3040 = vunpack.c.h.b16 %v2817
        %v3041 = vunpack.c.l.b16 %v2818
        %v3042 = vunpack.c.h.b16 %v2818
        %v3043 = vunpack.c.l.b16 %v2819
        %v3044 = vunpack.c.h.b16 %v2819
        %v3045 = vunpack.c.l.b16 %v2820
        %v3046 = vunpack.c.h.b16 %v2820
        %v3047 = vunpack.c.l.b16 %v2821
        %v3048 = vunpack.c.h.b16 %v2821
        %v3049 = vunpack.c.l.b16 %v2822
        %v3050 = vunpack.c.h.b16 %v2822
        %v3051 = vunpack.c.l.b16 %v2823
        %v3052 = vunpack.c.h.b16 %v2823
        %v3053 = vunpack.c.l.b16 %v2824
        %v3054 = vunpack.c.h.b16 %v2824
        %v3055 = vunpack.c.l.b16 %v2825
        %v3056 = vunpack.c.h.b16 %v2825
        %v3057 = vunpack.c.l.b16 %v2826
        %v3058 = vunpack.c.h.b16 %v2826
        %v3059 = vunpack.c.l.b16 %v2827
        %v3060 = vunpack.c.h.b16 %v2827
        %v3061 = vunpack.c.l.b16 %v2828
        %v3062 = vunpack.c.h.b16 %v2828
        %v3063 = vunpack.c.l.b16 %v2829
        %v3064 = vunpack.c.h.b16 %v2829
        %v3065 = vunpack.c.l.b16 %v2830
        %v3066 = vunpack.c.h.b16 %v2830
        %v3067 = vunpack.c.l.b16 %v2831
        %v3068 = vunpack.c.h.b16 %v2831
        %v3069 = vunpack.c.l.b16 %v2832
        %v3070 = vunpack.c.h.b16 %v2832
        %v3071 = vunpack.c.l.b16 %v2833
        %v3072 = vunpack.c.h.b16 %v2833
        %v3073 = vunpack.c.l.b16 %v2834
        %v3074 = vunpack.c.h.b16 %v2834
        %v3075 = vpack.c.b16 %v2985, %v2979
        %v3076 = vpack.c.b16 %v2986, %v2980
        %v3077 = vpack.c.b16 %v2987, %v2981
        %v3078 = vpack.c.b16 %v2988, %v2982
        %v3079 = vpack.c.b16 %v2989, %v2983
        %v3080 = vpack.c.b16 %v2990, %v2984
        %v3081 = vpack.c.b16 %v2997, %v2991
        %v3082 = vpack.c.b16 %v2998, %v2992
        %v3083 = vpack.c.b16 %v2999, %v2993
        %v3084 = vpack.c.b16 %v3000, %v2994
        %v3085 = vpack.c.b16 %v3001, %v2995
        %v3086 = vpack.c.b16 %v3002, %v2996
        %v3087 = vpack.c.b16 %v3009, %v3003
        %v3088 = vpack.c.b16 %v3010, %v3004
        %v3089 = vpack.c.b16 %v3011, %v3005
        %v3090 = vpack.c.b16 %v3012, %v3006
        %v3091 = vpack.c.b16 %v3013, %v3007
        %v3092 = vpack.c.b16 %v3014, %v3008
        %v3093 = vpack.c.b16 %v3021, %v3015
        %v3094 = vpack.c.b16 %v3022, %v3016
        %v3095 = vpack.c.b16 %v3023, %v3017
        %v3096 = vpack.c.b16 %v3024, %v3018
        %v3097 = vpack.c.b16 %v3025, %v3019
        %v3098 = vpack.c.b16 %v3026, %v3020
        %v3099 = vpack.c.b16 %v3033, %v3027
        %v3100 = vpack.c.b16 %v3034, %v3028
        %v3101 = vpack.c.b16 %v3035, %v3029
        %v3102 = vpack.c.b16 %v3036, %v3030
        %v3103 = vpack.c.b16 %v3037, %v3031
        %v3104 = vpack.c.b16 %v3038, %v3032
        %v3105 = vpack.c.b16 %v3045, %v3039
        %v3106 = vpack.c.b16 %v3046, %v3040
        %v3107 = vpack.c.b16 %v3047, %v3041
        %v3108 = vpack.c.b16 %v3048, %v3042
        %v3109 = vpack.c.b16 %v3049, %v3043
        %v3110 = vpack.c.b16 %v3050, %v3044
        %v3111 = vpack.c.b16 %v3057, %v3051
        %v3112 = vpack.c.b16 %v3058, %v3052
        %v3113 = vpack.c.b16 %v3059, %v3053
        %v3114 = vpack.c.b16 %v3060, %v3054
        %v3115 = vpack.c.b16 %v3061, %v3055
        %v3116 = vpack.c.b16 %v3062, %v3056
        %v3117 = vpack.c.b16 %v3069, %v3063
        %v3118 = vpack.c.b16 %v3070, %v3064
        %v3119 = vpack.c.b16 %v3071, %v3065
        %v3120 = vpack.c.b16 %v3072, %v3066
        %v3121 = vpack.c.b16 %v3073, %v3067
        %v3122 = vpack.c.b16 %v3074, %v3068
        %3171 = vmatprep.subr.bf16.mxu0 %v2404
        %3172 = vmatpush1.bf16.msra.mxu0 %v2403
        %3173 = vmatprep.subr.bf16.mxu0 %v2412
        %3174 = vmatpush1.bf16.msra.mxu0 %v2411
        %3175 = vmatprep.subr.bf16.mxu0 %v2420
        %3176 = vmatpush1.bf16.msra.mxu0 %v2419
        %3177 = vmatprep.subr.bf16.mxu0 %v2428
        %3178 = vmatpush1.bf16.msra.mxu0 %v2427
        %3179 = vmatprep.subr.bf16.mxu0 %v2436
        %3180 = vmatpush1.bf16.msra.mxu0 %v2435
        %3181 = vmatprep.subr.bf16.mxu0 %v2444
        %3182 = vmatpush1.bf16.msra.mxu0 %v2443
        %3183 = vmatprep.subr.bf16.mxu0 %v2452
        %3184 = vmatpush1.bf16.msra.mxu0 %v2451
        %3185 = vmatprep.subr.bf16.mxu0 %v2460
        %3186 = vmatpush1.bf16.msra.mxu0 %v2459
        %3187 = vmatprep.subr.bf16.mxu0 %v2468
        %3188 = vmatpush1.bf16.msra.mxu0 %v2467
        %3189 = vmatprep.subr.bf16.mxu0 %v2476
        %3190 = vmatpush1.bf16.msra.mxu0 %v2475
        %3191 = vmatprep.subr.bf16.mxu0 %v2484
        %3192 = vmatpush1.bf16.msra.mxu0 %v2483
        %3193 = vmatprep.subr.bf16.mxu0 %v2492
        %3194 = vmatpush1.bf16.msra.mxu0 %v2491
        %3195 = vmatprep.subr.bf16.mxu0 %v2500
        %3196 = vmatpush1.bf16.msra.mxu0 %v2499
        %3197 = vmatprep.subr.bf16.mxu0 %v2508
        %3198 = vmatpush1.bf16.msra.mxu0 %v2507
        %3199 = vmatprep.subr.bf16.mxu0 %v2516
        %3200 = vmatpush1.bf16.msra.mxu0 %v2515
        %3201 = vmatprep.subr.bf16.mxu0 %v2524
        %3202 = vmatpush1.bf16.msra.mxu0 %v2523
        %3203 = vmatprep.mubr.bf16.mxu0 %v3076
        %3204 = vmatmul.mubr.bf16.gmra.mrb[0].mxu0 %v3075
        %v3205 = vpop.f32.mrb[0].mxu0
        %v3206 = vadd.f32 %v2854, %v3205
        %v3207 = vpop.f32.mrb[0].mxu0
        %v3208 = vadd.f32 %v2854, %v3207
        %v3209 = vpop.f32.mrb[0].mxu0
        %v3210 = vadd.f32 %v2859, %v3209
        %v3211 = vpop.f32.mrb[0].mxu0
        %v3212 = vadd.f32 %v2859, %v3211
        %3213 = vmatprep.mubr.bf16.mxu0 %v3082
        %3214 = vmatmul.mubr.bf16.gmra.mrb[0].mxu0 %v3081
        %v3215 = vpop.f32.mrb[0].mxu0
        %v3216 = vadd.f32 %v2864, %v3215
        %v3217 = vpop.f32.mrb[0].mxu0
        %v3218 = vadd.f32 %v2864, %v3217
        %v3219 = vpop.f32.mrb[0].mxu0
        %v3220 = vadd.f32 %v2869, %v3219
        %v3221 = vpop.f32.mrb[0].mxu0
        %v3222 = vadd.f32 %v2869, %v3221
        %3223 = vmatprep.mubr.bf16.mxu0 %v3088
        %3224 = vmatmul.mubr.bf16.gmra.mrb[0].mxu0 %v3087
        %v3225 = vpop.f32.mrb[0].mxu0
        %v3226 = vadd.f32 %v2874, %v3225
        %v3227 = vpop.f32.mrb[0].mxu0
        %v3228 = vadd.f32 %v2874, %v3227
        %v3229 = vpop.f32.mrb[0].mxu0
        %v3230 = vadd.f32 %v2879, %v3229
        %v3231 = vpop.f32.mrb[0].mxu0
        %v3232 = vadd.f32 %v2879, %v3231
        %3233 = vmatprep.mubr.bf16.mxu0 %v3094
        %3234 = vmatmul.mubr.bf16.gmra.mrb[0].mxu0 %v3093
        %v3235 = vpop.f32.mrb[0].mxu0
        %v3236 = vadd.f32 %v2884, %v3235
        %v3237 = vpop.f32.mrb[0].mxu0
        %v3238 = vadd.f32 %v2884, %v3237
        %v3239 = vpop.f32.mrb[0].mxu0
        %v3240 = vadd.f32 %v2889, %v3239
        %v3241 = vpop.f32.mrb[0].mxu0
        %v3242 = vadd.f32 %v2889, %v3241
        %3243 = vmatprep.mubr.bf16.mxu0 %v3100
        %3244 = vmatmul.mubr.bf16.gmra.mrb[0].mxu0 %v3099
        %v3245 = vpop.f32.mrb[0].mxu0
        %v3246 = vadd.f32 %v2894, %v3245
        %v3247 = vpop.f32.mrb[0].mxu0
        %v3248 = vadd.f32 %v2894, %v3247
        %v3249 = vpop.f32.mrb[0].mxu0
        %v3250 = vadd.f32 %v2899, %v3249
        %v3251 = vpop.f32.mrb[0].mxu0
        %v3252 = vadd.f32 %v2899, %v3251
        %3253 = vmatprep.mubr.bf16.mxu0 %v3106
        %3254 = vmatmul.mubr.bf16.gmra.mrb[0].mxu0 %v3105
        %v3255 = vpop.f32.mrb[0].mxu0
        %v3256 = vadd.f32 %v2904, %v3255
        %v3257 = vpop.f32.mrb[0].mxu0
        %v3258 = vadd.f32 %v2904, %v3257
        %v3259 = vpop.f32.mrb[0].mxu0
        %v3260 = vadd.f32 %v2909, %v3259
        %v3261 = vpop.f32.mrb[0].mxu0
        %v3262 = vadd.f32 %v2909, %v3261
        %3263 = vmatprep.mubr.bf16.mxu0 %v3112
        %3264 = vmatmul.mubr.bf16.gmra.mrb[0].mxu0 %v3111
        %v3265 = vpop.f32.mrb[0].mxu0
        %v3266 = vadd.f32 %v2914, %v3265
        %v3267 = vpop.f32.mrb[0].mxu0
        %v3268 = vadd.f32 %v2914, %v3267
        %v3269 = vpop.f32.mrb[0].mxu0
        %v3270 = vadd.f32 %v2919, %v3269
        %v3271 = vpop.f32.mrb[0].mxu0
        %v3272 = vadd.f32 %v2919, %v3271
        %3273 = vmatprep.mubr.bf16.mxu0 %v3118
        %3274 = vmatmul.mubr.bf16.gmra.mrb[0].mxu0 %v3117
        %v3275 = vpop.f32.mrb[0].mxu0
        %v3276 = vadd.f32 %v2924, %v3275
        %v3277 = vpop.f32.mrb[0].mxu0
        %v3278 = vadd.f32 %v2924, %v3277
        %v3279 = vpop.f32.mrb[0].mxu0
        %v3280 = vadd.f32 %v2929, %v3279
        %v3281 = vpop.f32.mrb[0].mxu0
        %v3282 = vadd.f32 %v2929, %v3281
        %3283 = vdwg.mxu0
        %3284 = vmatprep.subr.bf16.mxu0 %v2532
        %3285 = vmatpush1.bf16.msra.mxu0 %v2531
        %3286 = vmatprep.subr.bf16.mxu0 %v2540
        %3287 = vmatpush1.bf16.msra.mxu0 %v2539
        %3288 = vmatprep.subr.bf16.mxu0 %v2548
        %3289 = vmatpush1.bf16.msra.mxu0 %v2547
        %3290 = vmatprep.subr.bf16.mxu0 %v2556
        %3291 = vmatpush1.bf16.msra.mxu0 %v2555
        %3292 = vmatprep.subr.bf16.mxu0 %v2564
        %3293 = vmatpush1.bf16.msra.mxu0 %v2563
        %3294 = vmatprep.subr.bf16.mxu0 %v2572
        %3295 = vmatpush1.bf16.msra.mxu0 %v2571
        %3296 = vmatprep.subr.bf16.mxu0 %v2580
        %3297 = vmatpush1.bf16.msra.mxu0 %v2579
        %3298 = vmatprep.subr.bf16.mxu0 %v2588
        %3299 = vmatpush1.bf16.msra.mxu0 %v2587
        %3300 = vmatprep.subr.bf16.mxu0 %v2596
        %3301 = vmatpush1.bf16.msra.mxu0 %v2595
        %3302 = vmatprep.subr.bf16.mxu0 %v2604
        %3303 = vmatpush1.bf16.msra.mxu0 %v2603
        %3304 = vmatprep.subr.bf16.mxu0 %v2612
        %3305 = vmatpush1.bf16.msra.mxu0 %v2611
        %3306 = vmatprep.subr.bf16.mxu0 %v2620
        %3307 = vmatpush1.bf16.msra.mxu0 %v2619
        %3308 = vmatprep.subr.bf16.mxu0 %v2628
        %3309 = vmatpush1.bf16.msra.mxu0 %v2627
        %3310 = vmatprep.subr.bf16.mxu0 %v2636
        %3311 = vmatpush1.bf16.msra.mxu0 %v2635
        %3312 = vmatprep.subr.bf16.mxu0 %v2644
        %3313 = vmatpush1.bf16.msra.mxu0 %v2643
        %3314 = vmatprep.subr.bf16.mxu0 %v2652
        %3315 = vmatpush1.bf16.msra.mxu0 %v2651
        %3316 = vmatprep.mubr.bf16.mxu0 %v3078
        %3317 = vmatmul.mubr.bf16.gmra.mrb[0].mxu0 %v3077
        %v3318 = vpop.f32.mrb[0].mxu0
        %v3319 = vadd.f32 %v3206, %v3318
        %v3320 = vpop.f32.mrb[0].mxu0
        %v3321 = vadd.f32 %v3208, %v3320
        %v3322 = vpop.f32.mrb[0].mxu0
        %v3323 = vadd.f32 %v3210, %v3322
        %v3324 = vpop.f32.mrb[0].mxu0
        %v3325 = vadd.f32 %v3212, %v3324
        %3326 = vmatprep.mubr.bf16.mxu0 %v3084
        %3327 = vmatmul.mubr.bf16.gmra.mrb[0].mxu0 %v3083
        %v3328 = vpop.f32.mrb[0].mxu0
        %v3329 = vadd.f32 %v3216, %v3328
        %v3330 = vpop.f32.mrb[0].mxu0
        %v3331 = vadd.f32 %v3218, %v3330
        %v3332 = vpop.f32.mrb[0].mxu0
        %v3333 = vadd.f32 %v3220, %v3332
        %v3334 = vpop.f32.mrb[0].mxu0
        %v3335 = vadd.f32 %v3222, %v3334
        %3336 = vmatprep.mubr.bf16.mxu0 %v3090
        %3337 = vmatmul.mubr.bf16.gmra.mrb[0].mxu0 %v3089
        %v3338 = vpop.f32.mrb[0].mxu0
        %v3339 = vadd.f32 %v3226, %v3338
        %v3340 = vpop.f32.mrb[0].mxu0
        %v3341 = vadd.f32 %v3228, %v3340
        %v3342 = vpop.f32.mrb[0].mxu0
        %v3343 = vadd.f32 %v3230, %v3342
        %v3344 = vpop.f32.mrb[0].mxu0
        %v3345 = vadd.f32 %v3232, %v3344
        %3346 = vmatprep.mubr.bf16.mxu0 %v3096
        %3347 = vmatmul.mubr.bf16.gmra.mrb[0].mxu0 %v3095
        %v3348 = vpop.f32.mrb[0].mxu0
        %v3349 = vadd.f32 %v3236, %v3348
        %v3350 = vpop.f32.mrb[0].mxu0
        %v3351 = vadd.f32 %v3238, %v3350
        %v3352 = vpop.f32.mrb[0].mxu0
        %v3353 = vadd.f32 %v3240, %v3352
        %v3354 = vpop.f32.mrb[0].mxu0
        %v3355 = vadd.f32 %v3242, %v3354
        %3356 = vmatprep.mubr.bf16.mxu0 %v3102
        %3357 = vmatmul.mubr.bf16.gmra.mrb[0].mxu0 %v3101
        %v3358 = vpop.f32.mrb[0].mxu0
        %v3359 = vadd.f32 %v3246, %v3358
        %v3360 = vpop.f32.mrb[0].mxu0
        %v3361 = vadd.f32 %v3248, %v3360
        %v3362 = vpop.f32.mrb[0].mxu0
        %v3363 = vadd.f32 %v3250, %v3362
        %v3364 = vpop.f32.mrb[0].mxu0
        %v3365 = vadd.f32 %v3252, %v3364
        %3366 = vmatprep.mubr.bf16.mxu0 %v3108
        %3367 = vmatmul.mubr.bf16.gmra.mrb[0].mxu0 %v3107
        %v3368 = vpop.f32.mrb[0].mxu0
        %v3369 = vadd.f32 %v3256, %v3368
        %v3370 = vpop.f32.mrb[0].mxu0
        %v3371 = vadd.f32 %v3258, %v3370
        %v3372 = vpop.f32.mrb[0].mxu0
        %v3373 = vadd.f32 %v3260, %v3372
        %v3374 = vpop.f32.mrb[0].mxu0
        %v3375 = vadd.f32 %v3262, %v3374
        %3376 = vmatprep.mubr.bf16.mxu0 %v3114
        %3377 = vmatmul.mubr.bf16.gmra.mrb[0].mxu0 %v3113
        %v3378 = vpop.f32.mrb[0].mxu0
        %v3379 = vadd.f32 %v3266, %v3378
        %v3380 = vpop.f32.mrb[0].mxu0
        %v3381 = vadd.f32 %v3268, %v3380
        %v3382 = vpop.f32.mrb[0].mxu0
        %v3383 = vadd.f32 %v3270, %v3382
        %v3384 = vpop.f32.mrb[0].mxu0
        %v3385 = vadd.f32 %v3272, %v3384
        %3386 = vmatprep.mubr.bf16.mxu0 %v3120
        %3387 = vmatmul.mubr.bf16.gmra.mrb[0].mxu0 %v3119
        %v3388 = vpop.f32.mrb[0].mxu0
        %v3389 = vadd.f32 %v3276, %v3388
        %v3390 = vpop.f32.mrb[0].mxu0
        %v3391 = vadd.f32 %v3278, %v3390
        %v3392 = vpop.f32.mrb[0].mxu0
        %v3393 = vadd.f32 %v3280, %v3392
        %v3394 = vpop.f32.mrb[0].mxu0
        %v3395 = vadd.f32 %v3282, %v3394
        %3396 = vdwg.mxu0
        %3397 = vmatprep.subr.bf16.mxu0 %v2660
        %3398 = vmatpush1.bf16.msra.mxu0 %v2659
        %3399 = vmatprep.subr.bf16.mxu0 %v2668
        %3400 = vmatpush1.bf16.msra.mxu0 %v2667
        %3401 = vmatprep.subr.bf16.mxu0 %v2676
        %3402 = vmatpush1.bf16.msra.mxu0 %v2675
        %3403 = vmatprep.subr.bf16.mxu0 %v2684
        %3404 = vmatpush1.bf16.msra.mxu0 %v2683
        %3405 = vmatprep.subr.bf16.mxu0 %v2692
        %3406 = vmatpush1.bf16.msra.mxu0 %v2691
        %3407 = vmatprep.subr.bf16.mxu0 %v2700
        %3408 = vmatpush1.bf16.msra.mxu0 %v2699
        %3409 = vmatprep.subr.bf16.mxu0 %v2708
        %3410 = vmatpush1.bf16.msra.mxu0 %v2707
        %3411 = vmatprep.subr.bf16.mxu0 %v2716
        %3412 = vmatpush1.bf16.msra.mxu0 %v2715
        %3413 = vmatprep.subr.bf16.mxu0 %v2724
        %3414 = vmatpush1.bf16.msra.mxu0 %v2723
        %3415 = vmatprep.subr.bf16.mxu0 %v2732
        %3416 = vmatpush1.bf16.msra.mxu0 %v2731
        %3417 = vmatprep.subr.bf16.mxu0 %v2740
        %3418 = vmatpush1.bf16.msra.mxu0 %v2739
        %3419 = vmatprep.subr.bf16.mxu0 %v2748
        %3420 = vmatpush1.bf16.msra.mxu0 %v2747
        %3421 = vmatprep.subr.bf16.mxu0 %v2756
        %3422 = vmatpush1.bf16.msra.mxu0 %v2755
        %3423 = vmatprep.subr.bf16.mxu0 %v2764
        %3424 = vmatpush1.bf16.msra.mxu0 %v2763
        %3425 = vmatprep.subr.bf16.mxu0 %v2772
        %3426 = vmatpush1.bf16.msra.mxu0 %v2771
        %3427 = vmatprep.subr.bf16.mxu0 %v2780
        %3428 = vmatpush1.bf16.msra.mxu0 %v2779
        %3429 = vmatprep.mubr.bf16.mxu0 %v3080
        %3430 = vmatmul.mubr.bf16.gmra.mrb[0].mxu0 %v3079
        %v3431 = vpop.f32.mrb[0].mxu0
        %v3432 = vadd.f32 %v3319, %v3431
        %v3433 = vpop.f32.mrb[0].mxu0
        %v3434 = vadd.f32 %v3321, %v3433
        %v3435 = vpop.f32.mrb[0].mxu0
        %v3436 = vadd.f32 %v3323, %v3435
        %v3437 = vpop.f32.mrb[0].mxu0
        %v3438 = vadd.f32 %v3325, %v3437
        %3439 = vmatprep.mubr.bf16.mxu0 %v3086
        %3440 = vmatmul.mubr.bf16.gmra.mrb[0].mxu0 %v3085
        %v3441 = vpop.f32.mrb[0].mxu0
        %v3442 = vadd.f32 %v3329, %v3441
        %v3443 = vpop.f32.mrb[0].mxu0
        %v3444 = vadd.f32 %v3331, %v3443
        %v3445 = vpop.f32.mrb[0].mxu0
        %v3446 = vadd.f32 %v3333, %v3445
        %v3447 = vpop.f32.mrb[0].mxu0
        %v3448 = vadd.f32 %v3335, %v3447
        %3449 = vmatprep.mubr.bf16.mxu0 %v3092
        %3450 = vmatmul.mubr.bf16.gmra.mrb[0].mxu0 %v3091
        %v3451 = vpop.f32.mrb[0].mxu0
        %v3452 = vadd.f32 %v3339, %v3451
        %v3453 = vpop.f32.mrb[0].mxu0
        %v3454 = vadd.f32 %v3341, %v3453
        %v3455 = vpop.f32.mrb[0].mxu0
        %v3456 = vadd.f32 %v3343, %v3455
        %v3457 = vpop.f32.mrb[0].mxu0
        %v3458 = vadd.f32 %v3345, %v3457
        %3459 = vmatprep.mubr.bf16.mxu0 %v3098
        %3460 = vmatmul.mubr.bf16.gmra.mrb[0].mxu0 %v3097
        %v3461 = vpop.f32.mrb[0].mxu0
        %v3462 = vadd.f32 %v3349, %v3461
        %v3463 = vpop.f32.mrb[0].mxu0
        %v3464 = vadd.f32 %v3351, %v3463
        %v3465 = vpop.f32.mrb[0].mxu0
        %v3466 = vadd.f32 %v3353, %v3465
        %v3467 = vpop.f32.mrb[0].mxu0
        %v3468 = vadd.f32 %v3355, %v3467
        %3469 = vmatprep.mubr.bf16.mxu0 %v3104
        %3470 = vmatmul.mubr.bf16.gmra.mrb[0].mxu0 %v3103
        %v3471 = vpop.f32.mrb[0].mxu0
        %v3472 = vadd.f32 %v3359, %v3471
        %v3473 = vpop.f32.mrb[0].mxu0
        %v3474 = vadd.f32 %v3361, %v3473
        %v3475 = vpop.f32.mrb[0].mxu0
        %v3476 = vadd.f32 %v3363, %v3475
        %v3477 = vpop.f32.mrb[0].mxu0
        %v3478 = vadd.f32 %v3365, %v3477
        %3479 = vmatprep.mubr.bf16.mxu0 %v3110
        %3480 = vmatmul.mubr.bf16.gmra.mrb[0].mxu0 %v3109
        %v3481 = vpop.f32.mrb[0].mxu0
        %v3482 = vadd.f32 %v3369, %v3481
        %v3483 = vpop.f32.mrb[0].mxu0
        %v3484 = vadd.f32 %v3371, %v3483
        %v3485 = vpop.f32.mrb[0].mxu0
        %v3486 = vadd.f32 %v3373, %v3485
        %v3487 = vpop.f32.mrb[0].mxu0
        %v3488 = vadd.f32 %v3375, %v3487
        %3489 = vmatprep.mubr.bf16.mxu0 %v3116
        %3490 = vmatmul.mubr.bf16.gmra.mrb[0].mxu0 %v3115
        %v3491 = vpop.f32.mrb[0].mxu0
        %v3492 = vadd.f32 %v3379, %v3491
        %v3493 = vpop.f32.mrb[0].mxu0
        %v3494 = vadd.f32 %v3381, %v3493
        %v3495 = vpop.f32.mrb[0].mxu0
        %v3496 = vadd.f32 %v3383, %v3495
        %v3497 = vpop.f32.mrb[0].mxu0
        %v3498 = vadd.f32 %v3385, %v3497
        %3499 = vmatprep.mubr.bf16.mxu0 %v3122
        %3500 = vmatmul.mubr.bf16.gmra.mrb[0].mxu0 %v3121
        %v3501 = vpop.f32.mrb[0].mxu0
        %v3502 = vadd.f32 %v3389, %v3501
        %v3503 = vpop.f32.mrb[0].mxu0
        %v3504 = vadd.f32 %v3391, %v3503
        %v3505 = vpop.f32.mrb[0].mxu0
        %v3506 = vadd.f32 %v3393, %v3505
        %v3507 = vpop.f32.mrb[0].mxu0
        %v3508 = vadd.f32 %v3395, %v3507
        %3509 = vdwg.mxu0
        %3510 = vmatprep.subr.bf16.mxu0 %v2406
        %3511 = vmatpush1.bf16.msra.mxu0 %v2405
        %3512 = vmatprep.subr.bf16.mxu0 %v2414
        %3513 = vmatpush1.bf16.msra.mxu0 %v2413
        %3514 = vmatprep.subr.bf16.mxu0 %v2422
        %3515 = vmatpush1.bf16.msra.mxu0 %v2421
        %3516 = vmatprep.subr.bf16.mxu0 %v2430
        %3517 = vmatpush1.bf16.msra.mxu0 %v2429
        %3518 = vmatprep.subr.bf16.mxu0 %v2438
        %3519 = vmatpush1.bf16.msra.mxu0 %v2437
        %3520 = vmatprep.subr.bf16.mxu0 %v2446
        %3521 = vmatpush1.bf16.msra.mxu0 %v2445
        %3522 = vmatprep.subr.bf16.mxu0 %v2454
        %3523 = vmatpush1.bf16.msra.mxu0 %v2453
        %3524 = vmatprep.subr.bf16.mxu0 %v2462
        %3525 = vmatpush1.bf16.msra.mxu0 %v2461
        %3526 = vmatprep.subr.bf16.mxu0 %v2470
        %3527 = vmatpush1.bf16.msra.mxu0 %v2469
        %3528 = vmatprep.subr.bf16.mxu0 %v2478
        %3529 = vmatpush1.bf16.msra.mxu0 %v2477
        %3530 = vmatprep.subr.bf16.mxu0 %v2486
        %3531 = vmatpush1.bf16.msra.mxu0 %v2485
        %3532 = vmatprep.subr.bf16.mxu0 %v2494
        %3533 = vmatpush1.bf16.msra.mxu0 %v2493
        %3534 = vmatprep.subr.bf16.mxu0 %v2502
        %3535 = vmatpush1.bf16.msra.mxu0 %v2501
        %3536 = vmatprep.subr.bf16.mxu0 %v2510
        %3537 = vmatpush1.bf16.msra.mxu0 %v2509
        %3538 = vmatprep.subr.bf16.mxu0 %v2518
        %3539 = vmatpush1.bf16.msra.mxu0 %v2517
        %3540 = vmatprep.subr.bf16.mxu0 %v2526
        %3541 = vmatpush1.bf16.msra.mxu0 %v2525
        %3542 = vmatprep.mubr.bf16.mxu0 %v3076
        %3543 = vmatmul.mubr.bf16.gmra.mrb[0].mxu0 %v3075
        %v3544 = vpop.f32.mrb[0].mxu0
        %v3545 = vadd.f32 %v2854, %v3544
        %v3546 = vpop.f32.mrb[0].mxu0
        %v3547 = vadd.f32 %v2854, %v3546
        %v3548 = vpop.f32.mrb[0].mxu0
        %v3549 = vadd.f32 %v2859, %v3548
        %v3550 = vpop.f32.mrb[0].mxu0
        %v3551 = vadd.f32 %v2859, %v3550
        %3552 = vmatprep.mubr.bf16.mxu0 %v3082
        %3553 = vmatmul.mubr.bf16.gmra.mrb[0].mxu0 %v3081
        %v3554 = vpop.f32.mrb[0].mxu0
        %v3555 = vadd.f32 %v2864, %v3554
        %v3556 = vpop.f32.mrb[0].mxu0
        %v3557 = vadd.f32 %v2864, %v3556
        %v3558 = vpop.f32.mrb[0].mxu0
        %v3559 = vadd.f32 %v2869, %v3558
        %v3560 = vpop.f32.mrb[0].mxu0
        %v3561 = vadd.f32 %v2869, %v3560
        %3562 = vmatprep.mubr.bf16.mxu0 %v3088
        %3563 = vmatmul.mubr.bf16.gmra.mrb[0].mxu0 %v3087
        %v3564 = vpop.f32.mrb[0].mxu0
        %v3565 = vadd.f32 %v2874, %v3564
        %v3566 = vpop.f32.mrb[0].mxu0
        %v3567 = vadd.f32 %v2874, %v3566
        %v3568 = vpop.f32.mrb[0].mxu0
        %v3569 = vadd.f32 %v2879, %v3568
        %v3570 = vpop.f32.mrb[0].mxu0
        %v3571 = vadd.f32 %v2879, %v3570
        %3572 = vmatprep.mubr.bf16.mxu0 %v3094
        %3573 = vmatmul.mubr.bf16.gmra.mrb[0].mxu0 %v3093
        %v3574 = vpop.f32.mrb[0].mxu0
        %v3575 = vadd.f32 %v2884, %v3574
        %v3576 = vpop.f32.mrb[0].mxu0
        %v3577 = vadd.f32 %v2884, %v3576
        %v3578 = vpop.f32.mrb[0].mxu0
        %v3579 = vadd.f32 %v2889, %v3578
        %v3580 = vpop.f32.mrb[0].mxu0
        %v3581 = vadd.f32 %v2889, %v3580
        %3582 = vmatprep.mubr.bf16.mxu0 %v3100
        %3583 = vmatmul.mubr.bf16.gmra.mrb[0].mxu0 %v3099
        %v3584 = vpop.f32.mrb[0].mxu0
        %v3585 = vadd.f32 %v2894, %v3584
        %v3586 = vpop.f32.mrb[0].mxu0
        %v3587 = vadd.f32 %v2894, %v3586
        %v3588 = vpop.f32.mrb[0].mxu0
        %v3589 = vadd.f32 %v2899, %v3588
        %v3590 = vpop.f32.mrb[0].mxu0
        %v3591 = vadd.f32 %v2899, %v3590
        %3592 = vmatprep.mubr.bf16.mxu0 %v3106
        %3593 = vmatmul.mubr.bf16.gmra.mrb[0].mxu0 %v3105
        %v3594 = vpop.f32.mrb[0].mxu0
        %v3595 = vadd.f32 %v2904, %v3594
        %v3596 = vpop.f32.mrb[0].mxu0
        %v3597 = vadd.f32 %v2904, %v3596
        %v3598 = vpop.f32.mrb[0].mxu0
        %v3599 = vadd.f32 %v2909, %v3598
        %v3600 = vpop.f32.mrb[0].mxu0
        %v3601 = vadd.f32 %v2909, %v3600
        %3602 = vmatprep.mubr.bf16.mxu0 %v3112
        %3603 = vmatmul.mubr.bf16.gmra.mrb[0].mxu0 %v3111
        %v3604 = vpop.f32.mrb[0].mxu0
        %v3605 = vadd.f32 %v2914, %v3604
        %v3606 = vpop.f32.mrb[0].mxu0
        %v3607 = vadd.f32 %v2914, %v3606
        %v3608 = vpop.f32.mrb[0].mxu0
        %v3609 = vadd.f32 %v2919, %v3608
        %v3610 = vpop.f32.mrb[0].mxu0
        %v3611 = vadd.f32 %v2919, %v3610
        %3612 = vmatprep.mubr.bf16.mxu0 %v3118
        %3613 = vmatmul.mubr.bf16.gmra.mrb[0].mxu0 %v3117
        %v3614 = vpop.f32.mrb[0].mxu0
        %v3615 = vadd.f32 %v2924, %v3614
        %v3616 = vpop.f32.mrb[0].mxu0
        %v3617 = vadd.f32 %v2924, %v3616
        %v3618 = vpop.f32.mrb[0].mxu0
        %v3619 = vadd.f32 %v2929, %v3618
        %v3620 = vpop.f32.mrb[0].mxu0
        %v3621 = vadd.f32 %v2929, %v3620
        %3622 = vdwg.mxu0
        %3623 = vmatprep.subr.bf16.mxu0 %v2534
        %3624 = vmatpush1.bf16.msra.mxu0 %v2533
        %3625 = vmatprep.subr.bf16.mxu0 %v2542
        %3626 = vmatpush1.bf16.msra.mxu0 %v2541
        %3627 = vmatprep.subr.bf16.mxu0 %v2550
        %3628 = vmatpush1.bf16.msra.mxu0 %v2549
        %3629 = vmatprep.subr.bf16.mxu0 %v2558
        %3630 = vmatpush1.bf16.msra.mxu0 %v2557
        %3631 = vmatprep.subr.bf16.mxu0 %v2566
        %3632 = vmatpush1.bf16.msra.mxu0 %v2565
        %3633 = vmatprep.subr.bf16.mxu0 %v2574
        %3634 = vmatpush1.bf16.msra.mxu0 %v2573
        %3635 = vmatprep.subr.bf16.mxu0 %v2582
        %3636 = vmatpush1.bf16.msra.mxu0 %v2581
        %3637 = vmatprep.subr.bf16.mxu0 %v2590
        %3638 = vmatpush1.bf16.msra.mxu0 %v2589
        %3639 = vmatprep.subr.bf16.mxu0 %v2598
        %3640 = vmatpush1.bf16.msra.mxu0 %v2597
        %3641 = vmatprep.subr.bf16.mxu0 %v2606
        %3642 = vmatpush1.bf16.msra.mxu0 %v2605
        %3643 = vmatprep.subr.bf16.mxu0 %v2614
        %3644 = vmatpush1.bf16.msra.mxu0 %v2613
        %3645 = vmatprep.subr.bf16.mxu0 %v2622
        %3646 = vmatpush1.bf16.msra.mxu0 %v2621
        %3647 = vmatprep.subr.bf16.mxu0 %v2630
        %3648 = vmatpush1.bf16.msra.mxu0 %v2629
        %3649 = vmatprep.subr.bf16.mxu0 %v2638
        %3650 = vmatpush1.bf16.msra.mxu0 %v2637
        %3651 = vmatprep.subr.bf16.mxu0 %v2646
        %3652 = vmatpush1.bf16.msra.mxu0 %v2645
        %3653 = vmatprep.subr.bf16.mxu0 %v2654
        %3654 = vmatpush1.bf16.msra.mxu0 %v2653
        %3655 = vmatprep.mubr.bf16.mxu0 %v3078
        %3656 = vmatmul.mubr.bf16.gmra.mrb[0].mxu0 %v3077
        %v3657 = vpop.f32.mrb[0].mxu0
        %v3658 = vadd.f32 %v3545, %v3657
        %v3659 = vpop.f32.mrb[0].mxu0
        %v3660 = vadd.f32 %v3547, %v3659
        %v3661 = vpop.f32.mrb[0].mxu0
        %v3662 = vadd.f32 %v3549, %v3661
        %v3663 = vpop.f32.mrb[0].mxu0
        %v3664 = vadd.f32 %v3551, %v3663
        %3665 = vmatprep.mubr.bf16.mxu0 %v3084
        %3666 = vmatmul.mubr.bf16.gmra.mrb[0].mxu0 %v3083
        %v3667 = vpop.f32.mrb[0].mxu0
        %v3668 = vadd.f32 %v3555, %v3667
        %v3669 = vpop.f32.mrb[0].mxu0
        %v3670 = vadd.f32 %v3557, %v3669
        %v3671 = vpop.f32.mrb[0].mxu0
        %v3672 = vadd.f32 %v3559, %v3671
        %v3673 = vpop.f32.mrb[0].mxu0
        %v3674 = vadd.f32 %v3561, %v3673
        %3675 = vmatprep.mubr.bf16.mxu0 %v3090
        %3676 = vmatmul.mubr.bf16.gmra.mrb[0].mxu0 %v3089
        %v3677 = vpop.f32.mrb[0].mxu0
        %v3678 = vadd.f32 %v3565, %v3677
        %v3679 = vpop.f32.mrb[0].mxu0
        %v3680 = vadd.f32 %v3567, %v3679
        %v3681 = vpop.f32.mrb[0].mxu0
        %v3682 = vadd.f32 %v3569, %v3681
        %v3683 = vpop.f32.mrb[0].mxu0
        %v3684 = vadd.f32 %v3571, %v3683
        %3685 = vmatprep.mubr.bf16.mxu0 %v3096
        %3686 = vmatmul.mubr.bf16.gmra.mrb[0].mxu0 %v3095
        %v3687 = vpop.f32.mrb[0].mxu0
        %v3688 = vadd.f32 %v3575, %v3687
        %v3689 = vpop.f32.mrb[0].mxu0
        %v3690 = vadd.f32 %v3577, %v3689
        %v3691 = vpop.f32.mrb[0].mxu0
        %v3692 = vadd.f32 %v3579, %v3691
        %v3693 = vpop.f32.mrb[0].mxu0
        %v3694 = vadd.f32 %v3581, %v3693
        %3695 = vmatprep.mubr.bf16.mxu0 %v3102
        %3696 = vmatmul.mubr.bf16.gmra.mrb[0].mxu0 %v3101
        %v3697 = vpop.f32.mrb[0].mxu0
        %v3698 = vadd.f32 %v3585, %v3697
        %v3699 = vpop.f32.mrb[0].mxu0
        %v3700 = vadd.f32 %v3587, %v3699
        %v3701 = vpop.f32.mrb[0].mxu0
        %v3702 = vadd.f32 %v3589, %v3701
        %v3703 = vpop.f32.mrb[0].mxu0
        %v3704 = vadd.f32 %v3591, %v3703
        %3705 = vmatprep.mubr.bf16.mxu0 %v3108
        %3706 = vmatmul.mubr.bf16.gmra.mrb[0].mxu0 %v3107
        %v3707 = vpop.f32.mrb[0].mxu0
        %v3708 = vadd.f32 %v3595, %v3707
        %v3709 = vpop.f32.mrb[0].mxu0
        %v3710 = vadd.f32 %v3597, %v3709
        %v3711 = vpop.f32.mrb[0].mxu0
        %v3712 = vadd.f32 %v3599, %v3711
        %v3713 = vpop.f32.mrb[0].mxu0
        %v3714 = vadd.f32 %v3601, %v3713
        %3715 = vmatprep.mubr.bf16.mxu0 %v3114
        %3716 = vmatmul.mubr.bf16.gmra.mrb[0].mxu0 %v3113
        %v3717 = vpop.f32.mrb[0].mxu0
        %v3718 = vadd.f32 %v3605, %v3717
        %v3719 = vpop.f32.mrb[0].mxu0
        %v3720 = vadd.f32 %v3607, %v3719
        %v3721 = vpop.f32.mrb[0].mxu0
        %v3722 = vadd.f32 %v3609, %v3721
        %v3723 = vpop.f32.mrb[0].mxu0
        %v3724 = vadd.f32 %v3611, %v3723
        %3725 = vmatprep.mubr.bf16.mxu0 %v3120
        %3726 = vmatmul.mubr.bf16.gmra.mrb[0].mxu0 %v3119
        %v3727 = vpop.f32.mrb[0].mxu0
        %v3728 = vadd.f32 %v3615, %v3727
        %v3729 = vpop.f32.mrb[0].mxu0
        %v3730 = vadd.f32 %v3617, %v3729
        %v3731 = vpop.f32.mrb[0].mxu0
        %v3732 = vadd.f32 %v3619, %v3731
        %v3733 = vpop.f32.mrb[0].mxu0
        %v3734 = vadd.f32 %v3621, %v3733
        %3735 = vdwg.mxu0
        %3736 = vmatprep.subr.bf16.mxu0 %v2662
        %3737 = vmatpush1.bf16.msra.mxu0 %v2661
        %3738 = vmatprep.subr.bf16.mxu0 %v2670
        %3739 = vmatpush1.bf16.msra.mxu0 %v2669
        %3740 = vmatprep.subr.bf16.mxu0 %v2678
        %3741 = vmatpush1.bf16.msra.mxu0 %v2677
        %3742 = vmatprep.subr.bf16.mxu0 %v2686
        %3743 = vmatpush1.bf16.msra.mxu0 %v2685
        %3744 = vmatprep.subr.bf16.mxu0 %v2694
        %3745 = vmatpush1.bf16.msra.mxu0 %v2693
        %3746 = vmatprep.subr.bf16.mxu0 %v2702
        %3747 = vmatpush1.bf16.msra.mxu0 %v2701
        %3748 = vmatprep.subr.bf16.mxu0 %v2710
        %3749 = vmatpush1.bf16.msra.mxu0 %v2709
        %3750 = vmatprep.subr.bf16.mxu0 %v2718
        %3751 = vmatpush1.bf16.msra.mxu0 %v2717
        %3752 = vmatprep.subr.bf16.mxu0 %v2726
        %3753 = vmatpush1.bf16.msra.mxu0 %v2725
        %3754 = vmatprep.subr.bf16.mxu0 %v2734
        %3755 = vmatpush1.bf16.msra.mxu0 %v2733
        %3756 = vmatprep.subr.bf16.mxu0 %v2742
        %3757 = vmatpush1.bf16.msra.mxu0 %v2741
        %3758 = vmatprep.subr.bf16.mxu0 %v2750
        %3759 = vmatpush1.bf16.msra.mxu0 %v2749
        %3760 = vmatprep.subr.bf16.mxu0 %v2758
        %3761 = vmatpush1.bf16.msra.mxu0 %v2757
        %3762 = vmatprep.subr.bf16.mxu0 %v2766
        %3763 = vmatpush1.bf16.msra.mxu0 %v2765
        %3764 = vmatprep.subr.bf16.mxu0 %v2774
        %3765 = vmatpush1.bf16.msra.mxu0 %v2773
        %3766 = vmatprep.subr.bf16.mxu0 %v2782
        %3767 = vmatpush1.bf16.msra.mxu0 %v2781
        %3768 = vmatprep.mubr.bf16.mxu0 %v3080
        %3769 = vmatmul.mubr.bf16.gmra.mrb[0].mxu0 %v3079
        %v3770 = vpop.f32.mrb[0].mxu0
        %v3771 = vadd.f32 %v3658, %v3770
        %v3772 = vpop.f32.mrb[0].mxu0
        %v3773 = vadd.f32 %v3660, %v3772
        %v3774 = vpop.f32.mrb[0].mxu0
        %v3775 = vadd.f32 %v3662, %v3774
        %v3776 = vpop.f32.mrb[0].mxu0
        %v3777 = vadd.f32 %v3664, %v3776
        %3778 = vmatprep.mubr.bf16.mxu0 %v3086
        %3779 = vmatmul.mubr.bf16.gmra.mrb[0].mxu0 %v3085
        %v3780 = vpop.f32.mrb[0].mxu0
        %v3781 = vadd.f32 %v3668, %v3780
        %v3782 = vpop.f32.mrb[0].mxu0
        %v3783 = vadd.f32 %v3670, %v3782
        %v3784 = vpop.f32.mrb[0].mxu0
        %v3785 = vadd.f32 %v3672, %v3784
        %v3786 = vpop.f32.mrb[0].mxu0
        %v3787 = vadd.f32 %v3674, %v3786
        %3788 = vmatprep.mubr.bf16.mxu0 %v3092
        %3789 = vmatmul.mubr.bf16.gmra.mrb[0].mxu0 %v3091
        %v3790 = vpop.f32.mrb[0].mxu0
        %v3791 = vadd.f32 %v3678, %v3790
        %v3792 = vpop.f32.mrb[0].mxu0
        %v3793 = vadd.f32 %v3680, %v3792
        %v3794 = vpop.f32.mrb[0].mxu0
        %v3795 = vadd.f32 %v3682, %v3794
        %v3796 = vpop.f32.mrb[0].mxu0
        %v3797 = vadd.f32 %v3684, %v3796
        %3798 = vmatprep.mubr.bf16.mxu0 %v3098
        %3799 = vmatmul.mubr.bf16.gmra.mrb[0].mxu0 %v3097
        %v3800 = vpop.f32.mrb[0].mxu0
        %v3801 = vadd.f32 %v3688, %v3800
        %v3802 = vpop.f32.mrb[0].mxu0
        %v3803 = vadd.f32 %v3690, %v3802
        %v3804 = vpop.f32.mrb[0].mxu0
        %v3805 = vadd.f32 %v3692, %v3804
        %v3806 = vpop.f32.mrb[0].mxu0
        %v3807 = vadd.f32 %v3694, %v3806
        %3808 = vmatprep.mubr.bf16.mxu0 %v3104
        %3809 = vmatmul.mubr.bf16.gmra.mrb[0].mxu0 %v3103
        %v3810 = vpop.f32.mrb[0].mxu0
        %v3811 = vadd.f32 %v3698, %v3810
        %v3812 = vpop.f32.mrb[0].mxu0
        %v3813 = vadd.f32 %v3700, %v3812
        %v3814 = vpop.f32.mrb[0].mxu0
        %v3815 = vadd.f32 %v3702, %v3814
        %v3816 = vpop.f32.mrb[0].mxu0
        %v3817 = vadd.f32 %v3704, %v3816
        %3818 = vmatprep.mubr.bf16.mxu0 %v3110
        %3819 = vmatmul.mubr.bf16.gmra.mrb[0].mxu0 %v3109
        %v3820 = vpop.f32.mrb[0].mxu0
        %v3821 = vadd.f32 %v3708, %v3820
        %v3822 = vpop.f32.mrb[0].mxu0
        %v3823 = vadd.f32 %v3710, %v3822
        %v3824 = vpop.f32.mrb[0].mxu0
        %v3825 = vadd.f32 %v3712, %v3824
        %v3826 = vpop.f32.mrb[0].mxu0
        %v3827 = vadd.f32 %v3714, %v3826
        %3828 = vmatprep.mubr.bf16.mxu0 %v3116
        %3829 = vmatmul.mubr.bf16.gmra.mrb[0].mxu0 %v3115
        %v3830 = vpop.f32.mrb[0].mxu0
        %v3831 = vadd.f32 %v3718, %v3830
        %v3832 = vpop.f32.mrb[0].mxu0
        %v3833 = vadd.f32 %v3720, %v3832
        %v3834 = vpop.f32.mrb[0].mxu0
        %v3835 = vadd.f32 %v3722, %v3834
        %v3836 = vpop.f32.mrb[0].mxu0
        %v3837 = vadd.f32 %v3724, %v3836
        %3838 = vmatprep.mubr.bf16.mxu0 %v3122
        %3839 = vmatmul.mubr.bf16.gmra.mrb[0].mxu0 %v3121
        %v3840 = vpop.f32.mrb[0].mxu0
        %v3841 = vadd.f32 %v3728, %v3840
        %v3842 = vpop.f32.mrb[0].mxu0
        %v3843 = vadd.f32 %v3730, %v3842
        %v3844 = vpop.f32.mrb[0].mxu0
        %v3845 = vadd.f32 %v3732, %v3844
        %v3846 = vpop.f32.mrb[0].mxu0
        %v3847 = vadd.f32 %v3734, %v3846
        %3848 = vdwg.mxu0
        %3849 = vmatprep.subr.bf16.mxu0 %v2408
        %3850 = vmatpush1.bf16.msra.mxu0 %v2407
        %3851 = vmatprep.subr.bf16.mxu0 %v2416
        %3852 = vmatpush1.bf16.msra.mxu0 %v2415
        %3853 = vmatprep.subr.bf16.mxu0 %v2424
        %3854 = vmatpush1.bf16.msra.mxu0 %v2423
        %3855 = vmatprep.subr.bf16.mxu0 %v2432
        %3856 = vmatpush1.bf16.msra.mxu0 %v2431
        %3857 = vmatprep.subr.bf16.mxu0 %v2440
        %3858 = vmatpush1.bf16.msra.mxu0 %v2439
        %3859 = vmatprep.subr.bf16.mxu0 %v2448
        %3860 = vmatpush1.bf16.msra.mxu0 %v2447
        %3861 = vmatprep.subr.bf16.mxu0 %v2456
        %3862 = vmatpush1.bf16.msra.mxu0 %v2455
        %3863 = vmatprep.subr.bf16.mxu0 %v2464
        %3864 = vmatpush1.bf16.msra.mxu0 %v2463
        %3865 = vmatprep.subr.bf16.mxu0 %v2472
        %3866 = vmatpush1.bf16.msra.mxu0 %v2471
        %3867 = vmatprep.subr.bf16.mxu0 %v2480
        %3868 = vmatpush1.bf16.msra.mxu0 %v2479
        %3869 = vmatprep.subr.bf16.mxu0 %v2488
        %3870 = vmatpush1.bf16.msra.mxu0 %v2487
        %3871 = vmatprep.subr.bf16.mxu0 %v2496
        %3872 = vmatpush1.bf16.msra.mxu0 %v2495
        %3873 = vmatprep.subr.bf16.mxu0 %v2504
        %3874 = vmatpush1.bf16.msra.mxu0 %v2503
        %3875 = vmatprep.subr.bf16.mxu0 %v2512
        %3876 = vmatpush1.bf16.msra.mxu0 %v2511
        %3877 = vmatprep.subr.bf16.mxu0 %v2520
        %3878 = vmatpush1.bf16.msra.mxu0 %v2519
        %3879 = vmatprep.subr.bf16.mxu0 %v2528
        %3880 = vmatpush1.bf16.msra.mxu0 %v2527
        %3881 = vmatprep.mubr.bf16.mxu0 %v3076
        %3882 = vmatmul.mubr.bf16.gmra.mrb[0].mxu0 %v3075
        %v3883 = vpop.f32.mrb[0].mxu0
        %v3884 = vadd.f32 %v2854, %v3883
        %v3885 = vpop.f32.mrb[0].mxu0
        %v3886 = vadd.f32 %v2854, %v3885
        %v3887 = vpop.f32.mrb[0].mxu0
        %v3888 = vadd.f32 %v2859, %v3887
        %v3889 = vpop.f32.mrb[0].mxu0
        %v3890 = vadd.f32 %v2859, %v3889
        %3891 = vmatprep.mubr.bf16.mxu0 %v3082
        %3892 = vmatmul.mubr.bf16.gmra.mrb[0].mxu0 %v3081
        %v3893 = vpop.f32.mrb[0].mxu0
        %v3894 = vadd.f32 %v2864, %v3893
        %v3895 = vpop.f32.mrb[0].mxu0
        %v3896 = vadd.f32 %v2864, %v3895
        %v3897 = vpop.f32.mrb[0].mxu0
        %v3898 = vadd.f32 %v2869, %v3897
        %v3899 = vpop.f32.mrb[0].mxu0
        %v3900 = vadd.f32 %v2869, %v3899
        %3901 = vmatprep.mubr.bf16.mxu0 %v3088
        %3902 = vmatmul.mubr.bf16.gmra.mrb[0].mxu0 %v3087
        %v3903 = vpop.f32.mrb[0].mxu0
        %v3904 = vadd.f32 %v2874, %v3903
        %v3905 = vpop.f32.mrb[0].mxu0
        %v3906 = vadd.f32 %v2874, %v3905
        %v3907 = vpop.f32.mrb[0].mxu0
        %v3908 = vadd.f32 %v2879, %v3907
        %v3909 = vpop.f32.mrb[0].mxu0
        %v3910 = vadd.f32 %v2879, %v3909
        %3911 = vmatprep.mubr.bf16.mxu0 %v3094
        %3912 = vmatmul.mubr.bf16.gmra.mrb[0].mxu0 %v3093
        %v3913 = vpop.f32.mrb[0].mxu0
        %v3914 = vadd.f32 %v2884, %v3913
        %v3915 = vpop.f32.mrb[0].mxu0
        %v3916 = vadd.f32 %v2884, %v3915
        %v3917 = vpop.f32.mrb[0].mxu0
        %v3918 = vadd.f32 %v2889, %v3917
        %v3919 = vpop.f32.mrb[0].mxu0
        %v3920 = vadd.f32 %v2889, %v3919
        %3921 = vmatprep.mubr.bf16.mxu0 %v3100
        %3922 = vmatmul.mubr.bf16.gmra.mrb[0].mxu0 %v3099
        %v3923 = vpop.f32.mrb[0].mxu0
        %v3924 = vadd.f32 %v2894, %v3923
        %v3925 = vpop.f32.mrb[0].mxu0
        %v3926 = vadd.f32 %v2894, %v3925
        %v3927 = vpop.f32.mrb[0].mxu0
        %v3928 = vadd.f32 %v2899, %v3927
        %v3929 = vpop.f32.mrb[0].mxu0
        %v3930 = vadd.f32 %v2899, %v3929
        %3931 = vmatprep.mubr.bf16.mxu0 %v3106
        %3932 = vmatmul.mubr.bf16.gmra.mrb[0].mxu0 %v3105
        %v3933 = vpop.f32.mrb[0].mxu0
        %v3934 = vadd.f32 %v2904, %v3933
        %v3935 = vpop.f32.mrb[0].mxu0
        %v3936 = vadd.f32 %v2904, %v3935
        %v3937 = vpop.f32.mrb[0].mxu0
        %v3938 = vadd.f32 %v2909, %v3937
        %v3939 = vpop.f32.mrb[0].mxu0
        %v3940 = vadd.f32 %v2909, %v3939
        %3941 = vmatprep.mubr.bf16.mxu0 %v3112
        %3942 = vmatmul.mubr.bf16.gmra.mrb[0].mxu0 %v3111
        %v3943 = vpop.f32.mrb[0].mxu0
        %v3944 = vadd.f32 %v2914, %v3943
        %v3945 = vpop.f32.mrb[0].mxu0
        %v3946 = vadd.f32 %v2914, %v3945
        %v3947 = vpop.f32.mrb[0].mxu0
        %v3948 = vadd.f32 %v2919, %v3947
        %v3949 = vpop.f32.mrb[0].mxu0
        %v3950 = vadd.f32 %v2919, %v3949
        %3951 = vmatprep.mubr.bf16.mxu0 %v3118
        %3952 = vmatmul.mubr.bf16.gmra.mrb[0].mxu0 %v3117
        %v3953 = vpop.f32.mrb[0].mxu0
        %v3954 = vadd.f32 %v2924, %v3953
        %v3955 = vpop.f32.mrb[0].mxu0
        %v3956 = vadd.f32 %v2924, %v3955
        %v3957 = vpop.f32.mrb[0].mxu0
        %v3958 = vadd.f32 %v2929, %v3957
        %v3959 = vpop.f32.mrb[0].mxu0
        %v3960 = vadd.f32 %v2929, %v3959
        %3961 = vdwg.mxu0
        %3962 = vmatprep.subr.bf16.mxu0 %v2536
        %3963 = vmatpush1.bf16.msra.mxu0 %v2535
        %3964 = vmatprep.subr.bf16.mxu0 %v2544
        %3965 = vmatpush1.bf16.msra.mxu0 %v2543
        %3966 = vmatprep.subr.bf16.mxu0 %v2552
        %3967 = vmatpush1.bf16.msra.mxu0 %v2551
        %3968 = vmatprep.subr.bf16.mxu0 %v2560
        %3969 = vmatpush1.bf16.msra.mxu0 %v2559
        %3970 = vmatprep.subr.bf16.mxu0 %v2568
        %3971 = vmatpush1.bf16.msra.mxu0 %v2567
        %3972 = vmatprep.subr.bf16.mxu0 %v2576
        %3973 = vmatpush1.bf16.msra.mxu0 %v2575
        %3974 = vmatprep.subr.bf16.mxu0 %v2584
        %3975 = vmatpush1.bf16.msra.mxu0 %v2583
        %3976 = vmatprep.subr.bf16.mxu0 %v2592
        %3977 = vmatpush1.bf16.msra.mxu0 %v2591
        %3978 = vmatprep.subr.bf16.mxu0 %v2600
        %3979 = vmatpush1.bf16.msra.mxu0 %v2599
        %3980 = vmatprep.subr.bf16.mxu0 %v2608
        %3981 = vmatpush1.bf16.msra.mxu0 %v2607
        %3982 = vmatprep.subr.bf16.mxu0 %v2616
        %3983 = vmatpush1.bf16.msra.mxu0 %v2615
        %3984 = vmatprep.subr.bf16.mxu0 %v2624
        %3985 = vmatpush1.bf16.msra.mxu0 %v2623
        %3986 = vmatprep.subr.bf16.mxu0 %v2632
        %3987 = vmatpush1.bf16.msra.mxu0 %v2631
        %3988 = vmatprep.subr.bf16.mxu0 %v2640
        %3989 = vmatpush1.bf16.msra.mxu0 %v2639
        %3990 = vmatprep.subr.bf16.mxu0 %v2648
        %3991 = vmatpush1.bf16.msra.mxu0 %v2647
        %3992 = vmatprep.subr.bf16.mxu0 %v2656
        %3993 = vmatpush1.bf16.msra.mxu0 %v2655
        %3994 = vmatprep.mubr.bf16.mxu0 %v3078
        %3995 = vmatmul.mubr.bf16.gmra.mrb[0].mxu0 %v3077
        %v3996 = vpop.f32.mrb[0].mxu0
        %v3997 = vadd.f32 %v3884, %v3996
        %v3998 = vpop.f32.mrb[0].mxu0
        %v3999 = vadd.f32 %v3886, %v3998
        %v4000 = vpop.f32.mrb[0].mxu0
        %v4001 = vadd.f32 %v3888, %v4000
        %v4002 = vpop.f32.mrb[0].mxu0
        %v4003 = vadd.f32 %v3890, %v4002
        %4004 = vmatprep.mubr.bf16.mxu0 %v3084
        %4005 = vmatmul.mubr.bf16.gmra.mrb[0].mxu0 %v3083
        %v4006 = vpop.f32.mrb[0].mxu0
        %v4007 = vadd.f32 %v3894, %v4006
        %v4008 = vpop.f32.mrb[0].mxu0
        %v4009 = vadd.f32 %v3896, %v4008
        %v4010 = vpop.f32.mrb[0].mxu0
        %v4011 = vadd.f32 %v3898, %v4010
        %v4012 = vpop.f32.mrb[0].mxu0
        %v4013 = vadd.f32 %v3900, %v4012
        %4014 = vmatprep.mubr.bf16.mxu0 %v3090
        %4015 = vmatmul.mubr.bf16.gmra.mrb[0].mxu0 %v3089
        %v4016 = vpop.f32.mrb[0].mxu0
        %v4017 = vadd.f32 %v3904, %v4016
        %v4018 = vpop.f32.mrb[0].mxu0
        %v4019 = vadd.f32 %v3906, %v4018
        %v4020 = vpop.f32.mrb[0].mxu0
        %v4021 = vadd.f32 %v3908, %v4020
        %v4022 = vpop.f32.mrb[0].mxu0
        %v4023 = vadd.f32 %v3910, %v4022
        %4024 = vmatprep.mubr.bf16.mxu0 %v3096
        %4025 = vmatmul.mubr.bf16.gmra.mrb[0].mxu0 %v3095
        %v4026 = vpop.f32.mrb[0].mxu0
        %v4027 = vadd.f32 %v3914, %v4026
        %v4028 = vpop.f32.mrb[0].mxu0
        %v4029 = vadd.f32 %v3916, %v4028
        %v4030 = vpop.f32.mrb[0].mxu0
        %v4031 = vadd.f32 %v3918, %v4030
        %v4032 = vpop.f32.mrb[0].mxu0
        %v4033 = vadd.f32 %v3920, %v4032
        %4034 = vmatprep.mubr.bf16.mxu0 %v3102
        %4035 = vmatmul.mubr.bf16.gmra.mrb[0].mxu0 %v3101
        %v4036 = vpop.f32.mrb[0].mxu0
        %v4037 = vadd.f32 %v3924, %v4036
        %v4038 = vpop.f32.mrb[0].mxu0
        %v4039 = vadd.f32 %v3926, %v4038
        %v4040 = vpop.f32.mrb[0].mxu0
        %v4041 = vadd.f32 %v3928, %v4040
        %v4042 = vpop.f32.mrb[0].mxu0
        %v4043 = vadd.f32 %v3930, %v4042
        %4044 = vmatprep.mubr.bf16.mxu0 %v3108
        %4045 = vmatmul.mubr.bf16.gmra.mrb[0].mxu0 %v3107
        %v4046 = vpop.f32.mrb[0].mxu0
        %v4047 = vadd.f32 %v3934, %v4046
        %v4048 = vpop.f32.mrb[0].mxu0
        %v4049 = vadd.f32 %v3936, %v4048
        %v4050 = vpop.f32.mrb[0].mxu0
        %v4051 = vadd.f32 %v3938, %v4050
        %v4052 = vpop.f32.mrb[0].mxu0
        %v4053 = vadd.f32 %v3940, %v4052
        %4054 = vmatprep.mubr.bf16.mxu0 %v3114
        %4055 = vmatmul.mubr.bf16.gmra.mrb[0].mxu0 %v3113
        %v4056 = vpop.f32.mrb[0].mxu0
        %v4057 = vadd.f32 %v3944, %v4056
        %v4058 = vpop.f32.mrb[0].mxu0
        %v4059 = vadd.f32 %v3946, %v4058
        %v4060 = vpop.f32.mrb[0].mxu0
        %v4061 = vadd.f32 %v3948, %v4060
        %v4062 = vpop.f32.mrb[0].mxu0
        %v4063 = vadd.f32 %v3950, %v4062
        %4064 = vmatprep.mubr.bf16.mxu0 %v3120
        %4065 = vmatmul.mubr.bf16.gmra.mrb[0].mxu0 %v3119
        %v4066 = vpop.f32.mrb[0].mxu0
        %v4067 = vadd.f32 %v3954, %v4066
        %v4068 = vpop.f32.mrb[0].mxu0
        %v4069 = vadd.f32 %v3956, %v4068
        %v4070 = vpop.f32.mrb[0].mxu0
        %v4071 = vadd.f32 %v3958, %v4070
        %v4072 = vpop.f32.mrb[0].mxu0
        %v4073 = vadd.f32 %v3960, %v4072
        %4074 = vdwg.mxu0
        %4075 = vmatprep.subr.bf16.mxu0 %v2664
        %4076 = vmatpush1.bf16.msra.mxu0 %v2663
        %4077 = vmatprep.subr.bf16.mxu0 %v2672
        %4078 = vmatpush1.bf16.msra.mxu0 %v2671
        %4079 = vmatprep.subr.bf16.mxu0 %v2680
        %4080 = vmatpush1.bf16.msra.mxu0 %v2679
        %4081 = vmatprep.subr.bf16.mxu0 %v2688
        %4082 = vmatpush1.bf16.msra.mxu0 %v2687
        %4083 = vmatprep.subr.bf16.mxu0 %v2696
        %4084 = vmatpush1.bf16.msra.mxu0 %v2695
        %4085 = vmatprep.subr.bf16.mxu0 %v2704
        %4086 = vmatpush1.bf16.msra.mxu0 %v2703
        %4087 = vmatprep.subr.bf16.mxu0 %v2712
        %4088 = vmatpush1.bf16.msra.mxu0 %v2711
        %4089 = vmatprep.subr.bf16.mxu0 %v2720
        %4090 = vmatpush1.bf16.msra.mxu0 %v2719
        %4091 = vmatprep.subr.bf16.mxu0 %v2728
        %4092 = vmatpush1.bf16.msra.mxu0 %v2727
        %4093 = vmatprep.subr.bf16.mxu0 %v2736
        %4094 = vmatpush1.bf16.msra.mxu0 %v2735
        %4095 = vmatprep.subr.bf16.mxu0 %v2744
        %4096 = vmatpush1.bf16.msra.mxu0 %v2743
        %4097 = vmatprep.subr.bf16.mxu0 %v2752
        %4098 = vmatpush1.bf16.msra.mxu0 %v2751
        %4099 = vmatprep.subr.bf16.mxu0 %v2760
        %4100 = vmatpush1.bf16.msra.mxu0 %v2759
        %4101 = vmatprep.subr.bf16.mxu0 %v2768
        %4102 = vmatpush1.bf16.msra.mxu0 %v2767
        %4103 = vmatprep.subr.bf16.mxu0 %v2776
        %4104 = vmatpush1.bf16.msra.mxu0 %v2775
        %4105 = vmatprep.subr.bf16.mxu0 %v2784
        %4106 = vmatpush1.bf16.msra.mxu0 %v2783
        %4107 = vmatprep.mubr.bf16.mxu0 %v3080
        %4108 = vmatmul.mubr.bf16.gmra.mrb[0].mxu0 %v3079
        %v4109 = vpop.f32.mrb[0].mxu0
        %v4110 = vadd.f32 %v3997, %v4109
        %v4111 = vpop.f32.mrb[0].mxu0
        %v4112 = vadd.f32 %v3999, %v4111
        %v4113 = vpop.f32.mrb[0].mxu0
        %v4114 = vadd.f32 %v4001, %v4113
        %v4115 = vpop.f32.mrb[0].mxu0
        %v4116 = vadd.f32 %v4003, %v4115
        %4117 = vmatprep.mubr.bf16.mxu0 %v3086
        %4118 = vmatmul.mubr.bf16.gmra.mrb[0].mxu0 %v3085
        %v4119 = vpop.f32.mrb[0].mxu0
        %v4120 = vadd.f32 %v4007, %v4119
        %v4121 = vpop.f32.mrb[0].mxu0
        %v4122 = vadd.f32 %v4009, %v4121
        %v4123 = vpop.f32.mrb[0].mxu0
        %v4124 = vadd.f32 %v4011, %v4123
        %v4125 = vpop.f32.mrb[0].mxu0
        %v4126 = vadd.f32 %v4013, %v4125
        %4127 = vmatprep.mubr.bf16.mxu0 %v3092
        %4128 = vmatmul.mubr.bf16.gmra.mrb[0].mxu0 %v3091
        %v4129 = vpop.f32.mrb[0].mxu0
        %v4130 = vadd.f32 %v4017, %v4129
        %v4131 = vpop.f32.mrb[0].mxu0
        %v4132 = vadd.f32 %v4019, %v4131
        %v4133 = vpop.f32.mrb[0].mxu0
        %v4134 = vadd.f32 %v4021, %v4133
        %v4135 = vpop.f32.mrb[0].mxu0
        %v4136 = vadd.f32 %v4023, %v4135
        %4137 = vmatprep.mubr.bf16.mxu0 %v3098
        %4138 = vmatmul.mubr.bf16.gmra.mrb[0].mxu0 %v3097
        %v4139 = vpop.f32.mrb[0].mxu0
        %v4140 = vadd.f32 %v4027, %v4139
        %v4141 = vpop.f32.mrb[0].mxu0
        %v4142 = vadd.f32 %v4029, %v4141
        %v4143 = vpop.f32.mrb[0].mxu0
        %v4144 = vadd.f32 %v4031, %v4143
        %v4145 = vpop.f32.mrb[0].mxu0
        %v4146 = vadd.f32 %v4033, %v4145
        %4147 = vmatprep.mubr.bf16.mxu0 %v3104
        %4148 = vmatmul.mubr.bf16.gmra.mrb[0].mxu0 %v3103
        %v4149 = vpop.f32.mrb[0].mxu0
        %v4150 = vadd.f32 %v4037, %v4149
        %v4151 = vpop.f32.mrb[0].mxu0
        %v4152 = vadd.f32 %v4039, %v4151
        %v4153 = vpop.f32.mrb[0].mxu0
        %v4154 = vadd.f32 %v4041, %v4153
        %v4155 = vpop.f32.mrb[0].mxu0
        %v4156 = vadd.f32 %v4043, %v4155
        %4157 = vmatprep.mubr.bf16.mxu0 %v3110
        %4158 = vmatmul.mubr.bf16.gmra.mrb[0].mxu0 %v3109
        %v4159 = vpop.f32.mrb[0].mxu0
        %v4160 = vadd.f32 %v4047, %v4159
        %v4161 = vpop.f32.mrb[0].mxu0
        %v4162 = vadd.f32 %v4049, %v4161
        %v4163 = vpop.f32.mrb[0].mxu0
        %v4164 = vadd.f32 %v4051, %v4163
        %v4165 = vpop.f32.mrb[0].mxu0
        %v4166 = vadd.f32 %v4053, %v4165
        %4167 = vmatprep.mubr.bf16.mxu0 %v3116
        %4168 = vmatmul.mubr.bf16.gmra.mrb[0].mxu0 %v3115
        %v4169 = vpop.f32.mrb[0].mxu0
        %v4170 = vadd.f32 %v4057, %v4169
        %v4171 = vpop.f32.mrb[0].mxu0
        %v4172 = vadd.f32 %v4059, %v4171
        %v4173 = vpop.f32.mrb[0].mxu0
        %v4174 = vadd.f32 %v4061, %v4173
        %v4175 = vpop.f32.mrb[0].mxu0
        %v4176 = vadd.f32 %v4063, %v4175
        %4177 = vmatprep.mubr.bf16.mxu0 %v3122
        %4178 = vmatmul.mubr.bf16.gmra.mrb[0].mxu0 %v3121
        %v4179 = vpop.f32.mrb[0].mxu0
        %v4180 = vadd.f32 %v4067, %v4179
        %v4181 = vpop.f32.mrb[0].mxu0
        %v4182 = vadd.f32 %v4069, %v4181
        %v4183 = vpop.f32.mrb[0].mxu0
        %v4184 = vadd.f32 %v4071, %v4183
        %v4185 = vpop.f32.mrb[0].mxu0
        %v4186 = vadd.f32 %v4073, %v4185
        %4187 = vdwg.mxu0
        %4188 = vmatprep.subr.bf16.mxu0 %v2410
        %4189 = vmatpush1.bf16.msra.mxu0 %v2409
        %4190 = vmatprep.subr.bf16.mxu0 %v2418
        %4191 = vmatpush1.bf16.msra.mxu0 %v2417
        %4192 = vmatprep.subr.bf16.mxu0 %v2426
        %4193 = vmatpush1.bf16.msra.mxu0 %v2425
        %4194 = vmatprep.subr.bf16.mxu0 %v2434
        %4195 = vmatpush1.bf16.msra.mxu0 %v2433
        %4196 = vmatprep.subr.bf16.mxu0 %v2442
        %4197 = vmatpush1.bf16.msra.mxu0 %v2441
        %4198 = vmatprep.subr.bf16.mxu0 %v2450
        %4199 = vmatpush1.bf16.msra.mxu0 %v2449
        %4200 = vmatprep.subr.bf16.mxu0 %v2458
        %4201 = vmatpush1.bf16.msra.mxu0 %v2457
        %4202 = vmatprep.subr.bf16.mxu0 %v2466
        %4203 = vmatpush1.bf16.msra.mxu0 %v2465
        %4204 = vmatprep.subr.bf16.mxu0 %v2474
        %4205 = vmatpush1.bf16.msra.mxu0 %v2473
        %4206 = vmatprep.subr.bf16.mxu0 %v2482
        %4207 = vmatpush1.bf16.msra.mxu0 %v2481
        %4208 = vmatprep.subr.bf16.mxu0 %v2490
        %4209 = vmatpush1.bf16.msra.mxu0 %v2489
        %4210 = vmatprep.subr.bf16.mxu0 %v2498
        %4211 = vmatpush1.bf16.msra.mxu0 %v2497
        %4212 = vmatprep.subr.bf16.mxu0 %v2506
        %4213 = vmatpush1.bf16.msra.mxu0 %v2505
        %4214 = vmatprep.subr.bf16.mxu0 %v2514
        %4215 = vmatpush1.bf16.msra.mxu0 %v2513
        %4216 = vmatprep.subr.bf16.mxu0 %v2522
        %4217 = vmatpush1.bf16.msra.mxu0 %v2521
        %4218 = vmatprep.subr.bf16.mxu0 %v2530
        %4219 = vmatpush1.bf16.msra.mxu0 %v2529
        %4220 = vmatprep.mubr.bf16.mxu0 %v3076
        %4221 = vmatmul.mubr.bf16.gmra.mrb[0].mxu0 %v3075
        %v4222 = vpop.f32.mrb[0].mxu0
        %v4223 = vadd.f32 %v2854, %v4222
        %v4224 = vpop.f32.mrb[0].mxu0
        %v4225 = vadd.f32 %v2854, %v4224
        %v4226 = vpop.f32.mrb[0].mxu0
        %v4227 = vadd.f32 %v2859, %v4226
        %v4228 = vpop.f32.mrb[0].mxu0
        %v4229 = vadd.f32 %v2859, %v4228
        %4230 = vmatprep.mubr.bf16.mxu0 %v3082
        %4231 = vmatmul.mubr.bf16.gmra.mrb[0].mxu0 %v3081
        %v4232 = vpop.f32.mrb[0].mxu0
        %v4233 = vadd.f32 %v2864, %v4232
        %v4234 = vpop.f32.mrb[0].mxu0
        %v4235 = vadd.f32 %v2864, %v4234
        %v4236 = vpop.f32.mrb[0].mxu0
        %v4237 = vadd.f32 %v2869, %v4236
        %v4238 = vpop.f32.mrb[0].mxu0
        %v4239 = vadd.f32 %v2869, %v4238
        %4240 = vmatprep.mubr.bf16.mxu0 %v3088
        %4241 = vmatmul.mubr.bf16.gmra.mrb[0].mxu0 %v3087
        %v4242 = vpop.f32.mrb[0].mxu0
        %v4243 = vadd.f32 %v2874, %v4242
        %v4244 = vpop.f32.mrb[0].mxu0
        %v4245 = vadd.f32 %v2874, %v4244
        %v4246 = vpop.f32.mrb[0].mxu0
        %v4247 = vadd.f32 %v2879, %v4246
        %v4248 = vpop.f32.mrb[0].mxu0
        %v4249 = vadd.f32 %v2879, %v4248
        %4250 = vmatprep.mubr.bf16.mxu0 %v3094
        %4251 = vmatmul.mubr.bf16.gmra.mrb[0].mxu0 %v3093
        %v4252 = vpop.f32.mrb[0].mxu0
        %v4253 = vadd.f32 %v2884, %v4252
        %v4254 = vpop.f32.mrb[0].mxu0
        %v4255 = vadd.f32 %v2884, %v4254
        %v4256 = vpop.f32.mrb[0].mxu0
        %v4257 = vadd.f32 %v2889, %v4256
        %v4258 = vpop.f32.mrb[0].mxu0
        %v4259 = vadd.f32 %v2889, %v4258
        %4260 = vmatprep.mubr.bf16.mxu0 %v3100
        %4261 = vmatmul.mubr.bf16.gmra.mrb[0].mxu0 %v3099
        %v4262 = vpop.f32.mrb[0].mxu0
        %v4263 = vadd.f32 %v2894, %v4262
        %v4264 = vpop.f32.mrb[0].mxu0
        %v4265 = vadd.f32 %v2894, %v4264
        %v4266 = vpop.f32.mrb[0].mxu0
        %v4267 = vadd.f32 %v2899, %v4266
        %v4268 = vpop.f32.mrb[0].mxu0
        %v4269 = vadd.f32 %v2899, %v4268
        %4270 = vmatprep.mubr.bf16.mxu0 %v3106
        %4271 = vmatmul.mubr.bf16.gmra.mrb[0].mxu0 %v3105
        %v4272 = vpop.f32.mrb[0].mxu0
        %v4273 = vadd.f32 %v2904, %v4272
        %v4274 = vpop.f32.mrb[0].mxu0
        %v4275 = vadd.f32 %v2904, %v4274
        %v4276 = vpop.f32.mrb[0].mxu0
        %v4277 = vadd.f32 %v2909, %v4276
        %v4278 = vpop.f32.mrb[0].mxu0
        %v4279 = vadd.f32 %v2909, %v4278
        %4280 = vmatprep.mubr.bf16.mxu0 %v3112
        %4281 = vmatmul.mubr.bf16.gmra.mrb[0].mxu0 %v3111
        %v4282 = vpop.f32.mrb[0].mxu0
        %v4283 = vadd.f32 %v2914, %v4282
        %v4284 = vpop.f32.mrb[0].mxu0
        %v4285 = vadd.f32 %v2914, %v4284
        %v4286 = vpop.f32.mrb[0].mxu0
        %v4287 = vadd.f32 %v2919, %v4286
        %v4288 = vpop.f32.mrb[0].mxu0
        %v4289 = vadd.f32 %v2919, %v4288
        %4290 = vmatprep.mubr.bf16.mxu0 %v3118
        %4291 = vmatmul.mubr.bf16.gmra.mrb[0].mxu0 %v3117
        %v4292 = vpop.f32.mrb[0].mxu0
        %v4293 = vadd.f32 %v2924, %v4292
        %v4294 = vpop.f32.mrb[0].mxu0
        %v4295 = vadd.f32 %v2924, %v4294
        %v4296 = vpop.f32.mrb[0].mxu0
        %v4297 = vadd.f32 %v2929, %v4296
        %v4298 = vpop.f32.mrb[0].mxu0
        %v4299 = vadd.f32 %v2929, %v4298
        %4300 = vdwg.mxu0
        %4301 = vmatprep.subr.bf16.mxu0 %v2538
        %4302 = vmatpush1.bf16.msra.mxu0 %v2537
        %4303 = vmatprep.subr.bf16.mxu0 %v2546
        %4304 = vmatpush1.bf16.msra.mxu0 %v2545
        %4305 = vmatprep.subr.bf16.mxu0 %v2554
        %4306 = vmatpush1.bf16.msra.mxu0 %v2553
        %4307 = vmatprep.subr.bf16.mxu0 %v2562
        %4308 = vmatpush1.bf16.msra.mxu0 %v2561
        %4309 = vmatprep.subr.bf16.mxu0 %v2570
        %4310 = vmatpush1.bf16.msra.mxu0 %v2569
        %4311 = vmatprep.subr.bf16.mxu0 %v2578
        %4312 = vmatpush1.bf16.msra.mxu0 %v2577
        %4313 = vmatprep.subr.bf16.mxu0 %v2586
        %4314 = vmatpush1.bf16.msra.mxu0 %v2585
        %4315 = vmatprep.subr.bf16.mxu0 %v2594
        %4316 = vmatpush1.bf16.msra.mxu0 %v2593
        %4317 = vmatprep.subr.bf16.mxu0 %v2602
        %4318 = vmatpush1.bf16.msra.mxu0 %v2601
        %4319 = vmatprep.subr.bf16.mxu0 %v2610
        %4320 = vmatpush1.bf16.msra.mxu0 %v2609
        %4321 = vmatprep.subr.bf16.mxu0 %v2618
        %4322 = vmatpush1.bf16.msra.mxu0 %v2617
        %4323 = vmatprep.subr.bf16.mxu0 %v2626
        %4324 = vmatpush1.bf16.msra.mxu0 %v2625
        %4325 = vmatprep.subr.bf16.mxu0 %v2634
        %4326 = vmatpush1.bf16.msra.mxu0 %v2633
        %4327 = vmatprep.subr.bf16.mxu0 %v2642
        %4328 = vmatpush1.bf16.msra.mxu0 %v2641
        %4329 = vmatprep.subr.bf16.mxu0 %v2650
        %4330 = vmatpush1.bf16.msra.mxu0 %v2649
        %4331 = vmatprep.subr.bf16.mxu0 %v2658
        %4332 = vmatpush1.bf16.msra.mxu0 %v2657
        %4333 = vmatprep.mubr.bf16.mxu0 %v3078
        %4334 = vmatmul.mubr.bf16.gmra.mrb[0].mxu0 %v3077
        %v4335 = vpop.f32.mrb[0].mxu0
        %v4336 = vadd.f32 %v4223, %v4335
        %v4337 = vpop.f32.mrb[0].mxu0
        %v4338 = vadd.f32 %v4225, %v4337
        %v4339 = vpop.f32.mrb[0].mxu0
        %v4340 = vadd.f32 %v4227, %v4339
        %v4341 = vpop.f32.mrb[0].mxu0
        %v4342 = vadd.f32 %v4229, %v4341
        %4343 = vmatprep.mubr.bf16.mxu0 %v3084
        %4344 = vmatmul.mubr.bf16.gmra.mrb[0].mxu0 %v3083
        %v4345 = vpop.f32.mrb[0].mxu0
        %v4346 = vadd.f32 %v4233, %v4345
        %v4347 = vpop.f32.mrb[0].mxu0
        %v4348 = vadd.f32 %v4235, %v4347
        %v4349 = vpop.f32.mrb[0].mxu0
        %v4350 = vadd.f32 %v4237, %v4349
        %v4351 = vpop.f32.mrb[0].mxu0
        %v4352 = vadd.f32 %v4239, %v4351
        %4353 = vmatprep.mubr.bf16.mxu0 %v3090
        %4354 = vmatmul.mubr.bf16.gmra.mrb[0].mxu0 %v3089
        %v4355 = vpop.f32.mrb[0].mxu0
        %v4356 = vadd.f32 %v4243, %v4355
        %v4357 = vpop.f32.mrb[0].mxu0
        %v4358 = vadd.f32 %v4245, %v4357
        %v4359 = vpop.f32.mrb[0].mxu0
        %v4360 = vadd.f32 %v4247, %v4359
        %v4361 = vpop.f32.mrb[0].mxu0
        %v4362 = vadd.f32 %v4249, %v4361
        %4363 = vmatprep.mubr.bf16.mxu0 %v3096
        %4364 = vmatmul.mubr.bf16.gmra.mrb[0].mxu0 %v3095
        %v4365 = vpop.f32.mrb[0].mxu0
        %v4366 = vadd.f32 %v4253, %v4365
        %v4367 = vpop.f32.mrb[0].mxu0
        %v4368 = vadd.f32 %v4255, %v4367
        %v4369 = vpop.f32.mrb[0].mxu0
        %v4370 = vadd.f32 %v4257, %v4369
        %v4371 = vpop.f32.mrb[0].mxu0
        %v4372 = vadd.f32 %v4259, %v4371
        %4373 = vmatprep.mubr.bf16.mxu0 %v3102
        %4374 = vmatmul.mubr.bf16.gmra.mrb[0].mxu0 %v3101
        %v4375 = vpop.f32.mrb[0].mxu0
        %v4376 = vadd.f32 %v4263, %v4375
        %v4377 = vpop.f32.mrb[0].mxu0
        %v4378 = vadd.f32 %v4265, %v4377
        %v4379 = vpop.f32.mrb[0].mxu0
        %v4380 = vadd.f32 %v4267, %v4379
        %v4381 = vpop.f32.mrb[0].mxu0
        %v4382 = vadd.f32 %v4269, %v4381
        %4383 = vmatprep.mubr.bf16.mxu0 %v3108
        %4384 = vmatmul.mubr.bf16.gmra.mrb[0].mxu0 %v3107
        %v4385 = vpop.f32.mrb[0].mxu0
        %v4386 = vadd.f32 %v4273, %v4385
        %v4387 = vpop.f32.mrb[0].mxu0
        %v4388 = vadd.f32 %v4275, %v4387
        %v4389 = vpop.f32.mrb[0].mxu0
        %v4390 = vadd.f32 %v4277, %v4389
        %v4391 = vpop.f32.mrb[0].mxu0
        %v4392 = vadd.f32 %v4279, %v4391
        %4393 = vmatprep.mubr.bf16.mxu0 %v3114
        %4394 = vmatmul.mubr.bf16.gmra.mrb[0].mxu0 %v3113
        %v4395 = vpop.f32.mrb[0].mxu0
        %v4396 = vadd.f32 %v4283, %v4395
        %v4397 = vpop.f32.mrb[0].mxu0
        %v4398 = vadd.f32 %v4285, %v4397
        %v4399 = vpop.f32.mrb[0].mxu0
        %v4400 = vadd.f32 %v4287, %v4399
        %v4401 = vpop.f32.mrb[0].mxu0
        %v4402 = vadd.f32 %v4289, %v4401
        %4403 = vmatprep.mubr.bf16.mxu0 %v3120
        %4404 = vmatmul.mubr.bf16.gmra.mrb[0].mxu0 %v3119
        %v4405 = vpop.f32.mrb[0].mxu0
        %v4406 = vadd.f32 %v4293, %v4405
        %v4407 = vpop.f32.mrb[0].mxu0
        %v4408 = vadd.f32 %v4295, %v4407
        %v4409 = vpop.f32.mrb[0].mxu0
        %v4410 = vadd.f32 %v4297, %v4409
        %v4411 = vpop.f32.mrb[0].mxu0
        %v4412 = vadd.f32 %v4299, %v4411
        %4413 = vdwg.mxu0
        %4414 = vmatprep.subr.bf16.mxu0 %v2666
        %4415 = vmatpush1.bf16.msra.mxu0 %v2665
        %4416 = vmatprep.subr.bf16.mxu0 %v2674
        %4417 = vmatpush1.bf16.msra.mxu0 %v2673
        %4418 = vmatprep.subr.bf16.mxu0 %v2682
        %4419 = vmatpush1.bf16.msra.mxu0 %v2681
        %4420 = vmatprep.subr.bf16.mxu0 %v2690
        %4421 = vmatpush1.bf16.msra.mxu0 %v2689
        %4422 = vmatprep.subr.bf16.mxu0 %v2698
        %4423 = vmatpush1.bf16.msra.mxu0 %v2697
        %4424 = vmatprep.subr.bf16.mxu0 %v2706
        %4425 = vmatpush1.bf16.msra.mxu0 %v2705
        %4426 = vmatprep.subr.bf16.mxu0 %v2714
        %4427 = vmatpush1.bf16.msra.mxu0 %v2713
        %4428 = vmatprep.subr.bf16.mxu0 %v2722
        %4429 = vmatpush1.bf16.msra.mxu0 %v2721
        %4430 = vmatprep.subr.bf16.mxu0 %v2730
        %4431 = vmatpush1.bf16.msra.mxu0 %v2729
        %4432 = vmatprep.subr.bf16.mxu0 %v2738
        %4433 = vmatpush1.bf16.msra.mxu0 %v2737
        %4434 = vmatprep.subr.bf16.mxu0 %v2746
        %4435 = vmatpush1.bf16.msra.mxu0 %v2745
        %4436 = vmatprep.subr.bf16.mxu0 %v2754
        %4437 = vmatpush1.bf16.msra.mxu0 %v2753
        %4438 = vmatprep.subr.bf16.mxu0 %v2762
        %4439 = vmatpush1.bf16.msra.mxu0 %v2761
        %4440 = vmatprep.subr.bf16.mxu0 %v2770
        %4441 = vmatpush1.bf16.msra.mxu0 %v2769
        %4442 = vmatprep.subr.bf16.mxu0 %v2778
        %4443 = vmatpush1.bf16.msra.mxu0 %v2777
        %4444 = vmatprep.subr.bf16.mxu0 %v2786
        %4445 = vmatpush1.bf16.msra.mxu0 %v2785
        %4446 = vmatprep.mubr.bf16.mxu0 %v3080
        %4447 = vmatmul.mubr.bf16.gmra.mrb[0].mxu0 %v3079
        %v4448 = vpop.f32.mrb[0].mxu0
        %v4449 = vadd.f32 %v4336, %v4448
        %v4450 = vpop.f32.mrb[0].mxu0
        %v4451 = vadd.f32 %v4338, %v4450
        %v4452 = vpop.f32.mrb[0].mxu0
        %v4453 = vadd.f32 %v4340, %v4452
        %v4454 = vpop.f32.mrb[0].mxu0
        %v4455 = vadd.f32 %v4342, %v4454
        %4456 = vmatprep.mubr.bf16.mxu0 %v3086
        %4457 = vmatmul.mubr.bf16.gmra.mrb[0].mxu0 %v3085
        %v4458 = vpop.f32.mrb[0].mxu0
        %v4459 = vadd.f32 %v4346, %v4458
        %v4460 = vpop.f32.mrb[0].mxu0
        %v4461 = vadd.f32 %v4348, %v4460
        %v4462 = vpop.f32.mrb[0].mxu0
        %v4463 = vadd.f32 %v4350, %v4462
        %v4464 = vpop.f32.mrb[0].mxu0
        %v4465 = vadd.f32 %v4352, %v4464
        %4466 = vmatprep.mubr.bf16.mxu0 %v3092
        %4467 = vmatmul.mubr.bf16.gmra.mrb[0].mxu0 %v3091
        %v4468 = vpop.f32.mrb[0].mxu0
        %v4469 = vadd.f32 %v4356, %v4468
        %v4470 = vpop.f32.mrb[0].mxu0
        %v4471 = vadd.f32 %v4358, %v4470
        %v4472 = vpop.f32.mrb[0].mxu0
        %v4473 = vadd.f32 %v4360, %v4472
        %v4474 = vpop.f32.mrb[0].mxu0
        %v4475 = vadd.f32 %v4362, %v4474
        %4476 = vmatprep.mubr.bf16.mxu0 %v3098
        %4477 = vmatmul.mubr.bf16.gmra.mrb[0].mxu0 %v3097
        %v4478 = vpop.f32.mrb[0].mxu0
        %v4479 = vadd.f32 %v4366, %v4478
        %v4480 = vpop.f32.mrb[0].mxu0
        %v4481 = vadd.f32 %v4368, %v4480
        %v4482 = vpop.f32.mrb[0].mxu0
        %v4483 = vadd.f32 %v4370, %v4482
        %v4484 = vpop.f32.mrb[0].mxu0
        %v4485 = vadd.f32 %v4372, %v4484
        %4486 = vmatprep.mubr.bf16.mxu0 %v3104
        %4487 = vmatmul.mubr.bf16.gmra.mrb[0].mxu0 %v3103
        %v4488 = vpop.f32.mrb[0].mxu0
        %v4489 = vadd.f32 %v4376, %v4488
        %v4490 = vpop.f32.mrb[0].mxu0
        %v4491 = vadd.f32 %v4378, %v4490
        %v4492 = vpop.f32.mrb[0].mxu0
        %v4493 = vadd.f32 %v4380, %v4492
        %v4494 = vpop.f32.mrb[0].mxu0
        %v4495 = vadd.f32 %v4382, %v4494
        %4496 = vmatprep.mubr.bf16.mxu0 %v3110
        %4497 = vmatmul.mubr.bf16.gmra.mrb[0].mxu0 %v3109
        %v4498 = vpop.f32.mrb[0].mxu0
        %v4499 = vadd.f32 %v4386, %v4498
        %v4500 = vpop.f32.mrb[0].mxu0
        %v4501 = vadd.f32 %v4388, %v4500
        %v4502 = vpop.f32.mrb[0].mxu0
        %v4503 = vadd.f32 %v4390, %v4502
        %v4504 = vpop.f32.mrb[0].mxu0
        %v4505 = vadd.f32 %v4392, %v4504
        %4506 = vmatprep.mubr.bf16.mxu0 %v3116
        %4507 = vmatmul.mubr.bf16.gmra.mrb[0].mxu0 %v3115
        %v4508 = vpop.f32.mrb[0].mxu0
        %v4509 = vadd.f32 %v4396, %v4508
        %v4510 = vpop.f32.mrb[0].mxu0
        %v4511 = vadd.f32 %v4398, %v4510
        %v4512 = vpop.f32.mrb[0].mxu0
        %v4513 = vadd.f32 %v4400, %v4512
        %v4514 = vpop.f32.mrb[0].mxu0
        %v4515 = vadd.f32 %v4402, %v4514
        %4516 = vmatprep.mubr.bf16.mxu0 %v3122
        %4517 = vmatmul.mubr.bf16.gmra.mrb[0].mxu0 %v3121
        %v4518 = vpop.f32.mrb[0].mxu0
        %v4519 = vadd.f32 %v4406, %v4518
        %v4520 = vpop.f32.mrb[0].mxu0
        %v4521 = vadd.f32 %v4408, %v4520
        %v4522 = vpop.f32.mrb[0].mxu0
        %v4523 = vadd.f32 %v4410, %v4522
        %v4524 = vpop.f32.mrb[0].mxu0
        %v4525 = vadd.f32 %v4412, %v4524
        %4526 = vdwg.mxu0
        %v4527 = vmin.f32 %v3432, 20.0
        %v4528 = vmin.f32 %v3434, 20.0
        %v4529 = vmin.f32 %v3771, 20.0
        %v4530 = vmin.f32 %v3773, 20.0
        %v4531 = vmin.f32 %v4110, 20.0
        %v4532 = vmin.f32 %v4112, 20.0
        %v4533 = vmin.f32 %v4449, 20.0
        %v4534 = vmin.f32 %v4451, 20.0
        %v4535 = vmin.f32 %v3436, 20.0
        %v4536 = vmin.f32 %v3438, 20.0
        %v4537 = vmin.f32 %v3775, 20.0
        %v4538 = vmin.f32 %v3777, 20.0
        %v4539 = vmin.f32 %v4114, 20.0
        %v4540 = vmin.f32 %v4116, 20.0
        %v4541 = vmin.f32 %v4453, 20.0
        %v4542 = vmin.f32 %v4455, 20.0
        %v4543 = vmin.f32 %v3442, 20.0
        %v4544 = vmin.f32 %v3444, 20.0
        %v4545 = vmin.f32 %v3781, 20.0
        %v4546 = vmin.f32 %v3783, 20.0
        %v4547 = vmin.f32 %v4120, 20.0
        %v4548 = vmin.f32 %v4122, 20.0
        %v4549 = vmin.f32 %v4459, 20.0
        %v4550 = vmin.f32 %v4461, 20.0
        %v4551 = vmin.f32 %v3446, 20.0
        %v4552 = vmin.f32 %v3448, 20.0
        %v4553 = vmin.f32 %v3785, 20.0
        %v4554 = vmin.f32 %v3787, 20.0
        %v4555 = vmin.f32 %v4124, 20.0
        %v4556 = vmin.f32 %v4126, 20.0
        %v4557 = vmin.f32 %v4463, 20.0
        %v4558 = vmin.f32 %v4465, 20.0
        %v4559 = vmin.f32 %v3452, 20.0
        %v4560 = vmin.f32 %v3454, 20.0
        %v4561 = vmin.f32 %v3791, 20.0
        %v4562 = vmin.f32 %v3793, 20.0
        %v4563 = vmin.f32 %v4130, 20.0
        %v4564 = vmin.f32 %v4132, 20.0
        %v4565 = vmin.f32 %v4469, 20.0
        %v4566 = vmin.f32 %v4471, 20.0
        %v4567 = vmin.f32 %v3456, 20.0
        %v4568 = vmin.f32 %v3458, 20.0
        %v4569 = vmin.f32 %v3795, 20.0
        %v4570 = vmin.f32 %v3797, 20.0
        %v4571 = vmin.f32 %v4134, 20.0
        %v4572 = vmin.f32 %v4136, 20.0
        %v4573 = vmin.f32 %v4473, 20.0
        %v4574 = vmin.f32 %v4475, 20.0
        %v4575 = vmin.f32 %v3462, 20.0
        %v4576 = vmin.f32 %v3464, 20.0
        %v4577 = vmin.f32 %v3801, 20.0
        %v4578 = vmin.f32 %v3803, 20.0
        %v4579 = vmin.f32 %v4140, 20.0
        %v4580 = vmin.f32 %v4142, 20.0
        %v4581 = vmin.f32 %v4479, 20.0
        %v4582 = vmin.f32 %v4481, 20.0
        %v4583 = vmin.f32 %v3466, 20.0
        %v4584 = vmin.f32 %v3468, 20.0
        %v4585 = vmin.f32 %v3805, 20.0
        %v4586 = vmin.f32 %v3807, 20.0
        %v4587 = vmin.f32 %v4144, 20.0
        %v4588 = vmin.f32 %v4146, 20.0
        %v4589 = vmin.f32 %v4483, 20.0
        %v4590 = vmin.f32 %v4485, 20.0
        %v4591 = vmin.f32 %v3472, 20.0
        %v4592 = vmin.f32 %v3474, 20.0
        %v4593 = vmin.f32 %v3811, 20.0
        %v4594 = vmin.f32 %v3813, 20.0
        %v4595 = vmin.f32 %v4150, 20.0
        %v4596 = vmin.f32 %v4152, 20.0
        %v4597 = vmin.f32 %v4489, 20.0
        %v4598 = vmin.f32 %v4491, 20.0
        %v4599 = vmin.f32 %v3476, 20.0
        %v4600 = vmin.f32 %v3478, 20.0
        %v4601 = vmin.f32 %v3815, 20.0
        %v4602 = vmin.f32 %v3817, 20.0
        %v4603 = vmin.f32 %v4154, 20.0
        %v4604 = vmin.f32 %v4156, 20.0
        %v4605 = vmin.f32 %v4493, 20.0
        %v4606 = vmin.f32 %v4495, 20.0
        %v4607 = vmin.f32 %v3482, 20.0
        %v4608 = vmin.f32 %v3484, 20.0
        %v4609 = vmin.f32 %v3821, 20.0
        %v4610 = vmin.f32 %v3823, 20.0
        %v4611 = vmin.f32 %v4160, 20.0
        %v4612 = vmin.f32 %v4162, 20.0
        %v4613 = vmin.f32 %v4499, 20.0
        %v4614 = vmin.f32 %v4501, 20.0
        %v4615 = vmin.f32 %v3486, 20.0
        %v4616 = vmin.f32 %v3488, 20.0
        %v4617 = vmin.f32 %v3825, 20.0
        %v4618 = vmin.f32 %v3827, 20.0
        %v4619 = vmin.f32 %v4164, 20.0
        %v4620 = vmin.f32 %v4166, 20.0
        %v4621 = vmin.f32 %v4503, 20.0
        %v4622 = vmin.f32 %v4505, 20.0
        %v4623 = vmin.f32 %v3492, 20.0
        %v4624 = vmin.f32 %v3494, 20.0
        %v4625 = vmin.f32 %v3831, 20.0
        %v4626 = vmin.f32 %v3833, 20.0
        %v4627 = vmin.f32 %v4170, 20.0
        %v4628 = vmin.f32 %v4172, 20.0
        %v4629 = vmin.f32 %v4509, 20.0
        %v4630 = vmin.f32 %v4511, 20.0
        %v4631 = vmin.f32 %v3496, 20.0
        %v4632 = vmin.f32 %v3498, 20.0
        %v4633 = vmin.f32 %v3835, 20.0
        %v4634 = vmin.f32 %v3837, 20.0
        %v4635 = vmin.f32 %v4174, 20.0
        %v4636 = vmin.f32 %v4176, 20.0
        %v4637 = vmin.f32 %v4513, 20.0
        %v4638 = vmin.f32 %v4515, 20.0
        %v4639 = vmin.f32 %v3502, 20.0
        %v4640 = vmin.f32 %v3504, 20.0
        %v4641 = vmin.f32 %v3841, 20.0
        %v4642 = vmin.f32 %v3843, 20.0
        %v4643 = vmin.f32 %v4180, 20.0
        %v4644 = vmin.f32 %v4182, 20.0
        %v4645 = vmin.f32 %v4519, 20.0
        %v4646 = vmin.f32 %v4521, 20.0
        %v4647 = vmin.f32 %v3506, 20.0
        %v4648 = vmin.f32 %v3508, 20.0
        %v4649 = vmin.f32 %v3845, 20.0
        %v4650 = vmin.f32 %v3847, 20.0
        %v4651 = vmin.f32 %v4184, 20.0
        %v4652 = vmin.f32 %v4186, 20.0
        %v4653 = vmin.f32 %v4523, 20.0
        %v4654 = vmin.f32 %v4525, 20.0
        %v4655 = vmul.f32 %v4527, 1.442695
        %v4656 = vpow.pop %v4655
        %v4657 = vmul.f32 %v4528, 1.442695
        %v4658 = vpow.pop %v4657
        %v4659 = vmul.f32 %v4529, 1.442695
        %v4660 = vpow.pop %v4659
        %v4661 = vmul.f32 %v4530, 1.442695
        %v4662 = vpow.pop %v4661
        %v4663 = vmul.f32 %v4531, 1.442695
        %v4664 = vpow.pop %v4663
        %v4665 = vmul.f32 %v4532, 1.442695
        %v4666 = vpow.pop %v4665
        %v4667 = vmul.f32 %v4533, 1.442695
        %v4668 = vpow.pop %v4667
        %v4669 = vmul.f32 %v4534, 1.442695
        %v4670 = vpow.pop %v4669
        %v4671 = vmul.f32 %v4535, 1.442695
        %v4672 = vpow.pop %v4671
        %v4673 = vmul.f32 %v4536, 1.442695
        %v4674 = vpow.pop %v4673
        %v4675 = vmul.f32 %v4537, 1.442695
        %v4676 = vpow.pop %v4675
        %v4677 = vmul.f32 %v4538, 1.442695
        %v4678 = vpow.pop %v4677
        %v4679 = vmul.f32 %v4539, 1.442695
        %v4680 = vpow.pop %v4679
        %v4681 = vmul.f32 %v4540, 1.442695
        %v4682 = vpow.pop %v4681
        %v4683 = vmul.f32 %v4541, 1.442695
        %v4684 = vpow.pop %v4683
        %v4685 = vmul.f32 %v4542, 1.442695
        %v4686 = vpow.pop %v4685
        %v4687 = vmul.f32 %v4543, 1.442695
        %v4688 = vpow.pop %v4687
        %v4689 = vmul.f32 %v4544, 1.442695
        %v4690 = vpow.pop %v4689
        %v4691 = vmul.f32 %v4545, 1.442695
        %v4692 = vpow.pop %v4691
        %v4693 = vmul.f32 %v4546, 1.442695
        %v4694 = vpow.pop %v4693
        %v4695 = vmul.f32 %v4547, 1.442695
        %v4696 = vpow.pop %v4695
        %v4697 = vmul.f32 %v4548, 1.442695
        %v4698 = vpow.pop %v4697
        %v4699 = vmul.f32 %v4549, 1.442695
        %v4700 = vpow.pop %v4699
        %v4701 = vmul.f32 %v4550, 1.442695
        %v4702 = vpow.pop %v4701
        %v4703 = vmul.f32 %v4551, 1.442695
        %v4704 = vpow.pop %v4703
        %v4705 = vmul.f32 %v4552, 1.442695
        %v4706 = vpow.pop %v4705
        %v4707 = vmul.f32 %v4553, 1.442695
        %v4708 = vpow.pop %v4707
        %v4709 = vmul.f32 %v4554, 1.442695
        %v4710 = vpow.pop %v4709
        %v4711 = vmul.f32 %v4555, 1.442695
        %v4712 = vpow.pop %v4711
        %v4713 = vmul.f32 %v4556, 1.442695
        %v4714 = vpow.pop %v4713
        %v4715 = vmul.f32 %v4557, 1.442695
        %v4716 = vpow.pop %v4715
        %v4717 = vmul.f32 %v4558, 1.442695
        %v4718 = vpow.pop %v4717
        %v4719 = vmul.f32 %v4559, 1.442695
        %v4720 = vpow.pop %v4719
        %v4721 = vmul.f32 %v4560, 1.442695
        %v4722 = vpow.pop %v4721
        %v4723 = vmul.f32 %v4561, 1.442695
        %v4724 = vpow.pop %v4723
        %v4725 = vmul.f32 %v4562, 1.442695
        %v4726 = vpow.pop %v4725
        %v4727 = vmul.f32 %v4563, 1.442695
        %v4728 = vpow.pop %v4727
        %v4729 = vmul.f32 %v4564, 1.442695
        %v4730 = vpow.pop %v4729
        %v4731 = vmul.f32 %v4565, 1.442695
        %v4732 = vpow.pop %v4731
        %v4733 = vmul.f32 %v4566, 1.442695
        %v4734 = vpow.pop %v4733
        %v4735 = vmul.f32 %v4567, 1.442695
        %v4736 = vpow.pop %v4735
        %v4737 = vmul.f32 %v4568, 1.442695
        %v4738 = vpow.pop %v4737
        %v4739 = vmul.f32 %v4569, 1.442695
        %v4740 = vpow.pop %v4739
        %v4741 = vmul.f32 %v4570, 1.442695
        %v4742 = vpow.pop %v4741
        %v4743 = vmul.f32 %v4571, 1.442695
        %v4744 = vpow.pop %v4743
        %v4745 = vmul.f32 %v4572, 1.442695
        %v4746 = vpow.pop %v4745
        %v4747 = vmul.f32 %v4573, 1.442695
        %v4748 = vpow.pop %v4747
        %v4749 = vmul.f32 %v4574, 1.442695
        %v4750 = vpow.pop %v4749
        %v4751 = vmul.f32 %v4575, 1.442695
        %v4752 = vpow.pop %v4751
        %v4753 = vmul.f32 %v4576, 1.442695
        %v4754 = vpow.pop %v4753
        %v4755 = vmul.f32 %v4577, 1.442695
        %v4756 = vpow.pop %v4755
        %v4757 = vmul.f32 %v4578, 1.442695
        %v4758 = vpow.pop %v4757
        %v4759 = vmul.f32 %v4579, 1.442695
        %v4760 = vpow.pop %v4759
        %v4761 = vmul.f32 %v4580, 1.442695
        %v4762 = vpow.pop %v4761
        %v4763 = vmul.f32 %v4581, 1.442695
        %v4764 = vpow.pop %v4763
        %v4765 = vmul.f32 %v4582, 1.442695
        %v4766 = vpow.pop %v4765
        %v4767 = vmul.f32 %v4583, 1.442695
        %v4768 = vpow.pop %v4767
        %v4769 = vmul.f32 %v4584, 1.442695
        %v4770 = vpow.pop %v4769
        %v4771 = vmul.f32 %v4585, 1.442695
        %v4772 = vpow.pop %v4771
        %v4773 = vmul.f32 %v4586, 1.442695
        %v4774 = vpow.pop %v4773
        %v4775 = vmul.f32 %v4587, 1.442695
        %v4776 = vpow.pop %v4775
        %v4777 = vmul.f32 %v4588, 1.442695
        %v4778 = vpow.pop %v4777
        %v4779 = vmul.f32 %v4589, 1.442695
        %v4780 = vpow.pop %v4779
        %v4781 = vmul.f32 %v4590, 1.442695
        %v4782 = vpow.pop %v4781
        %v4783 = vmul.f32 %v4591, 1.442695
        %v4784 = vpow.pop %v4783
        %v4785 = vmul.f32 %v4592, 1.442695
        %v4786 = vpow.pop %v4785
        %v4787 = vmul.f32 %v4593, 1.442695
        %v4788 = vpow.pop %v4787
        %v4789 = vmul.f32 %v4594, 1.442695
        %v4790 = vpow.pop %v4789
        %v4791 = vmul.f32 %v4595, 1.442695
        %v4792 = vpow.pop %v4791
        %v4793 = vmul.f32 %v4596, 1.442695
        %v4794 = vpow.pop %v4793
        %v4795 = vmul.f32 %v4597, 1.442695
        %v4796 = vpow.pop %v4795
        %v4797 = vmul.f32 %v4598, 1.442695
        %v4798 = vpow.pop %v4797
        %v4799 = vmul.f32 %v4599, 1.442695
        %v4800 = vpow.pop %v4799
        %v4801 = vmul.f32 %v4600, 1.442695
        %v4802 = vpow.pop %v4801
        %v4803 = vmul.f32 %v4601, 1.442695
        %v4804 = vpow.pop %v4803
        %v4805 = vmul.f32 %v4602, 1.442695
        %v4806 = vpow.pop %v4805
        %v4807 = vmul.f32 %v4603, 1.442695
        %v4808 = vpow.pop %v4807
        %v4809 = vmul.f32 %v4604, 1.442695
        %v4810 = vpow.pop %v4809
        %v4811 = vmul.f32 %v4605, 1.442695
        %v4812 = vpow.pop %v4811
        %v4813 = vmul.f32 %v4606, 1.442695
        %v4814 = vpow.pop %v4813
        %v4815 = vmul.f32 %v4607, 1.442695
        %v4816 = vpow.pop %v4815
        %v4817 = vmul.f32 %v4608, 1.442695
        %v4818 = vpow.pop %v4817
        %v4819 = vmul.f32 %v4609, 1.442695
        %v4820 = vpow.pop %v4819
        %v4821 = vmul.f32 %v4610, 1.442695
        %v4822 = vpow.pop %v4821
        %v4823 = vmul.f32 %v4611, 1.442695
        %v4824 = vpow.pop %v4823
        %v4825 = vmul.f32 %v4612, 1.442695
        %v4826 = vpow.pop %v4825
        %v4827 = vmul.f32 %v4613, 1.442695
        %v4828 = vpow.pop %v4827
        %v4829 = vmul.f32 %v4614, 1.442695
        %v4830 = vpow.pop %v4829
        %v4831 = vmul.f32 %v4615, 1.442695
        %v4832 = vpow.pop %v4831
        %v4833 = vmul.f32 %v4616, 1.442695
        %v4834 = vpow.pop %v4833
        %v4835 = vmul.f32 %v4617, 1.442695
        %v4836 = vpow.pop %v4835
        %v4837 = vmul.f32 %v4618, 1.442695
        %v4838 = vpow.pop %v4837
        %v4839 = vmul.f32 %v4619, 1.442695
        %v4840 = vpow.pop %v4839
        %v4841 = vmul.f32 %v4620, 1.442695
        %v4842 = vpow.pop %v4841
        %v4843 = vmul.f32 %v4621, 1.442695
        %v4844 = vpow.pop %v4843
        %v4845 = vmul.f32 %v4622, 1.442695
        %v4846 = vpow.pop %v4845
        %v4847 = vmul.f32 %v4623, 1.442695
        %v4848 = vpow.pop %v4847
        %v4849 = vmul.f32 %v4624, 1.442695
        %v4850 = vpow.pop %v4849
        %v4851 = vmul.f32 %v4625, 1.442695
        %v4852 = vpow.pop %v4851
        %v4853 = vmul.f32 %v4626, 1.442695
        %v4854 = vpow.pop %v4853
        %v4855 = vmul.f32 %v4627, 1.442695
        %v4856 = vpow.pop %v4855
        %v4857 = vmul.f32 %v4628, 1.442695
        %v4858 = vpow.pop %v4857
        %v4859 = vmul.f32 %v4629, 1.442695
        %v4860 = vpow.pop %v4859
        %v4861 = vmul.f32 %v4630, 1.442695
        %v4862 = vpow.pop %v4861
        %v4863 = vmul.f32 %v4631, 1.442695
        %v4864 = vpow.pop %v4863
        %v4865 = vmul.f32 %v4632, 1.442695
        %v4866 = vpow.pop %v4865
        %v4867 = vmul.f32 %v4633, 1.442695
        %v4868 = vpow.pop %v4867
        %v4869 = vmul.f32 %v4634, 1.442695
        %v4870 = vpow.pop %v4869
        %v4871 = vmul.f32 %v4635, 1.442695
        %v4872 = vpow.pop %v4871
        %v4873 = vmul.f32 %v4636, 1.442695
        %v4874 = vpow.pop %v4873
        %v4875 = vmul.f32 %v4637, 1.442695
        %v4876 = vpow.pop %v4875
        %v4877 = vmul.f32 %v4638, 1.442695
        %v4878 = vpow.pop %v4877
        %v4879 = vmul.f32 %v4639, 1.442695
        %v4880 = vpow.pop %v4879
        %v4881 = vmul.f32 %v4640, 1.442695
        %v4882 = vpow.pop %v4881
        %v4883 = vmul.f32 %v4641, 1.442695
        %v4884 = vpow.pop %v4883
        %v4885 = vmul.f32 %v4642, 1.442695
        %v4886 = vpow.pop %v4885
        %v4887 = vmul.f32 %v4643, 1.442695
        %v4888 = vpow.pop %v4887
        %v4889 = vmul.f32 %v4644, 1.442695
        %v4890 = vpow.pop %v4889
        %v4891 = vmul.f32 %v4645, 1.442695
        %v4892 = vpow.pop %v4891
        %v4893 = vmul.f32 %v4646, 1.442695
        %v4894 = vpow.pop %v4893
        %v4895 = vmul.f32 %v4647, 1.442695
        %v4896 = vpow.pop %v4895
        %v4897 = vmul.f32 %v4648, 1.442695
        %v4898 = vpow.pop %v4897
        %v4899 = vmul.f32 %v4649, 1.442695
        %v4900 = vpow.pop %v4899
        %v4901 = vmul.f32 %v4650, 1.442695
        %v4902 = vpow.pop %v4901
        %v4903 = vmul.f32 %v4651, 1.442695
        %v4904 = vpow.pop %v4903
        %v4905 = vmul.f32 %v4652, 1.442695
        %v4906 = vpow.pop %v4905
        %v4907 = vmul.f32 %v4653, 1.442695
        %v4908 = vpow.pop %v4907
        %v4909 = vmul.f32 %v4654, 1.442695
        %v4910 = vpow.pop %v4909
        %v4911 = vadd.f32 %v4656, 1.0
        %v4912 = vadd.f32 %v4658, 1.0
        %v4913 = vadd.f32 %v4660, 1.0
        %v4914 = vadd.f32 %v4662, 1.0
        %v4915 = vadd.f32 %v4664, 1.0
        %v4916 = vadd.f32 %v4666, 1.0
        %v4917 = vadd.f32 %v4668, 1.0
        %v4918 = vadd.f32 %v4670, 1.0
        %v4919 = vadd.f32 %v4672, 1.0
        %v4920 = vadd.f32 %v4674, 1.0
        %v4921 = vadd.f32 %v4676, 1.0
        %v4922 = vadd.f32 %v4678, 1.0
        %v4923 = vadd.f32 %v4680, 1.0
        %v4924 = vadd.f32 %v4682, 1.0
        %v4925 = vadd.f32 %v4684, 1.0
        %v4926 = vadd.f32 %v4686, 1.0
        %v4927 = vadd.f32 %v4688, 1.0
        %v4928 = vadd.f32 %v4690, 1.0
        %v4929 = vadd.f32 %v4692, 1.0
        %v4930 = vadd.f32 %v4694, 1.0
        %v4931 = vadd.f32 %v4696, 1.0
        %v4932 = vadd.f32 %v4698, 1.0
        %v4933 = vadd.f32 %v4700, 1.0
        %v4934 = vadd.f32 %v4702, 1.0
        %v4935 = vadd.f32 %v4704, 1.0
        %v4936 = vadd.f32 %v4706, 1.0
        %v4937 = vadd.f32 %v4708, 1.0
        %v4938 = vadd.f32 %v4710, 1.0
        %v4939 = vadd.f32 %v4712, 1.0
        %v4940 = vadd.f32 %v4714, 1.0
        %v4941 = vadd.f32 %v4716, 1.0
        %v4942 = vadd.f32 %v4718, 1.0
        %v4943 = vadd.f32 %v4720, 1.0
        %v4944 = vadd.f32 %v4722, 1.0
        %v4945 = vadd.f32 %v4724, 1.0
        %v4946 = vadd.f32 %v4726, 1.0
        %v4947 = vadd.f32 %v4728, 1.0
        %v4948 = vadd.f32 %v4730, 1.0
        %v4949 = vadd.f32 %v4732, 1.0
        %v4950 = vadd.f32 %v4734, 1.0
        %v4951 = vadd.f32 %v4736, 1.0
        %v4952 = vadd.f32 %v4738, 1.0
        %v4953 = vadd.f32 %v4740, 1.0
        %v4954 = vadd.f32 %v4742, 1.0
        %v4955 = vadd.f32 %v4744, 1.0
        %v4956 = vadd.f32 %v4746, 1.0
        %v4957 = vadd.f32 %v4748, 1.0
        %v4958 = vadd.f32 %v4750, 1.0
        %v4959 = vadd.f32 %v4752, 1.0
        %v4960 = vadd.f32 %v4754, 1.0
        %v4961 = vadd.f32 %v4756, 1.0
        %v4962 = vadd.f32 %v4758, 1.0
        %v4963 = vadd.f32 %v4760, 1.0
        %v4964 = vadd.f32 %v4762, 1.0
        %v4965 = vadd.f32 %v4764, 1.0
        %v4966 = vadd.f32 %v4766, 1.0
        %v4967 = vadd.f32 %v4768, 1.0
        %v4968 = vadd.f32 %v4770, 1.0
        %v4969 = vadd.f32 %v4772, 1.0
        %v4970 = vadd.f32 %v4774, 1.0
        %v4971 = vadd.f32 %v4776, 1.0
        %v4972 = vadd.f32 %v4778, 1.0
        %v4973 = vadd.f32 %v4780, 1.0
        %v4974 = vadd.f32 %v4782, 1.0
        %v4975 = vadd.f32 %v4784, 1.0
        %v4976 = vadd.f32 %v4786, 1.0
        %v4977 = vadd.f32 %v4788, 1.0
        %v4978 = vadd.f32 %v4790, 1.0
        %v4979 = vadd.f32 %v4792, 1.0
        %v4980 = vadd.f32 %v4794, 1.0
        %v4981 = vadd.f32 %v4796, 1.0
        %v4982 = vadd.f32 %v4798, 1.0
        %v4983 = vadd.f32 %v4800, 1.0
        %v4984 = vadd.f32 %v4802, 1.0
        %v4985 = vadd.f32 %v4804, 1.0
        %v4986 = vadd.f32 %v4806, 1.0
        %v4987 = vadd.f32 %v4808, 1.0
        %v4988 = vadd.f32 %v4810, 1.0
        %v4989 = vadd.f32 %v4812, 1.0
        %v4990 = vadd.f32 %v4814, 1.0
        %v4991 = vadd.f32 %v4816, 1.0
        %v4992 = vadd.f32 %v4818, 1.0
        %v4993 = vadd.f32 %v4820, 1.0
        %v4994 = vadd.f32 %v4822, 1.0
        %v4995 = vadd.f32 %v4824, 1.0
        %v4996 = vadd.f32 %v4826, 1.0
        %v4997 = vadd.f32 %v4828, 1.0
        %v4998 = vadd.f32 %v4830, 1.0
        %v4999 = vadd.f32 %v4832, 1.0
        %v5000 = vadd.f32 %v4834, 1.0
        %v5001 = vadd.f32 %v4836, 1.0
        %v5002 = vadd.f32 %v4838, 1.0
        %v5003 = vadd.f32 %v4840, 1.0
        %v5004 = vadd.f32 %v4842, 1.0
        %v5005 = vadd.f32 %v4844, 1.0
        %v5006 = vadd.f32 %v4846, 1.0
        %v5007 = vadd.f32 %v4848, 1.0
        %v5008 = vadd.f32 %v4850, 1.0
        %v5009 = vadd.f32 %v4852, 1.0
        %v5010 = vadd.f32 %v4854, 1.0
        %v5011 = vadd.f32 %v4856, 1.0
        %v5012 = vadd.f32 %v4858, 1.0
        %v5013 = vadd.f32 %v4860, 1.0
        %v5014 = vadd.f32 %v4862, 1.0
        %v5015 = vadd.f32 %v4864, 1.0
        %v5016 = vadd.f32 %v4866, 1.0
        %v5017 = vadd.f32 %v4868, 1.0
        %v5018 = vadd.f32 %v4870, 1.0
        %v5019 = vadd.f32 %v4872, 1.0
        %v5020 = vadd.f32 %v4874, 1.0
        %v5021 = vadd.f32 %v4876, 1.0
        %v5022 = vadd.f32 %v4878, 1.0
        %v5023 = vadd.f32 %v4880, 1.0
        %v5024 = vadd.f32 %v4882, 1.0
        %v5025 = vadd.f32 %v4884, 1.0
        %v5026 = vadd.f32 %v4886, 1.0
        %v5027 = vadd.f32 %v4888, 1.0
        %v5028 = vadd.f32 %v4890, 1.0
        %v5029 = vadd.f32 %v4892, 1.0
        %v5030 = vadd.f32 %v4894, 1.0
        %v5031 = vadd.f32 %v4896, 1.0
        %v5032 = vadd.f32 %v4898, 1.0
        %v5033 = vadd.f32 %v4900, 1.0
        %v5034 = vadd.f32 %v4902, 1.0
        %v5035 = vadd.f32 %v4904, 1.0
        %v5036 = vadd.f32 %v4906, 1.0
        %v5037 = vadd.f32 %v4908, 1.0
        %v5038 = vadd.f32 %v4910, 1.0
        %v5039 = vmul.f32 %v4911, %v4911
        %v5040 = vmul.f32 %v4912, %v4912
        %v5041 = vmul.f32 %v4913, %v4913
        %v5042 = vmul.f32 %v4914, %v4914
        %v5043 = vmul.f32 %v4915, %v4915
        %v5044 = vmul.f32 %v4916, %v4916
        %v5045 = vmul.f32 %v4917, %v4917
        %v5046 = vmul.f32 %v4918, %v4918
        %v5047 = vmul.f32 %v4919, %v4919
        %v5048 = vmul.f32 %v4920, %v4920
        %v5049 = vmul.f32 %v4921, %v4921
        %v5050 = vmul.f32 %v4922, %v4922
        %v5051 = vmul.f32 %v4923, %v4923
        %v5052 = vmul.f32 %v4924, %v4924
        %v5053 = vmul.f32 %v4925, %v4925
        %v5054 = vmul.f32 %v4926, %v4926
        %v5055 = vmul.f32 %v4927, %v4927
        %v5056 = vmul.f32 %v4928, %v4928
        %v5057 = vmul.f32 %v4929, %v4929
        %v5058 = vmul.f32 %v4930, %v4930
        %v5059 = vmul.f32 %v4931, %v4931
        %v5060 = vmul.f32 %v4932, %v4932
        %v5061 = vmul.f32 %v4933, %v4933
        %v5062 = vmul.f32 %v4934, %v4934
        %v5063 = vmul.f32 %v4935, %v4935
        %v5064 = vmul.f32 %v4936, %v4936
        %v5065 = vmul.f32 %v4937, %v4937
        %v5066 = vmul.f32 %v4938, %v4938
        %v5067 = vmul.f32 %v4939, %v4939
        %v5068 = vmul.f32 %v4940, %v4940
        %v5069 = vmul.f32 %v4941, %v4941
        %v5070 = vmul.f32 %v4942, %v4942
        %v5071 = vmul.f32 %v4943, %v4943
        %v5072 = vmul.f32 %v4944, %v4944
        %v5073 = vmul.f32 %v4945, %v4945
        %v5074 = vmul.f32 %v4946, %v4946
        %v5075 = vmul.f32 %v4947, %v4947
        %v5076 = vmul.f32 %v4948, %v4948
        %v5077 = vmul.f32 %v4949, %v4949
        %v5078 = vmul.f32 %v4950, %v4950
        %v5079 = vmul.f32 %v4951, %v4951
        %v5080 = vmul.f32 %v4952, %v4952
        %v5081 = vmul.f32 %v4953, %v4953
        %v5082 = vmul.f32 %v4954, %v4954
        %v5083 = vmul.f32 %v4955, %v4955
        %v5084 = vmul.f32 %v4956, %v4956
        %v5085 = vmul.f32 %v4957, %v4957
        %v5086 = vmul.f32 %v4958, %v4958
        %v5087 = vmul.f32 %v4959, %v4959
        %v5088 = vmul.f32 %v4960, %v4960
        %v5089 = vmul.f32 %v4961, %v4961
        %v5090 = vmul.f32 %v4962, %v4962
        %v5091 = vmul.f32 %v4963, %v4963
        %v5092 = vmul.f32 %v4964, %v4964
        %v5093 = vmul.f32 %v4965, %v4965
        %v5094 = vmul.f32 %v4966, %v4966
        %v5095 = vmul.f32 %v4967, %v4967
        %v5096 = vmul.f32 %v4968, %v4968
        %v5097 = vmul.f32 %v4969, %v4969
        %v5098 = vmul.f32 %v4970, %v4970
        %v5099 = vmul.f32 %v4971, %v4971
        %v5100 = vmul.f32 %v4972, %v4972
        %v5101 = vmul.f32 %v4973, %v4973
        %v5102 = vmul.f32 %v4974, %v4974
        %v5103 = vmul.f32 %v4975, %v4975
        %v5104 = vmul.f32 %v4976, %v4976
        %v5105 = vmul.f32 %v4977, %v4977
        %v5106 = vmul.f32 %v4978, %v4978
        %v5107 = vmul.f32 %v4979, %v4979
        %v5108 = vmul.f32 %v4980, %v4980
        %v5109 = vmul.f32 %v4981, %v4981
        %v5110 = vmul.f32 %v4982, %v4982
        %v5111 = vmul.f32 %v4983, %v4983
        %v5112 = vmul.f32 %v4984, %v4984
        %v5113 = vmul.f32 %v4985, %v4985
        %v5114 = vmul.f32 %v4986, %v4986
        %v5115 = vmul.f32 %v4987, %v4987
        %v5116 = vmul.f32 %v4988, %v4988
        %v5117 = vmul.f32 %v4989, %v4989
        %v5118 = vmul.f32 %v4990, %v4990
        %v5119 = vmul.f32 %v4991, %v4991
        %v5120 = vmul.f32 %v4992, %v4992
        %v5121 = vmul.f32 %v4993, %v4993
        %v5122 = vmul.f32 %v4994, %v4994
        %v5123 = vmul.f32 %v4995, %v4995
        %v5124 = vmul.f32 %v4996, %v4996
        %v5125 = vmul.f32 %v4997, %v4997
        %v5126 = vmul.f32 %v4998, %v4998
        %v5127 = vmul.f32 %v4999, %v4999
        %v5128 = vmul.f32 %v5000, %v5000
        %v5129 = vmul.f32 %v5001, %v5001
        %v5130 = vmul.f32 %v5002, %v5002
        %v5131 = vmul.f32 %v5003, %v5003
        %v5132 = vmul.f32 %v5004, %v5004
        %v5133 = vmul.f32 %v5005, %v5005
        %v5134 = vmul.f32 %v5006, %v5006
        %v5135 = vmul.f32 %v5007, %v5007
        %v5136 = vmul.f32 %v5008, %v5008
        %v5137 = vmul.f32 %v5009, %v5009
        %v5138 = vmul.f32 %v5010, %v5010
        %v5139 = vmul.f32 %v5011, %v5011
        %v5140 = vmul.f32 %v5012, %v5012
        %v5141 = vmul.f32 %v5013, %v5013
        %v5142 = vmul.f32 %v5014, %v5014
        %v5143 = vmul.f32 %v5015, %v5015
        %v5144 = vmul.f32 %v5016, %v5016
        %v5145 = vmul.f32 %v5017, %v5017
        %v5146 = vmul.f32 %v5018, %v5018
        %v5147 = vmul.f32 %v5019, %v5019
        %v5148 = vmul.f32 %v5020, %v5020
        %v5149 = vmul.f32 %v5021, %v5021
        %v5150 = vmul.f32 %v5022, %v5022
        %v5151 = vmul.f32 %v5023, %v5023
        %v5152 = vmul.f32 %v5024, %v5024
        %v5153 = vmul.f32 %v5025, %v5025
        %v5154 = vmul.f32 %v5026, %v5026
        %v5155 = vmul.f32 %v5027, %v5027
        %v5156 = vmul.f32 %v5028, %v5028
        %v5157 = vmul.f32 %v5029, %v5029
        %v5158 = vmul.f32 %v5030, %v5030
        %v5159 = vmul.f32 %v5031, %v5031
        %v5160 = vmul.f32 %v5032, %v5032
        %v5161 = vmul.f32 %v5033, %v5033
        %v5162 = vmul.f32 %v5034, %v5034
        %v5163 = vmul.f32 %v5035, %v5035
        %v5164 = vmul.f32 %v5036, %v5036
        %v5165 = vmul.f32 %v5037, %v5037
        %v5166 = vmul.f32 %v5038, %v5038
        %v5167 = vsub.f32 %v5039, 1.0
        %v5168 = vsub.f32 %v5040, 1.0
        %v5169 = vsub.f32 %v5041, 1.0
        %v5170 = vsub.f32 %v5042, 1.0
        %v5171 = vsub.f32 %v5043, 1.0
        %v5172 = vsub.f32 %v5044, 1.0
        %v5173 = vsub.f32 %v5045, 1.0
        %v5174 = vsub.f32 %v5046, 1.0
        %v5175 = vsub.f32 %v5047, 1.0
        %v5176 = vsub.f32 %v5048, 1.0
        %v5177 = vsub.f32 %v5049, 1.0
        %v5178 = vsub.f32 %v5050, 1.0
        %v5179 = vsub.f32 %v5051, 1.0
        %v5180 = vsub.f32 %v5052, 1.0
        %v5181 = vsub.f32 %v5053, 1.0
        %v5182 = vsub.f32 %v5054, 1.0
        %v5183 = vsub.f32 %v5055, 1.0
        %v5184 = vsub.f32 %v5056, 1.0
        %v5185 = vsub.f32 %v5057, 1.0
        %v5186 = vsub.f32 %v5058, 1.0
        %v5187 = vsub.f32 %v5059, 1.0
        %v5188 = vsub.f32 %v5060, 1.0
        %v5189 = vsub.f32 %v5061, 1.0
        %v5190 = vsub.f32 %v5062, 1.0
        %v5191 = vsub.f32 %v5063, 1.0
        %v5192 = vsub.f32 %v5064, 1.0
        %v5193 = vsub.f32 %v5065, 1.0
        %v5194 = vsub.f32 %v5066, 1.0
        %v5195 = vsub.f32 %v5067, 1.0
        %v5196 = vsub.f32 %v5068, 1.0
        %v5197 = vsub.f32 %v5069, 1.0
        %v5198 = vsub.f32 %v5070, 1.0
        %v5199 = vsub.f32 %v5071, 1.0
        %v5200 = vsub.f32 %v5072, 1.0
        %v5201 = vsub.f32 %v5073, 1.0
        %v5202 = vsub.f32 %v5074, 1.0
        %v5203 = vsub.f32 %v5075, 1.0
        %v5204 = vsub.f32 %v5076, 1.0
        %v5205 = vsub.f32 %v5077, 1.0
        %v5206 = vsub.f32 %v5078, 1.0
        %v5207 = vsub.f32 %v5079, 1.0
        %v5208 = vsub.f32 %v5080, 1.0
        %v5209 = vsub.f32 %v5081, 1.0
        %v5210 = vsub.f32 %v5082, 1.0
        %v5211 = vsub.f32 %v5083, 1.0
        %v5212 = vsub.f32 %v5084, 1.0
        %v5213 = vsub.f32 %v5085, 1.0
        %v5214 = vsub.f32 %v5086, 1.0
        %v5215 = vsub.f32 %v5087, 1.0
        %v5216 = vsub.f32 %v5088, 1.0
        %v5217 = vsub.f32 %v5089, 1.0
        %v5218 = vsub.f32 %v5090, 1.0
        %v5219 = vsub.f32 %v5091, 1.0
        %v5220 = vsub.f32 %v5092, 1.0
        %v5221 = vsub.f32 %v5093, 1.0
        %v5222 = vsub.f32 %v5094, 1.0
        %v5223 = vsub.f32 %v5095, 1.0
        %v5224 = vsub.f32 %v5096, 1.0
        %v5225 = vsub.f32 %v5097, 1.0
        %v5226 = vsub.f32 %v5098, 1.0
        %v5227 = vsub.f32 %v5099, 1.0
        %v5228 = vsub.f32 %v5100, 1.0
        %v5229 = vsub.f32 %v5101, 1.0
        %v5230 = vsub.f32 %v5102, 1.0
        %v5231 = vsub.f32 %v5103, 1.0
        %v5232 = vsub.f32 %v5104, 1.0
        %v5233 = vsub.f32 %v5105, 1.0
        %v5234 = vsub.f32 %v5106, 1.0
        %v5235 = vsub.f32 %v5107, 1.0
        %v5236 = vsub.f32 %v5108, 1.0
        %v5237 = vsub.f32 %v5109, 1.0
        %v5238 = vsub.f32 %v5110, 1.0
        %v5239 = vsub.f32 %v5111, 1.0
        %v5240 = vsub.f32 %v5112, 1.0
        %v5241 = vsub.f32 %v5113, 1.0
        %v5242 = vsub.f32 %v5114, 1.0
        %v5243 = vsub.f32 %v5115, 1.0
        %v5244 = vsub.f32 %v5116, 1.0
        %v5245 = vsub.f32 %v5117, 1.0
        %v5246 = vsub.f32 %v5118, 1.0
        %v5247 = vsub.f32 %v5119, 1.0
        %v5248 = vsub.f32 %v5120, 1.0
        %v5249 = vsub.f32 %v5121, 1.0
        %v5250 = vsub.f32 %v5122, 1.0
        %v5251 = vsub.f32 %v5123, 1.0
        %v5252 = vsub.f32 %v5124, 1.0
        %v5253 = vsub.f32 %v5125, 1.0
        %v5254 = vsub.f32 %v5126, 1.0
        %v5255 = vsub.f32 %v5127, 1.0
        %v5256 = vsub.f32 %v5128, 1.0
        %v5257 = vsub.f32 %v5129, 1.0
        %v5258 = vsub.f32 %v5130, 1.0
        %v5259 = vsub.f32 %v5131, 1.0
        %v5260 = vsub.f32 %v5132, 1.0
        %v5261 = vsub.f32 %v5133, 1.0
        %v5262 = vsub.f32 %v5134, 1.0
        %v5263 = vsub.f32 %v5135, 1.0
        %v5264 = vsub.f32 %v5136, 1.0
        %v5265 = vsub.f32 %v5137, 1.0
        %v5266 = vsub.f32 %v5138, 1.0
        %v5267 = vsub.f32 %v5139, 1.0
        %v5268 = vsub.f32 %v5140, 1.0
        %v5269 = vsub.f32 %v5141, 1.0
        %v5270 = vsub.f32 %v5142, 1.0
        %v5271 = vsub.f32 %v5143, 1.0
        %v5272 = vsub.f32 %v5144, 1.0
        %v5273 = vsub.f32 %v5145, 1.0
        %v5274 = vsub.f32 %v5146, 1.0
        %v5275 = vsub.f32 %v5147, 1.0
        %v5276 = vsub.f32 %v5148, 1.0
        %v5277 = vsub.f32 %v5149, 1.0
        %v5278 = vsub.f32 %v5150, 1.0
        %v5279 = vsub.f32 %v5151, 1.0
        %v5280 = vsub.f32 %v5152, 1.0
        %v5281 = vsub.f32 %v5153, 1.0
        %v5282 = vsub.f32 %v5154, 1.0
        %v5283 = vsub.f32 %v5155, 1.0
        %v5284 = vsub.f32 %v5156, 1.0
        %v5285 = vsub.f32 %v5157, 1.0
        %v5286 = vsub.f32 %v5158, 1.0
        %v5287 = vsub.f32 %v5159, 1.0
        %v5288 = vsub.f32 %v5160, 1.0
        %v5289 = vsub.f32 %v5161, 1.0
        %v5290 = vsub.f32 %v5162, 1.0
        %v5291 = vsub.f32 %v5163, 1.0
        %v5292 = vsub.f32 %v5164, 1.0
        %v5293 = vsub.f32 %v5165, 1.0
        %v5294 = vsub.f32 %v5166, 1.0
        %v5295 = vmul.f32 %v3432, %v5167
        %v5296 = vmul.f32 %v3434, %v5168
        %v5297 = vmul.f32 %v3771, %v5169
        %v5298 = vmul.f32 %v3773, %v5170
        %v5299 = vmul.f32 %v4110, %v5171
        %v5300 = vmul.f32 %v4112, %v5172
        %v5301 = vmul.f32 %v4449, %v5173
        %v5302 = vmul.f32 %v4451, %v5174
        %v5303 = vmul.f32 %v3436, %v5175
        %v5304 = vmul.f32 %v3438, %v5176
        %v5305 = vmul.f32 %v3775, %v5177
        %v5306 = vmul.f32 %v3777, %v5178
        %v5307 = vmul.f32 %v4114, %v5179
        %v5308 = vmul.f32 %v4116, %v5180
        %v5309 = vmul.f32 %v4453, %v5181
        %v5310 = vmul.f32 %v4455, %v5182
        %v5311 = vmul.f32 %v3442, %v5183
        %v5312 = vmul.f32 %v3444, %v5184
        %v5313 = vmul.f32 %v3781, %v5185
        %v5314 = vmul.f32 %v3783, %v5186
        %v5315 = vmul.f32 %v4120, %v5187
        %v5316 = vmul.f32 %v4122, %v5188
        %v5317 = vmul.f32 %v4459, %v5189
        %v5318 = vmul.f32 %v4461, %v5190
        %v5319 = vmul.f32 %v3446, %v5191
        %v5320 = vmul.f32 %v3448, %v5192
        %v5321 = vmul.f32 %v3785, %v5193
        %v5322 = vmul.f32 %v3787, %v5194
        %v5323 = vmul.f32 %v4124, %v5195
        %v5324 = vmul.f32 %v4126, %v5196
        %v5325 = vmul.f32 %v4463, %v5197
        %v5326 = vmul.f32 %v4465, %v5198
        %v5327 = vmul.f32 %v3452, %v5199
        %v5328 = vmul.f32 %v3454, %v5200
        %v5329 = vmul.f32 %v3791, %v5201
        %v5330 = vmul.f32 %v3793, %v5202
        %v5331 = vmul.f32 %v4130, %v5203
        %v5332 = vmul.f32 %v4132, %v5204
        %v5333 = vmul.f32 %v4469, %v5205
        %v5334 = vmul.f32 %v4471, %v5206
        %v5335 = vmul.f32 %v3456, %v5207
        %v5336 = vmul.f32 %v3458, %v5208
        %v5337 = vmul.f32 %v3795, %v5209
        %v5338 = vmul.f32 %v3797, %v5210
        %v5339 = vmul.f32 %v4134, %v5211
        %v5340 = vmul.f32 %v4136, %v5212
        %v5341 = vmul.f32 %v4473, %v5213
        %v5342 = vmul.f32 %v4475, %v5214
        %v5343 = vmul.f32 %v3462, %v5215
        %v5344 = vmul.f32 %v3464, %v5216
        %v5345 = vmul.f32 %v3801, %v5217
        %v5346 = vmul.f32 %v3803, %v5218
        %v5347 = vmul.f32 %v4140, %v5219
        %v5348 = vmul.f32 %v4142, %v5220
        %v5349 = vmul.f32 %v4479, %v5221
        %v5350 = vmul.f32 %v4481, %v5222
        %v5351 = vmul.f32 %v3466, %v5223
        %v5352 = vmul.f32 %v3468, %v5224
        %v5353 = vmul.f32 %v3805, %v5225
        %v5354 = vmul.f32 %v3807, %v5226
        %v5355 = vmul.f32 %v4144, %v5227
        %v5356 = vmul.f32 %v4146, %v5228
        %v5357 = vmul.f32 %v4483, %v5229
        %v5358 = vmul.f32 %v4485, %v5230
        %v5359 = vmul.f32 %v3472, %v5231
        %v5360 = vmul.f32 %v3474, %v5232
        %v5361 = vmul.f32 %v3811, %v5233
        %v5362 = vmul.f32 %v3813, %v5234
        %v5363 = vmul.f32 %v4150, %v5235
        %v5364 = vmul.f32 %v4152, %v5236
        %v5365 = vmul.f32 %v4489, %v5237
        %v5366 = vmul.f32 %v4491, %v5238
        %v5367 = vmul.f32 %v3476, %v5239
        %v5368 = vmul.f32 %v3478, %v5240
        %v5369 = vmul.f32 %v3815, %v5241
        %v5370 = vmul.f32 %v3817, %v5242
        %v5371 = vmul.f32 %v4154, %v5243
        %v5372 = vmul.f32 %v4156, %v5244
        %v5373 = vmul.f32 %v4493, %v5245
        %v5374 = vmul.f32 %v4495, %v5246
        %v5375 = vmul.f32 %v3482, %v5247
        %v5376 = vmul.f32 %v3484, %v5248
        %v5377 = vmul.f32 %v3821, %v5249
        %v5378 = vmul.f32 %v3823, %v5250
        %v5379 = vmul.f32 %v4160, %v5251
        %v5380 = vmul.f32 %v4162, %v5252
        %v5381 = vmul.f32 %v4499, %v5253
        %v5382 = vmul.f32 %v4501, %v5254
        %v5383 = vmul.f32 %v3486, %v5255
        %v5384 = vmul.f32 %v3488, %v5256
        %v5385 = vmul.f32 %v3825, %v5257
        %v5386 = vmul.f32 %v3827, %v5258
        %v5387 = vmul.f32 %v4164, %v5259
        %v5388 = vmul.f32 %v4166, %v5260
        %v5389 = vmul.f32 %v4503, %v5261
        %v5390 = vmul.f32 %v4505, %v5262
        %v5391 = vmul.f32 %v3492, %v5263
        %v5392 = vmul.f32 %v3494, %v5264
        %v5393 = vmul.f32 %v3831, %v5265
        %v5394 = vmul.f32 %v3833, %v5266
        %v5395 = vmul.f32 %v4170, %v5267
        %v5396 = vmul.f32 %v4172, %v5268
        %v5397 = vmul.f32 %v4509, %v5269
        %v5398 = vmul.f32 %v4511, %v5270
        %v5399 = vmul.f32 %v3496, %v5271
        %v5400 = vmul.f32 %v3498, %v5272
        %v5401 = vmul.f32 %v3835, %v5273
        %v5402 = vmul.f32 %v3837, %v5274
        %v5403 = vmul.f32 %v4174, %v5275
        %v5404 = vmul.f32 %v4176, %v5276
        %v5405 = vmul.f32 %v4513, %v5277
        %v5406 = vmul.f32 %v4515, %v5278
        %v5407 = vmul.f32 %v3502, %v5279
        %v5408 = vmul.f32 %v3504, %v5280
        %v5409 = vmul.f32 %v3841, %v5281
        %v5410 = vmul.f32 %v3843, %v5282
        %v5411 = vmul.f32 %v4180, %v5283
        %v5412 = vmul.f32 %v4182, %v5284
        %v5413 = vmul.f32 %v4519, %v5285
        %v5414 = vmul.f32 %v4521, %v5286
        %v5415 = vmul.f32 %v3506, %v5287
        %v5416 = vmul.f32 %v3508, %v5288
        %v5417 = vmul.f32 %v3845, %v5289
        %v5418 = vmul.f32 %v3847, %v5290
        %v5419 = vmul.f32 %v4184, %v5291
        %v5420 = vmul.f32 %v4186, %v5292
        %v5421 = vmul.f32 %v4523, %v5293
        %v5422 = vmul.f32 %v4525, %v5294
        %v5423 = vadd.f32 %v5039, 1.0
        %v5424 = vadd.f32 %v5040, 1.0
        %v5425 = vadd.f32 %v5041, 1.0
        %v5426 = vadd.f32 %v5042, 1.0
        %v5427 = vadd.f32 %v5043, 1.0
        %v5428 = vadd.f32 %v5044, 1.0
        %v5429 = vadd.f32 %v5045, 1.0
        %v5430 = vadd.f32 %v5046, 1.0
        %v5431 = vadd.f32 %v5047, 1.0
        %v5432 = vadd.f32 %v5048, 1.0
        %v5433 = vadd.f32 %v5049, 1.0
        %v5434 = vadd.f32 %v5050, 1.0
        %v5435 = vadd.f32 %v5051, 1.0
        %v5436 = vadd.f32 %v5052, 1.0
        %v5437 = vadd.f32 %v5053, 1.0
        %v5438 = vadd.f32 %v5054, 1.0
        %v5439 = vadd.f32 %v5055, 1.0
        %v5440 = vadd.f32 %v5056, 1.0
        %v5441 = vadd.f32 %v5057, 1.0
        %v5442 = vadd.f32 %v5058, 1.0
        %v5443 = vadd.f32 %v5059, 1.0
        %v5444 = vadd.f32 %v5060, 1.0
        %v5445 = vadd.f32 %v5061, 1.0
        %v5446 = vadd.f32 %v5062, 1.0
        %v5447 = vadd.f32 %v5063, 1.0
        %v5448 = vadd.f32 %v5064, 1.0
        %v5449 = vadd.f32 %v5065, 1.0
        %v5450 = vadd.f32 %v5066, 1.0
        %v5451 = vadd.f32 %v5067, 1.0
        %v5452 = vadd.f32 %v5068, 1.0
        %v5453 = vadd.f32 %v5069, 1.0
        %v5454 = vadd.f32 %v5070, 1.0
        %v5455 = vadd.f32 %v5071, 1.0
        %v5456 = vadd.f32 %v5072, 1.0
        %v5457 = vadd.f32 %v5073, 1.0
        %v5458 = vadd.f32 %v5074, 1.0
        %v5459 = vadd.f32 %v5075, 1.0
        %v5460 = vadd.f32 %v5076, 1.0
        %v5461 = vadd.f32 %v5077, 1.0
        %v5462 = vadd.f32 %v5078, 1.0
        %v5463 = vadd.f32 %v5079, 1.0
        %v5464 = vadd.f32 %v5080, 1.0
        %v5465 = vadd.f32 %v5081, 1.0
        %v5466 = vadd.f32 %v5082, 1.0
        %v5467 = vadd.f32 %v5083, 1.0
        %v5468 = vadd.f32 %v5084, 1.0
        %v5469 = vadd.f32 %v5085, 1.0
        %v5470 = vadd.f32 %v5086, 1.0
        %v5471 = vadd.f32 %v5087, 1.0
        %v5472 = vadd.f32 %v5088, 1.0
        %v5473 = vadd.f32 %v5089, 1.0
        %v5474 = vadd.f32 %v5090, 1.0
        %v5475 = vadd.f32 %v5091, 1.0
        %v5476 = vadd.f32 %v5092, 1.0
        %v5477 = vadd.f32 %v5093, 1.0
        %v5478 = vadd.f32 %v5094, 1.0
        %v5479 = vadd.f32 %v5095, 1.0
        %v5480 = vadd.f32 %v5096, 1.0
        %v5481 = vadd.f32 %v5097, 1.0
        %v5482 = vadd.f32 %v5098, 1.0
        %v5483 = vadd.f32 %v5099, 1.0
        %v5484 = vadd.f32 %v5100, 1.0
        %v5485 = vadd.f32 %v5101, 1.0
        %v5486 = vadd.f32 %v5102, 1.0
        %v5487 = vadd.f32 %v5103, 1.0
        %v5488 = vadd.f32 %v5104, 1.0
        %v5489 = vadd.f32 %v5105, 1.0
        %v5490 = vadd.f32 %v5106, 1.0
        %v5491 = vadd.f32 %v5107, 1.0
        %v5492 = vadd.f32 %v5108, 1.0
        %v5493 = vadd.f32 %v5109, 1.0
        %v5494 = vadd.f32 %v5110, 1.0
        %v5495 = vadd.f32 %v5111, 1.0
        %v5496 = vadd.f32 %v5112, 1.0
        %v5497 = vadd.f32 %v5113, 1.0
        %v5498 = vadd.f32 %v5114, 1.0
        %v5499 = vadd.f32 %v5115, 1.0
        %v5500 = vadd.f32 %v5116, 1.0
        %v5501 = vadd.f32 %v5117, 1.0
        %v5502 = vadd.f32 %v5118, 1.0
        %v5503 = vadd.f32 %v5119, 1.0
        %v5504 = vadd.f32 %v5120, 1.0
        %v5505 = vadd.f32 %v5121, 1.0
        %v5506 = vadd.f32 %v5122, 1.0
        %v5507 = vadd.f32 %v5123, 1.0
        %v5508 = vadd.f32 %v5124, 1.0
        %v5509 = vadd.f32 %v5125, 1.0
        %v5510 = vadd.f32 %v5126, 1.0
        %v5511 = vadd.f32 %v5127, 1.0
        %v5512 = vadd.f32 %v5128, 1.0
        %v5513 = vadd.f32 %v5129, 1.0
        %v5514 = vadd.f32 %v5130, 1.0
        %v5515 = vadd.f32 %v5131, 1.0
        %v5516 = vadd.f32 %v5132, 1.0
        %v5517 = vadd.f32 %v5133, 1.0
        %v5518 = vadd.f32 %v5134, 1.0
        %v5519 = vadd.f32 %v5135, 1.0
        %v5520 = vadd.f32 %v5136, 1.0
        %v5521 = vadd.f32 %v5137, 1.0
        %v5522 = vadd.f32 %v5138, 1.0
        %v5523 = vadd.f32 %v5139, 1.0
        %v5524 = vadd.f32 %v5140, 1.0
        %v5525 = vadd.f32 %v5141, 1.0
        %v5526 = vadd.f32 %v5142, 1.0
        %v5527 = vadd.f32 %v5143, 1.0
        %v5528 = vadd.f32 %v5144, 1.0
        %v5529 = vadd.f32 %v5145, 1.0
        %v5530 = vadd.f32 %v5146, 1.0
        %v5531 = vadd.f32 %v5147, 1.0
        %v5532 = vadd.f32 %v5148, 1.0
        %v5533 = vadd.f32 %v5149, 1.0
        %v5534 = vadd.f32 %v5150, 1.0
        %v5535 = vadd.f32 %v5151, 1.0
        %v5536 = vadd.f32 %v5152, 1.0
        %v5537 = vadd.f32 %v5153, 1.0
        %v5538 = vadd.f32 %v5154, 1.0
        %v5539 = vadd.f32 %v5155, 1.0
        %v5540 = vadd.f32 %v5156, 1.0
        %v5541 = vadd.f32 %v5157, 1.0
        %v5542 = vadd.f32 %v5158, 1.0
        %v5543 = vadd.f32 %v5159, 1.0
        %v5544 = vadd.f32 %v5160, 1.0
        %v5545 = vadd.f32 %v5161, 1.0
        %v5546 = vadd.f32 %v5162, 1.0
        %v5547 = vadd.f32 %v5163, 1.0
        %v5548 = vadd.f32 %v5164, 1.0
        %v5549 = vadd.f32 %v5165, 1.0
        %v5550 = vadd.f32 %v5166, 1.0
        %v5551 = vrcp.pop %v5423
        %v5552 = vrcp.pop %v5424
        %v5553 = vrcp.pop %v5425
        %v5554 = vrcp.pop %v5426
        %v5555 = vrcp.pop %v5427
        %v5556 = vrcp.pop %v5428
        %v5557 = vrcp.pop %v5429
        %v5558 = vrcp.pop %v5430
        %v5559 = vrcp.pop %v5431
        %v5560 = vrcp.pop %v5432
        %v5561 = vrcp.pop %v5433
        %v5562 = vrcp.pop %v5434
        %v5563 = vrcp.pop %v5435
        %v5564 = vrcp.pop %v5436
        %v5565 = vrcp.pop %v5437
        %v5566 = vrcp.pop %v5438
        %v5567 = vrcp.pop %v5439
        %v5568 = vrcp.pop %v5440
        %v5569 = vrcp.pop %v5441
        %v5570 = vrcp.pop %v5442
        %v5571 = vrcp.pop %v5443
        %v5572 = vrcp.pop %v5444
        %v5573 = vrcp.pop %v5445
        %v5574 = vrcp.pop %v5446
        %v5575 = vrcp.pop %v5447
        %v5576 = vrcp.pop %v5448
        %v5577 = vrcp.pop %v5449
        %v5578 = vrcp.pop %v5450
        %v5579 = vrcp.pop %v5451
        %v5580 = vrcp.pop %v5452
        %v5581 = vrcp.pop %v5453
        %v5582 = vrcp.pop %v5454
        %v5583 = vrcp.pop %v5455
        %v5584 = vrcp.pop %v5456
        %v5585 = vrcp.pop %v5457
        %v5586 = vrcp.pop %v5458
        %v5587 = vrcp.pop %v5459
        %v5588 = vrcp.pop %v5460
        %v5589 = vrcp.pop %v5461
        %v5590 = vrcp.pop %v5462
        %v5591 = vrcp.pop %v5463
        %v5592 = vrcp.pop %v5464
        %v5593 = vrcp.pop %v5465
        %v5594 = vrcp.pop %v5466
        %v5595 = vrcp.pop %v5467
        %v5596 = vrcp.pop %v5468
        %v5597 = vrcp.pop %v5469
        %v5598 = vrcp.pop %v5470
        %v5599 = vrcp.pop %v5471
        %v5600 = vrcp.pop %v5472
        %v5601 = vrcp.pop %v5473
        %v5602 = vrcp.pop %v5474
        %v5603 = vrcp.pop %v5475
        %v5604 = vrcp.pop %v5476
        %v5605 = vrcp.pop %v5477
        %v5606 = vrcp.pop %v5478
        %v5607 = vrcp.pop %v5479
        %v5608 = vrcp.pop %v5480
        %v5609 = vrcp.pop %v5481
        %v5610 = vrcp.pop %v5482
        %v5611 = vrcp.pop %v5483
        %v5612 = vrcp.pop %v5484
        %v5613 = vrcp.pop %v5485
        %v5614 = vrcp.pop %v5486
        %v5615 = vrcp.pop %v5487
        %v5616 = vrcp.pop %v5488
        %v5617 = vrcp.pop %v5489
        %v5618 = vrcp.pop %v5490
        %v5619 = vrcp.pop %v5491
        %v5620 = vrcp.pop %v5492
        %v5621 = vrcp.pop %v5493
        %v5622 = vrcp.pop %v5494
        %v5623 = vrcp.pop %v5495
        %v5624 = vrcp.pop %v5496
        %v5625 = vrcp.pop %v5497
        %v5626 = vrcp.pop %v5498
        %v5627 = vrcp.pop %v5499
        %v5628 = vrcp.pop %v5500
        %v5629 = vrcp.pop %v5501
        %v5630 = vrcp.pop %v5502
        %v5631 = vrcp.pop %v5503
        %v5632 = vrcp.pop %v5504
        %v5633 = vrcp.pop %v5505
        %v5634 = vrcp.pop %v5506
        %v5635 = vrcp.pop %v5507
        %v5636 = vrcp.pop %v5508
        %v5637 = vrcp.pop %v5509
        %v5638 = vrcp.pop %v5510
        %v5639 = vrcp.pop %v5511
        %v5640 = vrcp.pop %v5512
        %v5641 = vrcp.pop %v5513
        %v5642 = vrcp.pop %v5514
        %v5643 = vrcp.pop %v5515
        %v5644 = vrcp.pop %v5516
        %v5645 = vrcp.pop %v5517
        %v5646 = vrcp.pop %v5518
        %v5647 = vrcp.pop %v5519
        %v5648 = vrcp.pop %v5520
        %v5649 = vrcp.pop %v5521
        %v5650 = vrcp.pop %v5522
        %v5651 = vrcp.pop %v5523
        %v5652 = vrcp.pop %v5524
        %v5653 = vrcp.pop %v5525
        %v5654 = vrcp.pop %v5526
        %v5655 = vrcp.pop %v5527
        %v5656 = vrcp.pop %v5528
        %v5657 = vrcp.pop %v5529
        %v5658 = vrcp.pop %v5530
        %v5659 = vrcp.pop %v5531
        %v5660 = vrcp.pop %v5532
        %v5661 = vrcp.pop %v5533
        %v5662 = vrcp.pop %v5534
        %v5663 = vrcp.pop %v5535
        %v5664 = vrcp.pop %v5536
        %v5665 = vrcp.pop %v5537
        %v5666 = vrcp.pop %v5538
        %v5667 = vrcp.pop %v5539
        %v5668 = vrcp.pop %v5540
        %v5669 = vrcp.pop %v5541
        %v5670 = vrcp.pop %v5542
        %v5671 = vrcp.pop %v5543
        %v5672 = vrcp.pop %v5544
        %v5673 = vrcp.pop %v5545
        %v5674 = vrcp.pop %v5546
        %v5675 = vrcp.pop %v5547
        %v5676 = vrcp.pop %v5548
        %v5677 = vrcp.pop %v5549
        %v5678 = vrcp.pop %v5550
        %v5679 = vmul.f32 %v5295, %v5551
        %v5680 = vmul.f32 %v5296, %v5552
        %v5681 = vmul.f32 %v5297, %v5553
        %v5682 = vmul.f32 %v5298, %v5554
        %v5683 = vmul.f32 %v5299, %v5555
        %v5684 = vmul.f32 %v5300, %v5556
        %v5685 = vmul.f32 %v5301, %v5557
        %v5686 = vmul.f32 %v5302, %v5558
        %v5687 = vmul.f32 %v5303, %v5559
        %v5688 = vmul.f32 %v5304, %v5560
        %v5689 = vmul.f32 %v5305, %v5561
        %v5690 = vmul.f32 %v5306, %v5562
        %v5691 = vmul.f32 %v5307, %v5563
        %v5692 = vmul.f32 %v5308, %v5564
        %v5693 = vmul.f32 %v5309, %v5565
        %v5694 = vmul.f32 %v5310, %v5566
        %v5695 = vmul.f32 %v5311, %v5567
        %v5696 = vmul.f32 %v5312, %v5568
        %v5697 = vmul.f32 %v5313, %v5569
        %v5698 = vmul.f32 %v5314, %v5570
        %v5699 = vmul.f32 %v5315, %v5571
        %v5700 = vmul.f32 %v5316, %v5572
        %v5701 = vmul.f32 %v5317, %v5573
        %v5702 = vmul.f32 %v5318, %v5574
        %v5703 = vmul.f32 %v5319, %v5575
        %v5704 = vmul.f32 %v5320, %v5576
        %v5705 = vmul.f32 %v5321, %v5577
        %v5706 = vmul.f32 %v5322, %v5578
        %v5707 = vmul.f32 %v5323, %v5579
        %v5708 = vmul.f32 %v5324, %v5580
        %v5709 = vmul.f32 %v5325, %v5581
        %v5710 = vmul.f32 %v5326, %v5582
        %v5711 = vmul.f32 %v5327, %v5583
        %v5712 = vmul.f32 %v5328, %v5584
        %v5713 = vmul.f32 %v5329, %v5585
        %v5714 = vmul.f32 %v5330, %v5586
        %v5715 = vmul.f32 %v5331, %v5587
        %v5716 = vmul.f32 %v5332, %v5588
        %v5717 = vmul.f32 %v5333, %v5589
        %v5718 = vmul.f32 %v5334, %v5590
        %v5719 = vmul.f32 %v5335, %v5591
        %v5720 = vmul.f32 %v5336, %v5592
        %v5721 = vmul.f32 %v5337, %v5593
        %v5722 = vmul.f32 %v5338, %v5594
        %v5723 = vmul.f32 %v5339, %v5595
        %v5724 = vmul.f32 %v5340, %v5596
        %v5725 = vmul.f32 %v5341, %v5597
        %v5726 = vmul.f32 %v5342, %v5598
        %v5727 = vmul.f32 %v5343, %v5599
        %v5728 = vmul.f32 %v5344, %v5600
        %v5729 = vmul.f32 %v5345, %v5601
        %v5730 = vmul.f32 %v5346, %v5602
        %v5731 = vmul.f32 %v5347, %v5603
        %v5732 = vmul.f32 %v5348, %v5604
        %v5733 = vmul.f32 %v5349, %v5605
        %v5734 = vmul.f32 %v5350, %v5606
        %v5735 = vmul.f32 %v5351, %v5607
        %v5736 = vmul.f32 %v5352, %v5608
        %v5737 = vmul.f32 %v5353, %v5609
        %v5738 = vmul.f32 %v5354, %v5610
        %v5739 = vmul.f32 %v5355, %v5611
        %v5740 = vmul.f32 %v5356, %v5612
        %v5741 = vmul.f32 %v5357, %v5613
        %v5742 = vmul.f32 %v5358, %v5614
        %v5743 = vmul.f32 %v5359, %v5615
        %v5744 = vmul.f32 %v5360, %v5616
        %v5745 = vmul.f32 %v5361, %v5617
        %v5746 = vmul.f32 %v5362, %v5618
        %v5747 = vmul.f32 %v5363, %v5619
        %v5748 = vmul.f32 %v5364, %v5620
        %v5749 = vmul.f32 %v5365, %v5621
        %v5750 = vmul.f32 %v5366, %v5622
        %v5751 = vmul.f32 %v5367, %v5623
        %v5752 = vmul.f32 %v5368, %v5624
        %v5753 = vmul.f32 %v5369, %v5625
        %v5754 = vmul.f32 %v5370, %v5626
        %v5755 = vmul.f32 %v5371, %v5627
        %v5756 = vmul.f32 %v5372, %v5628
        %v5757 = vmul.f32 %v5373, %v5629
        %v5758 = vmul.f32 %v5374, %v5630
        %v5759 = vmul.f32 %v5375, %v5631
        %v5760 = vmul.f32 %v5376, %v5632
        %v5761 = vmul.f32 %v5377, %v5633
        %v5762 = vmul.f32 %v5378, %v5634
        %v5763 = vmul.f32 %v5379, %v5635
        %v5764 = vmul.f32 %v5380, %v5636
        %v5765 = vmul.f32 %v5381, %v5637
        %v5766 = vmul.f32 %v5382, %v5638
        %v5767 = vmul.f32 %v5383, %v5639
        %v5768 = vmul.f32 %v5384, %v5640
        %v5769 = vmul.f32 %v5385, %v5641
        %v5770 = vmul.f32 %v5386, %v5642
        %v5771 = vmul.f32 %v5387, %v5643
        %v5772 = vmul.f32 %v5388, %v5644
        %v5773 = vmul.f32 %v5389, %v5645
        %v5774 = vmul.f32 %v5390, %v5646
        %v5775 = vmul.f32 %v5391, %v5647
        %v5776 = vmul.f32 %v5392, %v5648
        %v5777 = vmul.f32 %v5393, %v5649
        %v5778 = vmul.f32 %v5394, %v5650
        %v5779 = vmul.f32 %v5395, %v5651
        %v5780 = vmul.f32 %v5396, %v5652
        %v5781 = vmul.f32 %v5397, %v5653
        %v5782 = vmul.f32 %v5398, %v5654
        %v5783 = vmul.f32 %v5399, %v5655
        %v5784 = vmul.f32 %v5400, %v5656
        %v5785 = vmul.f32 %v5401, %v5657
        %v5786 = vmul.f32 %v5402, %v5658
        %v5787 = vmul.f32 %v5403, %v5659
        %v5788 = vmul.f32 %v5404, %v5660
        %v5789 = vmul.f32 %v5405, %v5661
        %v5790 = vmul.f32 %v5406, %v5662
        %v5791 = vmul.f32 %v5407, %v5663
        %v5792 = vmul.f32 %v5408, %v5664
        %v5793 = vmul.f32 %v5409, %v5665
        %v5794 = vmul.f32 %v5410, %v5666
        %v5795 = vmul.f32 %v5411, %v5667
        %v5796 = vmul.f32 %v5412, %v5668
        %v5797 = vmul.f32 %v5413, %v5669
        %v5798 = vmul.f32 %v5414, %v5670
        %v5799 = vmul.f32 %v5415, %v5671
        %v5800 = vmul.f32 %v5416, %v5672
        %v5801 = vmul.f32 %v5417, %v5673
        %v5802 = vmul.f32 %v5418, %v5674
        %v5803 = vmul.f32 %v5419, %v5675
        %v5804 = vmul.f32 %v5420, %v5676
        %v5805 = vmul.f32 %v5421, %v5677
        %v5806 = vmul.f32 %v5422, %v5678
        %5807 = vst [vmem:[%s1619] sm:$0xff] %v5679
        %5808 = vst [vmem:[%s1619 + $0x8] sm:$0xff] %v5680
        %5809 = vst [vmem:[%s1619 + $0x10] sm:$0xff] %v5681
        %5810 = vst [vmem:[%s1619 + $0x18] sm:$0xff] %v5682
        %5811 = vst [vmem:[%s1619 + $0x20] sm:$0xff] %v5683
        %5812 = vst [vmem:[%s1619 + $0x28] sm:$0xff] %v5684
        %5813 = vst [vmem:[%s1619 + $0x30] sm:$0xff] %v5685
        %5814 = vst [vmem:[%s1619 + $0x38] sm:$0xff] %v5686
        %5815 = vst [vmem:[%s1619 + $0x40] sm:$0xff] %v5687
        %5816 = vst [vmem:[%s1619 + $0x48] sm:$0xff] %v5688
        %5817 = vst [vmem:[%s1619 + $0x50] sm:$0xff] %v5689
        %5818 = vst [vmem:[%s1619 + $0x58] sm:$0xff] %v5690
        %5819 = vst [vmem:[%s1619 + $0x60] sm:$0xff] %v5691
        %5820 = vst [vmem:[%s1619 + $0x68] sm:$0xff] %v5692
        %5821 = vst [vmem:[%s1619 + $0x70] sm:$0xff] %v5693
        %5822 = vst [vmem:[%s1619 + $0x78] sm:$0xff] %v5694
        %5823 = vst [vmem:[%s1619 + $0x80] sm:$0xff] %v5695
        %5824 = vst [vmem:[%s1619 + $0x88] sm:$0xff] %v5696
        %5825 = vst [vmem:[%s1619 + $0x90] sm:$0xff] %v5697
        %5826 = vst [vmem:[%s1619 + $0x98] sm:$0xff] %v5698
        %5827 = vst [vmem:[%s1619 + $0xa0] sm:$0xff] %v5699
        %5828 = vst [vmem:[%s1619 + $0xa8] sm:$0xff] %v5700
        %5829 = vst [vmem:[%s1619 + $0xb0] sm:$0xff] %v5701
        %5830 = vst [vmem:[%s1619 + $0xb8] sm:$0xff] %v5702
        %5831 = vst [vmem:[%s1619 + $0xc0] sm:$0xff] %v5703
        %5832 = vst [vmem:[%s1619 + $0xc8] sm:$0xff] %v5704
        %5833 = vst [vmem:[%s1619 + $0xd0] sm:$0xff] %v5705
        %5834 = vst [vmem:[%s1619 + $0xd8] sm:$0xff] %v5706
        %5835 = vst [vmem:[%s1619 + $0xe0] sm:$0xff] %v5707
        %5836 = vst [vmem:[%s1619 + $0xe8] sm:$0xff] %v5708
        %5837 = vst [vmem:[%s1619 + $0xf0] sm:$0xff] %v5709
        %5838 = vst [vmem:[%s1619 + $0xf8] sm:$0xff] %v5710
        %5839 = vst [vmem:[%s1619 + $0x100] sm:$0xff] %v5711
        %5840 = vst [vmem:[%s1619 + $0x108] sm:$0xff] %v5712
        %5841 = vst [vmem:[%s1619 + $0x110] sm:$0xff] %v5713
        %5842 = vst [vmem:[%s1619 + $0x118] sm:$0xff] %v5714
        %5843 = vst [vmem:[%s1619 + $0x120] sm:$0xff] %v5715
        %5844 = vst [vmem:[%s1619 + $0x128] sm:$0xff] %v5716
        %5845 = vst [vmem:[%s1619 + $0x130] sm:$0xff] %v5717
        %5846 = vst [vmem:[%s1619 + $0x138] sm:$0xff] %v5718
        %5847 = vst [vmem:[%s1619 + $0x140] sm:$0xff] %v5719
        %5848 = vst [vmem:[%s1619 + $0x148] sm:$0xff] %v5720
        %5849 = vst [vmem:[%s1619 + $0x150] sm:$0xff] %v5721
        %5850 = vst [vmem:[%s1619 + $0x158] sm:$0xff] %v5722
        %5851 = vst [vmem:[%s1619 + $0x160] sm:$0xff] %v5723
        %5852 = vst [vmem:[%s1619 + $0x168] sm:$0xff] %v5724
        %5853 = vst [vmem:[%s1619 + $0x170] sm:$0xff] %v5725
        %5854 = vst [vmem:[%s1619 + $0x178] sm:$0xff] %v5726
        %5855 = vst [vmem:[%s1619 + $0x180] sm:$0xff] %v5727
        %5856 = vst [vmem:[%s1619 + $0x188] sm:$0xff] %v5728
        %5857 = vst [vmem:[%s1619 + $0x190] sm:$0xff] %v5729
        %5858 = vst [vmem:[%s1619 + $0x198] sm:$0xff] %v5730
        %5859 = vst [vmem:[%s1619 + $0x1a0] sm:$0xff] %v5731
        %5860 = vst [vmem:[%s1619 + $0x1a8] sm:$0xff] %v5732
        %5861 = vst [vmem:[%s1619 + $0x1b0] sm:$0xff] %v5733
        %5862 = vst [vmem:[%s1619 + $0x1b8] sm:$0xff] %v5734
        %5863 = vst [vmem:[%s1619 + $0x1c0] sm:$0xff] %v5735
        %5864 = vst [vmem:[%s1619 + $0x1c8] sm:$0xff] %v5736
        %5865 = vst [vmem:[%s1619 + $0x1d0] sm:$0xff] %v5737
        %5866 = vst [vmem:[%s1619 + $0x1d8] sm:$0xff] %v5738
        %5867 = vst [vmem:[%s1619 + $0x1e0] sm:$0xff] %v5739
        %5868 = vst [vmem:[%s1619 + $0x1e8] sm:$0xff] %v5740
        %5869 = vst [vmem:[%s1619 + $0x1f0] sm:$0xff] %v5741
        %5870 = vst [vmem:[%s1619 + $0x1f8] sm:$0xff] %v5742
        %5871 = vst [vmem:[%s1619 + $0x200] sm:$0xff] %v5743
        %5872 = vst [vmem:[%s1619 + $0x208] sm:$0xff] %v5744
        %5873 = vst [vmem:[%s1619 + $0x210] sm:$0xff] %v5745
        %5874 = vst [vmem:[%s1619 + $0x218] sm:$0xff] %v5746
        %5875 = vst [vmem:[%s1619 + $0x220] sm:$0xff] %v5747
        %5876 = vst [vmem:[%s1619 + $0x228] sm:$0xff] %v5748
        %5877 = vst [vmem:[%s1619 + $0x230] sm:$0xff] %v5749
        %5878 = vst [vmem:[%s1619 + $0x238] sm:$0xff] %v5750
        %5879 = vst [vmem:[%s1619 + $0x240] sm:$0xff] %v5751
        %5880 = vst [vmem:[%s1619 + $0x248] sm:$0xff] %v5752
        %5881 = vst [vmem:[%s1619 + $0x250] sm:$0xff] %v5753
        %5882 = vst [vmem:[%s1619 + $0x258] sm:$0xff] %v5754
        %5883 = vst [vmem:[%s1619 + $0x260] sm:$0xff] %v5755
        %5884 = vst [vmem:[%s1619 + $0x268] sm:$0xff] %v5756
        %5885 = vst [vmem:[%s1619 + $0x270] sm:$0xff] %v5757
        %5886 = vst [vmem:[%s1619 + $0x278] sm:$0xff] %v5758
        %5887 = vst [vmem:[%s1619 + $0x280] sm:$0xff] %v5759
        %5888 = vst [vmem:[%s1619 + $0x288] sm:$0xff] %v5760
        %5889 = vst [vmem:[%s1619 + $0x290] sm:$0xff] %v5761
        %5890 = vst [vmem:[%s1619 + $0x298] sm:$0xff] %v5762
        %5891 = vst [vmem:[%s1619 + $0x2a0] sm:$0xff] %v5763
        %5892 = vst [vmem:[%s1619 + $0x2a8] sm:$0xff] %v5764
        %5893 = vst [vmem:[%s1619 + $0x2b0] sm:$0xff] %v5765
        %5894 = vst [vmem:[%s1619 + $0x2b8] sm:$0xff] %v5766
        %5895 = vst [vmem:[%s1619 + $0x2c0] sm:$0xff] %v5767
        %5896 = vst [vmem:[%s1619 + $0x2c8] sm:$0xff] %v5768
        %5897 = vst [vmem:[%s1619 + $0x2d0] sm:$0xff] %v5769
        %5898 = vst [vmem:[%s1619 + $0x2d8] sm:$0xff] %v5770
        %5899 = vst [vmem:[%s1619 + $0x2e0] sm:$0xff] %v5771
        %5900 = vst [vmem:[%s1619 + $0x2e8] sm:$0xff] %v5772
        %5901 = vst [vmem:[%s1619 + $0x2f0] sm:$0xff] %v5773
        %5902 = vst [vmem:[%s1619 + $0x2f8] sm:$0xff] %v5774
        %5903 = vst [vmem:[%s1619 + $0x300] sm:$0xff] %v5775
        %5904 = vst [vmem:[%s1619 + $0x308] sm:$0xff] %v5776
        %5905 = vst [vmem:[%s1619 + $0x310] sm:$0xff] %v5777
        %5906 = vst [vmem:[%s1619 + $0x318] sm:$0xff] %v5778
        %5907 = vst [vmem:[%s1619 + $0x320] sm:$0xff] %v5779
        %5908 = vst [vmem:[%s1619 + $0x328] sm:$0xff] %v5780
        %5909 = vst [vmem:[%s1619 + $0x330] sm:$0xff] %v5781
        %5910 = vst [vmem:[%s1619 + $0x338] sm:$0xff] %v5782
        %5911 = vst [vmem:[%s1619 + $0x340] sm:$0xff] %v5783
        %5912 = vst [vmem:[%s1619 + $0x348] sm:$0xff] %v5784
        %5913 = vst [vmem:[%s1619 + $0x350] sm:$0xff] %v5785
        %5914 = vst [vmem:[%s1619 + $0x358] sm:$0xff] %v5786
        %5915 = vst [vmem:[%s1619 + $0x360] sm:$0xff] %v5787
        %5916 = vst [vmem:[%s1619 + $0x368] sm:$0xff] %v5788
        %5917 = vst [vmem:[%s1619 + $0x370] sm:$0xff] %v5789
        %5918 = vst [vmem:[%s1619 + $0x378] sm:$0xff] %v5790
        %5919 = vst [vmem:[%s1619 + $0x380] sm:$0xff] %v5791
        %5920 = vst [vmem:[%s1619 + $0x388] sm:$0xff] %v5792
        %5921 = vst [vmem:[%s1619 + $0x390] sm:$0xff] %v5793
        %5922 = vst [vmem:[%s1619 + $0x398] sm:$0xff] %v5794
        %5923 = vst [vmem:[%s1619 + $0x3a0] sm:$0xff] %v5795
        %5924 = vst [vmem:[%s1619 + $0x3a8] sm:$0xff] %v5796
        %5925 = vst [vmem:[%s1619 + $0x3b0] sm:$0xff] %v5797
        %5926 = vst [vmem:[%s1619 + $0x3b8] sm:$0xff] %v5798
        %5927 = vst [vmem:[%s1619 + $0x3c0] sm:$0xff] %v5799
        %5928 = vst [vmem:[%s1619 + $0x3c8] sm:$0xff] %v5800
        %5929 = vst [vmem:[%s1619 + $0x3d0] sm:$0xff] %v5801
        %5930 = vst [vmem:[%s1619 + $0x3d8] sm:$0xff] %v5802
        %5931 = vst [vmem:[%s1619 + $0x3e0] sm:$0xff] %v5803
        %5932 = vst [vmem:[%s1619 + $0x3e8] sm:$0xff] %v5804
        %5933 = vst [vmem:[%s1619 + $0x3f0] sm:$0xff] %v5805
        %5934 = vst [vmem:[%s1619 + $0x3f8] sm:$0xff] %v5806
        %v5935 = vld [vmem:[%s1594] sm:$0xff]
        %v5936 = vld [vmem:[%s1594 + $0x8] sm:$0xff]
        %v5937 = vld [vmem:[%s1594 + $0x10] sm:$0xff]
        %v5938 = vld [vmem:[%s1594 + $0x18] sm:$0xff]
        %v5939 = vld [vmem:[%s1594 + $0x20] sm:$0xff]
        %v5940 = vld [vmem:[%s1594 + $0x28] sm:$0xff]
        %v5941 = vld [vmem:[%s1594 + $0x30] sm:$0xff]
        %v5942 = vld [vmem:[%s1594 + $0x38] sm:$0xff]
        %v5943 = vld [vmem:[%s1594 + $0x40] sm:$0xff]
        %v5944 = vld [vmem:[%s1594 + $0x48] sm:$0xff]
        %v5945 = vld [vmem:[%s1594 + $0x50] sm:$0xff]
        %v5946 = vld [vmem:[%s1594 + $0x58] sm:$0xff]
        %v5947 = vld [vmem:[%s1594 + $0x60] sm:$0xff]
        %v5948 = vld [vmem:[%s1594 + $0x68] sm:$0xff]
        %v5949 = vld [vmem:[%s1594 + $0x70] sm:$0xff]
        %v5950 = vld [vmem:[%s1594 + $0x78] sm:$0xff]
        %v5951 = vld [vmem:[%s1594 + $0x80] sm:$0xff]
        %v5952 = vld [vmem:[%s1594 + $0x88] sm:$0xff]
        %v5953 = vld [vmem:[%s1594 + $0x90] sm:$0xff]
        %v5954 = vld [vmem:[%s1594 + $0x98] sm:$0xff]
        %v5955 = vld [vmem:[%s1594 + $0xa0] sm:$0xff]
        %v5956 = vld [vmem:[%s1594 + $0xa8] sm:$0xff]
        %v5957 = vld [vmem:[%s1594 + $0xb0] sm:$0xff]
        %v5958 = vld [vmem:[%s1594 + $0xb8] sm:$0xff]
        %v5959 = vld [vmem:[%s1594 + $0xc0] sm:$0xff]
        %v5960 = vld [vmem:[%s1594 + $0xc8] sm:$0xff]
        %v5961 = vld [vmem:[%s1594 + $0xd0] sm:$0xff]
        %v5962 = vld [vmem:[%s1594 + $0xd8] sm:$0xff]
        %v5963 = vld [vmem:[%s1594 + $0xe0] sm:$0xff]
        %v5964 = vld [vmem:[%s1594 + $0xe8] sm:$0xff]
        %v5965 = vld [vmem:[%s1594 + $0xf0] sm:$0xff]
        %v5966 = vld [vmem:[%s1594 + $0xf8] sm:$0xff]
        %v5967 = vld [vmem:[%s1594 + $0x100] sm:$0xff]
        %v5968 = vld [vmem:[%s1594 + $0x108] sm:$0xff]
        %v5969 = vld [vmem:[%s1594 + $0x110] sm:$0xff]
        %v5970 = vld [vmem:[%s1594 + $0x118] sm:$0xff]
        %v5971 = vld [vmem:[%s1594 + $0x120] sm:$0xff]
        %v5972 = vld [vmem:[%s1594 + $0x128] sm:$0xff]
        %v5973 = vld [vmem:[%s1594 + $0x130] sm:$0xff]
        %v5974 = vld [vmem:[%s1594 + $0x138] sm:$0xff]
        %v5975 = vld [vmem:[%s1594 + $0x140] sm:$0xff]
        %v5976 = vld [vmem:[%s1594 + $0x148] sm:$0xff]
        %v5977 = vld [vmem:[%s1594 + $0x150] sm:$0xff]
        %v5978 = vld [vmem:[%s1594 + $0x158] sm:$0xff]
        %v5979 = vld [vmem:[%s1594 + $0x160] sm:$0xff]
        %v5980 = vld [vmem:[%s1594 + $0x168] sm:$0xff]
        %v5981 = vld [vmem:[%s1594 + $0x170] sm:$0xff]
        %v5982 = vld [vmem:[%s1594 + $0x178] sm:$0xff]
        %v5983 = vld [vmem:[%s1594 + $0x180] sm:$0xff]
        %v5984 = vld [vmem:[%s1594 + $0x188] sm:$0xff]
        %v5985 = vld [vmem:[%s1594 + $0x190] sm:$0xff]
        %v5986 = vld [vmem:[%s1594 + $0x198] sm:$0xff]
        %v5987 = vld [vmem:[%s1594 + $0x1a0] sm:$0xff]
        %v5988 = vld [vmem:[%s1594 + $0x1a8] sm:$0xff]
        %v5989 = vld [vmem:[%s1594 + $0x1b0] sm:$0xff]
        %v5990 = vld [vmem:[%s1594 + $0x1b8] sm:$0xff]
        %v5991 = vld [vmem:[%s1594 + $0x1c0] sm:$0xff]
        %v5992 = vld [vmem:[%s1594 + $0x1c8] sm:$0xff]
        %v5993 = vld [vmem:[%s1594 + $0x1d0] sm:$0xff]
        %v5994 = vld [vmem:[%s1594 + $0x1d8] sm:$0xff]
        %v5995 = vld [vmem:[%s1594 + $0x1e0] sm:$0xff]
        %v5996 = vld [vmem:[%s1594 + $0x1e8] sm:$0xff]
        %v5997 = vld [vmem:[%s1594 + $0x1f0] sm:$0xff]
        %v5998 = vld [vmem:[%s1594 + $0x1f8] sm:$0xff]
        %v5999 = vld [vmem:[%s1594 + $0x200] sm:$0xff]
        %v6000 = vld [vmem:[%s1594 + $0x208] sm:$0xff]
        %v6001 = vld [vmem:[%s1594 + $0x210] sm:$0xff]
        %v6002 = vld [vmem:[%s1594 + $0x218] sm:$0xff]
        %v6003 = vld [vmem:[%s1594 + $0x220] sm:$0xff]
        %v6004 = vld [vmem:[%s1594 + $0x228] sm:$0xff]
        %v6005 = vld [vmem:[%s1594 + $0x230] sm:$0xff]
        %v6006 = vld [vmem:[%s1594 + $0x238] sm:$0xff]
        %v6007 = vld [vmem:[%s1594 + $0x240] sm:$0xff]
        %v6008 = vld [vmem:[%s1594 + $0x248] sm:$0xff]
        %v6009 = vld [vmem:[%s1594 + $0x250] sm:$0xff]
        %v6010 = vld [vmem:[%s1594 + $0x258] sm:$0xff]
        %v6011 = vld [vmem:[%s1594 + $0x260] sm:$0xff]
        %v6012 = vld [vmem:[%s1594 + $0x268] sm:$0xff]
        %v6013 = vld [vmem:[%s1594 + $0x270] sm:$0xff]
        %v6014 = vld [vmem:[%s1594 + $0x278] sm:$0xff]
        %v6015 = vld [vmem:[%s1594 + $0x280] sm:$0xff]
        %v6016 = vld [vmem:[%s1594 + $0x288] sm:$0xff]
        %v6017 = vld [vmem:[%s1594 + $0x290] sm:$0xff]
        %v6018 = vld [vmem:[%s1594 + $0x298] sm:$0xff]
        %v6019 = vld [vmem:[%s1594 + $0x2a0] sm:$0xff]
        %v6020 = vld [vmem:[%s1594 + $0x2a8] sm:$0xff]
        %v6021 = vld [vmem:[%s1594 + $0x2b0] sm:$0xff]
        %v6022 = vld [vmem:[%s1594 + $0x2b8] sm:$0xff]
        %v6023 = vld [vmem:[%s1594 + $0x2c0] sm:$0xff]
        %v6024 = vld [vmem:[%s1594 + $0x2c8] sm:$0xff]
        %v6025 = vld [vmem:[%s1594 + $0x2d0] sm:$0xff]
        %v6026 = vld [vmem:[%s1594 + $0x2d8] sm:$0xff]
        %v6027 = vld [vmem:[%s1594 + $0x2e0] sm:$0xff]
        %v6028 = vld [vmem:[%s1594 + $0x2e8] sm:$0xff]
        %v6029 = vld [vmem:[%s1594 + $0x2f0] sm:$0xff]
        %v6030 = vld [vmem:[%s1594 + $0x2f8] sm:$0xff]
        %v6031 = vld [vmem:[%s1594 + $0x300] sm:$0xff]
        %v6032 = vld [vmem:[%s1594 + $0x308] sm:$0xff]
        %v6033 = vld [vmem:[%s1594 + $0x310] sm:$0xff]
        %v6034 = vld [vmem:[%s1594 + $0x318] sm:$0xff]
        %v6035 = vld [vmem:[%s1594 + $0x320] sm:$0xff]
        %v6036 = vld [vmem:[%s1594 + $0x328] sm:$0xff]
        %v6037 = vld [vmem:[%s1594 + $0x330] sm:$0xff]
        %v6038 = vld [vmem:[%s1594 + $0x338] sm:$0xff]
        %v6039 = vld [vmem:[%s1594 + $0x340] sm:$0xff]
        %v6040 = vld [vmem:[%s1594 + $0x348] sm:$0xff]
        %v6041 = vld [vmem:[%s1594 + $0x350] sm:$0xff]
        %v6042 = vld [vmem:[%s1594 + $0x358] sm:$0xff]
        %v6043 = vld [vmem:[%s1594 + $0x360] sm:$0xff]
        %v6044 = vld [vmem:[%s1594 + $0x368] sm:$0xff]
        %v6045 = vld [vmem:[%s1594 + $0x370] sm:$0xff]
        %v6046 = vld [vmem:[%s1594 + $0x378] sm:$0xff]
        %v6047 = vld [vmem:[%s1594 + $0x380] sm:$0xff]
        %v6048 = vld [vmem:[%s1594 + $0x388] sm:$0xff]
        %v6049 = vld [vmem:[%s1594 + $0x390] sm:$0xff]
        %v6050 = vld [vmem:[%s1594 + $0x398] sm:$0xff]
        %v6051 = vld [vmem:[%s1594 + $0x3a0] sm:$0xff]
        %v6052 = vld [vmem:[%s1594 + $0x3a8] sm:$0xff]
        %v6053 = vld [vmem:[%s1594 + $0x3b0] sm:$0xff]
        %v6054 = vld [vmem:[%s1594 + $0x3b8] sm:$0xff]
        %v6055 = vld [vmem:[%s1594 + $0x3c0] sm:$0xff]
        %v6056 = vld [vmem:[%s1594 + $0x3c8] sm:$0xff]
        %v6057 = vld [vmem:[%s1594 + $0x3d0] sm:$0xff]
        %v6058 = vld [vmem:[%s1594 + $0x3d8] sm:$0xff]
        %v6059 = vld [vmem:[%s1594 + $0x3e0] sm:$0xff]
        %v6060 = vld [vmem:[%s1594 + $0x3e8] sm:$0xff]
        %v6061 = vld [vmem:[%s1594 + $0x3f0] sm:$0xff]
        %v6062 = vld [vmem:[%s1594 + $0x3f8] sm:$0xff]
        %6063 = vst [vmem:[%s1619 + $0x400] sm:$0xff] %v5935
        %6064 = vst [vmem:[%s1619 + $0x408] sm:$0xff] %v5936
        %6065 = vst [vmem:[%s1619 + $0x410] sm:$0xff] %v5937
        %6066 = vst [vmem:[%s1619 + $0x418] sm:$0xff] %v5938
        %6067 = vst [vmem:[%s1619 + $0x420] sm:$0xff] %v5939
        %6068 = vst [vmem:[%s1619 + $0x428] sm:$0xff] %v5940
        %6069 = vst [vmem:[%s1619 + $0x430] sm:$0xff] %v5941
        %6070 = vst [vmem:[%s1619 + $0x438] sm:$0xff] %v5942
        %6071 = vst [vmem:[%s1619 + $0x440] sm:$0xff] %v5943
        %6072 = vst [vmem:[%s1619 + $0x448] sm:$0xff] %v5944
        %6073 = vst [vmem:[%s1619 + $0x450] sm:$0xff] %v5945
        %6074 = vst [vmem:[%s1619 + $0x458] sm:$0xff] %v5946
        %6075 = vst [vmem:[%s1619 + $0x460] sm:$0xff] %v5947
        %6076 = vst [vmem:[%s1619 + $0x468] sm:$0xff] %v5948
        %6077 = vst [vmem:[%s1619 + $0x470] sm:$0xff] %v5949
        %6078 = vst [vmem:[%s1619 + $0x478] sm:$0xff] %v5950
        %6079 = vst [vmem:[%s1619 + $0x480] sm:$0xff] %v5951
        %6080 = vst [vmem:[%s1619 + $0x488] sm:$0xff] %v5952
        %6081 = vst [vmem:[%s1619 + $0x490] sm:$0xff] %v5953
        %6082 = vst [vmem:[%s1619 + $0x498] sm:$0xff] %v5954
        %6083 = vst [vmem:[%s1619 + $0x4a0] sm:$0xff] %v5955
        %6084 = vst [vmem:[%s1619 + $0x4a8] sm:$0xff] %v5956
        %6085 = vst [vmem:[%s1619 + $0x4b0] sm:$0xff] %v5957
        %6086 = vst [vmem:[%s1619 + $0x4b8] sm:$0xff] %v5958
        %6087 = vst [vmem:[%s1619 + $0x4c0] sm:$0xff] %v5959
        %6088 = vst [vmem:[%s1619 + $0x4c8] sm:$0xff] %v5960
        %6089 = vst [vmem:[%s1619 + $0x4d0] sm:$0xff] %v5961
        %6090 = vst [vmem:[%s1619 + $0x4d8] sm:$0xff] %v5962
        %6091 = vst [vmem:[%s1619 + $0x4e0] sm:$0xff] %v5963
        %6092 = vst [vmem:[%s1619 + $0x4e8] sm:$0xff] %v5964
        %6093 = vst [vmem:[%s1619 + $0x4f0] sm:$0xff] %v5965
        %6094 = vst [vmem:[%s1619 + $0x4f8] sm:$0xff] %v5966
        %6095 = vst [vmem:[%s1619 + $0x500] sm:$0xff] %v5967
        %6096 = vst [vmem:[%s1619 + $0x508] sm:$0xff] %v5968
        %6097 = vst [vmem:[%s1619 + $0x510] sm:$0xff] %v5969
        %6098 = vst [vmem:[%s1619 + $0x518] sm:$0xff] %v5970
        %6099 = vst [vmem:[%s1619 + $0x520] sm:$0xff] %v5971
        %6100 = vst [vmem:[%s1619 + $0x528] sm:$0xff] %v5972
        %6101 = vst [vmem:[%s1619 + $0x530] sm:$0xff] %v5973
        %6102 = vst [vmem:[%s1619 + $0x538] sm:$0xff] %v5974
        %6103 = vst [vmem:[%s1619 + $0x540] sm:$0xff] %v5975
        %6104 = vst [vmem:[%s1619 + $0x548] sm:$0xff] %v5976
        %6105 = vst [vmem:[%s1619 + $0x550] sm:$0xff] %v5977
        %6106 = vst [vmem:[%s1619 + $0x558] sm:$0xff] %v5978
        %6107 = vst [vmem:[%s1619 + $0x560] sm:$0xff] %v5979
        %6108 = vst [vmem:[%s1619 + $0x568] sm:$0xff] %v5980
        %6109 = vst [vmem:[%s1619 + $0x570] sm:$0xff] %v5981
        %6110 = vst [vmem:[%s1619 + $0x578] sm:$0xff] %v5982
        %6111 = vst [vmem:[%s1619 + $0x580] sm:$0xff] %v5983
        %6112 = vst [vmem:[%s1619 + $0x588] sm:$0xff] %v5984
        %6113 = vst [vmem:[%s1619 + $0x590] sm:$0xff] %v5985
        %6114 = vst [vmem:[%s1619 + $0x598] sm:$0xff] %v5986
        %6115 = vst [vmem:[%s1619 + $0x5a0] sm:$0xff] %v5987
        %6116 = vst [vmem:[%s1619 + $0x5a8] sm:$0xff] %v5988
        %6117 = vst [vmem:[%s1619 + $0x5b0] sm:$0xff] %v5989
        %6118 = vst [vmem:[%s1619 + $0x5b8] sm:$0xff] %v5990
        %6119 = vst [vmem:[%s1619 + $0x5c0] sm:$0xff] %v5991
        %6120 = vst [vmem:[%s1619 + $0x5c8] sm:$0xff] %v5992
        %6121 = vst [vmem:[%s1619 + $0x5d0] sm:$0xff] %v5993
        %6122 = vst [vmem:[%s1619 + $0x5d8] sm:$0xff] %v5994
        %6123 = vst [vmem:[%s1619 + $0x5e0] sm:$0xff] %v5995
        %6124 = vst [vmem:[%s1619 + $0x5e8] sm:$0xff] %v5996
        %6125 = vst [vmem:[%s1619 + $0x5f0] sm:$0xff] %v5997
        %6126 = vst [vmem:[%s1619 + $0x5f8] sm:$0xff] %v5998
        %6127 = vst [vmem:[%s1619 + $0x600] sm:$0xff] %v5999
        %6128 = vst [vmem:[%s1619 + $0x608] sm:$0xff] %v6000
        %6129 = vst [vmem:[%s1619 + $0x610] sm:$0xff] %v6001
        %6130 = vst [vmem:[%s1619 + $0x618] sm:$0xff] %v6002
        %6131 = vst [vmem:[%s1619 + $0x620] sm:$0xff] %v6003
        %6132 = vst [vmem:[%s1619 + $0x628] sm:$0xff] %v6004
        %6133 = vst [vmem:[%s1619 + $0x630] sm:$0xff] %v6005
        %6134 = vst [vmem:[%s1619 + $0x638] sm:$0xff] %v6006
        %6135 = vst [vmem:[%s1619 + $0x640] sm:$0xff] %v6007
        %6136 = vst [vmem:[%s1619 + $0x648] sm:$0xff] %v6008
        %6137 = vst [vmem:[%s1619 + $0x650] sm:$0xff] %v6009
        %6138 = vst [vmem:[%s1619 + $0x658] sm:$0xff] %v6010
        %6139 = vst [vmem:[%s1619 + $0x660] sm:$0xff] %v6011
        %6140 = vst [vmem:[%s1619 + $0x668] sm:$0xff] %v6012
        %6141 = vst [vmem:[%s1619 + $0x670] sm:$0xff] %v6013
        %6142 = vst [vmem:[%s1619 + $0x678] sm:$0xff] %v6014
        %6143 = vst [vmem:[%s1619 + $0x680] sm:$0xff] %v6015
        %6144 = vst [vmem:[%s1619 + $0x688] sm:$0xff] %v6016
        %6145 = vst [vmem:[%s1619 + $0x690] sm:$0xff] %v6017
        %6146 = vst [vmem:[%s1619 + $0x698] sm:$0xff] %v6018
        %6147 = vst [vmem:[%s1619 + $0x6a0] sm:$0xff] %v6019
        %6148 = vst [vmem:[%s1619 + $0x6a8] sm:$0xff] %v6020
        %6149 = vst [vmem:[%s1619 + $0x6b0] sm:$0xff] %v6021
        %6150 = vst [vmem:[%s1619 + $0x6b8] sm:$0xff] %v6022
        %6151 = vst [vmem:[%s1619 + $0x6c0] sm:$0xff] %v6023
        %6152 = vst [vmem:[%s1619 + $0x6c8] sm:$0xff] %v6024
        %6153 = vst [vmem:[%s1619 + $0x6d0] sm:$0xff] %v6025
        %6154 = vst [vmem:[%s1619 + $0x6d8] sm:$0xff] %v6026
        %6155 = vst [vmem:[%s1619 + $0x6e0] sm:$0xff] %v6027
        %6156 = vst [vmem:[%s1619 + $0x6e8] sm:$0xff] %v6028
        %6157 = vst [vmem:[%s1619 + $0x6f0] sm:$0xff] %v6029
        %6158 = vst [vmem:[%s1619 + $0x6f8] sm:$0xff] %v6030
        %6159 = vst [vmem:[%s1619 + $0x700] sm:$0xff] %v6031
        %6160 = vst [vmem:[%s1619 + $0x708] sm:$0xff] %v6032
        %6161 = vst [vmem:[%s1619 + $0x710] sm:$0xff] %v6033
        %6162 = vst [vmem:[%s1619 + $0x718] sm:$0xff] %v6034
        %6163 = vst [vmem:[%s1619 + $0x720] sm:$0xff] %v6035
        %6164 = vst [vmem:[%s1619 + $0x728] sm:$0xff] %v6036
        %6165 = vst [vmem:[%s1619 + $0x730] sm:$0xff] %v6037
        %6166 = vst [vmem:[%s1619 + $0x738] sm:$0xff] %v6038
        %6167 = vst [vmem:[%s1619 + $0x740] sm:$0xff] %v6039
        %6168 = vst [vmem:[%s1619 + $0x748] sm:$0xff] %v6040
        %6169 = vst [vmem:[%s1619 + $0x750] sm:$0xff] %v6041
        %6170 = vst [vmem:[%s1619 + $0x758] sm:$0xff] %v6042
        %6171 = vst [vmem:[%s1619 + $0x760] sm:$0xff] %v6043
        %6172 = vst [vmem:[%s1619 + $0x768] sm:$0xff] %v6044
        %6173 = vst [vmem:[%s1619 + $0x770] sm:$0xff] %v6045
        %6174 = vst [vmem:[%s1619 + $0x778] sm:$0xff] %v6046
        %6175 = vst [vmem:[%s1619 + $0x780] sm:$0xff] %v6047
        %6176 = vst [vmem:[%s1619 + $0x788] sm:$0xff] %v6048
        %6177 = vst [vmem:[%s1619 + $0x790] sm:$0xff] %v6049
        %6178 = vst [vmem:[%s1619 + $0x798] sm:$0xff] %v6050
        %6179 = vst [vmem:[%s1619 + $0x7a0] sm:$0xff] %v6051
        %6180 = vst [vmem:[%s1619 + $0x7a8] sm:$0xff] %v6052
        %6181 = vst [vmem:[%s1619 + $0x7b0] sm:$0xff] %v6053
        %6182 = vst [vmem:[%s1619 + $0x7b8] sm:$0xff] %v6054
        %6183 = vst [vmem:[%s1619 + $0x7c0] sm:$0xff] %v6055
        %6184 = vst [vmem:[%s1619 + $0x7c8] sm:$0xff] %v6056
        %6185 = vst [vmem:[%s1619 + $0x7d0] sm:$0xff] %v6057
        %6186 = vst [vmem:[%s1619 + $0x7d8] sm:$0xff] %v6058
        %6187 = vst [vmem:[%s1619 + $0x7e0] sm:$0xff] %v6059
        %6188 = vst [vmem:[%s1619 + $0x7e8] sm:$0xff] %v6060
        %6189 = vst [vmem:[%s1619 + $0x7f0] sm:$0xff] %v6061
        %6190 = vst [vmem:[%s1619 + $0x7f8] sm:$0xff] %v6062
        %s6191 = sand.u32 %s135, 1
        %s6192 = sand.u32 %s135, 1
        %s6193 = smul.addr %s6192, 2048
        %s6194 = scalar_lea.vmem [#allocation4], %s6193
        // Predicated region
        $region155: #{ffmv2_forward.1} parent=145 // pred_check
          %p6195 = pneg %p145
        $region156: #{ffmv2_forward.1} parent=145 // pred_check_branch
          %6197 = sbr.rel (%p6195) target = $region158
        $region157: #{ffmv2_forward.1} parent=145 // pred_region
          %s6198 = smul.u32 8, %s20
          %s6199 = ssub.s32 13, %s6198
          %p6200 = scmp.lt.s32.totalorder %s6199, 8
          %s6201 = scalar_select %p6200, %s6199, 8
          %s6202 = smul.u32 4096, %s6201
          %p6203 = scmp.ne.s32.totalorder 0, %s6202
          %s6204 = smul.addr %s19, 416
          %s6205 = sadd.s32 %s6198, %s6204
          %s6206 = smul.addr %s6205, 8
          %s6207 = scalar_lea.vmem %s4, %s6206
          %s6208 = smul.u32 %s6201, 8
          // Predicated region
          $region159: #{ffmv2_forward.1} parent=157 // pred_check
            %p6209 = pneg %p6203
          $region160: #{ffmv2_forward.1} parent=157 // pred_check_branch
            %6211 = sbr.rel (%p6209) target = $region162
          $region161: #{ffmv2_forward.1} parent=157 // pred_region
            %p6212 = scmp.lt.u32.totalorder %s6208, 8
            %p6213 = pneg %p6212
            // Predicated region
            $region163: #{ffmv2_forward.1} parent=161 // pred_check
              _
            $region164: #{ffmv2_forward.1} parent=161 // pred_check_branch
              %6215 = sbr.rel (%p6212) target = $region166
            $region165: #{ffmv2_forward.1} parent=161 // pred_region
              %s6292 = sand.u32 %s6208, 7
              %p6293 = scmp.eq.s32.totalorder %s6292, 0
              // Predicated region
              $region178: #{ffmv2_forward.1} parent=165 // pred_check
                %p6294 = pneg %p6293
              $region179: #{ffmv2_forward.1} parent=165 // pred_check_branch
                %6296 = sbr.rel (%p6294) target = $region181
              $region180: #{ffmv2_forward.1} parent=165 // pred_region
                %s6297 = sshrl.u32 %s6208, 3
                %s6298 = sshrl.u32 %s6297, 1
                // While loop
                $region182: #{ffmv2_forward.1} parent=180 // loop_pre_header
                  _
                $region183: #{ffmv2_forward.1} parent=180 // loop_header
                  %s6302 = sphi 0, %s6304
                  %p6303 = scmp.ge.s32.totalorder %s6302, %s6298
                  %s6307 = sphi 0, %s6440
                  %s6308 = sphi %s6194, %s6443
                  %s6309 = sphi %s6207, %s6444
                $region184: #{ffmv2_forward.1} parent=180 // loop_header_branch
                  %6306 = sbr.rel (%p6303) target = $region188
                $region185: #{ffmv2_forward.1} parent=180 // loop_body
                  %v6310 = vld [vmem:[%s6308] sm:$0xff]
                  %6311 = vst [vmem:[%s6309] sm:$0xff] %v6310
                  %v6312 = vld [vmem:[%s6308 + $0x8] sm:$0xff]
                  %6313 = vst [vmem:[%s6309 + $0x8] sm:$0xff] %v6312
                  %v6314 = vld [vmem:[%s6308 + $0x40] sm:$0xff]
                  %6315 = vst [vmem:[%s6309 + $0x68] sm:$0xff] %v6314
                  %v6316 = vld [vmem:[%s6308 + $0x48] sm:$0xff]
                  %6317 = vst [vmem:[%s6309 + $0x70] sm:$0xff] %v6316
                  %v6318 = vld [vmem:[%s6308 + $0x80] sm:$0xff]
                  %6319 = vst [vmem:[%s6309 + $0xd0] sm:$0xff] %v6318
                  %v6320 = vld [vmem:[%s6308 + $0x88] sm:$0xff]
                  %6321 = vst [vmem:[%s6309 + $0xd8] sm:$0xff] %v6320
                  %v6322 = vld [vmem:[%s6308 + $0xc0] sm:$0xff]
                  %6323 = vst [vmem:[%s6309 + $0x138] sm:$0xff] %v6322
                  %v6324 = vld [vmem:[%s6308 + $0xc8] sm:$0xff]
                  %6325 = vst [vmem:[%s6309 + $0x140] sm:$0xff] %v6324
                  %v6326 = vld [vmem:[%s6308 + $0x100] sm:$0xff]
                  %6327 = vst [vmem:[%s6309 + $0x1a0] sm:$0xff] %v6326
                  %v6328 = vld [vmem:[%s6308 + $0x108] sm:$0xff]
                  %6329 = vst [vmem:[%s6309 + $0x1a8] sm:$0xff] %v6328
                  %v6330 = vld [vmem:[%s6308 + $0x140] sm:$0xff]
                  %6331 = vst [vmem:[%s6309 + $0x208] sm:$0xff] %v6330
                  %v6332 = vld [vmem:[%s6308 + $0x148] sm:$0xff]
                  %6333 = vst [vmem:[%s6309 + $0x210] sm:$0xff] %v6332
                  %v6334 = vld [vmem:[%s6308 + $0x180] sm:$0xff]
                  %6335 = vst [vmem:[%s6309 + $0x270] sm:$0xff] %v6334
                  %v6336 = vld [vmem:[%s6308 + $0x188] sm:$0xff]
                  %6337 = vst [vmem:[%s6309 + $0x278] sm:$0xff] %v6336
                  %v6338 = vld [vmem:[%s6308 + $0x1c0] sm:$0xff]
                  %6339 = vst [vmem:[%s6309 + $0x2d8] sm:$0xff] %v6338
                  %v6340 = vld [vmem:[%s6308 + $0x1c8] sm:$0xff]
                  %6341 = vst [vmem:[%s6309 + $0x2e0] sm:$0xff] %v6340
                  %v6342 = vld [vmem:[%s6308 + $0x200] sm:$0xff]
                  %6343 = vst [vmem:[%s6309 + $0x340] sm:$0xff] %v6342
                  %v6344 = vld [vmem:[%s6308 + $0x208] sm:$0xff]
                  %6345 = vst [vmem:[%s6309 + $0x348] sm:$0xff] %v6344
                  %v6346 = vld [vmem:[%s6308 + $0x240] sm:$0xff]
                  %6347 = vst [vmem:[%s6309 + $0x3a8] sm:$0xff] %v6346
                  %v6348 = vld [vmem:[%s6308 + $0x248] sm:$0xff]
                  %6349 = vst [vmem:[%s6309 + $0x3b0] sm:$0xff] %v6348
                  %v6350 = vld [vmem:[%s6308 + $0x280] sm:$0xff]
                  %6351 = vst [vmem:[%s6309 + $0x410] sm:$0xff] %v6350
                  %v6352 = vld [vmem:[%s6308 + $0x288] sm:$0xff]
                  %6353 = vst [vmem:[%s6309 + $0x418] sm:$0xff] %v6352
                  %v6354 = vld [vmem:[%s6308 + $0x2c0] sm:$0xff]
                  %6355 = vst [vmem:[%s6309 + $0x478] sm:$0xff] %v6354
                  %v6356 = vld [vmem:[%s6308 + $0x2c8] sm:$0xff]
                  %6357 = vst [vmem:[%s6309 + $0x480] sm:$0xff] %v6356
                  %v6358 = vld [vmem:[%s6308 + $0x300] sm:$0xff]
                  %6359 = vst [vmem:[%s6309 + $0x4e0] sm:$0xff] %v6358
                  %v6360 = vld [vmem:[%s6308 + $0x308] sm:$0xff]
                  %6361 = vst [vmem:[%s6309 + $0x4e8] sm:$0xff] %v6360
                  %v6362 = vld [vmem:[%s6308 + $0x340] sm:$0xff]
                  %6363 = vst [vmem:[%s6309 + $0x548] sm:$0xff] %v6362
                  %v6364 = vld [vmem:[%s6308 + $0x348] sm:$0xff]
                  %6365 = vst [vmem:[%s6309 + $0x550] sm:$0xff] %v6364
                  %v6366 = vld [vmem:[%s6308 + $0x380] sm:$0xff]
                  %6367 = vst [vmem:[%s6309 + $0x5b0] sm:$0xff] %v6366
                  %v6368 = vld [vmem:[%s6308 + $0x388] sm:$0xff]
                  %6369 = vst [vmem:[%s6309 + $0x5b8] sm:$0xff] %v6368
                  %v6370 = vld [vmem:[%s6308 + $0x3c0] sm:$0xff]
                  %6371 = vst [vmem:[%s6309 + $0x618] sm:$0xff] %v6370
                  %v6372 = vld [vmem:[%s6308 + $0x3c8] sm:$0xff]
                  %6373 = vst [vmem:[%s6309 + $0x620] sm:$0xff] %v6372
                  %v6374 = vld [vmem:[%s6308 + $0x400] sm:$0xff]
                  %6375 = vst [vmem:[%s6309 + $0x680] sm:$0xff] %v6374
                  %v6376 = vld [vmem:[%s6308 + $0x408] sm:$0xff]
                  %6377 = vst [vmem:[%s6309 + $0x688] sm:$0xff] %v6376
                  %v6378 = vld [vmem:[%s6308 + $0x440] sm:$0xff]
                  %6379 = vst [vmem:[%s6309 + $0x6e8] sm:$0xff] %v6378
                  %v6380 = vld [vmem:[%s6308 + $0x448] sm:$0xff]
                  %6381 = vst [vmem:[%s6309 + $0x6f0] sm:$0xff] %v6380
                  %v6382 = vld [vmem:[%s6308 + $0x480] sm:$0xff]
                  %6383 = vst [vmem:[%s6309 + $0x750] sm:$0xff] %v6382
                  %v6384 = vld [vmem:[%s6308 + $0x488] sm:$0xff]
                  %6385 = vst [vmem:[%s6309 + $0x758] sm:$0xff] %v6384
                  %v6386 = vld [vmem:[%s6308 + $0x4c0] sm:$0xff]
                  %6387 = vst [vmem:[%s6309 + $0x7b8] sm:$0xff] %v6386
                  %v6388 = vld [vmem:[%s6308 + $0x4c8] sm:$0xff]
                  %6389 = vst [vmem:[%s6309 + $0x7c0] sm:$0xff] %v6388
                  %v6390 = vld [vmem:[%s6308 + $0x500] sm:$0xff]
                  %6391 = vst [vmem:[%s6309 + $0x820] sm:$0xff] %v6390
                  %v6392 = vld [vmem:[%s6308 + $0x508] sm:$0xff]
                  %6393 = vst [vmem:[%s6309 + $0x828] sm:$0xff] %v6392
                  %v6394 = vld [vmem:[%s6308 + $0x540] sm:$0xff]
                  %6395 = vst [vmem:[%s6309 + $0x888] sm:$0xff] %v6394
                  %v6396 = vld [vmem:[%s6308 + $0x548] sm:$0xff]
                  %6397 = vst [vmem:[%s6309 + $0x890] sm:$0xff] %v6396
                  %v6398 = vld [vmem:[%s6308 + $0x580] sm:$0xff]
                  %6399 = vst [vmem:[%s6309 + $0x8f0] sm:$0xff] %v6398
                  %v6400 = vld [vmem:[%s6308 + $0x588] sm:$0xff]
                  %6401 = vst [vmem:[%s6309 + $0x8f8] sm:$0xff] %v6400
                  %v6402 = vld [vmem:[%s6308 + $0x5c0] sm:$0xff]
                  %6403 = vst [vmem:[%s6309 + $0x958] sm:$0xff] %v6402
                  %v6404 = vld [vmem:[%s6308 + $0x5c8] sm:$0xff]
                  %6405 = vst [vmem:[%s6309 + $0x960] sm:$0xff] %v6404
                  %v6406 = vld [vmem:[%s6308 + $0x600] sm:$0xff]
                  %6407 = vst [vmem:[%s6309 + $0x9c0] sm:$0xff] %v6406
                  %v6408 = vld [vmem:[%s6308 + $0x608] sm:$0xff]
                  %6409 = vst [vmem:[%s6309 + $0x9c8] sm:$0xff] %v6408
                  %v6410 = vld [vmem:[%s6308 + $0x640] sm:$0xff]
                  %6411 = vst [vmem:[%s6309 + $0xa28] sm:$0xff] %v6410
                  %v6412 = vld [vmem:[%s6308 + $0x648] sm:$0xff]
                  %6413 = vst [vmem:[%s6309 + $0xa30] sm:$0xff] %v6412
                  %v6414 = vld [vmem:[%s6308 + $0x680] sm:$0xff]
                  %6415 = vst [vmem:[%s6309 + $0xa90] sm:$0xff] %v6414
                  %v6416 = vld [vmem:[%s6308 + $0x688] sm:$0xff]
                  %6417 = vst [vmem:[%s6309 + $0xa98] sm:$0xff] %v6416
                  %v6418 = vld [vmem:[%s6308 + $0x6c0] sm:$0xff]
                  %6419 = vst [vmem:[%s6309 + $0xaf8] sm:$0xff] %v6418
                  %v6420 = vld [vmem:[%s6308 + $0x6c8] sm:$0xff]
                  %6421 = vst [vmem:[%s6309 + $0xb00] sm:$0xff] %v6420
                  %v6422 = vld [vmem:[%s6308 + $0x700] sm:$0xff]
                  %6423 = vst [vmem:[%s6309 + $0xb60] sm:$0xff] %v6422
                  %v6424 = vld [vmem:[%s6308 + $0x708] sm:$0xff]
                  %6425 = vst [vmem:[%s6309 + $0xb68] sm:$0xff] %v6424
                  %v6426 = vld [vmem:[%s6308 + $0x740] sm:$0xff]
                  %6427 = vst [vmem:[%s6309 + $0xbc8] sm:$0xff] %v6426
                  %v6428 = vld [vmem:[%s6308 + $0x748] sm:$0xff]
                  %6429 = vst [vmem:[%s6309 + $0xbd0] sm:$0xff] %v6428
                  %v6430 = vld [vmem:[%s6308 + $0x780] sm:$0xff]
                  %6431 = vst [vmem:[%s6309 + $0xc30] sm:$0xff] %v6430
                  %v6432 = vld [vmem:[%s6308 + $0x788] sm:$0xff]
                  %6433 = vst [vmem:[%s6309 + $0xc38] sm:$0xff] %v6432
                  %v6434 = vld [vmem:[%s6308 + $0x7c0] sm:$0xff]
                  %6435 = vst [vmem:[%s6309 + $0xc98] sm:$0xff] %v6434
                  %v6436 = vld [vmem:[%s6308 + $0x7c8] sm:$0xff]
                  %6437 = vst [vmem:[%s6309 + $0xca0] sm:$0xff] %v6436
                  %s6438 = sadd.s32 1, %s6307
                  %p6439 = scmp.ge.s32.totalorder %s6438, %s6298
                  %s6440 = scalar_select %p6439, 0, %s6438
                  %s6441 = smul.u32 %s6440, 16
                  %s6442 = smul.u32 %s6440, 16
                  %s6443 = scalar_lea.vmem %s6194, %s6441 [#allocation4]
                  %s6444 = scalar_lea.vmem %s6207, %s6442
                $region186: #{ffmv2_forward.1} parent=180 // loop_footer
                  %s6304 = sadd.s32 %s6302, 1
                $region187: #{ffmv2_forward.1} parent=180 // loop_footer_branch
                  %6301 = sbr.rel target = $region183
                $region188: #{ffmv2_forward.1} parent=180 // loop_exit
                  _
                %s6445 = sshrl.u32 %s6297, 1
                %s6446 = sand.u32 %s6297, 1
                %s6447 = smul.u32 %s6445, 2
                %s6448 = smul.u32 128, %s6447
                %s6449 = sshra.s32 %s6448, 4
                %s6450 = scalar_lea.vmem %s6194, %s6449 [#allocation4]
                %s6451 = smul.u32 128, %s6447
                %s6452 = sshra.s32 %s6451, 4
                %s6453 = scalar_lea.vmem %s6207, %s6452
                // While loop
                $region189: #{ffmv2_forward.1} parent=180 // loop_pre_header
                  _
                $region190: #{ffmv2_forward.1} parent=180 // loop_header
                  %s6457 = sphi 0, %s6459
                  %p6458 = scmp.ge.s32.totalorder %s6457, %s6446
                  %s6462 = sphi 0, %s6531
                  %s6463 = sphi %s6450, %s6534
                  %s6464 = sphi %s6453, %s6535
                $region191: #{ffmv2_forward.1} parent=180 // loop_header_branch
                  %6461 = sbr.rel (%p6458) target = $region195
                $region192: #{ffmv2_forward.1} parent=180 // loop_body
                  %v6465 = vld [vmem:[%s6463] sm:$0xff]
                  %6466 = vst [vmem:[%s6464] sm:$0xff] %v6465
                  %v6467 = vld [vmem:[%s6463 + $0x40] sm:$0xff]
                  %6468 = vst [vmem:[%s6464 + $0x68] sm:$0xff] %v6467
                  %v6469 = vld [vmem:[%s6463 + $0x80] sm:$0xff]
                  %6470 = vst [vmem:[%s6464 + $0xd0] sm:$0xff] %v6469
                  %v6471 = vld [vmem:[%s6463 + $0xc0] sm:$0xff]
                  %6472 = vst [vmem:[%s6464 + $0x138] sm:$0xff] %v6471
                  %v6473 = vld [vmem:[%s6463 + $0x100] sm:$0xff]
                  %6474 = vst [vmem:[%s6464 + $0x1a0] sm:$0xff] %v6473
                  %v6475 = vld [vmem:[%s6463 + $0x140] sm:$0xff]
                  %6476 = vst [vmem:[%s6464 + $0x208] sm:$0xff] %v6475
                  %v6477 = vld [vmem:[%s6463 + $0x180] sm:$0xff]
                  %6478 = vst [vmem:[%s6464 + $0x270] sm:$0xff] %v6477
                  %v6479 = vld [vmem:[%s6463 + $0x1c0] sm:$0xff]
                  %6480 = vst [vmem:[%s6464 + $0x2d8] sm:$0xff] %v6479
                  %v6481 = vld [vmem:[%s6463 + $0x200] sm:$0xff]
                  %6482 = vst [vmem:[%s6464 + $0x340] sm:$0xff] %v6481
                  %v6483 = vld [vmem:[%s6463 + $0x240] sm:$0xff]
                  %6484 = vst [vmem:[%s6464 + $0x3a8] sm:$0xff] %v6483
                  %v6485 = vld [vmem:[%s6463 + $0x280] sm:$0xff]
                  %6486 = vst [vmem:[%s6464 + $0x410] sm:$0xff] %v6485
                  %v6487 = vld [vmem:[%s6463 + $0x2c0] sm:$0xff]
                  %6488 = vst [vmem:[%s6464 + $0x478] sm:$0xff] %v6487
                  %v6489 = vld [vmem:[%s6463 + $0x300] sm:$0xff]
                  %6490 = vst [vmem:[%s6464 + $0x4e0] sm:$0xff] %v6489
                  %v6491 = vld [vmem:[%s6463 + $0x340] sm:$0xff]
                  %6492 = vst [vmem:[%s6464 + $0x548] sm:$0xff] %v6491
                  %v6493 = vld [vmem:[%s6463 + $0x380] sm:$0xff]
                  %6494 = vst [vmem:[%s6464 + $0x5b0] sm:$0xff] %v6493
                  %v6495 = vld [vmem:[%s6463 + $0x3c0] sm:$0xff]
                  %6496 = vst [vmem:[%s6464 + $0x618] sm:$0xff] %v6495
                  %v6497 = vld [vmem:[%s6463 + $0x400] sm:$0xff]
                  %6498 = vst [vmem:[%s6464 + $0x680] sm:$0xff] %v6497
                  %v6499 = vld [vmem:[%s6463 + $0x440] sm:$0xff]
                  %6500 = vst [vmem:[%s6464 + $0x6e8] sm:$0xff] %v6499
                  %v6501 = vld [vmem:[%s6463 + $0x480] sm:$0xff]
                  %6502 = vst [vmem:[%s6464 + $0x750] sm:$0xff] %v6501
                  %v6503 = vld [vmem:[%s6463 + $0x4c0] sm:$0xff]
                  %6504 = vst [vmem:[%s6464 + $0x7b8] sm:$0xff] %v6503
                  %v6505 = vld [vmem:[%s6463 + $0x500] sm:$0xff]
                  %6506 = vst [vmem:[%s6464 + $0x820] sm:$0xff] %v6505
                  %v6507 = vld [vmem:[%s6463 + $0x540] sm:$0xff]
                  %6508 = vst [vmem:[%s6464 + $0x888] sm:$0xff] %v6507
                  %v6509 = vld [vmem:[%s6463 + $0x580] sm:$0xff]
                  %6510 = vst [vmem:[%s6464 + $0x8f0] sm:$0xff] %v6509
                  %v6511 = vld [vmem:[%s6463 + $0x5c0] sm:$0xff]
                  %6512 = vst [vmem:[%s6464 + $0x958] sm:$0xff] %v6511
                  %v6513 = vld [vmem:[%s6463 + $0x600] sm:$0xff]
                  %6514 = vst [vmem:[%s6464 + $0x9c0] sm:$0xff] %v6513
                  %v6515 = vld [vmem:[%s6463 + $0x640] sm:$0xff]
                  %6516 = vst [vmem:[%s6464 + $0xa28] sm:$0xff] %v6515
                  %v6517 = vld [vmem:[%s6463 + $0x680] sm:$0xff]
                  %6518 = vst [vmem:[%s6464 + $0xa90] sm:$0xff] %v6517
                  %v6519 = vld [vmem:[%s6463 + $0x6c0] sm:$0xff]
                  %6520 = vst [vmem:[%s6464 + $0xaf8] sm:$0xff] %v6519
                  %v6521 = vld [vmem:[%s6463 + $0x700] sm:$0xff]
                  %6522 = vst [vmem:[%s6464 + $0xb60] sm:$0xff] %v6521
                  %v6523 = vld [vmem:[%s6463 + $0x740] sm:$0xff]
                  %6524 = vst [vmem:[%s6464 + $0xbc8] sm:$0xff] %v6523
                  %v6525 = vld [vmem:[%s6463 + $0x780] sm:$0xff]
                  %6526 = vst [vmem:[%s6464 + $0xc30] sm:$0xff] %v6525
                  %v6527 = vld [vmem:[%s6463 + $0x7c0] sm:$0xff]
                  %6528 = vst [vmem:[%s6464 + $0xc98] sm:$0xff] %v6527
                  %s6529 = sadd.s32 1, %s6462
                  %p6530 = scmp.ge.s32.totalorder %s6529, %s6446
                  %s6531 = scalar_select %p6530, 0, %s6529
                  %s6532 = smul.u32 %s6531, 8
                  %s6533 = smul.u32 %s6531, 8
                  %s6534 = scalar_lea.vmem %s6450, %s6532 [#allocation4]
                  %s6535 = scalar_lea.vmem %s6453, %s6533
                $region193: #{ffmv2_forward.1} parent=180 // loop_footer
                  %s6459 = sadd.s32 %s6457, 1
                $region194: #{ffmv2_forward.1} parent=180 // loop_footer_branch
                  %6456 = sbr.rel target = $region190
                $region195: #{ffmv2_forward.1} parent=180 // loop_exit
                  _
              $region181: #{ffmv2_forward.1} parent=165 // pred_fallthru
                _
              %p6536 = pneg %p6293
              // Predicated region
              $region196: #{ffmv2_forward.1} parent=165 // pred_check
                _
              $region197: #{ffmv2_forward.1} parent=165 // pred_check_branch
                %6538 = sbr.rel (%p6293) target = $region199
              $region198: #{ffmv2_forward.1} parent=165 // pred_region
                %s6539 = sand.u32 %s6208, 7
                %s6540 = ssub.s32 %s6208, %s6539
                %s6541 = scalar_lea.vmem %s6194, %s6540 [#allocation4]
                %s6542 = ssub.s32 %s6208, %s6539
                %s6543 = scalar_lea.vmem %s6207, %s6542
                %s6544 = sshrl.u32 %s6208, 3
                %s6545 = sshrl.u32 %s6544, 1
                // While loop
                $region200: #{ffmv2_forward.1} parent=198 // loop_pre_header
                  _
                $region201: #{ffmv2_forward.1} parent=198 // loop_header
                  %s6549 = sphi 0, %s6551
                  %p6550 = scmp.ge.s32.totalorder %s6549, %s6545
                  %s6554 = sphi 0, %s6687
                  %s6555 = sphi %s6194, %s6690
                  %s6556 = sphi %s6207, %s6691
                $region202: #{ffmv2_forward.1} parent=198 // loop_header_branch
                  %6553 = sbr.rel (%p6550) target = $region206
                $region203: #{ffmv2_forward.1} parent=198 // loop_body
                  %v6557 = vld [vmem:[%s6555] sm:$0xff]
                  %6558 = vst [vmem:[%s6556] sm:$0xff] %v6557
                  %v6559 = vld [vmem:[%s6555 + $0x8] sm:$0xff]
                  %6560 = vst [vmem:[%s6556 + $0x8] sm:$0xff] %v6559
                  %v6561 = vld [vmem:[%s6555 + $0x40] sm:$0xff]
                  %6562 = vst [vmem:[%s6556 + $0x68] sm:$0xff] %v6561
                  %v6563 = vld [vmem:[%s6555 + $0x48] sm:$0xff]
                  %6564 = vst [vmem:[%s6556 + $0x70] sm:$0xff] %v6563
                  %v6565 = vld [vmem:[%s6555 + $0x80] sm:$0xff]
                  %6566 = vst [vmem:[%s6556 + $0xd0] sm:$0xff] %v6565
                  %v6567 = vld [vmem:[%s6555 + $0x88] sm:$0xff]
                  %6568 = vst [vmem:[%s6556 + $0xd8] sm:$0xff] %v6567
                  %v6569 = vld [vmem:[%s6555 + $0xc0] sm:$0xff]
                  %6570 = vst [vmem:[%s6556 + $0x138] sm:$0xff] %v6569
                  %v6571 = vld [vmem:[%s6555 + $0xc8] sm:$0xff]
                  %6572 = vst [vmem:[%s6556 + $0x140] sm:$0xff] %v6571
                  %v6573 = vld [vmem:[%s6555 + $0x100] sm:$0xff]
                  %6574 = vst [vmem:[%s6556 + $0x1a0] sm:$0xff] %v6573
                  %v6575 = vld [vmem:[%s6555 + $0x108] sm:$0xff]
                  %6576 = vst [vmem:[%s6556 + $0x1a8] sm:$0xff] %v6575
                  %v6577 = vld [vmem:[%s6555 + $0x140] sm:$0xff]
                  %6578 = vst [vmem:[%s6556 + $0x208] sm:$0xff] %v6577
                  %v6579 = vld [vmem:[%s6555 + $0x148] sm:$0xff]
                  %6580 = vst [vmem:[%s6556 + $0x210] sm:$0xff] %v6579
                  %v6581 = vld [vmem:[%s6555 + $0x180] sm:$0xff]
                  %6582 = vst [vmem:[%s6556 + $0x270] sm:$0xff] %v6581
                  %v6583 = vld [vmem:[%s6555 + $0x188] sm:$0xff]
                  %6584 = vst [vmem:[%s6556 + $0x278] sm:$0xff] %v6583
                  %v6585 = vld [vmem:[%s6555 + $0x1c0] sm:$0xff]
                  %6586 = vst [vmem:[%s6556 + $0x2d8] sm:$0xff] %v6585
                  %v6587 = vld [vmem:[%s6555 + $0x1c8] sm:$0xff]
                  %6588 = vst [vmem:[%s6556 + $0x2e0] sm:$0xff] %v6587
                  %v6589 = vld [vmem:[%s6555 + $0x200] sm:$0xff]
                  %6590 = vst [vmem:[%s6556 + $0x340] sm:$0xff] %v6589
                  %v6591 = vld [vmem:[%s6555 + $0x208] sm:$0xff]
                  %6592 = vst [vmem:[%s6556 + $0x348] sm:$0xff] %v6591
                  %v6593 = vld [vmem:[%s6555 + $0x240] sm:$0xff]
                  %6594 = vst [vmem:[%s6556 + $0x3a8] sm:$0xff] %v6593
                  %v6595 = vld [vmem:[%s6555 + $0x248] sm:$0xff]
                  %6596 = vst [vmem:[%s6556 + $0x3b0] sm:$0xff] %v6595
                  %v6597 = vld [vmem:[%s6555 + $0x280] sm:$0xff]
                  %6598 = vst [vmem:[%s6556 + $0x410] sm:$0xff] %v6597
                  %v6599 = vld [vmem:[%s6555 + $0x288] sm:$0xff]
                  %6600 = vst [vmem:[%s6556 + $0x418] sm:$0xff] %v6599
                  %v6601 = vld [vmem:[%s6555 + $0x2c0] sm:$0xff]
                  %6602 = vst [vmem:[%s6556 + $0x478] sm:$0xff] %v6601
                  %v6603 = vld [vmem:[%s6555 + $0x2c8] sm:$0xff]
                  %6604 = vst [vmem:[%s6556 + $0x480] sm:$0xff] %v6603
                  %v6605 = vld [vmem:[%s6555 + $0x300] sm:$0xff]
                  %6606 = vst [vmem:[%s6556 + $0x4e0] sm:$0xff] %v6605
                  %v6607 = vld [vmem:[%s6555 + $0x308] sm:$0xff]
                  %6608 = vst [vmem:[%s6556 + $0x4e8] sm:$0xff] %v6607
                  %v6609 = vld [vmem:[%s6555 + $0x340] sm:$0xff]
                  %6610 = vst [vmem:[%s6556 + $0x548] sm:$0xff] %v6609
                  %v6611 = vld [vmem:[%s6555 + $0x348] sm:$0xff]
                  %6612 = vst [vmem:[%s6556 + $0x550] sm:$0xff] %v6611
                  %v6613 = vld [vmem:[%s6555 + $0x380] sm:$0xff]
                  %6614 = vst [vmem:[%s6556 + $0x5b0] sm:$0xff] %v6613
                  %v6615 = vld [vmem:[%s6555 + $0x388] sm:$0xff]
                  %6616 = vst [vmem:[%s6556 + $0x5b8] sm:$0xff] %v6615
                  %v6617 = vld [vmem:[%s6555 + $0x3c0] sm:$0xff]
                  %6618 = vst [vmem:[%s6556 + $0x618] sm:$0xff] %v6617
                  %v6619 = vld [vmem:[%s6555 + $0x3c8] sm:$0xff]
                  %6620 = vst [vmem:[%s6556 + $0x620] sm:$0xff] %v6619
                  %v6621 = vld [vmem:[%s6555 + $0x400] sm:$0xff]
                  %6622 = vst [vmem:[%s6556 + $0x680] sm:$0xff] %v6621
                  %v6623 = vld [vmem:[%s6555 + $0x408] sm:$0xff]
                  %6624 = vst [vmem:[%s6556 + $0x688] sm:$0xff] %v6623
                  %v6625 = vld [vmem:[%s6555 + $0x440] sm:$0xff]
                  %6626 = vst [vmem:[%s6556 + $0x6e8] sm:$0xff] %v6625
                  %v6627 = vld [vmem:[%s6555 + $0x448] sm:$0xff]
                  %6628 = vst [vmem:[%s6556 + $0x6f0] sm:$0xff] %v6627
                  %v6629 = vld [vmem:[%s6555 + $0x480] sm:$0xff]
                  %6630 = vst [vmem:[%s6556 + $0x750] sm:$0xff] %v6629
                  %v6631 = vld [vmem:[%s6555 + $0x488] sm:$0xff]
                  %6632 = vst [vmem:[%s6556 + $0x758] sm:$0xff] %v6631
                  %v6633 = vld [vmem:[%s6555 + $0x4c0] sm:$0xff]
                  %6634 = vst [vmem:[%s6556 + $0x7b8] sm:$0xff] %v6633
                  %v6635 = vld [vmem:[%s6555 + $0x4c8] sm:$0xff]
                  %6636 = vst [vmem:[%s6556 + $0x7c0] sm:$0xff] %v6635
                  %v6637 = vld [vmem:[%s6555 + $0x500] sm:$0xff]
                  %6638 = vst [vmem:[%s6556 + $0x820] sm:$0xff] %v6637
                  %v6639 = vld [vmem:[%s6555 + $0x508] sm:$0xff]
                  %6640 = vst [vmem:[%s6556 + $0x828] sm:$0xff] %v6639
                  %v6641 = vld [vmem:[%s6555 + $0x540] sm:$0xff]
                  %6642 = vst [vmem:[%s6556 + $0x888] sm:$0xff] %v6641
                  %v6643 = vld [vmem:[%s6555 + $0x548] sm:$0xff]
                  %6644 = vst [vmem:[%s6556 + $0x890] sm:$0xff] %v6643
                  %v6645 = vld [vmem:[%s6555 + $0x580] sm:$0xff]
                  %6646 = vst [vmem:[%s6556 + $0x8f0] sm:$0xff] %v6645
                  %v6647 = vld [vmem:[%s6555 + $0x588] sm:$0xff]
                  %6648 = vst [vmem:[%s6556 + $0x8f8] sm:$0xff] %v6647
                  %v6649 = vld [vmem:[%s6555 + $0x5c0] sm:$0xff]
                  %6650 = vst [vmem:[%s6556 + $0x958] sm:$0xff] %v6649
                  %v6651 = vld [vmem:[%s6555 + $0x5c8] sm:$0xff]
                  %6652 = vst [vmem:[%s6556 + $0x960] sm:$0xff] %v6651
                  %v6653 = vld [vmem:[%s6555 + $0x600] sm:$0xff]
                  %6654 = vst [vmem:[%s6556 + $0x9c0] sm:$0xff] %v6653
                  %v6655 = vld [vmem:[%s6555 + $0x608] sm:$0xff]
                  %6656 = vst [vmem:[%s6556 + $0x9c8] sm:$0xff] %v6655
                  %v6657 = vld [vmem:[%s6555 + $0x640] sm:$0xff]
                  %6658 = vst [vmem:[%s6556 + $0xa28] sm:$0xff] %v6657
                  %v6659 = vld [vmem:[%s6555 + $0x648] sm:$0xff]
                  %6660 = vst [vmem:[%s6556 + $0xa30] sm:$0xff] %v6659
                  %v6661 = vld [vmem:[%s6555 + $0x680] sm:$0xff]
                  %6662 = vst [vmem:[%s6556 + $0xa90] sm:$0xff] %v6661
                  %v6663 = vld [vmem:[%s6555 + $0x688] sm:$0xff]
                  %6664 = vst [vmem:[%s6556 + $0xa98] sm:$0xff] %v6663
                  %v6665 = vld [vmem:[%s6555 + $0x6c0] sm:$0xff]
                  %6666 = vst [vmem:[%s6556 + $0xaf8] sm:$0xff] %v6665
                  %v6667 = vld [vmem:[%s6555 + $0x6c8] sm:$0xff]
                  %6668 = vst [vmem:[%s6556 + $0xb00] sm:$0xff] %v6667
                  %v6669 = vld [vmem:[%s6555 + $0x700] sm:$0xff]
                  %6670 = vst [vmem:[%s6556 + $0xb60] sm:$0xff] %v6669
                  %v6671 = vld [vmem:[%s6555 + $0x708] sm:$0xff]
                  %6672 = vst [vmem:[%s6556 + $0xb68] sm:$0xff] %v6671
                  %v6673 = vld [vmem:[%s6555 + $0x740] sm:$0xff]
                  %6674 = vst [vmem:[%s6556 + $0xbc8] sm:$0xff] %v6673
                  %v6675 = vld [vmem:[%s6555 + $0x748] sm:$0xff]
                  %6676 = vst [vmem:[%s6556 + $0xbd0] sm:$0xff] %v6675
                  %v6677 = vld [vmem:[%s6555 + $0x780] sm:$0xff]
                  %6678 = vst [vmem:[%s6556 + $0xc30] sm:$0xff] %v6677
                  %v6679 = vld [vmem:[%s6555 + $0x788] sm:$0xff]
                  %6680 = vst [vmem:[%s6556 + $0xc38] sm:$0xff] %v6679
                  %v6681 = vld [vmem:[%s6555 + $0x7c0] sm:$0xff]
                  %6682 = vst [vmem:[%s6556 + $0xc98] sm:$0xff] %v6681
                  %v6683 = vld [vmem:[%s6555 + $0x7c8] sm:$0xff]
                  %6684 = vst [vmem:[%s6556 + $0xca0] sm:$0xff] %v6683
                  %s6685 = sadd.s32 1, %s6554
                  %p6686 = scmp.ge.s32.totalorder %s6685, %s6545
                  %s6687 = scalar_select %p6686, 0, %s6685
                  %s6688 = smul.u32 %s6687, 16
                  %s6689 = smul.u32 %s6687, 16
                  %s6690 = scalar_lea.vmem %s6194, %s6688 [#allocation4]
                  %s6691 = scalar_lea.vmem %s6207, %s6689
                $region204: #{ffmv2_forward.1} parent=198 // loop_footer
                  %s6551 = sadd.s32 %s6549, 1
                $region205: #{ffmv2_forward.1} parent=198 // loop_footer_branch
                  %6548 = sbr.rel target = $region201
                $region206: #{ffmv2_forward.1} parent=198 // loop_exit
                  _
                %s6692 = sshrl.u32 %s6544, 1
                %s6693 = sand.u32 %s6544, 1
                %s6694 = smul.u32 %s6692, 2
                %s6695 = smul.u32 128, %s6694
                %s6696 = sshra.s32 %s6695, 4
                %s6697 = scalar_lea.vmem %s6194, %s6696 [#allocation4]
                %s6698 = smul.u32 128, %s6694
                %s6699 = sshra.s32 %s6698, 4
                %s6700 = scalar_lea.vmem %s6207, %s6699
                // While loop
                $region207: #{ffmv2_forward.1} parent=198 // loop_pre_header
                  _
                $region208: #{ffmv2_forward.1} parent=198 // loop_header
                  %s6704 = sphi 0, %s6706
                  %p6705 = scmp.ge.s32.totalorder %s6704, %s6693
                  %s6709 = sphi 0, %s6778
                  %s6710 = sphi %s6697, %s6781
                  %s6711 = sphi %s6700, %s6782
                $region209: #{ffmv2_forward.1} parent=198 // loop_header_branch
                  %6708 = sbr.rel (%p6705) target = $region213
                $region210: #{ffmv2_forward.1} parent=198 // loop_body
                  %v6712 = vld [vmem:[%s6710] sm:$0xff]
                  %6713 = vst [vmem:[%s6711] sm:$0xff] %v6712
                  %v6714 = vld [vmem:[%s6710 + $0x40] sm:$0xff]
                  %6715 = vst [vmem:[%s6711 + $0x68] sm:$0xff] %v6714
                  %v6716 = vld [vmem:[%s6710 + $0x80] sm:$0xff]
                  %6717 = vst [vmem:[%s6711 + $0xd0] sm:$0xff] %v6716
                  %v6718 = vld [vmem:[%s6710 + $0xc0] sm:$0xff]
                  %6719 = vst [vmem:[%s6711 + $0x138] sm:$0xff] %v6718
                  %v6720 = vld [vmem:[%s6710 + $0x100] sm:$0xff]
                  %6721 = vst [vmem:[%s6711 + $0x1a0] sm:$0xff] %v6720
                  %v6722 = vld [vmem:[%s6710 + $0x140] sm:$0xff]
                  %6723 = vst [vmem:[%s6711 + $0x208] sm:$0xff] %v6722
                  %v6724 = vld [vmem:[%s6710 + $0x180] sm:$0xff]
                  %6725 = vst [vmem:[%s6711 + $0x270] sm:$0xff] %v6724
                  %v6726 = vld [vmem:[%s6710 + $0x1c0] sm:$0xff]
                  %6727 = vst [vmem:[%s6711 + $0x2d8] sm:$0xff] %v6726
                  %v6728 = vld [vmem:[%s6710 + $0x200] sm:$0xff]
                  %6729 = vst [vmem:[%s6711 + $0x340] sm:$0xff] %v6728
                  %v6730 = vld [vmem:[%s6710 + $0x240] sm:$0xff]
                  %6731 = vst [vmem:[%s6711 + $0x3a8] sm:$0xff] %v6730
                  %v6732 = vld [vmem:[%s6710 + $0x280] sm:$0xff]
                  %6733 = vst [vmem:[%s6711 + $0x410] sm:$0xff] %v6732
                  %v6734 = vld [vmem:[%s6710 + $0x2c0] sm:$0xff]
                  %6735 = vst [vmem:[%s6711 + $0x478] sm:$0xff] %v6734
                  %v6736 = vld [vmem:[%s6710 + $0x300] sm:$0xff]
                  %6737 = vst [vmem:[%s6711 + $0x4e0] sm:$0xff] %v6736
                  %v6738 = vld [vmem:[%s6710 + $0x340] sm:$0xff]
                  %6739 = vst [vmem:[%s6711 + $0x548] sm:$0xff] %v6738
                  %v6740 = vld [vmem:[%s6710 + $0x380] sm:$0xff]
                  %6741 = vst [vmem:[%s6711 + $0x5b0] sm:$0xff] %v6740
                  %v6742 = vld [vmem:[%s6710 + $0x3c0] sm:$0xff]
                  %6743 = vst [vmem:[%s6711 + $0x618] sm:$0xff] %v6742
                  %v6744 = vld [vmem:[%s6710 + $0x400] sm:$0xff]
                  %6745 = vst [vmem:[%s6711 + $0x680] sm:$0xff] %v6744
                  %v6746 = vld [vmem:[%s6710 + $0x440] sm:$0xff]
                  %6747 = vst [vmem:[%s6711 + $0x6e8] sm:$0xff] %v6746
                  %v6748 = vld [vmem:[%s6710 + $0x480] sm:$0xff]
                  %6749 = vst [vmem:[%s6711 + $0x750] sm:$0xff] %v6748
                  %v6750 = vld [vmem:[%s6710 + $0x4c0] sm:$0xff]
                  %6751 = vst [vmem:[%s6711 + $0x7b8] sm:$0xff] %v6750
                  %v6752 = vld [vmem:[%s6710 + $0x500] sm:$0xff]
                  %6753 = vst [vmem:[%s6711 + $0x820] sm:$0xff] %v6752
                  %v6754 = vld [vmem:[%s6710 + $0x540] sm:$0xff]
                  %6755 = vst [vmem:[%s6711 + $0x888] sm:$0xff] %v6754
                  %v6756 = vld [vmem:[%s6710 + $0x580] sm:$0xff]
                  %6757 = vst [vmem:[%s6711 + $0x8f0] sm:$0xff] %v6756
                  %v6758 = vld [vmem:[%s6710 + $0x5c0] sm:$0xff]
                  %6759 = vst [vmem:[%s6711 + $0x958] sm:$0xff] %v6758
                  %v6760 = vld [vmem:[%s6710 + $0x600] sm:$0xff]
                  %6761 = vst [vmem:[%s6711 + $0x9c0] sm:$0xff] %v6760
                  %v6762 = vld [vmem:[%s6710 + $0x640] sm:$0xff]
                  %6763 = vst [vmem:[%s6711 + $0xa28] sm:$0xff] %v6762
                  %v6764 = vld [vmem:[%s6710 + $0x680] sm:$0xff]
                  %6765 = vst [vmem:[%s6711 + $0xa90] sm:$0xff] %v6764
                  %v6766 = vld [vmem:[%s6710 + $0x6c0] sm:$0xff]
                  %6767 = vst [vmem:[%s6711 + $0xaf8] sm:$0xff] %v6766
                  %v6768 = vld [vmem:[%s6710 + $0x700] sm:$0xff]
                  %6769 = vst [vmem:[%s6711 + $0xb60] sm:$0xff] %v6768
                  %v6770 = vld [vmem:[%s6710 + $0x740] sm:$0xff]
                  %6771 = vst [vmem:[%s6711 + $0xbc8] sm:$0xff] %v6770
                  %v6772 = vld [vmem:[%s6710 + $0x780] sm:$0xff]
                  %6773 = vst [vmem:[%s6711 + $0xc30] sm:$0xff] %v6772
                  %v6774 = vld [vmem:[%s6710 + $0x7c0] sm:$0xff]
                  %6775 = vst [vmem:[%s6711 + $0xc98] sm:$0xff] %v6774
                  %s6776 = sadd.s32 1, %s6709
                  %p6777 = scmp.ge.s32.totalorder %s6776, %s6693
                  %s6778 = scalar_select %p6777, 0, %s6776
                  %s6779 = smul.u32 %s6778, 8
                  %s6780 = smul.u32 %s6778, 8
                  %s6781 = scalar_lea.vmem %s6697, %s6779 [#allocation4]
                  %s6782 = scalar_lea.vmem %s6700, %s6780
                $region211: #{ffmv2_forward.1} parent=198 // loop_footer
                  %s6706 = sadd.s32 %s6704, 1
                $region212: #{ffmv2_forward.1} parent=198 // loop_footer_branch
                  %6703 = sbr.rel target = $region208
                $region213: #{ffmv2_forward.1} parent=198 // loop_exit
                  _
                %s6783 = sshllo.u32 0, %s6539
                loop: start=0, step=1, limit=1
                $region214: #{ffmv2_forward.1} parent=198 // loop_pre_header
                  _
                $region215: #{ffmv2_forward.1} parent=198 // loop_header
                  %s6785 = sphi 0, %s6789
                  %p6786 = scmp.ge.s32.totalorder %s6785, 1
                  %s6790 = sphi %s6541, %s6541
                  %s6791 = sphi %s6543, %s6543
                $region216: #{ffmv2_forward.1} parent=198 // loop_header_branch
                  %6788 = sbr.rel (%p6786) target = $region220
                $region217: #{ffmv2_forward.1} parent=198 // loop_body
                  %v6792 = vld [vmem:[%s6790] sm:%s6783]
                  %6793 = vst [vmem:[%s6791] sm:%s6783] %v6792
                  %v6794 = vld [vmem:[%s6790 + $0x40] sm:%s6783]
                  %6795 = vst [vmem:[%s6791 + $0x68] sm:%s6783] %v6794
                  %v6796 = vld [vmem:[%s6790 + $0x80] sm:%s6783]
                  %6797 = vst [vmem:[%s6791 + $0xd0] sm:%s6783] %v6796
                  %v6798 = vld [vmem:[%s6790 + $0xc0] sm:%s6783]
                  %6799 = vst [vmem:[%s6791 + $0x138] sm:%s6783] %v6798
                  %v6800 = vld [vmem:[%s6790 + $0x100] sm:%s6783]
                  %6801 = vst [vmem:[%s6791 + $0x1a0] sm:%s6783] %v6800
                  %v6802 = vld [vmem:[%s6790 + $0x140] sm:%s6783]
                  %6803 = vst [vmem:[%s6791 + $0x208] sm:%s6783] %v6802
                  %v6804 = vld [vmem:[%s6790 + $0x180] sm:%s6783]
                  %6805 = vst [vmem:[%s6791 + $0x270] sm:%s6783] %v6804
                  %v6806 = vld [vmem:[%s6790 + $0x1c0] sm:%s6783]
                  %6807 = vst [vmem:[%s6791 + $0x2d8] sm:%s6783] %v6806
                  %v6808 = vld [vmem:[%s6790 + $0x200] sm:%s6783]
                  %6809 = vst [vmem:[%s6791 + $0x340] sm:%s6783] %v6808
                  %v6810 = vld [vmem:[%s6790 + $0x240] sm:%s6783]
                  %6811 = vst [vmem:[%s6791 + $0x3a8] sm:%s6783] %v6810
                  %v6812 = vld [vmem:[%s6790 + $0x280] sm:%s6783]
                  %6813 = vst [vmem:[%s6791 + $0x410] sm:%s6783] %v6812
                  %v6814 = vld [vmem:[%s6790 + $0x2c0] sm:%s6783]
                  %6815 = vst [vmem:[%s6791 + $0x478] sm:%s6783] %v6814
                  %v6816 = vld [vmem:[%s6790 + $0x300] sm:%s6783]
                  %6817 = vst [vmem:[%s6791 + $0x4e0] sm:%s6783] %v6816
                  %v6818 = vld [vmem:[%s6790 + $0x340] sm:%s6783]
                  %6819 = vst [vmem:[%s6791 + $0x548] sm:%s6783] %v6818
                  %v6820 = vld [vmem:[%s6790 + $0x380] sm:%s6783]
                  %6821 = vst [vmem:[%s6791 + $0x5b0] sm:%s6783] %v6820
                  %v6822 = vld [vmem:[%s6790 + $0x3c0] sm:%s6783]
                  %6823 = vst [vmem:[%s6791 + $0x618] sm:%s6783] %v6822
                  %v6824 = vld [vmem:[%s6790 + $0x400] sm:%s6783]
                  %6825 = vst [vmem:[%s6791 + $0x680] sm:%s6783] %v6824
                  %v6826 = vld [vmem:[%s6790 + $0x440] sm:%s6783]
                  %6827 = vst [vmem:[%s6791 + $0x6e8] sm:%s6783] %v6826
                  %v6828 = vld [vmem:[%s6790 + $0x480] sm:%s6783]
                  %6829 = vst [vmem:[%s6791 + $0x750] sm:%s6783] %v6828
                  %v6830 = vld [vmem:[%s6790 + $0x4c0] sm:%s6783]
                  %6831 = vst [vmem:[%s6791 + $0x7b8] sm:%s6783] %v6830
                  %v6832 = vld [vmem:[%s6790 + $0x500] sm:%s6783]
                  %6833 = vst [vmem:[%s6791 + $0x820] sm:%s6783] %v6832
                  %v6834 = vld [vmem:[%s6790 + $0x540] sm:%s6783]
                  %6835 = vst [vmem:[%s6791 + $0x888] sm:%s6783] %v6834
                  %v6836 = vld [vmem:[%s6790 + $0x580] sm:%s6783]
                  %6837 = vst [vmem:[%s6791 + $0x8f0] sm:%s6783] %v6836
                  %v6838 = vld [vmem:[%s6790 + $0x5c0] sm:%s6783]
                  %6839 = vst [vmem:[%s6791 + $0x958] sm:%s6783] %v6838
                  %v6840 = vld [vmem:[%s6790 + $0x600] sm:%s6783]
                  %6841 = vst [vmem:[%s6791 + $0x9c0] sm:%s6783] %v6840
                  %v6842 = vld [vmem:[%s6790 + $0x640] sm:%s6783]
                  %6843 = vst [vmem:[%s6791 + $0xa28] sm:%s6783] %v6842
                  %v6844 = vld [vmem:[%s6790 + $0x680] sm:%s6783]
                  %6845 = vst [vmem:[%s6791 + $0xa90] sm:%s6783] %v6844
                  %v6846 = vld [vmem:[%s6790 + $0x6c0] sm:%s6783]
                  %6847 = vst [vmem:[%s6791 + $0xaf8] sm:%s6783] %v6846
                  %v6848 = vld [vmem:[%s6790 + $0x700] sm:%s6783]
                  %6849 = vst [vmem:[%s6791 + $0xb60] sm:%s6783] %v6848
                  %v6850 = vld [vmem:[%s6790 + $0x740] sm:%s6783]
                  %6851 = vst [vmem:[%s6791 + $0xbc8] sm:%s6783] %v6850
                  %v6852 = vld [vmem:[%s6790 + $0x780] sm:%s6783]
                  %6853 = vst [vmem:[%s6791 + $0xc30] sm:%s6783] %v6852
                  %v6854 = vld [vmem:[%s6790 + $0x7c0] sm:%s6783]
                  %6855 = vst [vmem:[%s6791 + $0xc98] sm:%s6783] %v6854
                $region218: #{ffmv2_forward.1} parent=198 // loop_footer
                  %s6789 = sadd.s32 1, %s6785
                $region219: #{ffmv2_forward.1} parent=198 // loop_footer_branch
                  %6784 = sbr.rel target = $region215
                $region220: #{ffmv2_forward.1} parent=198 // loop_exit
                  _
              $region199: #{ffmv2_forward.1} parent=165 // pred_fallthru
                _
            $region166: #{ffmv2_forward.1} parent=161 // pred_fallthru
              _
            // Predicated region
            $region167: #{ffmv2_forward.1} parent=161 // pred_check
              %p6216 = pneg %p6212
            $region168: #{ffmv2_forward.1} parent=161 // pred_check_branch
              %6218 = sbr.rel (%p6216) target = $region170
            $region169: #{ffmv2_forward.1} parent=161 // pred_region
              %s6219 = sshllo.u32 0, %s6208
              loop: start=0, step=1, limit=1
              $region171: #{ffmv2_forward.1} parent=169 // loop_pre_header
                _
              $region172: #{ffmv2_forward.1} parent=169 // loop_header
                %s6221 = sphi 0, %s6225
                %p6222 = scmp.ge.s32.totalorder %s6221, 1
                %s6226 = sphi %s6194, %s6194
                %s6227 = sphi %s6207, %s6207
              $region173: #{ffmv2_forward.1} parent=169 // loop_header_branch
                %6224 = sbr.rel (%p6222) target = $region177
              $region174: #{ffmv2_forward.1} parent=169 // loop_body
                %v6228 = vld [vmem:[%s6226] sm:%s6219]
                %6229 = vst [vmem:[%s6227] sm:%s6219] %v6228
                %v6230 = vld [vmem:[%s6226 + $0x40] sm:%s6219]
                %6231 = vst [vmem:[%s6227 + $0x68] sm:%s6219] %v6230
                %v6232 = vld [vmem:[%s6226 + $0x80] sm:%s6219]
                %6233 = vst [vmem:[%s6227 + $0xd0] sm:%s6219] %v6232
                %v6234 = vld [vmem:[%s6226 + $0xc0] sm:%s6219]
                %6235 = vst [vmem:[%s6227 + $0x138] sm:%s6219] %v6234
                %v6236 = vld [vmem:[%s6226 + $0x100] sm:%s6219]
                %6237 = vst [vmem:[%s6227 + $0x1a0] sm:%s6219] %v6236
                %v6238 = vld [vmem:[%s6226 + $0x140] sm:%s6219]
                %6239 = vst [vmem:[%s6227 + $0x208] sm:%s6219] %v6238
                %v6240 = vld [vmem:[%s6226 + $0x180] sm:%s6219]
                %6241 = vst [vmem:[%s6227 + $0x270] sm:%s6219] %v6240
                %v6242 = vld [vmem:[%s6226 + $0x1c0] sm:%s6219]
                %6243 = vst [vmem:[%s6227 + $0x2d8] sm:%s6219] %v6242
                %v6244 = vld [vmem:[%s6226 + $0x200] sm:%s6219]
                %6245 = vst [vmem:[%s6227 + $0x340] sm:%s6219] %v6244
                %v6246 = vld [vmem:[%s6226 + $0x240] sm:%s6219]
                %6247 = vst [vmem:[%s6227 + $0x3a8] sm:%s6219] %v6246
                %v6248 = vld [vmem:[%s6226 + $0x280] sm:%s6219]
                %6249 = vst [vmem:[%s6227 + $0x410] sm:%s6219] %v6248
                %v6250 = vld [vmem:[%s6226 + $0x2c0] sm:%s6219]
                %6251 = vst [vmem:[%s6227 + $0x478] sm:%s6219] %v6250
                %v6252 = vld [vmem:[%s6226 + $0x300] sm:%s6219]
                %6253 = vst [vmem:[%s6227 + $0x4e0] sm:%s6219] %v6252
                %v6254 = vld [vmem:[%s6226 + $0x340] sm:%s6219]
                %6255 = vst [vmem:[%s6227 + $0x548] sm:%s6219] %v6254
                %v6256 = vld [vmem:[%s6226 + $0x380] sm:%s6219]
                %6257 = vst [vmem:[%s6227 + $0x5b0] sm:%s6219] %v6256
                %v6258 = vld [vmem:[%s6226 + $0x3c0] sm:%s6219]
                %6259 = vst [vmem:[%s6227 + $0x618] sm:%s6219] %v6258
                %v6260 = vld [vmem:[%s6226 + $0x400] sm:%s6219]
                %6261 = vst [vmem:[%s6227 + $0x680] sm:%s6219] %v6260
                %v6262 = vld [vmem:[%s6226 + $0x440] sm:%s6219]
                %6263 = vst [vmem:[%s6227 + $0x6e8] sm:%s6219] %v6262
                %v6264 = vld [vmem:[%s6226 + $0x480] sm:%s6219]
                %6265 = vst [vmem:[%s6227 + $0x750] sm:%s6219] %v6264
                %v6266 = vld [vmem:[%s6226 + $0x4c0] sm:%s6219]
                %6267 = vst [vmem:[%s6227 + $0x7b8] sm:%s6219] %v6266
                %v6268 = vld [vmem:[%s6226 + $0x500] sm:%s6219]
                %6269 = vst [vmem:[%s6227 + $0x820] sm:%s6219] %v6268
                %v6270 = vld [vmem:[%s6226 + $0x540] sm:%s6219]
                %6271 = vst [vmem:[%s6227 + $0x888] sm:%s6219] %v6270
                %v6272 = vld [vmem:[%s6226 + $0x580] sm:%s6219]
                %6273 = vst [vmem:[%s6227 + $0x8f0] sm:%s6219] %v6272
                %v6274 = vld [vmem:[%s6226 + $0x5c0] sm:%s6219]
                %6275 = vst [vmem:[%s6227 + $0x958] sm:%s6219] %v6274
                %v6276 = vld [vmem:[%s6226 + $0x600] sm:%s6219]
                %6277 = vst [vmem:[%s6227 + $0x9c0] sm:%s6219] %v6276
                %v6278 = vld [vmem:[%s6226 + $0x640] sm:%s6219]
                %6279 = vst [vmem:[%s6227 + $0xa28] sm:%s6219] %v6278
                %v6280 = vld [vmem:[%s6226 + $0x680] sm:%s6219]
                %6281 = vst [vmem:[%s6227 + $0xa90] sm:%s6219] %v6280
                %v6282 = vld [vmem:[%s6226 + $0x6c0] sm:%s6219]
                %6283 = vst [vmem:[%s6227 + $0xaf8] sm:%s6219] %v6282
                %v6284 = vld [vmem:[%s6226 + $0x700] sm:%s6219]
                %6285 = vst [vmem:[%s6227 + $0xb60] sm:%s6219] %v6284
                %v6286 = vld [vmem:[%s6226 + $0x740] sm:%s6219]
                %6287 = vst [vmem:[%s6227 + $0xbc8] sm:%s6219] %v6286
                %v6288 = vld [vmem:[%s6226 + $0x780] sm:%s6219]
                %6289 = vst [vmem:[%s6227 + $0xc30] sm:%s6219] %v6288
                %v6290 = vld [vmem:[%s6226 + $0x7c0] sm:%s6219]
                %6291 = vst [vmem:[%s6227 + $0xc98] sm:%s6219] %v6290
              $region175: #{ffmv2_forward.1} parent=169 // loop_footer
                %s6225 = sadd.s32 1, %s6221
              $region176: #{ffmv2_forward.1} parent=169 // loop_footer_branch
                %6220 = sbr.rel target = $region172
              $region177: #{ffmv2_forward.1} parent=169 // loop_exit
                _
            $region170: #{ffmv2_forward.1} parent=161 // pred_fallthru
              _
          $region162: #{ffmv2_forward.1} parent=157 // pred_fallthru
            _
          %6856 = vnop
        $region158: #{ffmv2_forward.1} parent=145 // pred_fallthru
          _
      $region146: #{ffmv2_forward.1} parent=5 // pred_fallthru
        _
      %p6857 = scmp.le.s32.totalorder 2, %s10
      // Predicated region
      $region221: #{ffmv2_forward.1} parent=5 // pred_check
        %p6858 = pneg %p6857
      $region222: #{ffmv2_forward.1} parent=5 // pred_check_branch
        %6860 = sbr.rel (%p6858) target = $region224
      $region223: #{ffmv2_forward.1} parent=5 // pred_region
        %s6861 = ssub.s32 %s10, 2
        // Predicated region
        $region225: #{ffmv2_forward.1} parent=223 // pred_check
          %p6862 = pneg %p151
        $region226: #{ffmv2_forward.1} parent=223 // pred_check_branch
          %6864 = sbr.rel (%p6862) target = $region228
        $region227: #{ffmv2_forward.1} parent=223 // pred_region
          %s6865 = sand.u32 %s136, 1
          %s6866 = sand.u32 %s136, 1
          %s6867 = smul.addr %s6866, 2048
          %s6868 = scalar_lea.vmem [#allocation4], %s6867
        $region228: #{ffmv2_forward.1} parent=223 // pred_fallthru
          _
      $region224: #{ffmv2_forward.1} parent=5 // pred_fallthru
        _
    $region6: #{ffmv2_forward.1} parent=1 // loop_footer
      %s14 = sadd.s32 1, %s10
    $region7: #{ffmv2_forward.1} parent=1 // loop_footer_branch
      %9 = sbr.rel target = $region3
    $region8: #{ffmv2_forward.1} parent=1 // loop_exit
      _

</llo_original>
